<compile_context>
chip_gen: v6e
topology: v6e:2x2x1
jax: 0.10.0
libtpu: 0.0.40
codegen_flags: <defaults>
</compile_context>

<pallas_src>
import jax
import jax.numpy as jnp
from jax.experimental import pallas as pl
from jax.experimental.pallas import tpu as pltpu

_BF16 = jnp.bfloat16


# ----------------------------------------------------------------------------
# In-kernel GroupNorm(group size 2, eps=1e-5, biased var) + ReLU on a (C, M)
# f32 activation.  Per-channel spatial sums are cross-lane reductions; the
# pair (group) averaging is a tiny constant (C, C) matmul (gm passed in).
# ----------------------------------------------------------------------------
def _gn2_relu(y, gm, gamma, beta):
    s = jnp.sum(y, axis=1, keepdims=True)                        # (C, 1)  sum x
    ss = jnp.sum(y * y, axis=1, keepdims=True)                   # (C, 1)  sum x^2
    mean = jnp.dot(gm, s, preferred_element_type=jnp.float32)    # (C, 1)
    esq = jnp.dot(gm, ss, preferred_element_type=jnp.float32)    # (C, 1)
    var = jnp.maximum(esq - mean * mean, 0.0)                    # cancellation guard
    inv = jax.lax.rsqrt(var + 1e-5)
    yn = (y - mean) * (inv * gamma) + beta
    return jnp.maximum(yn, 0.0)


# Kernel 1: fused Conv2d(3x3, pad=1) + GroupNorm(C//2) + ReLU, one sample per
# grid step.  The conv is a single (Cout, 9*Cin) @ (9*Cin, H*W) MXU matmul.
def _conv3x3_gn_relu_kernel(p_ref, w_ref, b_ref, g_ref, be_ref, gm_ref, o_ref):
    y = jnp.dot(w_ref[...], p_ref[0],
                preferred_element_type=jnp.float32) + b_ref[...]   # (Cout, M) f32
    act = _gn2_relu(y, gm_ref[...], g_ref[...], be_ref[...])
    o_ref[0] = act.astype(o_ref.dtype)


# Kernel 2: kernel 1 plus a fused 1x1 OutConv epilogue (network's last conv).
def _conv3x3_gn_relu_out_kernel(p_ref, w_ref, b_ref, g_ref, be_ref, gm_ref,
                                wp_ref, bp_ref, o_ref):
    y = jnp.dot(w_ref[...], p_ref[0],
                preferred_element_type=jnp.float32) + b_ref[...]
    act = _gn2_relu(y, gm_ref[...], g_ref[...], be_ref[...])
    o_ref[0] = (jnp.dot(wp_ref[...], act.astype(wp_ref.dtype),
                        preferred_element_type=jnp.float32)
                + bp_ref[...]).astype(o_ref.dtype)


# Kernel 3: per-sample (K, Cin) @ (Cin, H*W) + bias matmul, used for
# ConvTranspose2d(kernel=2, stride=2) with weights flattened to (4*Cout, Cin).
# Transposed orientation so the output's last dim (= H*W) is lane-dense.
def _matmul_bias_kernel(x_ref, w_ref, b_ref, o_ref):
    o_ref[0] = (jnp.dot(w_ref[...], x_ref[0],
                        preferred_element_type=jnp.float32)
                + b_ref[...]).astype(o_ref.dtype)


# ----------------------------------------------------------------------------
# Wrappers
# ----------------------------------------------------------------------------
def _im2col_nchw(x):
    """(N, C, H, W) -> (N, 9*C, H*W) patches, tap-major (dy, dx) then channel."""
    N, C, H, W = x.shape
    xp = jnp.pad(x, ((0, 0), (0, 0), (1, 1), (1, 1)))
    taps = [xp[:, :, dy:dy + H, dx:dx + W] for dy in range(3) for dx in range(3)]
    # TODO(synk): at large H*W generate the 9 taps inside the kernel with
    # pltpu.roll (XLU, idle here) from a single padded copy to avoid the 9x
    # im2col HBM traffic, and add an H-strip grid axis with a two-pass GN so
    # blocks fit v7x's 64 MiB VMEM at realistic resolutions.
    return jnp.concatenate(taps, axis=1).reshape(N, 9 * C, H * W)


def _group_avg_matrix(c, hw):
    """(C, C) constant: (gm @ per-channel-sums)[c] = mean over c's 2-ch group."""
    g = jnp.arange(c) // 2
    return jnp.where(g[:, None] == g[None, :],
                     1.0 / (2.0 * hw), 0.0).astype(jnp.float32)


def conv3x3_gn_relu(x, w, b, gamma, beta, out_proj=None):
    """x: (N, Cin, H, W).  w: PyTorch layout (Cout, Cin, 3, 3).
    out_proj: optional (w1x1 (C2, Cout, 1, 1), b1x1 (C2,)) fused 1x1-conv epilogue."""
    N, Cin, H, W = x.shape
    Cout = w.shape[0]
    M = H * W

    patches = _im2col_nchw(x).astype(_BF16)                       # (N, 9Cin, M)
    wf = jnp.transpose(w, (0, 2, 3, 1)).reshape(Cout, 9 * Cin).astype(_BF16)
    bcol = b.reshape(Cout, 1).astype(jnp.float32)
    gcol = gamma.reshape(Cout, 1).astype(jnp.float32)
    becol = beta.reshape(Cout, 1).astype(jnp.float32)
    gm = _group_avg_matrix(Cout, M)

    in_specs = [
        pl.BlockSpec((1, 9 * Cin, M), lambda n: (n, 0, 0)),
        pl.BlockSpec((Cout, 9 * Cin), lambda n: (0, 0)),
        pl.BlockSpec((Cout, 1), lambda n: (0, 0)),
        pl.BlockSpec((Cout, 1), lambda n: (0, 0)),
        pl.BlockSpec((Cout, 1), lambda n: (0, 0)),
        pl.BlockSpec((Cout, Cout), lambda n: (0, 0)),
    ]
    cparams = pltpu.CompilerParams(dimension_semantics=("parallel",))

    if out_proj is None:
        out = pl.pallas_call(
            _conv3x3_gn_relu_kernel,
            out_shape=jax.ShapeDtypeStruct((N, Cout, M), _BF16),
            grid=(N,),
            in_specs=in_specs,
            out_specs=pl.BlockSpec((1, Cout, M), lambda n: (n, 0, 0)),
            compiler_params=cparams,
        )(patches, wf, bcol, gcol, becol, gm)
        return out.reshape(N, Cout, H, W)

    wp, bp = out_proj
    C2 = wp.shape[0]
    wp2 = wp.reshape(C2, Cout).astype(_BF16)
    bp2 = bp.reshape(C2, 1).astype(jnp.float32)
    out = pl.pallas_call(
        _conv3x3_gn_relu_out_kernel,
        out_shape=jax.ShapeDtypeStruct((N, C2, M), jnp.float32),
        grid=(N,),
        in_specs=in_specs + [
            pl.BlockSpec((C2, Cout), lambda n: (0, 0)),
            pl.BlockSpec((C2, 1), lambda n: (0, 0)),
        ],
        out_specs=pl.BlockSpec((1, C2, M), lambda n: (n, 0, 0)),
        compiler_params=cparams,
    )(patches, wf, bcol, gcol, becol, gm, wp2, bp2)
    return out.reshape(N, C2, H, W)


def conv_transpose2x2(x, wt, bt):
    """ConvTranspose2d(Cin, Cout, 2, stride=2).  x: (N, Cin, H, W),
    wt: PyTorch layout (Cin, Cout, 2, 2)."""
    N, Cin, H, W = x.shape
    Cout = wt.shape[1]
    M = H * W
    xm = x.reshape(N, Cin, M).astype(_BF16)
    # rows ordered (co, dy, dx) so the bias is a simple 4x repeat
    wf = jnp.transpose(wt, (1, 2, 3, 0)).reshape(4 * Cout, Cin).astype(_BF16)
    bf = jnp.repeat(bt, 4).reshape(4 * Cout, 1).astype(jnp.float32)

    y = pl.pallas_call(
        _matmul_bias_kernel,
        out_shape=jax.ShapeDtypeStruct((N, 4 * Cout, M), _BF16),
        grid=(N,),
        in_specs=[
            pl.BlockSpec((1, Cin, M), lambda n: (n, 0, 0)),
            pl.BlockSpec((4 * Cout, Cin), lambda n: (0, 0)),
            pl.BlockSpec((4 * Cout, 1), lambda n: (0, 0)),
        ],
        out_specs=pl.BlockSpec((1, 4 * Cout, M), lambda n: (n, 0, 0)),
        compiler_params=pltpu.CompilerParams(dimension_semantics=("parallel",)),
    )(xm, wf, bf)

    # TODO(synk): fold this 2x2 interleave (and the following pad/concat) into
    # the next conv's patch gather so the upsampled map makes one HBM pass.
    y = y.reshape(N, Cout, 2, 2, H, W)
    return jnp.transpose(y, (0, 1, 4, 2, 5, 3)).reshape(N, Cout, 2 * H, 2 * W)


def avgpool2(x):
    """AvgPool2d(2) -- layout glue; XLA fuses it with the next im2col gather."""
    N, C, H, W = x.shape
    y = x.astype(jnp.float32).reshape(N, C, H // 2, 2, W // 2, 2).mean(axis=(3, 5))
    return y.astype(x.dtype)


def double_conv(x, p, out_proj=None):
    x = conv3x3_gn_relu(x, p["w1"], p["b1"], p["g1"], p["be1"])
    return conv3x3_gn_relu(x, p["w2"], p["b2"], p["g2"], p["be2"], out_proj=out_proj)


def unet2d_forward(params, x_nchw):
    # Native NCHW (C-major) throughout; bf16 activation storage between stages.
    x = x_nchw.astype(_BF16)
    x = double_conv(x, params["inc"])                      # first=True -> inc

    skips = []
    for name in ("down0", "down1"):
        skips.append(x)
        x = avgpool2(x)
        x = double_conv(x, params[name])

    for name, skip in zip(("up0", "up1"), reversed(skips)):
        p = params[name]
        x1 = conv_transpose2x2(x, p["wt"], p["bt"])
        dY = skip.shape[2] - x1.shape[2]
        dX = skip.shape[3] - x1.shape[3]
        x1 = jnp.pad(x1, ((0, 0), (0, 0),
                          (dY // 2, dY - dY // 2),
                          (dX // 2, dX - dX // 2)))
        x = jnp.concatenate([skip, x1], axis=1)            # cat((x2, x1), dim=1)
        proj = ((params["outc"]["w"], params["outc"]["b"])
                if name == "up1" else None)                # fuse OutConv2d 1x1
        x = double_conv(x, p["conv"], out_proj=proj)

    return x                                               # (N, out_cha, H, W) f32


# ----------------------------------------------------------------------------
# Deterministic synthetic parameters (PyTorch weight layouts)
# ----------------------------------------------------------------------------
def init_params(key):
    keys = iter(jax.random.split(key, 64))

    def nrm(shape, scale=0.1):
        return scale * jax.random.normal(next(keys), shape, jnp.float32)

    def dc(cin, cout):                                     # DoubleConv2d(cin, cout)
        return dict(
            w1=nrm((cout, cin, 3, 3)), b1=nrm((cout,)),
            g1=1.0 + nrm((cout,)), be1=nrm((cout,)),
            w2=nrm((cout, cout, 3, 3)), b2=nrm((cout,)),
            g2=1.0 + nrm((cout,)), be2=nrm((cout,)),
        )

    return dict(
        inc=dc(3, 16),                                     # DoubleConv2d(3, 16)
        down0=dc(16, 32),                                  # Down2d(16, 32)
        down1=dc(32, 64),                                  # Down2d(32, 64)
        up0=dict(wt=nrm((64, 32, 2, 2)), bt=nrm((32,)),    # Up2d(64, 32)
                 conv=dc(64, 32)),
        up1=dict(wt=nrm((32, 16, 2, 2)), bt=nrm((16,)),    # Up2d(32, 16)
                 conv=dc(32, 16)),
        outc=dict(w=nrm((3, 16, 1, 1)), b=nrm((3,))),      # OutConv2d(16, 3)
    )


if __name__ == "__main__":
    key = jax.random.PRNGKey(0)
    kp, kx = jax.random.split(key)
    params = init_params(kp)
    x = jax.random.normal(kx, (2, 3, 16, 16), jnp.float32)   # NCHW, like PyTorch

    fwd = jax.jit(unet2d_forward)
    out = jax.block_until_ready(fwd(params, x))

    assert out.shape == (2, 3, 16, 16), out.shape
    assert out.dtype == jnp.float32, out.dtype
    assert jnp.all(jnp.isfinite(out))
    print("KERNEL_OK")
</pallas_src>

<mosaic_0001>
module attributes {stable_mosaic.version = 11 : i64} {
  func.func @_conv3x3_gn_relu_kernel(%arg0: i32, %arg1: memref<1x27x256xbf16, #tpu.memory_space<vmem>>, %arg2: memref<16x27xbf16, #tpu.memory_space<vmem>>, %arg3: memref<16x1xf32, #tpu.memory_space<vmem>>, %arg4: memref<16x1xf32, #tpu.memory_space<vmem>>, %arg5: memref<16x1xf32, #tpu.memory_space<vmem>>, %arg6: memref<16x16xf32, #tpu.memory_space<vmem>>, %arg7: memref<1x16x256xbf16, #tpu.memory_space<vmem>>) attributes {dimension_semantics = [#tpu.dimension_semantics<parallel>], iteration_bounds = array<i64: 2>, scalar_prefetch = 0 : i64, scratch_operands = 0 : i64, tpu.core_type = #tpu.core_type<tc>, window_params = [{transform_indices = @transform_0, window_bounds = array<i64: 1, 27, 256>}, {pipeline_mode = #tpu.pipeline_mode<synchronous>, transform_indices = @transform_1, window_bounds = array<i64: 16, 27>}, {pipeline_mode = #tpu.pipeline_mode<synchronous>, transform_indices = @transform_2, window_bounds = array<i64: 16, 1>}, {pipeline_mode = #tpu.pipeline_mode<synchronous>, transform_indices = @transform_3, window_bounds = array<i64: 16, 1>}, {pipeline_mode = #tpu.pipeline_mode<synchronous>, transform_indices = @transform_4, window_bounds = array<i64: 16, 1>}, {pipeline_mode = #tpu.pipeline_mode<synchronous>, transform_indices = @transform_5, window_bounds = array<i64: 16, 16>}, {transform_indices = @transform_6, window_bounds = array<i64: 1, 16, 256>}]} {
    %c0 = arith.constant 0 : index
    %c0_0 = arith.constant 0 : index
    %0 = vector.load %arg2[%c0, %c0_0] : memref<16x27xbf16, #tpu.memory_space<vmem>>, vector<16x27xbf16>
    %c0_1 = arith.constant 0 : index
    %c0_2 = arith.constant 0 : index
    %c0_3 = arith.constant 0 : index
    %1 = vector.load %arg1[%c0_1, %c0_2, %c0_3] : memref<1x27x256xbf16, #tpu.memory_space<vmem>>, vector<1x27x256xbf16>
    %2 = vector.shape_cast %1 : vector<1x27x256xbf16> to vector<27x256xbf16>
    %cst = arith.constant dense<0.000000e+00> : vector<16x256xf32>
    %3 = tpu.matmul %0, %2, %cst {dimension_numbers = #tpu.dot_dimension_numbers<[1], [0], [0], [1], [0, 0, 1, 1], [], []>} : vector<16x27xbf16>, vector<27x256xbf16>, vector<16x256xf32> -> vector<16x256xf32>
    %c0_4 = arith.constant 0 : index
    %c0_5 = arith.constant 0 : index
    %4 = vector.load %arg3[%c0_4, %c0_5] : memref<16x1xf32, #tpu.memory_space<vmem>>, vector<16x1xf32>
    %5 = vector.broadcast %4 : vector<16x1xf32> to vector<16x256xf32>
    %6 = arith.addf %3, %5 : vector<16x256xf32>
    %c0_6 = arith.constant 0 : index
    %c0_7 = arith.constant 0 : index
    %7 = vector.load %arg6[%c0_6, %c0_7] : memref<16x16xf32, #tpu.memory_space<vmem>>, vector<16x16xf32>
    %c0_8 = arith.constant 0 : index
    %c0_9 = arith.constant 0 : index
    %8 = vector.load %arg4[%c0_8, %c0_9] : memref<16x1xf32, #tpu.memory_space<vmem>>, vector<16x1xf32>
    %c0_10 = arith.constant 0 : index
    %c0_11 = arith.constant 0 : index
    %9 = vector.load %arg5[%c0_10, %c0_11] : memref<16x1xf32, #tpu.memory_space<vmem>>, vector<16x1xf32>
    %cst_12 = arith.constant dense<0.000000e+00> : vector<16xf32>
    %10 = vector.multi_reduction <add>, %6, %cst_12 [1] : vector<16x256xf32> to vector<16xf32>
    %11 = vector.shape_cast %10 : vector<16xf32> to vector<16x1xf32>
    %12 = arith.mulf %6, %6 : vector<16x256xf32>
    %cst_13 = arith.constant dense<0.000000e+00> : vector<16xf32>
    %13 = vector.multi_reduction <add>, %12, %cst_13 [1] : vector<16x256xf32> to vector<16xf32>
    %14 = vector.shape_cast %13 : vector<16xf32> to vector<16x1xf32>
    %cst_14 = arith.constant dense<0.000000e+00> : vector<16x1xf32>
    %15 = tpu.matmul %7, %11, %cst_14 {dimension_numbers = #tpu.dot_dimension_numbers<[1], [0], [0], [1], [0, 0, 1, 1], [], []>} : vector<16x16xf32>, vector<16x1xf32>, vector<16x1xf32> -> vector<16x1xf32>
    %cst_15 = arith.constant dense<0.000000e+00> : vector<16x1xf32>
    %16 = tpu.matmul %7, %14, %cst_15 {dimension_numbers = #tpu.dot_dimension_numbers<[1], [0], [0], [1], [0, 0, 1, 1], [], []>} : vector<16x16xf32>, vector<16x1xf32>, vector<16x1xf32> -> vector<16x1xf32>
    %17 = arith.mulf %15, %15 : vector<16x1xf32>
    %18 = arith.subf %16, %17 : vector<16x1xf32>
    %cst_16 = arith.constant 0.000000e+00 : f32
    %19 = vector.broadcast %cst_16 : f32 to vector<16x1xf32>
    %20 = arith.maximumf %18, %19 : vector<16x1xf32>
    %cst_17 = arith.constant 9.99999974E-6 : f32
    %21 = vector.broadcast %cst_17 : f32 to vector<16x1xf32>
    %22 = arith.addf %20, %21 : vector<16x1xf32>
    %23 = math.rsqrt %22 : vector<16x1xf32>
    %24 = vector.broadcast %15 : vector<16x1xf32> to vector<16x256xf32>
    %25 = arith.subf %6, %24 : vector<16x256xf32>
    %26 = arith.mulf %23, %8 : vector<16x1xf32>
    %27 = vector.broadcast %26 : vector<16x1xf32> to vector<16x256xf32>
    %28 = arith.mulf %25, %27 : vector<16x256xf32>
    %29 = vector.broadcast %9 : vector<16x1xf32> to vector<16x256xf32>
    %30 = arith.addf %28, %29 : vector<16x256xf32>
    %cst_18 = arith.constant 0.000000e+00 : f32
    %31 = vector.broadcast %cst_18 : f32 to vector<16x256xf32>
    %32 = arith.maximumf %30, %31 : vector<16x256xf32>
    %33 = arith.truncf %32 : vector<16x256xf32> to vector<16x256xbf16>
    %c0_19 = arith.constant 0 : index
    %c0_20 = arith.constant 0 : index
    %c0_21 = arith.constant 0 : index
    %34 = vector.load %arg7[%c0_19, %c0_20, %c0_21] : memref<1x16x256xbf16, #tpu.memory_space<vmem>>, vector<1x16x256xbf16>
    %35 = vector.shape_cast %34 : vector<1x16x256xbf16> to vector<16x256xbf16>
    %36 = vector.shape_cast %33 : vector<16x256xbf16> to vector<1x16x256xbf16>
    tpu.vector_store %arg7[%c0_19, %c0_20, %c0_21], %36 {strides = array<i32>} : memref<1x16x256xbf16, #tpu.memory_space<vmem>>, vector<1x16x256xbf16>,
    return
  }
  func.func @transform_0(%arg0: i32) -> (i32, i32, i32) {
    %c0_i32 = arith.constant 0 : i32
    %c0_i32_0 = arith.constant 0 : i32
    %c0_i32_1 = arith.constant 0 : i32
    return %arg0, %c0_i32, %c0_i32_0 : i32, i32, i32
  }
  func.func @transform_1(%arg0: i32) -> (i32, i32) {
    %c0_i32 = arith.constant 0 : i32
    %c0_i32_0 = arith.constant 0 : i32
    %c0_i32_1 = arith.constant 0 : i32
    return %c0_i32, %c0_i32_0 : i32, i32
  }
  func.func @transform_2(%arg0: i32) -> (i32, i32) {
    %c0_i32 = arith.constant 0 : i32
    %c0_i32_0 = arith.constant 0 : i32
    %c0_i32_1 = arith.constant 0 : i32
    return %c0_i32, %c0_i32_0 : i32, i32
  }
  func.func @transform_3(%arg0: i32) -> (i32, i32) {
    %c0_i32 = arith.constant 0 : i32
    %c0_i32_0 = arith.constant 0 : i32
    %c0_i32_1 = arith.constant 0 : i32
    return %c0_i32, %c0_i32_0 : i32, i32
  }
  func.func @transform_4(%arg0: i32) -> (i32, i32) {
    %c0_i32 = arith.constant 0 : i32
    %c0_i32_0 = arith.constant 0 : i32
    %c0_i32_1 = arith.constant 0 : i32
    return %c0_i32, %c0_i32_0 : i32, i32
  }
  func.func @transform_5(%arg0: i32) -> (i32, i32) {
    %c0_i32 = arith.constant 0 : i32
    %c0_i32_0 = arith.constant 0 : i32
    %c0_i32_1 = arith.constant 0 : i32
    return %c0_i32, %c0_i32_0 : i32, i32
  }
  func.func @transform_6(%arg0: i32) -> (i32, i32, i32) {
    %c0_i32 = arith.constant 0 : i32
    %c0_i32_0 = arith.constant 0 : i32
    %c0_i32_1 = arith.constant 0 : i32
    return %arg0, %c0_i32, %c0_i32_0 : i32, i32, i32
  }
}

module attributes {stable_mosaic.version = 11 : i64} {
  func.func @_conv3x3_gn_relu_kernel(%arg0: i32, %arg1: memref<1x144x256xbf16, #tpu.memory_space<vmem>>, %arg2: memref<16x144xbf16, #tpu.memory_space<vmem>>, %arg3: memref<16x1xf32, #tpu.memory_space<vmem>>, %arg4: memref<16x1xf32, #tpu.memory_space<vmem>>, %arg5: memref<16x1xf32, #tpu.memory_space<vmem>>, %arg6: memref<16x16xf32, #tpu.memory_space<vmem>>, %arg7: memref<1x16x256xbf16, #tpu.memory_space<vmem>>) attributes {dimension_semantics = [#tpu.dimension_semantics<parallel>], iteration_bounds = array<i64: 2>, scalar_prefetch = 0 : i64, scratch_operands = 0 : i64, tpu.core_type = #tpu.core_type<tc>, window_params = [{transform_indices = @transform_0, window_bounds = array<i64: 1, 144, 256>}, {pipeline_mode = #tpu.pipeline_mode<synchronous>, transform_indices = @transform_1, window_bounds = array<i64: 16, 144>}, {pipeline_mode = #tpu.pipeline_mode<synchronous>, transform_indices = @transform_2, window_bounds = array<i64: 16, 1>}, {pipeline_mode = #tpu.pipeline_mode<synchronous>, transform_indices = @transform_3, window_bounds = array<i64: 16, 1>}, {pipeline_mode = #tpu.pipeline_mode<synchronous>, transform_indices = @transform_4, window_bounds = array<i64: 16, 1>}, {pipeline_mode = #tpu.pipeline_mode<synchronous>, transform_indices = @transform_5, window_bounds = array<i64: 16, 16>}, {transform_indices = @transform_6, window_bounds = array<i64: 1, 16, 256>}]} {
    %c0 = arith.constant 0 : index
    %c0_0 = arith.constant 0 : index
    %0 = vector.load %arg2[%c0, %c0_0] : memref<16x144xbf16, #tpu.memory_space<vmem>>, vector<16x144xbf16>
    %c0_1 = arith.constant 0 : index
    %c0_2 = arith.constant 0 : index
    %c0_3 = arith.constant 0 : index
    %1 = vector.load %arg1[%c0_1, %c0_2, %c0_3] : memref<1x144x256xbf16, #tpu.memory_space<vmem>>, vector<1x144x256xbf16>
    %2 = vector.shape_cast %1 : vector<1x144x256xbf16> to vector<144x256xbf16>
    %cst = arith.constant dense<0.000000e+00> : vector<16x256xf32>
    %3 = tpu.matmul %0, %2, %cst {dimension_numbers = #tpu.dot_dimension_numbers<[1], [0], [0], [1], [0, 0, 1, 1], [], []>} : vector<16x144xbf16>, vector<144x256xbf16>, vector<16x256xf32> -> vector<16x256xf32>
    %c0_4 = arith.constant 0 : index
    %c0_5 = arith.constant 0 : index
    %4 = vector.load %arg3[%c0_4, %c0_5] : memref<16x1xf32, #tpu.memory_space<vmem>>, vector<16x1xf32>
    %5 = vector.broadcast %4 : vector<16x1xf32> to vector<16x256xf32>
    %6 = arith.addf %3, %5 : vector<16x256xf32>
    %c0_6 = arith.constant 0 : index
    %c0_7 = arith.constant 0 : index
    %7 = vector.load %arg6[%c0_6, %c0_7] : memref<16x16xf32, #tpu.memory_space<vmem>>, vector<16x16xf32>
    %c0_8 = arith.constant 0 : index
    %c0_9 = arith.constant 0 : index
    %8 = vector.load %arg4[%c0_8, %c0_9] : memref<16x1xf32, #tpu.memory_space<vmem>>, vector<16x1xf32>
    %c0_10 = arith.constant 0 : index
    %c0_11 = arith.constant 0 : index
    %9 = vector.load %arg5[%c0_10, %c0_11] : memref<16x1xf32, #tpu.memory_space<vmem>>, vector<16x1xf32>
    %cst_12 = arith.constant dense<0.000000e+00> : vector<16xf32>
    %10 = vector.multi_reduction <add>, %6, %cst_12 [1] : vector<16x256xf32> to vector<16xf32>
    %11 = vector.shape_cast %10 : vector<16xf32> to vector<16x1xf32>
    %12 = arith.mulf %6, %6 : vector<16x256xf32>
    %cst_13 = arith.constant dense<0.000000e+00> : vector<16xf32>
    %13 = vector.multi_reduction <add>, %12, %cst_13 [1] : vector<16x256xf32> to vector<16xf32>
    %14 = vector.shape_cast %13 : vector<16xf32> to vector<16x1xf32>
    %cst_14 = arith.constant dense<0.000000e+00> : vector<16x1xf32>
    %15 = tpu.matmul %7, %11, %cst_14 {dimension_numbers = #tpu.dot_dimension_numbers<[1], [0], [0], [1], [0, 0, 1, 1], [], []>} : vector<16x16xf32>, vector<16x1xf32>, vector<16x1xf32> -> vector<16x1xf32>
    %cst_15 = arith.constant dense<0.000000e+00> : vector<16x1xf32>
    %16 = tpu.matmul %7, %14, %cst_15 {dimension_numbers = #tpu.dot_dimension_numbers<[1], [0], [0], [1], [0, 0, 1, 1], [], []>} : vector<16x16xf32>, vector<16x1xf32>, vector<16x1xf32> -> vector<16x1xf32>
    %17 = arith.mulf %15, %15 : vector<16x1xf32>
    %18 = arith.subf %16, %17 : vector<16x1xf32>
    %cst_16 = arith.constant 0.000000e+00 : f32
    %19 = vector.broadcast %cst_16 : f32 to vector<16x1xf32>
    %20 = arith.maximumf %18, %19 : vector<16x1xf32>
    %cst_17 = arith.constant 9.99999974E-6 : f32
    %21 = vector.broadcast %cst_17 : f32 to vector<16x1xf32>
    %22 = arith.addf %20, %21 : vector<16x1xf32>
    %23 = math.rsqrt %22 : vector<16x1xf32>
    %24 = vector.broadcast %15 : vector<16x1xf32> to vector<16x256xf32>
    %25 = arith.subf %6, %24 : vector<16x256xf32>
    %26 = arith.mulf %23, %8 : vector<16x1xf32>
    %27 = vector.broadcast %26 : vector<16x1xf32> to vector<16x256xf32>
    %28 = arith.mulf %25, %27 : vector<16x256xf32>
    %29 = vector.broadcast %9 : vector<16x1xf32> to vector<16x256xf32>
    %30 = arith.addf %28, %29 : vector<16x256xf32>
    %cst_18 = arith.constant 0.000000e+00 : f32
    %31 = vector.broadcast %cst_18 : f32 to vector<16x256xf32>
    %32 = arith.maximumf %30, %31 : vector<16x256xf32>
    %33 = arith.truncf %32 : vector<16x256xf32> to vector<16x256xbf16>
    %c0_19 = arith.constant 0 : index
    %c0_20 = arith.constant 0 : index
    %c0_21 = arith.constant 0 : index
    %34 = vector.load %arg7[%c0_19, %c0_20, %c0_21] : memref<1x16x256xbf16, #tpu.memory_space<vmem>>, vector<1x16x256xbf16>
    %35 = vector.shape_cast %34 : vector<1x16x256xbf16> to vector<16x256xbf16>
    %36 = vector.shape_cast %33 : vector<16x256xbf16> to vector<1x16x256xbf16>
    tpu.vector_store %arg7[%c0_19, %c0_20, %c0_21], %36 {strides = array<i32>} : memref<1x16x256xbf16, #tpu.memory_space<vmem>>, vector<1x16x256xbf16>,
    return
  }
  func.func @transform_0(%arg0: i32) -> (i32, i32, i32) {
    %c0_i32 = arith.constant 0 : i32
    %c0_i32_0 = arith.constant 0 : i32
    %c0_i32_1 = arith.constant 0 : i32
    return %arg0, %c0_i32, %c0_i32_0 : i32, i32, i32
  }
  func.func @transform_1(%arg0: i32) -> (i32, i32) {
    %c0_i32 = arith.constant 0 : i32
    %c0_i32_0 = arith.constant 0 : i32
    %c0_i32_1 = arith.constant 0 : i32
    return %c0_i32, %c0_i32_0 : i32, i32
  }
  func.func @transform_2(%arg0: i32) -> (i32, i32) {
    %c0_i32 = arith.constant 0 : i32
    %c0_i32_0 = arith.constant 0 : i32
    %c0_i32_1 = arith.constant 0 : i32
    return %c0_i32, %c0_i32_0 : i32, i32
  }
  func.func @transform_3(%arg0: i32) -> (i32, i32) {
    %c0_i32 = arith.constant 0 : i32
    %c0_i32_0 = arith.constant 0 : i32
    %c0_i32_1 = arith.constant 0 : i32
    return %c0_i32, %c0_i32_0 : i32, i32
  }
  func.func @transform_4(%arg0: i32) -> (i32, i32) {
    %c0_i32 = arith.constant 0 : i32
    %c0_i32_0 = arith.constant 0 : i32
    %c0_i32_1 = arith.constant 0 : i32
    return %c0_i32, %c0_i32_0 : i32, i32
  }
  func.func @transform_5(%arg0: i32) -> (i32, i32) {
    %c0_i32 = arith.constant 0 : i32
    %c0_i32_0 = arith.constant 0 : i32
    %c0_i32_1 = arith.constant 0 : i32
    return %c0_i32, %c0_i32_0 : i32, i32
  }
  func.func @transform_6(%arg0: i32) -> (i32, i32, i32) {
    %c0_i32 = arith.constant 0 : i32
    %c0_i32_0 = arith.constant 0 : i32
    %c0_i32_1 = arith.constant 0 : i32
    return %arg0, %c0_i32, %c0_i32_0 : i32, i32, i32
  }
}

module attributes {stable_mosaic.version = 11 : i64} {
  func.func @_conv3x3_gn_relu_kernel(%arg0: i32, %arg1: memref<1x144x64xbf16, #tpu.memory_space<vmem>>, %arg2: memref<32x144xbf16, #tpu.memory_space<vmem>>, %arg3: memref<32x1xf32, #tpu.memory_space<vmem>>, %arg4: memref<32x1xf32, #tpu.memory_space<vmem>>, %arg5: memref<32x1xf32, #tpu.memory_space<vmem>>, %arg6: memref<32x32xf32, #tpu.memory_space<vmem>>, %arg7: memref<1x32x64xbf16, #tpu.memory_space<vmem>>) attributes {dimension_semantics = [#tpu.dimension_semantics<parallel>], iteration_bounds = array<i64: 2>, scalar_prefetch = 0 : i64, scratch_operands = 0 : i64, tpu.core_type = #tpu.core_type<tc>, window_params = [{transform_indices = @transform_0, window_bounds = array<i64: 1, 144, 64>}, {pipeline_mode = #tpu.pipeline_mode<synchronous>, transform_indices = @transform_1, window_bounds = array<i64: 32, 144>}, {pipeline_mode = #tpu.pipeline_mode<synchronous>, transform_indices = @transform_2, window_bounds = array<i64: 32, 1>}, {pipeline_mode = #tpu.pipeline_mode<synchronous>, transform_indices = @transform_3, window_bounds = array<i64: 32, 1>}, {pipeline_mode = #tpu.pipeline_mode<synchronous>, transform_indices = @transform_4, window_bounds = array<i64: 32, 1>}, {pipeline_mode = #tpu.pipeline_mode<synchronous>, transform_indices = @transform_5, window_bounds = array<i64: 32, 32>}, {transform_indices = @transform_6, window_bounds = array<i64: 1, 32, 64>}]} {
    %c0 = arith.constant 0 : index
    %c0_0 = arith.constant 0 : index
    %0 = vector.load %arg2[%c0, %c0_0] : memref<32x144xbf16, #tpu.memory_space<vmem>>, vector<32x144xbf16>
    %c0_1 = arith.constant 0 : index
    %c0_2 = arith.constant 0 : index
    %c0_3 = arith.constant 0 : index
    %1 = vector.load %arg1[%c0_1, %c0_2, %c0_3] : memref<1x144x64xbf16, #tpu.memory_space<vmem>>, vector<1x144x64xbf16>
    %2 = vector.shape_cast %1 : vector<1x144x64xbf16> to vector<144x64xbf16>
    %cst = arith.constant dense<0.000000e+00> : vector<32x64xf32>
    %3 = tpu.matmul %0, %2, %cst {dimension_numbers = #tpu.dot_dimension_numbers<[1], [0], [0], [1], [0, 0, 1, 1], [], []>} : vector<32x144xbf16>, vector<144x64xbf16>, vector<32x64xf32> -> vector<32x64xf32>
    %c0_4 = arith.constant 0 : index
    %c0_5 = arith.constant 0 : index
    %4 = vector.load %arg3[%c0_4, %c0_5] : memref<32x1xf32, #tpu.memory_space<vmem>>, vector<32x1xf32>
    %5 = vector.broadcast %4 : vector<32x1xf32> to vector<32x64xf32>
    %6 = arith.addf %3, %5 : vector<32x64xf32>
    %c0_6 = arith.constant 0 : index
    %c0_7 = arith.constant 0 : index
    %7 = vector.load %arg6[%c0_6, %c0_7] : memref<32x32xf32, #tpu.memory_space<vmem>>, vector<32x32xf32>
    %c0_8 = arith.constant 0 : index
    %c0_9 = arith.constant 0 : index
    %8 = vector.load %arg4[%c0_8, %c0_9] : memref<32x1xf32, #tpu.memory_space<vmem>>, vector<32x1xf32>
    %c0_10 = arith.constant 0 : index
    %c0_11 = arith.constant 0 : index
    %9 = vector.load %arg5[%c0_10, %c0_11] : memref<32x1xf32, #tpu.memory_space<vmem>>, vector<32x1xf32>
    %cst_12 = arith.constant dense<0.000000e+00> : vector<32xf32>
    %10 = vector.multi_reduction <add>, %6, %cst_12 [1] : vector<32x64xf32> to vector<32xf32>
    %11 = vector.shape_cast %10 : vector<32xf32> to vector<32x1xf32>
    %12 = arith.mulf %6, %6 : vector<32x64xf32>
    %cst_13 = arith.constant dense<0.000000e+00> : vector<32xf32>
    %13 = vector.multi_reduction <add>, %12, %cst_13 [1] : vector<32x64xf32> to vector<32xf32>
    %14 = vector.shape_cast %13 : vector<32xf32> to vector<32x1xf32>
    %cst_14 = arith.constant dense<0.000000e+00> : vector<32x1xf32>
    %15 = tpu.matmul %7, %11, %cst_14 {dimension_numbers = #tpu.dot_dimension_numbers<[1], [0], [0], [1], [0, 0, 1, 1], [], []>} : vector<32x32xf32>, vector<32x1xf32>, vector<32x1xf32> -> vector<32x1xf32>
    %cst_15 = arith.constant dense<0.000000e+00> : vector<32x1xf32>
    %16 = tpu.matmul %7, %14, %cst_15 {dimension_numbers = #tpu.dot_dimension_numbers<[1], [0], [0], [1], [0, 0, 1, 1], [], []>} : vector<32x32xf32>, vector<32x1xf32>, vector<32x1xf32> -> vector<32x1xf32>
    %17 = arith.mulf %15, %15 : vector<32x1xf32>
    %18 = arith.subf %16, %17 : vector<32x1xf32>
    %cst_16 = arith.constant 0.000000e+00 : f32
    %19 = vector.broadcast %cst_16 : f32 to vector<32x1xf32>
    %20 = arith.maximumf %18, %19 : vector<32x1xf32>
    %cst_17 = arith.constant 9.99999974E-6 : f32
    %21 = vector.broadcast %cst_17 : f32 to vector<32x1xf32>
    %22 = arith.addf %20, %21 : vector<32x1xf32>
    %23 = math.rsqrt %22 : vector<32x1xf32>
    %24 = vector.broadcast %15 : vector<32x1xf32> to vector<32x64xf32>
    %25 = arith.subf %6, %24 : vector<32x64xf32>
    %26 = arith.mulf %23, %8 : vector<32x1xf32>
    %27 = vector.broadcast %26 : vector<32x1xf32> to vector<32x64xf32>
    %28 = arith.mulf %25, %27 : vector<32x64xf32>
    %29 = vector.broadcast %9 : vector<32x1xf32> to vector<32x64xf32>
    %30 = arith.addf %28, %29 : vector<32x64xf32>
    %cst_18 = arith.constant 0.000000e+00 : f32
    %31 = vector.broadcast %cst_18 : f32 to vector<32x64xf32>
    %32 = arith.maximumf %30, %31 : vector<32x64xf32>
    %33 = arith.truncf %32 : vector<32x64xf32> to vector<32x64xbf16>
    %c0_19 = arith.constant 0 : index
    %c0_20 = arith.constant 0 : index
    %c0_21 = arith.constant 0 : index
    %34 = vector.load %arg7[%c0_19, %c0_20, %c0_21] : memref<1x32x64xbf16, #tpu.memory_space<vmem>>, vector<1x32x64xbf16>
    %35 = vector.shape_cast %34 : vector<1x32x64xbf16> to vector<32x64xbf16>
    %36 = vector.shape_cast %33 : vector<32x64xbf16> to vector<1x32x64xbf16>
    tpu.vector_store %arg7[%c0_19, %c0_20, %c0_21], %36 {strides = array<i32>} : memref<1x32x64xbf16, #tpu.memory_space<vmem>>, vector<1x32x64xbf16>,
    return
  }
  func.func @transform_0(%arg0: i32) -> (i32, i32, i32) {
    %c0_i32 = arith.constant 0 : i32
    %c0_i32_0 = arith.constant 0 : i32
    %c0_i32_1 = arith.constant 0 : i32
    return %arg0, %c0_i32, %c0_i32_0 : i32, i32, i32
  }
  func.func @transform_1(%arg0: i32) -> (i32, i32) {
    %c0_i32 = arith.constant 0 : i32
    %c0_i32_0 = arith.constant 0 : i32
    %c0_i32_1 = arith.constant 0 : i32
    return %c0_i32, %c0_i32_0 : i32, i32
  }
  func.func @transform_2(%arg0: i32) -> (i32, i32) {
    %c0_i32 = arith.constant 0 : i32
    %c0_i32_0 = arith.constant 0 : i32
    %c0_i32_1 = arith.constant 0 : i32
    return %c0_i32, %c0_i32_0 : i32, i32
  }
  func.func @transform_3(%arg0: i32) -> (i32, i32) {
    %c0_i32 = arith.constant 0 : i32
    %c0_i32_0 = arith.constant 0 : i32
    %c0_i32_1 = arith.constant 0 : i32
    return %c0_i32, %c0_i32_0 : i32, i32
  }
  func.func @transform_4(%arg0: i32) -> (i32, i32) {
    %c0_i32 = arith.constant 0 : i32
    %c0_i32_0 = arith.constant 0 : i32
    %c0_i32_1 = arith.constant 0 : i32
    return %c0_i32, %c0_i32_0 : i32, i32
  }
  func.func @transform_5(%arg0: i32) -> (i32, i32) {
    %c0_i32 = arith.constant 0 : i32
    %c0_i32_0 = arith.constant 0 : i32
    %c0_i32_1 = arith.constant 0 : i32
    return %c0_i32, %c0_i32_0 : i32, i32
  }
  func.func @transform_6(%arg0: i32) -> (i32, i32, i32) {
    %c0_i32 = arith.constant 0 : i32
    %c0_i32_0 = arith.constant 0 : i32
    %c0_i32_1 = arith.constant 0 : i32
    return %arg0, %c0_i32, %c0_i32_0 : i32, i32, i32
  }
}

module attributes {stable_mosaic.version = 11 : i64} {
  func.func @_conv3x3_gn_relu_kernel(%arg0: i32, %arg1: memref<1x288x64xbf16, #tpu.memory_space<vmem>>, %arg2: memref<32x288xbf16, #tpu.memory_space<vmem>>, %arg3: memref<32x1xf32, #tpu.memory_space<vmem>>, %arg4: memref<32x1xf32, #tpu.memory_space<vmem>>, %arg5: memref<32x1xf32, #tpu.memory_space<vmem>>, %arg6: memref<32x32xf32, #tpu.memory_space<vmem>>, %arg7: memref<1x32x64xbf16, #tpu.memory_space<vmem>>) attributes {dimension_semantics = [#tpu.dimension_semantics<parallel>], iteration_bounds = array<i64: 2>, scalar_prefetch = 0 : i64, scratch_operands = 0 : i64, tpu.core_type = #tpu.core_type<tc>, window_params = [{transform_indices = @transform_0, window_bounds = array<i64: 1, 288, 64>}, {pipeline_mode = #tpu.pipeline_mode<synchronous>, transform_indices = @transform_1, window_bounds = array<i64: 32, 288>}, {pipeline_mode = #tpu.pipeline_mode<synchronous>, transform_indices = @transform_2, window_bounds = array<i64: 32, 1>}, {pipeline_mode = #tpu.pipeline_mode<synchronous>, transform_indices = @transform_3, window_bounds = array<i64: 32, 1>}, {pipeline_mode = #tpu.pipeline_mode<synchronous>, transform_indices = @transform_4, window_bounds = array<i64: 32, 1>}, {pipeline_mode = #tpu.pipeline_mode<synchronous>, transform_indices = @transform_5, window_bounds = array<i64: 32, 32>}, {transform_indices = @transform_6, window_bounds = array<i64: 1, 32, 64>}]} {
    %c0 = arith.constant 0 : index
    %c0_0 = arith.constant 0 : index
    %0 = vector.load %arg2[%c0, %c0_0] : memref<32x288xbf16, #tpu.memory_space<vmem>>, vector<32x288xbf16>
    %c0_1 = arith.constant 0 : index
    %c0_2 = arith.constant 0 : index
    %c0_3 = arith.constant 0 : index
    %1 = vector.load %arg1[%c0_1, %c0_2, %c0_3] : memref<1x288x64xbf16, #tpu.memory_space<vmem>>, vector<1x288x64xbf16>
    %2 = vector.shape_cast %1 : vector<1x288x64xbf16> to vector<288x64xbf16>
    %cst = arith.constant dense<0.000000e+00> : vector<32x64xf32>
    %3 = tpu.matmul %0, %2, %cst {dimension_numbers = #tpu.dot_dimension_numbers<[1], [0], [0], [1], [0, 0, 1, 1], [], []>} : vector<32x288xbf16>, vector<288x64xbf16>, vector<32x64xf32> -> vector<32x64xf32>
    %c0_4 = arith.constant 0 : index
    %c0_5 = arith.constant 0 : index
    %4 = vector.load %arg3[%c0_4, %c0_5] : memref<32x1xf32, #tpu.memory_space<vmem>>, vector<32x1xf32>
    %5 = vector.broadcast %4 : vector<32x1xf32> to vector<32x64xf32>
    %6 = arith.addf %3, %5 : vector<32x64xf32>
    %c0_6 = arith.constant 0 : index
    %c0_7 = arith.constant 0 : index
    %7 = vector.load %arg6[%c0_6, %c0_7] : memref<32x32xf32, #tpu.memory_space<vmem>>, vector<32x32xf32>
    %c0_8 = arith.constant 0 : index
    %c0_9 = arith.constant 0 : index
    %8 = vector.load %arg4[%c0_8, %c0_9] : memref<32x1xf32, #tpu.memory_space<vmem>>, vector<32x1xf32>
    %c0_10 = arith.constant 0 : index
    %c0_11 = arith.constant 0 : index
    %9 = vector.load %arg5[%c0_10, %c0_11] : memref<32x1xf32, #tpu.memory_space<vmem>>, vector<32x1xf32>
    %cst_12 = arith.constant dense<0.000000e+00> : vector<32xf32>
    %10 = vector.multi_reduction <add>, %6, %cst_12 [1] : vector<32x64xf32> to vector<32xf32>
    %11 = vector.shape_cast %10 : vector<32xf32> to vector<32x1xf32>
    %12 = arith.mulf %6, %6 : vector<32x64xf32>
    %cst_13 = arith.constant dense<0.000000e+00> : vector<32xf32>
    %13 = vector.multi_reduction <add>, %12, %cst_13 [1] : vector<32x64xf32> to vector<32xf32>
    %14 = vector.shape_cast %13 : vector<32xf32> to vector<32x1xf32>
    %cst_14 = arith.constant dense<0.000000e+00> : vector<32x1xf32>
    %15 = tpu.matmul %7, %11, %cst_14 {dimension_numbers = #tpu.dot_dimension_numbers<[1], [0], [0], [1], [0, 0, 1, 1], [], []>} : vector<32x32xf32>, vector<32x1xf32>, vector<32x1xf32> -> vector<32x1xf32>
    %cst_15 = arith.constant dense<0.000000e+00> : vector<32x1xf32>
    %16 = tpu.matmul %7, %14, %cst_15 {dimension_numbers = #tpu.dot_dimension_numbers<[1], [0], [0], [1], [0, 0, 1, 1], [], []>} : vector<32x32xf32>, vector<32x1xf32>, vector<32x1xf32> -> vector<32x1xf32>
    %17 = arith.mulf %15, %15 : vector<32x1xf32>
    %18 = arith.subf %16, %17 : vector<32x1xf32>
    %cst_16 = arith.constant 0.000000e+00 : f32
    %19 = vector.broadcast %cst_16 : f32 to vector<32x1xf32>
    %20 = arith.maximumf %18, %19 : vector<32x1xf32>
    %cst_17 = arith.constant 9.99999974E-6 : f32
    %21 = vector.broadcast %cst_17 : f32 to vector<32x1xf32>
    %22 = arith.addf %20, %21 : vector<32x1xf32>
    %23 = math.rsqrt %22 : vector<32x1xf32>
    %24 = vector.broadcast %15 : vector<32x1xf32> to vector<32x64xf32>
    %25 = arith.subf %6, %24 : vector<32x64xf32>
    %26 = arith.mulf %23, %8 : vector<32x1xf32>
    %27 = vector.broadcast %26 : vector<32x1xf32> to vector<32x64xf32>
    %28 = arith.mulf %25, %27 : vector<32x64xf32>
    %29 = vector.broadcast %9 : vector<32x1xf32> to vector<32x64xf32>
    %30 = arith.addf %28, %29 : vector<32x64xf32>
    %cst_18 = arith.constant 0.000000e+00 : f32
    %31 = vector.broadcast %cst_18 : f32 to vector<32x64xf32>
    %32 = arith.maximumf %30, %31 : vector<32x64xf32>
    %33 = arith.truncf %32 : vector<32x64xf32> to vector<32x64xbf16>
    %c0_19 = arith.constant 0 : index
    %c0_20 = arith.constant 0 : index
    %c0_21 = arith.constant 0 : index
    %34 = vector.load %arg7[%c0_19, %c0_20, %c0_21] : memref<1x32x64xbf16, #tpu.memory_space<vmem>>, vector<1x32x64xbf16>
    %35 = vector.shape_cast %34 : vector<1x32x64xbf16> to vector<32x64xbf16>
    %36 = vector.shape_cast %33 : vector<32x64xbf16> to vector<1x32x64xbf16>
    tpu.vector_store %arg7[%c0_19, %c0_20, %c0_21], %36 {strides = array<i32>} : memref<1x32x64xbf16, #tpu.memory_space<vmem>>, vector<1x32x64xbf16>,
    return
  }
  func.func @transform_0(%arg0: i32) -> (i32, i32, i32) {
    %c0_i32 = arith.constant 0 : i32
    %c0_i32_0 = arith.constant 0 : i32
    %c0_i32_1 = arith.constant 0 : i32
    return %arg0, %c0_i32, %c0_i32_0 : i32, i32, i32
  }
  func.func @transform_1(%arg0: i32) -> (i32, i32) {
    %c0_i32 = arith.constant 0 : i32
    %c0_i32_0 = arith.constant 0 : i32
    %c0_i32_1 = arith.constant 0 : i32
    return %c0_i32, %c0_i32_0 : i32, i32
  }
  func.func @transform_2(%arg0: i32) -> (i32, i32) {
    %c0_i32 = arith.constant 0 : i32
    %c0_i32_0 = arith.constant 0 : i32
    %c0_i32_1 = arith.constant 0 : i32
    return %c0_i32, %c0_i32_0 : i32, i32
  }
  func.func @transform_3(%arg0: i32) -> (i32, i32) {
    %c0_i32 = arith.constant 0 : i32
    %c0_i32_0 = arith.constant 0 : i32
    %c0_i32_1 = arith.constant 0 : i32
    return %c0_i32, %c0_i32_0 : i32, i32
  }
  func.func @transform_4(%arg0: i32) -> (i32, i32) {
    %c0_i32 = arith.constant 0 : i32
    %c0_i32_0 = arith.constant 0 : i32
    %c0_i32_1 = arith.constant 0 : i32
    return %c0_i32, %c0_i32_0 : i32, i32
  }
  func.func @transform_5(%arg0: i32) -> (i32, i32) {
    %c0_i32 = arith.constant 0 : i32
    %c0_i32_0 = arith.constant 0 : i32
    %c0_i32_1 = arith.constant 0 : i32
    return %c0_i32, %c0_i32_0 : i32, i32
  }
  func.func @transform_6(%arg0: i32) -> (i32, i32, i32) {
    %c0_i32 = arith.constant 0 : i32
    %c0_i32_0 = arith.constant 0 : i32
    %c0_i32_1 = arith.constant 0 : i32
    return %arg0, %c0_i32, %c0_i32_0 : i32, i32, i32
  }
}

module attributes {stable_mosaic.version = 11 : i64} {
  func.func @_conv3x3_gn_relu_kernel(%arg0: i32, %arg1: memref<1x288x16xbf16, #tpu.memory_space<vmem>>, %arg2: memref<64x288xbf16, #tpu.memory_space<vmem>>, %arg3: memref<64x1xf32, #tpu.memory_space<vmem>>, %arg4: memref<64x1xf32, #tpu.memory_space<vmem>>, %arg5: memref<64x1xf32, #tpu.memory_space<vmem>>, %arg6: memref<64x64xf32, #tpu.memory_space<vmem>>, %arg7: memref<1x64x16xbf16, #tpu.memory_space<vmem>>) attributes {dimension_semantics = [#tpu.dimension_semantics<parallel>], iteration_bounds = array<i64: 2>, scalar_prefetch = 0 : i64, scratch_operands = 0 : i64, tpu.core_type = #tpu.core_type<tc>, window_params = [{transform_indices = @transform_0, window_bounds = array<i64: 1, 288, 16>}, {pipeline_mode = #tpu.pipeline_mode<synchronous>, transform_indices = @transform_1, window_bounds = array<i64: 64, 288>}, {pipeline_mode = #tpu.pipeline_mode<synchronous>, transform_indices = @transform_2, window_bounds = array<i64: 64, 1>}, {pipeline_mode = #tpu.pipeline_mode<synchronous>, transform_indices = @transform_3, window_bounds = array<i64: 64, 1>}, {pipeline_mode = #tpu.pipeline_mode<synchronous>, transform_indices = @transform_4, window_bounds = array<i64: 64, 1>}, {pipeline_mode = #tpu.pipeline_mode<synchronous>, transform_indices = @transform_5, window_bounds = array<i64: 64, 64>}, {transform_indices = @transform_6, window_bounds = array<i64: 1, 64, 16>}]} {
    %c0 = arith.constant 0 : index
    %c0_0 = arith.constant 0 : index
    %0 = vector.load %arg2[%c0, %c0_0] : memref<64x288xbf16, #tpu.memory_space<vmem>>, vector<64x288xbf16>
    %c0_1 = arith.constant 0 : index
    %c0_2 = arith.constant 0 : index
    %c0_3 = arith.constant 0 : index
    %1 = vector.load %arg1[%c0_1, %c0_2, %c0_3] : memref<1x288x16xbf16, #tpu.memory_space<vmem>>, vector<1x288x16xbf16>
    %2 = vector.shape_cast %1 : vector<1x288x16xbf16> to vector<288x16xbf16>
    %cst = arith.constant dense<0.000000e+00> : vector<64x16xf32>
    %3 = tpu.matmul %0, %2, %cst {dimension_numbers = #tpu.dot_dimension_numbers<[1], [0], [0], [1], [0, 0, 1, 1], [], []>} : vector<64x288xbf16>, vector<288x16xbf16>, vector<64x16xf32> -> vector<64x16xf32>
    %c0_4 = arith.constant 0 : index
    %c0_5 = arith.constant 0 : index
    %4 = vector.load %arg3[%c0_4, %c0_5] : memref<64x1xf32, #tpu.memory_space<vmem>>, vector<64x1xf32>
    %5 = vector.broadcast %4 : vector<64x1xf32> to vector<64x16xf32>
    %6 = arith.addf %3, %5 : vector<64x16xf32>
    %c0_6 = arith.constant 0 : index
    %c0_7 = arith.constant 0 : index
    %7 = vector.load %arg6[%c0_6, %c0_7] : memref<64x64xf32, #tpu.memory_space<vmem>>, vector<64x64xf32>
    %c0_8 = arith.constant 0 : index
    %c0_9 = arith.constant 0 : index
    %8 = vector.load %arg4[%c0_8, %c0_9] : memref<64x1xf32, #tpu.memory_space<vmem>>, vector<64x1xf32>
    %c0_10 = arith.constant 0 : index
    %c0_11 = arith.constant 0 : index
    %9 = vector.load %arg5[%c0_10, %c0_11] : memref<64x1xf32, #tpu.memory_space<vmem>>, vector<64x1xf32>
    %cst_12 = arith.constant dense<0.000000e+00> : vector<64xf32>
    %10 = vector.multi_reduction <add>, %6, %cst_12 [1] : vector<64x16xf32> to vector<64xf32>
    %11 = vector.shape_cast %10 : vector<64xf32> to vector<64x1xf32>
    %12 = arith.mulf %6, %6 : vector<64x16xf32>
    %cst_13 = arith.constant dense<0.000000e+00> : vector<64xf32>
    %13 = vector.multi_reduction <add>, %12, %cst_13 [1] : vector<64x16xf32> to vector<64xf32>
    %14 = vector.shape_cast %13 : vector<64xf32> to vector<64x1xf32>
    %cst_14 = arith.constant dense<0.000000e+00> : vector<64x1xf32>
    %15 = tpu.matmul %7, %11, %cst_14 {dimension_numbers = #tpu.dot_dimension_numbers<[1], [0], [0], [1], [0, 0, 1, 1], [], []>} : vector<64x64xf32>, vector<64x1xf32>, vector<64x1xf32> -> vector<64x1xf32>
    %cst_15 = arith.constant dense<0.000000e+00> : vector<64x1xf32>
    %16 = tpu.matmul %7, %14, %cst_15 {dimension_numbers = #tpu.dot_dimension_numbers<[1], [0], [0], [1], [0, 0, 1, 1], [], []>} : vector<64x64xf32>, vector<64x1xf32>, vector<64x1xf32> -> vector<64x1xf32>
    %17 = arith.mulf %15, %15 : vector<64x1xf32>
    %18 = arith.subf %16, %17 : vector<64x1xf32>
    %cst_16 = arith.constant 0.000000e+00 : f32
    %19 = vector.broadcast %cst_16 : f32 to vector<64x1xf32>
    %20 = arith.maximumf %18, %19 : vector<64x1xf32>
    %cst_17 = arith.constant 9.99999974E-6 : f32
    %21 = vector.broadcast %cst_17 : f32 to vector<64x1xf32>
    %22 = arith.addf %20, %21 : vector<64x1xf32>
    %23 = math.rsqrt %22 : vector<64x1xf32>
    %24 = vector.broadcast %15 : vector<64x1xf32> to vector<64x16xf32>
    %25 = arith.subf %6, %24 : vector<64x16xf32>
    %26 = arith.mulf %23, %8 : vector<64x1xf32>
    %27 = vector.broadcast %26 : vector<64x1xf32> to vector<64x16xf32>
    %28 = arith.mulf %25, %27 : vector<64x16xf32>
    %29 = vector.broadcast %9 : vector<64x1xf32> to vector<64x16xf32>
    %30 = arith.addf %28, %29 : vector<64x16xf32>
    %cst_18 = arith.constant 0.000000e+00 : f32
    %31 = vector.broadcast %cst_18 : f32 to vector<64x16xf32>
    %32 = arith.maximumf %30, %31 : vector<64x16xf32>
    %33 = arith.truncf %32 : vector<64x16xf32> to vector<64x16xbf16>
    %c0_19 = arith.constant 0 : index
    %c0_20 = arith.constant 0 : index
    %c0_21 = arith.constant 0 : index
    %34 = vector.load %arg7[%c0_19, %c0_20, %c0_21] : memref<1x64x16xbf16, #tpu.memory_space<vmem>>, vector<1x64x16xbf16>
    %35 = vector.shape_cast %34 : vector<1x64x16xbf16> to vector<64x16xbf16>
    %36 = vector.shape_cast %33 : vector<64x16xbf16> to vector<1x64x16xbf16>
    tpu.vector_store %arg7[%c0_19, %c0_20, %c0_21], %36 {strides = array<i32>} : memref<1x64x16xbf16, #tpu.memory_space<vmem>>, vector<1x64x16xbf16>,
    return
  }
  func.func @transform_0(%arg0: i32) -> (i32, i32, i32) {
    %c0_i32 = arith.constant 0 : i32
    %c0_i32_0 = arith.constant 0 : i32
    %c0_i32_1 = arith.constant 0 : i32
    return %arg0, %c0_i32, %c0_i32_0 : i32, i32, i32
  }
  func.func @transform_1(%arg0: i32) -> (i32, i32) {
    %c0_i32 = arith.constant 0 : i32
    %c0_i32_0 = arith.constant 0 : i32
    %c0_i32_1 = arith.constant 0 : i32
    return %c0_i32, %c0_i32_0 : i32, i32
  }
  func.func @transform_2(%arg0: i32) -> (i32, i32) {
    %c0_i32 = arith.constant 0 : i32
    %c0_i32_0 = arith.constant 0 : i32
    %c0_i32_1 = arith.constant 0 : i32
    return %c0_i32, %c0_i32_0 : i32, i32
  }
  func.func @transform_3(%arg0: i32) -> (i32, i32) {
    %c0_i32 = arith.constant 0 : i32
    %c0_i32_0 = arith.constant 0 : i32
    %c0_i32_1 = arith.constant 0 : i32
    return %c0_i32, %c0_i32_0 : i32, i32
  }
  func.func @transform_4(%arg0: i32) -> (i32, i32) {
    %c0_i32 = arith.constant 0 : i32
    %c0_i32_0 = arith.constant 0 : i32
    %c0_i32_1 = arith.constant 0 : i32
    return %c0_i32, %c0_i32_0 : i32, i32
  }
  func.func @transform_5(%arg0: i32) -> (i32, i32) {
    %c0_i32 = arith.constant 0 : i32
    %c0_i32_0 = arith.constant 0 : i32
    %c0_i32_1 = arith.constant 0 : i32
    return %c0_i32, %c0_i32_0 : i32, i32
  }
  func.func @transform_6(%arg0: i32) -> (i32, i32, i32) {
    %c0_i32 = arith.constant 0 : i32
    %c0_i32_0 = arith.constant 0 : i32
    %c0_i32_1 = arith.constant 0 : i32
    return %arg0, %c0_i32, %c0_i32_0 : i32, i32, i32
  }
}

module attributes {stable_mosaic.version = 11 : i64} {
  func.func @_conv3x3_gn_relu_kernel(%arg0: i32, %arg1: memref<1x576x16xbf16, #tpu.memory_space<vmem>>, %arg2: memref<64x576xbf16, #tpu.memory_space<vmem>>, %arg3: memref<64x1xf32, #tpu.memory_space<vmem>>, %arg4: memref<64x1xf32, #tpu.memory_space<vmem>>, %arg5: memref<64x1xf32, #tpu.memory_space<vmem>>, %arg6: memref<64x64xf32, #tpu.memory_space<vmem>>, %arg7: memref<1x64x16xbf16, #tpu.memory_space<vmem>>) attributes {dimension_semantics = [#tpu.dimension_semantics<parallel>], iteration_bounds = array<i64: 2>, scalar_prefetch = 0 : i64, scratch_operands = 0 : i64, tpu.core_type = #tpu.core_type<tc>, window_params = [{transform_indices = @transform_0, window_bounds = array<i64: 1, 576, 16>}, {pipeline_mode = #tpu.pipeline_mode<synchronous>, transform_indices = @transform_1, window_bounds = array<i64: 64, 576>}, {pipeline_mode = #tpu.pipeline_mode<synchronous>, transform_indices = @transform_2, window_bounds = array<i64: 64, 1>}, {pipeline_mode = #tpu.pipeline_mode<synchronous>, transform_indices = @transform_3, window_bounds = array<i64: 64, 1>}, {pipeline_mode = #tpu.pipeline_mode<synchronous>, transform_indices = @transform_4, window_bounds = array<i64: 64, 1>}, {pipeline_mode = #tpu.pipeline_mode<synchronous>, transform_indices = @transform_5, window_bounds = array<i64: 64, 64>}, {transform_indices = @transform_6, window_bounds = array<i64: 1, 64, 16>}]} {
    %c0 = arith.constant 0 : index
    %c0_0 = arith.constant 0 : index
    %0 = vector.load %arg2[%c0, %c0_0] : memref<64x576xbf16, #tpu.memory_space<vmem>>, vector<64x576xbf16>
    %c0_1 = arith.constant 0 : index
    %c0_2 = arith.constant 0 : index
    %c0_3 = arith.constant 0 : index
    %1 = vector.load %arg1[%c0_1, %c0_2, %c0_3] : memref<1x576x16xbf16, #tpu.memory_space<vmem>>, vector<1x576x16xbf16>
    %2 = vector.shape_cast %1 : vector<1x576x16xbf16> to vector<576x16xbf16>
    %cst = arith.constant dense<0.000000e+00> : vector<64x16xf32>
    %3 = tpu.matmul %0, %2, %cst {dimension_numbers = #tpu.dot_dimension_numbers<[1], [0], [0], [1], [0, 0, 1, 1], [], []>} : vector<64x576xbf16>, vector<576x16xbf16>, vector<64x16xf32> -> vector<64x16xf32>
    %c0_4 = arith.constant 0 : index
    %c0_5 = arith.constant 0 : index
    %4 = vector.load %arg3[%c0_4, %c0_5] : memref<64x1xf32, #tpu.memory_space<vmem>>, vector<64x1xf32>
    %5 = vector.broadcast %4 : vector<64x1xf32> to vector<64x16xf32>
    %6 = arith.addf %3, %5 : vector<64x16xf32>
    %c0_6 = arith.constant 0 : index
    %c0_7 = arith.constant 0 : index
    %7 = vector.load %arg6[%c0_6, %c0_7] : memref<64x64xf32, #tpu.memory_space<vmem>>, vector<64x64xf32>
    %c0_8 = arith.constant 0 : index
    %c0_9 = arith.constant 0 : index
    %8 = vector.load %arg4[%c0_8, %c0_9] : memref<64x1xf32, #tpu.memory_space<vmem>>, vector<64x1xf32>
    %c0_10 = arith.constant 0 : index
    %c0_11 = arith.constant 0 : index
    %9 = vector.load %arg5[%c0_10, %c0_11] : memref<64x1xf32, #tpu.memory_space<vmem>>, vector<64x1xf32>
    %cst_12 = arith.constant dense<0.000000e+00> : vector<64xf32>
    %10 = vector.multi_reduction <add>, %6, %cst_12 [1] : vector<64x16xf32> to vector<64xf32>
    %11 = vector.shape_cast %10 : vector<64xf32> to vector<64x1xf32>
    %12 = arith.mulf %6, %6 : vector<64x16xf32>
    %cst_13 = arith.constant dense<0.000000e+00> : vector<64xf32>
    %13 = vector.multi_reduction <add>, %12, %cst_13 [1] : vector<64x16xf32> to vector<64xf32>
    %14 = vector.shape_cast %13 : vector<64xf32> to vector<64x1xf32>
    %cst_14 = arith.constant dense<0.000000e+00> : vector<64x1xf32>
    %15 = tpu.matmul %7, %11, %cst_14 {dimension_numbers = #tpu.dot_dimension_numbers<[1], [0], [0], [1], [0, 0, 1, 1], [], []>} : vector<64x64xf32>, vector<64x1xf32>, vector<64x1xf32> -> vector<64x1xf32>
    %cst_15 = arith.constant dense<0.000000e+00> : vector<64x1xf32>
    %16 = tpu.matmul %7, %14, %cst_15 {dimension_numbers = #tpu.dot_dimension_numbers<[1], [0], [0], [1], [0, 0, 1, 1], [], []>} : vector<64x64xf32>, vector<64x1xf32>, vector<64x1xf32> -> vector<64x1xf32>
    %17 = arith.mulf %15, %15 : vector<64x1xf32>
    %18 = arith.subf %16, %17 : vector<64x1xf32>
    %cst_16 = arith.constant 0.000000e+00 : f32
    %19 = vector.broadcast %cst_16 : f32 to vector<64x1xf32>
    %20 = arith.maximumf %18, %19 : vector<64x1xf32>
    %cst_17 = arith.constant 9.99999974E-6 : f32
    %21 = vector.broadcast %cst_17 : f32 to vector<64x1xf32>
    %22 = arith.addf %20, %21 : vector<64x1xf32>
    %23 = math.rsqrt %22 : vector<64x1xf32>
    %24 = vector.broadcast %15 : vector<64x1xf32> to vector<64x16xf32>
    %25 = arith.subf %6, %24 : vector<64x16xf32>
    %26 = arith.mulf %23, %8 : vector<64x1xf32>
    %27 = vector.broadcast %26 : vector<64x1xf32> to vector<64x16xf32>
    %28 = arith.mulf %25, %27 : vector<64x16xf32>
    %29 = vector.broadcast %9 : vector<64x1xf32> to vector<64x16xf32>
    %30 = arith.addf %28, %29 : vector<64x16xf32>
    %cst_18 = arith.constant 0.000000e+00 : f32
    %31 = vector.broadcast %cst_18 : f32 to vector<64x16xf32>
    %32 = arith.maximumf %30, %31 : vector<64x16xf32>
    %33 = arith.truncf %32 : vector<64x16xf32> to vector<64x16xbf16>
    %c0_19 = arith.constant 0 : index
    %c0_20 = arith.constant 0 : index
    %c0_21 = arith.constant 0 : index
    %34 = vector.load %arg7[%c0_19, %c0_20, %c0_21] : memref<1x64x16xbf16, #tpu.memory_space<vmem>>, vector<1x64x16xbf16>
    %35 = vector.shape_cast %34 : vector<1x64x16xbf16> to vector<64x16xbf16>
    %36 = vector.shape_cast %33 : vector<64x16xbf16> to vector<1x64x16xbf16>
    tpu.vector_store %arg7[%c0_19, %c0_20, %c0_21], %36 {strides = array<i32>} : memref<1x64x16xbf16, #tpu.memory_space<vmem>>, vector<1x64x16xbf16>,
    return
  }
  func.func @transform_0(%arg0: i32) -> (i32, i32, i32) {
    %c0_i32 = arith.constant 0 : i32
    %c0_i32_0 = arith.constant 0 : i32
    %c0_i32_1 = arith.constant 0 : i32
    return %arg0, %c0_i32, %c0_i32_0 : i32, i32, i32
  }
  func.func @transform_1(%arg0: i32) -> (i32, i32) {
    %c0_i32 = arith.constant 0 : i32
    %c0_i32_0 = arith.constant 0 : i32
    %c0_i32_1 = arith.constant 0 : i32
    return %c0_i32, %c0_i32_0 : i32, i32
  }
  func.func @transform_2(%arg0: i32) -> (i32, i32) {
    %c0_i32 = arith.constant 0 : i32
    %c0_i32_0 = arith.constant 0 : i32
    %c0_i32_1 = arith.constant 0 : i32
    return %c0_i32, %c0_i32_0 : i32, i32
  }
  func.func @transform_3(%arg0: i32) -> (i32, i32) {
    %c0_i32 = arith.constant 0 : i32
    %c0_i32_0 = arith.constant 0 : i32
    %c0_i32_1 = arith.constant 0 : i32
    return %c0_i32, %c0_i32_0 : i32, i32
  }
  func.func @transform_4(%arg0: i32) -> (i32, i32) {
    %c0_i32 = arith.constant 0 : i32
    %c0_i32_0 = arith.constant 0 : i32
    %c0_i32_1 = arith.constant 0 : i32
    return %c0_i32, %c0_i32_0 : i32, i32
  }
  func.func @transform_5(%arg0: i32) -> (i32, i32) {
    %c0_i32 = arith.constant 0 : i32
    %c0_i32_0 = arith.constant 0 : i32
    %c0_i32_1 = arith.constant 0 : i32
    return %c0_i32, %c0_i32_0 : i32, i32
  }
  func.func @transform_6(%arg0: i32) -> (i32, i32, i32) {
    %c0_i32 = arith.constant 0 : i32
    %c0_i32_0 = arith.constant 0 : i32
    %c0_i32_1 = arith.constant 0 : i32
    return %arg0, %c0_i32, %c0_i32_0 : i32, i32, i32
  }
}

module attributes {stable_mosaic.version = 11 : i64} {
  func.func @_matmul_bias_kernel(%arg0: i32, %arg1: memref<1x64x16xbf16, #tpu.memory_space<vmem>>, %arg2: memref<128x64xbf16, #tpu.memory_space<vmem>>, %arg3: memref<128x1xf32, #tpu.memory_space<vmem>>, %arg4: memref<1x128x16xbf16, #tpu.memory_space<vmem>>) attributes {dimension_semantics = [#tpu.dimension_semantics<parallel>], iteration_bounds = array<i64: 2>, scalar_prefetch = 0 : i64, scratch_operands = 0 : i64, tpu.core_type = #tpu.core_type<tc>, window_params = [{transform_indices = @transform_0, window_bounds = array<i64: 1, 64, 16>}, {pipeline_mode = #tpu.pipeline_mode<synchronous>, transform_indices = @transform_1, window_bounds = array<i64: 128, 64>}, {pipeline_mode = #tpu.pipeline_mode<synchronous>, transform_indices = @transform_2, window_bounds = array<i64: 128, 1>}, {transform_indices = @transform_3, window_bounds = array<i64: 1, 128, 16>}]} {
    %c0 = arith.constant 0 : index
    %c0_0 = arith.constant 0 : index
    %0 = vector.load %arg2[%c0, %c0_0] : memref<128x64xbf16, #tpu.memory_space<vmem>>, vector<128x64xbf16>
    %c0_1 = arith.constant 0 : index
    %c0_2 = arith.constant 0 : index
    %c0_3 = arith.constant 0 : index
    %1 = vector.load %arg1[%c0_1, %c0_2, %c0_3] : memref<1x64x16xbf16, #tpu.memory_space<vmem>>, vector<1x64x16xbf16>
    %2 = vector.shape_cast %1 : vector<1x64x16xbf16> to vector<64x16xbf16>
    %cst = arith.constant dense<0.000000e+00> : vector<128x16xf32>
    %3 = tpu.matmul %0, %2, %cst {dimension_numbers = #tpu.dot_dimension_numbers<[1], [0], [0], [1], [0, 0, 1, 1], [], []>} : vector<128x64xbf16>, vector<64x16xbf16>, vector<128x16xf32> -> vector<128x16xf32>
    %c0_4 = arith.constant 0 : index
    %c0_5 = arith.constant 0 : index
    %4 = vector.load %arg3[%c0_4, %c0_5] : memref<128x1xf32, #tpu.memory_space<vmem>>, vector<128x1xf32>
    %5 = vector.broadcast %4 : vector<128x1xf32> to vector<128x16xf32>
    %6 = arith.addf %3, %5 : vector<128x16xf32>
    %7 = arith.truncf %6 : vector<128x16xf32> to vector<128x16xbf16>
    %c0_6 = arith.constant 0 : index
    %c0_7 = arith.constant 0 : index
    %c0_8 = arith.constant 0 : index
    %8 = vector.load %arg4[%c0_6, %c0_7, %c0_8] : memref<1x128x16xbf16, #tpu.memory_space<vmem>>, vector<1x128x16xbf16>
    %9 = vector.shape_cast %8 : vector<1x128x16xbf16> to vector<128x16xbf16>
    %10 = vector.shape_cast %7 : vector<128x16xbf16> to vector<1x128x16xbf16>
    tpu.vector_store %arg4[%c0_6, %c0_7, %c0_8], %10 {strides = array<i32>} : memref<1x128x16xbf16, #tpu.memory_space<vmem>>, vector<1x128x16xbf16>,
    return
  }
  func.func @transform_0(%arg0: i32) -> (i32, i32, i32) {
    %c0_i32 = arith.constant 0 : i32
    %c0_i32_0 = arith.constant 0 : i32
    %c0_i32_1 = arith.constant 0 : i32
    return %arg0, %c0_i32, %c0_i32_0 : i32, i32, i32
  }
  func.func @transform_1(%arg0: i32) -> (i32, i32) {
    %c0_i32 = arith.constant 0 : i32
    %c0_i32_0 = arith.constant 0 : i32
    %c0_i32_1 = arith.constant 0 : i32
    return %c0_i32, %c0_i32_0 : i32, i32
  }
  func.func @transform_2(%arg0: i32) -> (i32, i32) {
    %c0_i32 = arith.constant 0 : i32
    %c0_i32_0 = arith.constant 0 : i32
    %c0_i32_1 = arith.constant 0 : i32
    return %c0_i32, %c0_i32_0 : i32, i32
  }
  func.func @transform_3(%arg0: i32) -> (i32, i32, i32) {
    %c0_i32 = arith.constant 0 : i32
    %c0_i32_0 = arith.constant 0 : i32
    %c0_i32_1 = arith.constant 0 : i32
    return %arg0, %c0_i32, %c0_i32_0 : i32, i32, i32
  }
}

module attributes {stable_mosaic.version = 11 : i64} {
  func.func @_conv3x3_gn_relu_kernel(%arg0: i32, %arg1: memref<1x576x64xbf16, #tpu.memory_space<vmem>>, %arg2: memref<32x576xbf16, #tpu.memory_space<vmem>>, %arg3: memref<32x1xf32, #tpu.memory_space<vmem>>, %arg4: memref<32x1xf32, #tpu.memory_space<vmem>>, %arg5: memref<32x1xf32, #tpu.memory_space<vmem>>, %arg6: memref<32x32xf32, #tpu.memory_space<vmem>>, %arg7: memref<1x32x64xbf16, #tpu.memory_space<vmem>>) attributes {dimension_semantics = [#tpu.dimension_semantics<parallel>], iteration_bounds = array<i64: 2>, scalar_prefetch = 0 : i64, scratch_operands = 0 : i64, tpu.core_type = #tpu.core_type<tc>, window_params = [{transform_indices = @transform_0, window_bounds = array<i64: 1, 576, 64>}, {pipeline_mode = #tpu.pipeline_mode<synchronous>, transform_indices = @transform_1, window_bounds = array<i64: 32, 576>}, {pipeline_mode = #tpu.pipeline_mode<synchronous>, transform_indices = @transform_2, window_bounds = array<i64: 32, 1>}, {pipeline_mode = #tpu.pipeline_mode<synchronous>, transform_indices = @transform_3, window_bounds = array<i64: 32, 1>}, {pipeline_mode = #tpu.pipeline_mode<synchronous>, transform_indices = @transform_4, window_bounds = array<i64: 32, 1>}, {pipeline_mode = #tpu.pipeline_mode<synchronous>, transform_indices = @transform_5, window_bounds = array<i64: 32, 32>}, {transform_indices = @transform_6, window_bounds = array<i64: 1, 32, 64>}]} {
    %c0 = arith.constant 0 : index
    %c0_0 = arith.constant 0 : index
    %0 = vector.load %arg2[%c0, %c0_0] : memref<32x576xbf16, #tpu.memory_space<vmem>>, vector<32x576xbf16>
    %c0_1 = arith.constant 0 : index
    %c0_2 = arith.constant 0 : index
    %c0_3 = arith.constant 0 : index
    %1 = vector.load %arg1[%c0_1, %c0_2, %c0_3] : memref<1x576x64xbf16, #tpu.memory_space<vmem>>, vector<1x576x64xbf16>
    %2 = vector.shape_cast %1 : vector<1x576x64xbf16> to vector<576x64xbf16>
    %cst = arith.constant dense<0.000000e+00> : vector<32x64xf32>
    %3 = tpu.matmul %0, %2, %cst {dimension_numbers = #tpu.dot_dimension_numbers<[1], [0], [0], [1], [0, 0, 1, 1], [], []>} : vector<32x576xbf16>, vector<576x64xbf16>, vector<32x64xf32> -> vector<32x64xf32>
    %c0_4 = arith.constant 0 : index
    %c0_5 = arith.constant 0 : index
    %4 = vector.load %arg3[%c0_4, %c0_5] : memref<32x1xf32, #tpu.memory_space<vmem>>, vector<32x1xf32>
    %5 = vector.broadcast %4 : vector<32x1xf32> to vector<32x64xf32>
    %6 = arith.addf %3, %5 : vector<32x64xf32>
    %c0_6 = arith.constant 0 : index
    %c0_7 = arith.constant 0 : index
    %7 = vector.load %arg6[%c0_6, %c0_7] : memref<32x32xf32, #tpu.memory_space<vmem>>, vector<32x32xf32>
    %c0_8 = arith.constant 0 : index
    %c0_9 = arith.constant 0 : index
    %8 = vector.load %arg4[%c0_8, %c0_9] : memref<32x1xf32, #tpu.memory_space<vmem>>, vector<32x1xf32>
    %c0_10 = arith.constant 0 : index
    %c0_11 = arith.constant 0 : index
    %9 = vector.load %arg5[%c0_10, %c0_11] : memref<32x1xf32, #tpu.memory_space<vmem>>, vector<32x1xf32>
    %cst_12 = arith.constant dense<0.000000e+00> : vector<32xf32>
    %10 = vector.multi_reduction <add>, %6, %cst_12 [1] : vector<32x64xf32> to vector<32xf32>
    %11 = vector.shape_cast %10 : vector<32xf32> to vector<32x1xf32>
    %12 = arith.mulf %6, %6 : vector<32x64xf32>
    %cst_13 = arith.constant dense<0.000000e+00> : vector<32xf32>
    %13 = vector.multi_reduction <add>, %12, %cst_13 [1] : vector<32x64xf32> to vector<32xf32>
    %14 = vector.shape_cast %13 : vector<32xf32> to vector<32x1xf32>
    %cst_14 = arith.constant dense<0.000000e+00> : vector<32x1xf32>
    %15 = tpu.matmul %7, %11, %cst_14 {dimension_numbers = #tpu.dot_dimension_numbers<[1], [0], [0], [1], [0, 0, 1, 1], [], []>} : vector<32x32xf32>, vector<32x1xf32>, vector<32x1xf32> -> vector<32x1xf32>
    %cst_15 = arith.constant dense<0.000000e+00> : vector<32x1xf32>
    %16 = tpu.matmul %7, %14, %cst_15 {dimension_numbers = #tpu.dot_dimension_numbers<[1], [0], [0], [1], [0, 0, 1, 1], [], []>} : vector<32x32xf32>, vector<32x1xf32>, vector<32x1xf32> -> vector<32x1xf32>
    %17 = arith.mulf %15, %15 : vector<32x1xf32>
    %18 = arith.subf %16, %17 : vector<32x1xf32>
    %cst_16 = arith.constant 0.000000e+00 : f32
    %19 = vector.broadcast %cst_16 : f32 to vector<32x1xf32>
    %20 = arith.maximumf %18, %19 : vector<32x1xf32>
    %cst_17 = arith.constant 9.99999974E-6 : f32
    %21 = vector.broadcast %cst_17 : f32 to vector<32x1xf32>
    %22 = arith.addf %20, %21 : vector<32x1xf32>
    %23 = math.rsqrt %22 : vector<32x1xf32>
    %24 = vector.broadcast %15 : vector<32x1xf32> to vector<32x64xf32>
    %25 = arith.subf %6, %24 : vector<32x64xf32>
    %26 = arith.mulf %23, %8 : vector<32x1xf32>
    %27 = vector.broadcast %26 : vector<32x1xf32> to vector<32x64xf32>
    %28 = arith.mulf %25, %27 : vector<32x64xf32>
    %29 = vector.broadcast %9 : vector<32x1xf32> to vector<32x64xf32>
    %30 = arith.addf %28, %29 : vector<32x64xf32>
    %cst_18 = arith.constant 0.000000e+00 : f32
    %31 = vector.broadcast %cst_18 : f32 to vector<32x64xf32>
    %32 = arith.maximumf %30, %31 : vector<32x64xf32>
    %33 = arith.truncf %32 : vector<32x64xf32> to vector<32x64xbf16>
    %c0_19 = arith.constant 0 : index
    %c0_20 = arith.constant 0 : index
    %c0_21 = arith.constant 0 : index
    %34 = vector.load %arg7[%c0_19, %c0_20, %c0_21] : memref<1x32x64xbf16, #tpu.memory_space<vmem>>, vector<1x32x64xbf16>
    %35 = vector.shape_cast %34 : vector<1x32x64xbf16> to vector<32x64xbf16>
    %36 = vector.shape_cast %33 : vector<32x64xbf16> to vector<1x32x64xbf16>
    tpu.vector_store %arg7[%c0_19, %c0_20, %c0_21], %36 {strides = array<i32>} : memref<1x32x64xbf16, #tpu.memory_space<vmem>>, vector<1x32x64xbf16>,
    return
  }
  func.func @transform_0(%arg0: i32) -> (i32, i32, i32) {
    %c0_i32 = arith.constant 0 : i32
    %c0_i32_0 = arith.constant 0 : i32
    %c0_i32_1 = arith.constant 0 : i32
    return %arg0, %c0_i32, %c0_i32_0 : i32, i32, i32
  }
  func.func @transform_1(%arg0: i32) -> (i32, i32) {
    %c0_i32 = arith.constant 0 : i32
    %c0_i32_0 = arith.constant 0 : i32
    %c0_i32_1 = arith.constant 0 : i32
    return %c0_i32, %c0_i32_0 : i32, i32
  }
  func.func @transform_2(%arg0: i32) -> (i32, i32) {
    %c0_i32 = arith.constant 0 : i32
    %c0_i32_0 = arith.constant 0 : i32
    %c0_i32_1 = arith.constant 0 : i32
    return %c0_i32, %c0_i32_0 : i32, i32
  }
  func.func @transform_3(%arg0: i32) -> (i32, i32) {
    %c0_i32 = arith.constant 0 : i32
    %c0_i32_0 = arith.constant 0 : i32
    %c0_i32_1 = arith.constant 0 : i32
    return %c0_i32, %c0_i32_0 : i32, i32
  }
  func.func @transform_4(%arg0: i32) -> (i32, i32) {
    %c0_i32 = arith.constant 0 : i32
    %c0_i32_0 = arith.constant 0 : i32
    %c0_i32_1 = arith.constant 0 : i32
    return %c0_i32, %c0_i32_0 : i32, i32
  }
  func.func @transform_5(%arg0: i32) -> (i32, i32) {
    %c0_i32 = arith.constant 0 : i32
    %c0_i32_0 = arith.constant 0 : i32
    %c0_i32_1 = arith.constant 0 : i32
    return %c0_i32, %c0_i32_0 : i32, i32
  }
  func.func @transform_6(%arg0: i32) -> (i32, i32, i32) {
    %c0_i32 = arith.constant 0 : i32
    %c0_i32_0 = arith.constant 0 : i32
    %c0_i32_1 = arith.constant 0 : i32
    return %arg0, %c0_i32, %c0_i32_0 : i32, i32, i32
  }
}

module attributes {stable_mosaic.version = 11 : i64} {
  func.func @_matmul_bias_kernel(%arg0: i32, %arg1: memref<1x32x64xbf16, #tpu.memory_space<vmem>>, %arg2: memref<64x32xbf16, #tpu.memory_space<vmem>>, %arg3: memref<64x1xf32, #tpu.memory_space<vmem>>, %arg4: memref<1x64x64xbf16, #tpu.memory_space<vmem>>) attributes {dimension_semantics = [#tpu.dimension_semantics<parallel>], iteration_bounds = array<i64: 2>, scalar_prefetch = 0 : i64, scratch_operands = 0 : i64, tpu.core_type = #tpu.core_type<tc>, window_params = [{transform_indices = @transform_0, window_bounds = array<i64: 1, 32, 64>}, {pipeline_mode = #tpu.pipeline_mode<synchronous>, transform_indices = @transform_1, window_bounds = array<i64: 64, 32>}, {pipeline_mode = #tpu.pipeline_mode<synchronous>, transform_indices = @transform_2, window_bounds = array<i64: 64, 1>}, {transform_indices = @transform_3, window_bounds = array<i64: 1, 64, 64>}]} {
    %c0 = arith.constant 0 : index
    %c0_0 = arith.constant 0 : index
    %0 = vector.load %arg2[%c0, %c0_0] : memref<64x32xbf16, #tpu.memory_space<vmem>>, vector<64x32xbf16>
    %c0_1 = arith.constant 0 : index
    %c0_2 = arith.constant 0 : index
    %c0_3 = arith.constant 0 : index
    %1 = vector.load %arg1[%c0_1, %c0_2, %c0_3] : memref<1x32x64xbf16, #tpu.memory_space<vmem>>, vector<1x32x64xbf16>
    %2 = vector.shape_cast %1 : vector<1x32x64xbf16> to vector<32x64xbf16>
    %cst = arith.constant dense<0.000000e+00> : vector<64x64xf32>
    %3 = tpu.matmul %0, %2, %cst {dimension_numbers = #tpu.dot_dimension_numbers<[1], [0], [0], [1], [0, 0, 1, 1], [], []>} : vector<64x32xbf16>, vector<32x64xbf16>, vector<64x64xf32> -> vector<64x64xf32>
    %c0_4 = arith.constant 0 : index
    %c0_5 = arith.constant 0 : index
    %4 = vector.load %arg3[%c0_4, %c0_5] : memref<64x1xf32, #tpu.memory_space<vmem>>, vector<64x1xf32>
    %5 = vector.broadcast %4 : vector<64x1xf32> to vector<64x64xf32>
    %6 = arith.addf %3, %5 : vector<64x64xf32>
    %7 = arith.truncf %6 : vector<64x64xf32> to vector<64x64xbf16>
    %c0_6 = arith.constant 0 : index
    %c0_7 = arith.constant 0 : index
    %c0_8 = arith.constant 0 : index
    %8 = vector.load %arg4[%c0_6, %c0_7, %c0_8] : memref<1x64x64xbf16, #tpu.memory_space<vmem>>, vector<1x64x64xbf16>
    %9 = vector.shape_cast %8 : vector<1x64x64xbf16> to vector<64x64xbf16>
    %10 = vector.shape_cast %7 : vector<64x64xbf16> to vector<1x64x64xbf16>
    tpu.vector_store %arg4[%c0_6, %c0_7, %c0_8], %10 {strides = array<i32>} : memref<1x64x64xbf16, #tpu.memory_space<vmem>>, vector<1x64x64xbf16>,
    return
  }
  func.func @transform_0(%arg0: i32) -> (i32, i32, i32) {
    %c0_i32 = arith.constant 0 : i32
    %c0_i32_0 = arith.constant 0 : i32
    %c0_i32_1 = arith.constant 0 : i32
    return %arg0, %c0_i32, %c0_i32_0 : i32, i32, i32
  }
  func.func @transform_1(%arg0: i32) -> (i32, i32) {
    %c0_i32 = arith.constant 0 : i32
    %c0_i32_0 = arith.constant 0 : i32
    %c0_i32_1 = arith.constant 0 : i32
    return %c0_i32, %c0_i32_0 : i32, i32
  }
  func.func @transform_2(%arg0: i32) -> (i32, i32) {
    %c0_i32 = arith.constant 0 : i32
    %c0_i32_0 = arith.constant 0 : i32
    %c0_i32_1 = arith.constant 0 : i32
    return %c0_i32, %c0_i32_0 : i32, i32
  }
  func.func @transform_3(%arg0: i32) -> (i32, i32, i32) {
    %c0_i32 = arith.constant 0 : i32
    %c0_i32_0 = arith.constant 0 : i32
    %c0_i32_1 = arith.constant 0 : i32
    return %arg0, %c0_i32, %c0_i32_0 : i32, i32, i32
  }
}

module attributes {stable_mosaic.version = 11 : i64} {
  func.func @_conv3x3_gn_relu_kernel(%arg0: i32, %arg1: memref<1x288x256xbf16, #tpu.memory_space<vmem>>, %arg2: memref<16x288xbf16, #tpu.memory_space<vmem>>, %arg3: memref<16x1xf32, #tpu.memory_space<vmem>>, %arg4: memref<16x1xf32, #tpu.memory_space<vmem>>, %arg5: memref<16x1xf32, #tpu.memory_space<vmem>>, %arg6: memref<16x16xf32, #tpu.memory_space<vmem>>, %arg7: memref<1x16x256xbf16, #tpu.memory_space<vmem>>) attributes {dimension_semantics = [#tpu.dimension_semantics<parallel>], iteration_bounds = array<i64: 2>, scalar_prefetch = 0 : i64, scratch_operands = 0 : i64, tpu.core_type = #tpu.core_type<tc>, window_params = [{transform_indices = @transform_0, window_bounds = array<i64: 1, 288, 256>}, {pipeline_mode = #tpu.pipeline_mode<synchronous>, transform_indices = @transform_1, window_bounds = array<i64: 16, 288>}, {pipeline_mode = #tpu.pipeline_mode<synchronous>, transform_indices = @transform_2, window_bounds = array<i64: 16, 1>}, {pipeline_mode = #tpu.pipeline_mode<synchronous>, transform_indices = @transform_3, window_bounds = array<i64: 16, 1>}, {pipeline_mode = #tpu.pipeline_mode<synchronous>, transform_indices = @transform_4, window_bounds = array<i64: 16, 1>}, {pipeline_mode = #tpu.pipeline_mode<synchronous>, transform_indices = @transform_5, window_bounds = array<i64: 16, 16>}, {transform_indices = @transform_6, window_bounds = array<i64: 1, 16, 256>}]} {
    %c0 = arith.constant 0 : index
    %c0_0 = arith.constant 0 : index
    %0 = vector.load %arg2[%c0, %c0_0] : memref<16x288xbf16, #tpu.memory_space<vmem>>, vector<16x288xbf16>
    %c0_1 = arith.constant 0 : index
    %c0_2 = arith.constant 0 : index
    %c0_3 = arith.constant 0 : index
    %1 = vector.load %arg1[%c0_1, %c0_2, %c0_3] : memref<1x288x256xbf16, #tpu.memory_space<vmem>>, vector<1x288x256xbf16>
    %2 = vector.shape_cast %1 : vector<1x288x256xbf16> to vector<288x256xbf16>
    %cst = arith.constant dense<0.000000e+00> : vector<16x256xf32>
    %3 = tpu.matmul %0, %2, %cst {dimension_numbers = #tpu.dot_dimension_numbers<[1], [0], [0], [1], [0, 0, 1, 1], [], []>} : vector<16x288xbf16>, vector<288x256xbf16>, vector<16x256xf32> -> vector<16x256xf32>
    %c0_4 = arith.constant 0 : index
    %c0_5 = arith.constant 0 : index
    %4 = vector.load %arg3[%c0_4, %c0_5] : memref<16x1xf32, #tpu.memory_space<vmem>>, vector<16x1xf32>
    %5 = vector.broadcast %4 : vector<16x1xf32> to vector<16x256xf32>
    %6 = arith.addf %3, %5 : vector<16x256xf32>
    %c0_6 = arith.constant 0 : index
    %c0_7 = arith.constant 0 : index
    %7 = vector.load %arg6[%c0_6, %c0_7] : memref<16x16xf32, #tpu.memory_space<vmem>>, vector<16x16xf32>
    %c0_8 = arith.constant 0 : index
    %c0_9 = arith.constant 0 : index
    %8 = vector.load %arg4[%c0_8, %c0_9] : memref<16x1xf32, #tpu.memory_space<vmem>>, vector<16x1xf32>
    %c0_10 = arith.constant 0 : index
    %c0_11 = arith.constant 0 : index
    %9 = vector.load %arg5[%c0_10, %c0_11] : memref<16x1xf32, #tpu.memory_space<vmem>>, vector<16x1xf32>
    %cst_12 = arith.constant dense<0.000000e+00> : vector<16xf32>
    %10 = vector.multi_reduction <add>, %6, %cst_12 [1] : vector<16x256xf32> to vector<16xf32>
    %11 = vector.shape_cast %10 : vector<16xf32> to vector<16x1xf32>
    %12 = arith.mulf %6, %6 : vector<16x256xf32>
    %cst_13 = arith.constant dense<0.000000e+00> : vector<16xf32>
    %13 = vector.multi_reduction <add>, %12, %cst_13 [1] : vector<16x256xf32> to vector<16xf32>
    %14 = vector.shape_cast %13 : vector<16xf32> to vector<16x1xf32>
    %cst_14 = arith.constant dense<0.000000e+00> : vector<16x1xf32>
    %15 = tpu.matmul %7, %11, %cst_14 {dimension_numbers = #tpu.dot_dimension_numbers<[1], [0], [0], [1], [0, 0, 1, 1], [], []>} : vector<16x16xf32>, vector<16x1xf32>, vector<16x1xf32> -> vector<16x1xf32>
    %cst_15 = arith.constant dense<0.000000e+00> : vector<16x1xf32>
    %16 = tpu.matmul %7, %14, %cst_15 {dimension_numbers = #tpu.dot_dimension_numbers<[1], [0], [0], [1], [0, 0, 1, 1], [], []>} : vector<16x16xf32>, vector<16x1xf32>, vector<16x1xf32> -> vector<16x1xf32>
    %17 = arith.mulf %15, %15 : vector<16x1xf32>
    %18 = arith.subf %16, %17 : vector<16x1xf32>
    %cst_16 = arith.constant 0.000000e+00 : f32
    %19 = vector.broadcast %cst_16 : f32 to vector<16x1xf32>
    %20 = arith.maximumf %18, %19 : vector<16x1xf32>
    %cst_17 = arith.constant 9.99999974E-6 : f32
    %21 = vector.broadcast %cst_17 : f32 to vector<16x1xf32>
    %22 = arith.addf %20, %21 : vector<16x1xf32>
    %23 = math.rsqrt %22 : vector<16x1xf32>
    %24 = vector.broadcast %15 : vector<16x1xf32> to vector<16x256xf32>
    %25 = arith.subf %6, %24 : vector<16x256xf32>
    %26 = arith.mulf %23, %8 : vector<16x1xf32>
    %27 = vector.broadcast %26 : vector<16x1xf32> to vector<16x256xf32>
    %28 = arith.mulf %25, %27 : vector<16x256xf32>
    %29 = vector.broadcast %9 : vector<16x1xf32> to vector<16x256xf32>
    %30 = arith.addf %28, %29 : vector<16x256xf32>
    %cst_18 = arith.constant 0.000000e+00 : f32
    %31 = vector.broadcast %cst_18 : f32 to vector<16x256xf32>
    %32 = arith.maximumf %30, %31 : vector<16x256xf32>
    %33 = arith.truncf %32 : vector<16x256xf32> to vector<16x256xbf16>
    %c0_19 = arith.constant 0 : index
    %c0_20 = arith.constant 0 : index
    %c0_21 = arith.constant 0 : index
    %34 = vector.load %arg7[%c0_19, %c0_20, %c0_21] : memref<1x16x256xbf16, #tpu.memory_space<vmem>>, vector<1x16x256xbf16>
    %35 = vector.shape_cast %34 : vector<1x16x256xbf16> to vector<16x256xbf16>
    %36 = vector.shape_cast %33 : vector<16x256xbf16> to vector<1x16x256xbf16>
    tpu.vector_store %arg7[%c0_19, %c0_20, %c0_21], %36 {strides = array<i32>} : memref<1x16x256xbf16, #tpu.memory_space<vmem>>, vector<1x16x256xbf16>,
    return
  }
  func.func @transform_0(%arg0: i32) -> (i32, i32, i32) {
    %c0_i32 = arith.constant 0 : i32
    %c0_i32_0 = arith.constant 0 : i32
    %c0_i32_1 = arith.constant 0 : i32
    return %arg0, %c0_i32, %c0_i32_0 : i32, i32, i32
  }
  func.func @transform_1(%arg0: i32) -> (i32, i32) {
    %c0_i32 = arith.constant 0 : i32
    %c0_i32_0 = arith.constant 0 : i32
    %c0_i32_1 = arith.constant 0 : i32
    return %c0_i32, %c0_i32_0 : i32, i32
  }
  func.func @transform_2(%arg0: i32) -> (i32, i32) {
    %c0_i32 = arith.constant 0 : i32
    %c0_i32_0 = arith.constant 0 : i32
    %c0_i32_1 = arith.constant 0 : i32
    return %c0_i32, %c0_i32_0 : i32, i32
  }
  func.func @transform_3(%arg0: i32) -> (i32, i32) {
    %c0_i32 = arith.constant 0 : i32
    %c0_i32_0 = arith.constant 0 : i32
    %c0_i32_1 = arith.constant 0 : i32
    return %c0_i32, %c0_i32_0 : i32, i32
  }
  func.func @transform_4(%arg0: i32) -> (i32, i32) {
    %c0_i32 = arith.constant 0 : i32
    %c0_i32_0 = arith.constant 0 : i32
    %c0_i32_1 = arith.constant 0 : i32
    return %c0_i32, %c0_i32_0 : i32, i32
  }
  func.func @transform_5(%arg0: i32) -> (i32, i32) {
    %c0_i32 = arith.constant 0 : i32
    %c0_i32_0 = arith.constant 0 : i32
    %c0_i32_1 = arith.constant 0 : i32
    return %c0_i32, %c0_i32_0 : i32, i32
  }
  func.func @transform_6(%arg0: i32) -> (i32, i32, i32) {
    %c0_i32 = arith.constant 0 : i32
    %c0_i32_0 = arith.constant 0 : i32
    %c0_i32_1 = arith.constant 0 : i32
    return %arg0, %c0_i32, %c0_i32_0 : i32, i32, i32
  }
}

module attributes {stable_mosaic.version = 11 : i64} {
  func.func @_conv3x3_gn_relu_out_kernel(%arg0: i32, %arg1: memref<1x144x256xbf16, #tpu.memory_space<vmem>>, %arg2: memref<16x144xbf16, #tpu.memory_space<vmem>>, %arg3: memref<16x1xf32, #tpu.memory_space<vmem>>, %arg4: memref<16x1xf32, #tpu.memory_space<vmem>>, %arg5: memref<16x1xf32, #tpu.memory_space<vmem>>, %arg6: memref<16x16xf32, #tpu.memory_space<vmem>>, %arg7: memref<3x16xbf16, #tpu.memory_space<vmem>>, %arg8: memref<3x1xf32, #tpu.memory_space<vmem>>, %arg9: memref<1x3x256xf32, #tpu.memory_space<vmem>>) attributes {dimension_semantics = [#tpu.dimension_semantics<parallel>], iteration_bounds = array<i64: 2>, scalar_prefetch = 0 : i64, scratch_operands = 0 : i64, tpu.core_type = #tpu.core_type<tc>, window_params = [{transform_indices = @transform_0, window_bounds = array<i64: 1, 144, 256>}, {pipeline_mode = #tpu.pipeline_mode<synchronous>, transform_indices = @transform_1, window_bounds = array<i64: 16, 144>}, {pipeline_mode = #tpu.pipeline_mode<synchronous>, transform_indices = @transform_2, window_bounds = array<i64: 16, 1>}, {pipeline_mode = #tpu.pipeline_mode<synchronous>, transform_indices = @transform_3, window_bounds = array<i64: 16, 1>}, {pipeline_mode = #tpu.pipeline_mode<synchronous>, transform_indices = @transform_4, window_bounds = array<i64: 16, 1>}, {pipeline_mode = #tpu.pipeline_mode<synchronous>, transform_indices = @transform_5, window_bounds = array<i64: 16, 16>}, {pipeline_mode = #tpu.pipeline_mode<synchronous>, transform_indices = @transform_6, window_bounds = array<i64: 3, 16>}, {pipeline_mode = #tpu.pipeline_mode<synchronous>, transform_indices = @transform_7, window_bounds = array<i64: 3, 1>}, {transform_indices = @transform_8, window_bounds = array<i64: 1, 3, 256>}]} {
    %c0 = arith.constant 0 : index
    %c0_0 = arith.constant 0 : index
    %0 = vector.load %arg2[%c0, %c0_0] : memref<16x144xbf16, #tpu.memory_space<vmem>>, vector<16x144xbf16>
    %c0_1 = arith.constant 0 : index
    %c0_2 = arith.constant 0 : index
    %c0_3 = arith.constant 0 : index
    %1 = vector.load %arg1[%c0_1, %c0_2, %c0_3] : memref<1x144x256xbf16, #tpu.memory_space<vmem>>, vector<1x144x256xbf16>
    %2 = vector.shape_cast %1 : vector<1x144x256xbf16> to vector<144x256xbf16>
    %cst = arith.constant dense<0.000000e+00> : vector<16x256xf32>
    %3 = tpu.matmul %0, %2, %cst {dimension_numbers = #tpu.dot_dimension_numbers<[1], [0], [0], [1], [0, 0, 1, 1], [], []>} : vector<16x144xbf16>, vector<144x256xbf16>, vector<16x256xf32> -> vector<16x256xf32>
    %c0_4 = arith.constant 0 : index
    %c0_5 = arith.constant 0 : index
    %4 = vector.load %arg3[%c0_4, %c0_5] : memref<16x1xf32, #tpu.memory_space<vmem>>, vector<16x1xf32>
    %5 = vector.broadcast %4 : vector<16x1xf32> to vector<16x256xf32>
    %6 = arith.addf %3, %5 : vector<16x256xf32>
    %c0_6 = arith.constant 0 : index
    %c0_7 = arith.constant 0 : index
    %7 = vector.load %arg6[%c0_6, %c0_7] : memref<16x16xf32, #tpu.memory_space<vmem>>, vector<16x16xf32>
    %c0_8 = arith.constant 0 : index
    %c0_9 = arith.constant 0 : index
    %8 = vector.load %arg4[%c0_8, %c0_9] : memref<16x1xf32, #tpu.memory_space<vmem>>, vector<16x1xf32>
    %c0_10 = arith.constant 0 : index
    %c0_11 = arith.constant 0 : index
    %9 = vector.load %arg5[%c0_10, %c0_11] : memref<16x1xf32, #tpu.memory_space<vmem>>, vector<16x1xf32>
    %cst_12 = arith.constant dense<0.000000e+00> : vector<16xf32>
    %10 = vector.multi_reduction <add>, %6, %cst_12 [1] : vector<16x256xf32> to vector<16xf32>
    %11 = vector.shape_cast %10 : vector<16xf32> to vector<16x1xf32>
    %12 = arith.mulf %6, %6 : vector<16x256xf32>
    %cst_13 = arith.constant dense<0.000000e+00> : vector<16xf32>
    %13 = vector.multi_reduction <add>, %12, %cst_13 [1] : vector<16x256xf32> to vector<16xf32>
    %14 = vector.shape_cast %13 : vector<16xf32> to vector<16x1xf32>
    %cst_14 = arith.constant dense<0.000000e+00> : vector<16x1xf32>
    %15 = tpu.matmul %7, %11, %cst_14 {dimension_numbers = #tpu.dot_dimension_numbers<[1], [0], [0], [1], [0, 0, 1, 1], [], []>} : vector<16x16xf32>, vector<16x1xf32>, vector<16x1xf32> -> vector<16x1xf32>
    %cst_15 = arith.constant dense<0.000000e+00> : vector<16x1xf32>
    %16 = tpu.matmul %7, %14, %cst_15 {dimension_numbers = #tpu.dot_dimension_numbers<[1], [0], [0], [1], [0, 0, 1, 1], [], []>} : vector<16x16xf32>, vector<16x1xf32>, vector<16x1xf32> -> vector<16x1xf32>
    %17 = arith.mulf %15, %15 : vector<16x1xf32>
    %18 = arith.subf %16, %17 : vector<16x1xf32>
    %cst_16 = arith.constant 0.000000e+00 : f32
    %19 = vector.broadcast %cst_16 : f32 to vector<16x1xf32>
    %20 = arith.maximumf %18, %19 : vector<16x1xf32>
    %cst_17 = arith.constant 9.99999974E-6 : f32
    %21 = vector.broadcast %cst_17 : f32 to vector<16x1xf32>
    %22 = arith.addf %20, %21 : vector<16x1xf32>
    %23 = math.rsqrt %22 : vector<16x1xf32>
    %24 = vector.broadcast %15 : vector<16x1xf32> to vector<16x256xf32>
    %25 = arith.subf %6, %24 : vector<16x256xf32>
    %26 = arith.mulf %23, %8 : vector<16x1xf32>
    %27 = vector.broadcast %26 : vector<16x1xf32> to vector<16x256xf32>
    %28 = arith.mulf %25, %27 : vector<16x256xf32>
    %29 = vector.broadcast %9 : vector<16x1xf32> to vector<16x256xf32>
    %30 = arith.addf %28, %29 : vector<16x256xf32>
    %cst_18 = arith.constant 0.000000e+00 : f32
    %31 = vector.broadcast %cst_18 : f32 to vector<16x256xf32>
    %32 = arith.maximumf %30, %31 : vector<16x256xf32>
    %c0_19 = arith.constant 0 : index
    %c0_20 = arith.constant 0 : index
    %33 = vector.load %arg7[%c0_19, %c0_20] : memref<3x16xbf16, #tpu.memory_space<vmem>>, vector<3x16xbf16>
    %34 = arith.truncf %32 : vector<16x256xf32> to vector<16x256xbf16>
    %cst_21 = arith.constant dense<0.000000e+00> : vector<3x256xf32>
    %35 = tpu.matmul %33, %34, %cst_21 {dimension_numbers = #tpu.dot_dimension_numbers<[1], [0], [0], [1], [0, 0, 1, 1], [], []>} : vector<3x16xbf16>, vector<16x256xbf16>, vector<3x256xf32> -> vector<3x256xf32>
    %c0_22 = arith.constant 0 : index
    %c0_23 = arith.constant 0 : index
    %36 = vector.load %arg8[%c0_22, %c0_23] : memref<3x1xf32, #tpu.memory_space<vmem>>, vector<3x1xf32>
    %37 = vector.broadcast %36 : vector<3x1xf32> to vector<3x256xf32>
    %38 = arith.addf %35, %37 : vector<3x256xf32>
    %c0_24 = arith.constant 0 : index
    %c0_25 = arith.constant 0 : index
    %c0_26 = arith.constant 0 : index
    %39 = vector.load %arg9[%c0_24, %c0_25, %c0_26] : memref<1x3x256xf32, #tpu.memory_space<vmem>>, vector<1x3x256xf32>
    %40 = vector.shape_cast %39 : vector<1x3x256xf32> to vector<3x256xf32>
    %41 = vector.shape_cast %38 : vector<3x256xf32> to vector<1x3x256xf32>
    tpu.vector_store %arg9[%c0_24, %c0_25, %c0_26], %41 {strides = array<i32>} : memref<1x3x256xf32, #tpu.memory_space<vmem>>, vector<1x3x256xf32>,
    return
  }
  func.func @transform_0(%arg0: i32) -> (i32, i32, i32) {
    %c0_i32 = arith.constant 0 : i32
    %c0_i32_0 = arith.constant 0 : i32
    %c0_i32_1 = arith.constant 0 : i32
    return %arg0, %c0_i32, %c0_i32_0 : i32, i32, i32
  }
  func.func @transform_1(%arg0: i32) -> (i32, i32) {
    %c0_i32 = arith.constant 0 : i32
    %c0_i32_0 = arith.constant 0 : i32
    %c0_i32_1 = arith.constant 0 : i32
    return %c0_i32, %c0_i32_0 : i32, i32
  }
  func.func @transform_2(%arg0: i32) -> (i32, i32) {
    %c0_i32 = arith.constant 0 : i32
    %c0_i32_0 = arith.constant 0 : i32
    %c0_i32_1 = arith.constant 0 : i32
    return %c0_i32, %c0_i32_0 : i32, i32
  }
  func.func @transform_3(%arg0: i32) -> (i32, i32) {
    %c0_i32 = arith.constant 0 : i32
    %c0_i32_0 = arith.constant 0 : i32
    %c0_i32_1 = arith.constant 0 : i32
    return %c0_i32, %c0_i32_0 : i32, i32
  }
  func.func @transform_4(%arg0: i32) -> (i32, i32) {
    %c0_i32 = arith.constant 0 : i32
    %c0_i32_0 = arith.constant 0 : i32
    %c0_i32_1 = arith.constant 0 : i32
    return %c0_i32, %c0_i32_0 : i32, i32
  }
  func.func @transform_5(%arg0: i32) -> (i32, i32) {
    %c0_i32 = arith.constant 0 : i32
    %c0_i32_0 = arith.constant 0 : i32
    %c0_i32_1 = arith.constant 0 : i32
    return %c0_i32, %c0_i32_0 : i32, i32
  }
  func.func @transform_6(%arg0: i32) -> (i32, i32) {
    %c0_i32 = arith.constant 0 : i32
    %c0_i32_0 = arith.constant 0 : i32
    %c0_i32_1 = arith.constant 0 : i32
    return %c0_i32, %c0_i32_0 : i32, i32
  }
  func.func @transform_7(%arg0: i32) -> (i32, i32) {
    %c0_i32 = arith.constant 0 : i32
    %c0_i32_0 = arith.constant 0 : i32
    %c0_i32_1 = arith.constant 0 : i32
    return %c0_i32, %c0_i32_0 : i32, i32
  }
  func.func @transform_8(%arg0: i32) -> (i32, i32, i32) {
    %c0_i32 = arith.constant 0 : i32
    %c0_i32_0 = arith.constant 0 : i32
    %c0_i32_1 = arith.constant 0 : i32
    return %arg0, %c0_i32, %c0_i32_0 : i32, i32, i32
  }
}

</mosaic_0001>

<llo_original>
// kernel: unet2d_forward.12
$region0: #{unet2d_forward.12}
  #allocation0 [shape = 'u32[]', space=smem, size = 0x4, offset = 0x4, fixed_abs, tag = 'smem constant byte address 0x4 - core index']
  #allocation1 [shape = 'u32[144,128]{1,0:T(1,128)}', space=vmem, size = 0x12000, scoped, tag = 'internal scratch']
  %s0 = inlined_call_operand.vmem [shape: bf16[2,27,256], index: 0, kind: input, shape index: {}]
  %s1 = inlined_call_operand.vmem [shape: bf16[16,27], index: 1, kind: input, shape index: {}]
  %s2 = inlined_call_operand.vmem [shape: f32[16,1], index: 2, kind: input, shape index: {}]
  %s3 = inlined_call_operand.vmem [shape: f32[16,1], index: 3, kind: input, shape index: {}]
  %s4 = inlined_call_operand.vmem [shape: f32[16,1], index: 4, kind: input, shape index: {}]
  %s5 = inlined_call_operand.vmem [shape: f32[16,16], index: 5, kind: input, shape index: {}]
  %s6 = inlined_call_operand.vmem [shape: bf16[2,16,256], index: 6, kind: output, shape index: {}]
  %s7 = sld [smem:[#allocation0]]
  $region57: #{unet2d_forward.12} parent=0
    _
  %s9 = ssub.s32 1, %s7
  %s10 = scalar_select 0, %s9, %s7
  loop: start=0, step=1, limit=4
  $region2: #{unet2d_forward.12} parent=0 // loop_pre_header
    _
  $region3: #{unet2d_forward.12} parent=0 // loop_header
    %s12 = sphi 0, %s16
    %p13 = scmp.ge.s32.totalorder %s12, 4
    %s22 = sphi 0, %s24
    %s25 = sphi 0, %s22
    %s26 = sphi 0, %s25
    %s42 = sphi 0, %s26
    %s46 = sphi 0, %s46
    %s48 = sphi 0, %s46
    %s49 = sphi 0, %s48
    %s63 = sphi 0, %s49
    %s67 = sphi 0, %s67
    %s69 = sphi 0, %s67
    %s70 = sphi 0, %s69
    %s84 = sphi 0, %s70
    %s88 = sphi 0, %s88
    %s90 = sphi 0, %s88
    %s91 = sphi 0, %s90
    %s105 = sphi 0, %s91
    %s109 = sphi 0, %s109
    %s111 = sphi 0, %s109
    %s112 = sphi 0, %s111
    %s126 = sphi 0, %s112
    %s130 = sphi 0, %s130
    %s132 = sphi 0, %s130
    %s133 = sphi 0, %s132
    %s147 = sphi 0, %s133
    %s153 = sphi 0, %s155
    %s156 = sphi 0, %s153
    %s157 = sphi 0, %s156
    %s173 = sphi 0, %s157
  $region4: #{unet2d_forward.12} parent=0 // loop_header_branch
    %15 = sbr.rel (%p13) target = $region8
  $region5: #{unet2d_forward.12} parent=0 // loop_body
    %s17 = ssub.s32 %s12, 1
    %s18 = ssub.s32 %s12, 2
    %s19 = sadd.s32 %s12, 1
    %s20 = ssub.s32 %s12, %s19
    %p21 = scmp.eq.s32.totalorder %s20, 0
    %s23 = sadd.s32 %s22, 1
    %s24 = scalar_select %p21, %s22, %s23
    %p27 = pneg %p21
    %p28 = scmp.eq.s32.totalorder %s12, 1
    %p29 = por %p27, %p28
    %p30 = scmp.ne.s32.totalorder %s22, %s25
    %p31 = scmp.eq.s32.totalorder %s12, 0
    %p32 = por %p30, %p31
    %p33 = scmp.ne.s32.totalorder %s22, %s25
    %p34 = scmp.eq.s32.totalorder %s17, 1
    %p35 = por %p33, %p34
    %p36 = scmp.ne.s32.totalorder %s25, %s26
    %p37 = scmp.eq.s32.totalorder %s17, 0
    %p38 = por %p36, %p37
    %p39 = scmp.ne.s32.totalorder %s25, %s26
    %p40 = scmp.eq.s32.totalorder %s18, 1
    %p41 = por %p39, %p40
    %p43 = scmp.ne.s32.totalorder %s26, %s42
    %p44 = scmp.eq.s32.totalorder %s18, 0
    %p45 = por %p43, %p44
    %s47 = sadd.s32 %s46, 1
    %p50 = scmp.eq.s32.totalorder %s12, 1
    %p51 = scmp.ne.s32.totalorder %s46, %s48
    %p52 = scmp.eq.s32.totalorder %s12, 0
    %p53 = por %p51, %p52
    %p54 = scmp.ne.s32.totalorder %s46, %s48
    %p55 = scmp.eq.s32.totalorder %s17, 1
    %p56 = por %p54, %p55
    %p57 = scmp.ne.s32.totalorder %s48, %s49
    %p58 = scmp.eq.s32.totalorder %s17, 0
    %p59 = por %p57, %p58
    %p60 = scmp.ne.s32.totalorder %s48, %s49
    %p61 = scmp.eq.s32.totalorder %s18, 1
    %p62 = por %p60, %p61
    %p64 = scmp.ne.s32.totalorder %s49, %s63
    %p65 = scmp.eq.s32.totalorder %s18, 0
    %p66 = por %p64, %p65
    %s68 = sadd.s32 %s67, 1
    %p71 = scmp.eq.s32.totalorder %s12, 1
    %p72 = scmp.ne.s32.totalorder %s67, %s69
    %p73 = scmp.eq.s32.totalorder %s12, 0
    %p74 = por %p72, %p73
    %p75 = scmp.ne.s32.totalorder %s67, %s69
    %p76 = scmp.eq.s32.totalorder %s17, 1
    %p77 = por %p75, %p76
    %p78 = scmp.ne.s32.totalorder %s69, %s70
    %p79 = scmp.eq.s32.totalorder %s17, 0
    %p80 = por %p78, %p79
    %p81 = scmp.ne.s32.totalorder %s69, %s70
    %p82 = scmp.eq.s32.totalorder %s18, 1
    %p83 = por %p81, %p82
    %p85 = scmp.ne.s32.totalorder %s70, %s84
    %p86 = scmp.eq.s32.totalorder %s18, 0
    %p87 = por %p85, %p86
    %s89 = sadd.s32 %s88, 1
    %p92 = scmp.eq.s32.totalorder %s12, 1
    %p93 = scmp.ne.s32.totalorder %s88, %s90
    %p94 = scmp.eq.s32.totalorder %s12, 0
    %p95 = por %p93, %p94
    %p96 = scmp.ne.s32.totalorder %s88, %s90
    %p97 = scmp.eq.s32.totalorder %s17, 1
    %p98 = por %p96, %p97
    %p99 = scmp.ne.s32.totalorder %s90, %s91
    %p100 = scmp.eq.s32.totalorder %s17, 0
    %p101 = por %p99, %p100
    %p102 = scmp.ne.s32.totalorder %s90, %s91
    %p103 = scmp.eq.s32.totalorder %s18, 1
    %p104 = por %p102, %p103
    %p106 = scmp.ne.s32.totalorder %s91, %s105
    %p107 = scmp.eq.s32.totalorder %s18, 0
    %p108 = por %p106, %p107
    %s110 = sadd.s32 %s109, 1
    %p113 = scmp.eq.s32.totalorder %s12, 1
    %p114 = scmp.ne.s32.totalorder %s109, %s111
    %p115 = scmp.eq.s32.totalorder %s12, 0
    %p116 = por %p114, %p115
    %p117 = scmp.ne.s32.totalorder %s109, %s111
    %p118 = scmp.eq.s32.totalorder %s17, 1
    %p119 = por %p117, %p118
    %p120 = scmp.ne.s32.totalorder %s111, %s112
    %p121 = scmp.eq.s32.totalorder %s17, 0
    %p122 = por %p120, %p121
    %p123 = scmp.ne.s32.totalorder %s111, %s112
    %p124 = scmp.eq.s32.totalorder %s18, 1
    %p125 = por %p123, %p124
    %p127 = scmp.ne.s32.totalorder %s112, %s126
    %p128 = scmp.eq.s32.totalorder %s18, 0
    %p129 = por %p127, %p128
    %s131 = sadd.s32 %s130, 1
    %p134 = scmp.eq.s32.totalorder %s12, 1
    %p135 = scmp.ne.s32.totalorder %s130, %s132
    %p136 = scmp.eq.s32.totalorder %s12, 0
    %p137 = por %p135, %p136
    %p138 = scmp.ne.s32.totalorder %s130, %s132
    %p139 = scmp.eq.s32.totalorder %s17, 1
    %p140 = por %p138, %p139
    %p141 = scmp.ne.s32.totalorder %s132, %s133
    %p142 = scmp.eq.s32.totalorder %s17, 0
    %p143 = por %p141, %p142
    %p144 = scmp.ne.s32.totalorder %s132, %s133
    %p145 = scmp.eq.s32.totalorder %s18, 1
    %p146 = por %p144, %p145
    %p148 = scmp.ne.s32.totalorder %s133, %s147
    %p149 = scmp.eq.s32.totalorder %s18, 0
    %p150 = por %p148, %p149
    %s151 = ssub.s32 %s12, %s19
    %p152 = scmp.eq.s32.totalorder %s151, 0
    %s154 = sadd.s32 %s153, 1
    %s155 = scalar_select %p152, %s153, %s154
    %p158 = pneg %p152
    %p159 = scmp.eq.s32.totalorder %s12, 1
    %p160 = por %p158, %p159
    %p161 = scmp.ne.s32.totalorder %s153, %s156
    %p162 = scmp.eq.s32.totalorder %s12, 0
    %p163 = por %p161, %p162
    %p164 = scmp.ne.s32.totalorder %s153, %s156
    %p165 = scmp.eq.s32.totalorder %s17, 1
    %p166 = por %p164, %p165
    %p167 = scmp.ne.s32.totalorder %s156, %s157
    %p168 = scmp.eq.s32.totalorder %s17, 0
    %p169 = por %p167, %p168
    %p170 = scmp.ne.s32.totalorder %s156, %s157
    %p171 = scmp.eq.s32.totalorder %s18, 1
    %p172 = por %p170, %p171
    %p174 = scmp.ne.s32.totalorder %s157, %s173
    %p175 = scmp.eq.s32.totalorder %s18, 0
    %p176 = por %p174, %p175
    %p177 = scmp.le.s32.totalorder 1, %s12
    %p178 = scmp.lt.s32.totalorder %s12, 3
    %p179 = pnand %p177, %p178
    %p180 = pneg %p179
    // Predicated region
    $region9: #{unet2d_forward.12} parent=5 // pred_check
      _
    $region10: #{unet2d_forward.12} parent=5 // pred_check_branch
      %182 = sbr.rel (%p179) target = $region12
    $region11: #{unet2d_forward.12} parent=5 // pred_region
      %s183 = ssub.s32 %s12, 1
      // Predicated region
      $region13: #{unet2d_forward.12} parent=11 // pred_check
        %p184 = pneg %p59
      $region14: #{unet2d_forward.12} parent=11 // pred_check_branch
        %186 = sbr.rel (%p184) target = $region16
      $region15: #{unet2d_forward.12} parent=11 // pred_region
        _
      $region16: #{unet2d_forward.12} parent=11 // pred_fallthru
        _
      // Predicated region
      $region17: #{unet2d_forward.12} parent=11 // pred_check
        %p187 = pneg %p80
      $region18: #{unet2d_forward.12} parent=11 // pred_check_branch
        %189 = sbr.rel (%p187) target = $region20
      $region19: #{unet2d_forward.12} parent=11 // pred_region
        _
      $region20: #{unet2d_forward.12} parent=11 // pred_fallthru
        _
      // Predicated region
      $region21: #{unet2d_forward.12} parent=11 // pred_check
        %p190 = pneg %p101
      $region22: #{unet2d_forward.12} parent=11 // pred_check_branch
        %192 = sbr.rel (%p190) target = $region24
      $region23: #{unet2d_forward.12} parent=11 // pred_region
        _
      $region24: #{unet2d_forward.12} parent=11 // pred_fallthru
        _
      // Predicated region
      $region25: #{unet2d_forward.12} parent=11 // pred_check
        %p193 = pneg %p122
      $region26: #{unet2d_forward.12} parent=11 // pred_check_branch
        %195 = sbr.rel (%p193) target = $region28
      $region27: #{unet2d_forward.12} parent=11 // pred_region
        _
      $region28: #{unet2d_forward.12} parent=11 // pred_fallthru
        _
      // Predicated region
      $region29: #{unet2d_forward.12} parent=11 // pred_check
        %p196 = pneg %p143
      $region30: #{unet2d_forward.12} parent=11 // pred_check_branch
        %198 = sbr.rel (%p196) target = $region32
      $region31: #{unet2d_forward.12} parent=11 // pred_region
        _
      $region32: #{unet2d_forward.12} parent=11 // pred_fallthru
        _
    $region12: #{unet2d_forward.12} parent=5 // pred_fallthru
      _
    %p199 = scmp.lt.s32.totalorder %s12, 2
    // Predicated region
    $region33: #{unet2d_forward.12} parent=5 // pred_check
      %p200 = pneg %p199
    $region34: #{unet2d_forward.12} parent=5 // pred_check_branch
      %202 = sbr.rel (%p200) target = $region36
    $region35: #{unet2d_forward.12} parent=5 // pred_region
      // Predicated region
      $region37: #{unet2d_forward.12} parent=35 // pred_check
        %p203 = pneg %p32
      $region38: #{unet2d_forward.12} parent=35 // pred_check_branch
        %205 = sbr.rel (%p203) target = $region40
      $region39: #{unet2d_forward.12} parent=35 // pred_region
        %p206 = scmp.lt.s32.totalorder %s12, 1
        %s207 = scalar_select %p206, %s12, 1
        %s208 = smul.addr %s207, 8
        %s209 = smul.addr %s208, 4
        %s210 = scalar_lea.vmem %s0, %s209
      $region40: #{unet2d_forward.12} parent=35 // pred_fallthru
        _
    $region36: #{unet2d_forward.12} parent=5 // pred_fallthru
      _
    %p211 = scmp.le.s32.totalorder 1, %s12
    %p212 = scmp.lt.s32.totalorder %s12, 3
    %p213 = pnand %p211, %p212
    %p214 = pneg %p213
    // Predicated region
    $region41: #{unet2d_forward.12} parent=5 // pred_check
      _
    $region42: #{unet2d_forward.12} parent=5 // pred_check_branch
      %216 = sbr.rel (%p213) target = $region44
    $region43: #{unet2d_forward.12} parent=5 // pred_region
      %s217 = ssub.s32 %s12, 1
      %p218 = scmp.lt.s32.totalorder %s17, 1
      %s219 = scalar_select %p218, %s17, 1
      %s220 = smul.addr %s219, 8
      %s221 = smul.addr %s220, 4
      %s222 = scalar_lea.vmem %s0, %s221
      %p223 = pneg %p38
      %p224 = pneg %p35
      %p225 = pneg %p59
      %p226 = pneg %p56
      %p227 = pneg %p80
      %p228 = pneg %p77
      %p229 = pneg %p101
      %p230 = pneg %p98
      %p231 = pneg %p122
      %p232 = pneg %p119
      %p233 = pneg %p143
      %p234 = pneg %p140
      %p235 = pneg %p169
      %p236 = pneg %p166
      %p237 = scmp.lt.s32.totalorder %s17, 1
      %s238 = scalar_select %p237, %s17, 1
      %s239 = smul.addr %s238, 4
      %s240 = smul.addr %s239, 4
      %s241 = scalar_lea.vmem %s6, %s240
      %p242 = scmp.lt.s32.totalorder %s17, 1
      %s243 = scalar_select %p242, %s17, 1
      %s244 = smul.addr %s243, 8
      %s245 = smul.addr %s244, 4
      %s246 = scalar_lea.vmem %s0, %s245
      %p247 = scmp.lt.s32.totalorder %s17, 1
      %s248 = scalar_select %p247, %s17, 1
      %s249 = smul.addr %s248, 4
      %s250 = smul.addr %s249, 4
      %s251 = scalar_lea.vmem %s6, %s250
      %v253 = vld [vmem:[%s1] sm:$0xf]
      %v254 = vld [vmem:[%s1 + $0x4] sm:$0xf]
      %v255 = vld [vmem:[%s246] sm:$0xff]
      %v256 = vld [vmem:[%s246 + $0x8] sm:$0xff]
      %v257 = vld [vmem:[%s246 + $0x10] sm:$0xff]
      %v258 = vld [vmem:[%s246 + $0x18] sm:$0x33]
      %v259 = vld [vmem:[%s2] sm:$0xff]
      %v260 = vld [vmem:[%s2 + $0x8] sm:$0xff]
      %262 = vset.pattern.permute.xlu0 0
      %263 = vperm.xlu0 %262, %v259
      %v264 = vpop.permute.xlu0 %263
      %267 = vset.pattern.permute.xlu0 0
      %268 = vperm.xlu0 %267, %v260
      %v269 = vpop.permute.xlu0 %268
      %v273 = vunpack.c.l.b16 %v253
      %v274 = vunpack.c.l.b16 %v254
      %v275 = vpack.c.b16 %v274, %v273
      %v280 = vunpack.c.l.b16 %v255
      %v281 = vunpack.c.h.b16 %v255
      %v282 = vunpack.c.l.b16 %v256
      %v283 = vunpack.c.h.b16 %v256
      %v284 = vunpack.c.l.b16 %v257
      %v285 = vunpack.c.h.b16 %v257
      %v286 = vunpack.c.l.b16 %v258
      %v287 = vunpack.c.h.b16 %v258
      %v288 = vpack.c.b16 %v282, %v280
      %v289 = vpack.c.b16 %v283, %v281
      %v290 = vpack.c.b16 %v286, %v284
      %v291 = vpack.c.b16 %v287, %v285
      %vm294 = vcmask 220160
      %v296 = vsel %vm294, %v275, 0
      %vm298 = vcmask 1044480
      %vm299 = vcmask 1045504
      %v300 = vsel %vm298, 4294967295, 65535
      %v301 = vsel %vm299, %v300, 0
      %v303 = vand.u32 %v290, %v301
      %v306 = vand.u32 %v291, %v301
      %308 = vmatprep.subr.bf16.mxu0 0
      %309 = vmatpush1.bf16.msra.mxu0 0
      %310 = vmatprep.subr.bf16.mxu0 0
      %311 = vmatpush1.bf16.msra.mxu0 0
      %312 = vmatprep.subr.bf16.mxu0 0
      %313 = vmatpush1.bf16.msra.mxu0 0
      %314 = vmatprep.subr.bf16.mxu0 0
      %315 = vmatpush1.bf16.msra.mxu0 0
      %316 = vmatprep.subr.bf16.mxu0 0
      %317 = vmatpush1.bf16.msra.mxu0 0
      %318 = vmatprep.subr.bf16.mxu0 0
      %319 = vmatpush1.bf16.msra.mxu0 0
      %320 = vmatprep.subr.bf16.mxu0 %v306
      %321 = vmatpush1.bf16.msra.mxu0 %v303
      %322 = vmatprep.subr.bf16.mxu0 %v289
      %323 = vmatpush1.bf16.msra.mxu0 %v288
      %324 = vmatprep.subr.bf16.mxu0 0
      %325 = vmatpush2.bf16.msra.mxu0 0
      %326 = vmatprep.subr.bf16.mxu0 0
      %327 = vmatpush2.bf16.msra.mxu0 0
      %328 = vmatprep.subr.bf16.mxu0 0
      %329 = vmatpush2.bf16.msra.mxu0 0
      %330 = vmatprep.subr.bf16.mxu0 0
      %331 = vmatpush2.bf16.msra.mxu0 0
      %332 = vmatprep.subr.bf16.mxu0 0
      %333 = vmatpush2.bf16.msra.mxu0 0
      %334 = vmatprep.subr.bf16.mxu0 0
      %335 = vmatpush2.bf16.msra.mxu0 0
      %336 = vmatprep.subr.bf16.mxu0 0
      %337 = vmatpush2.bf16.msra.mxu0 0
      %338 = vmatprep.subr.bf16.mxu0 0
      %339 = vmatpush2.bf16.msra.mxu0 0
      %340 = vmatprep.mubr.bf16.mxu0 0
      %341 = vmatmul.mubr.bf16.gmra.mxu0 %v296
      %v342 = vpop.f32.mrf.mxu0
      %v343 = vadd.f32 %v264, %v342
      %v344 = vpop.f32.mrf.mxu0
      %v345 = vadd.f32 %v264, %v344
      %v346 = vpop.f32.mrf.mxu0
      %v347 = vadd.f32 %v269, %v346
      %v348 = vpop.f32.mrf.mxu0
      %v349 = vadd.f32 %v269, %v348
      %350 = vdwg.mxu0
      %v351 = vld [vmem:[%s5] sm:$0xff]
      %v352 = vld [vmem:[%s5 + $0x8] sm:$0xff]
      %v353 = vld [vmem:[%s3] sm:$0xff]
      %v354 = vld [vmem:[%s3 + $0x8] sm:$0xff]
      %v355 = vld [vmem:[%s4] sm:$0xff]
      %v356 = vld [vmem:[%s4 + $0x8] sm:$0xff]
      %v357 = vadd.f32 %v343, %v345
      %358 = vadd.xlane.f32.xlu0 %v357
      %v359 = vpop.xlane.xlu0 %358
      %v360 = vadd.f32 %v347, %v349
      %361 = vadd.xlane.f32.xlu0 %v360
      %v362 = vpop.xlane.xlu0 %361
      %v363 = vmul.f32 %v343, %v343
      %v364 = vmul.f32 %v345, %v345
      %v365 = vmul.f32 %v347, %v347
      %v366 = vmul.f32 %v349, %v349
      %v367 = vadd.f32 %v363, %v364
      %368 = vadd.xlane.f32.xlu0 %v367
      %v369 = vpop.xlane.xlu0 %368
      %v370 = vadd.f32 %v365, %v366
      %371 = vadd.xlane.f32.xlu0 %v370
      %v372 = vpop.xlane.xlu0 %371
      %vm373 = vcmask 130048
      %v375 = vsel %vm373, %v351, 0
      %v378 = vsel %vm373, %v352, 0
      %380 = vmatprep.subr.mxu0 0.0
      %381 = vmatpush1.msra.mxu0 0.0
      %382 = vmatprep.subr.mxu0 0.0
      %383 = vmatpush1.msra.mxu0 0.0
      %384 = vmatprep.subr.mxu0 0.0
      %385 = vmatpush1.msra.mxu0 0.0
      %386 = vmatprep.subr.mxu0 0.0
      %387 = vmatpush1.msra.mxu0 0.0
      %388 = vmatprep.subr.mxu0 0.0
      %389 = vmatpush1.msra.mxu0 0.0
      %390 = vmatprep.subr.mxu0 0.0
      %391 = vmatpush1.msra.mxu0 0.0
      %392 = vmatprep.subr.mxu0 0.0
      %393 = vmatpush1.msra.mxu0 0.0
      %394 = vmatprep.subr.mxu0 0.0
      %395 = vmatpush1.msra.mxu0 0.0
      %396 = vmatprep.subr.mxu0 0.0
      %397 = vmatpush1.msra.mxu0 0.0
      %398 = vmatprep.subr.mxu0 0.0
      %399 = vmatpush1.msra.mxu0 0.0
      %400 = vmatprep.subr.mxu0 0.0
      %401 = vmatpush1.msra.mxu0 0.0
      %402 = vmatprep.subr.mxu0 0.0
      %403 = vmatpush1.msra.mxu0 0.0
      %404 = vmatprep.subr.mxu0 0.0
      %405 = vmatpush1.msra.mxu0 0.0
      %406 = vmatprep.subr.mxu0 0.0
      %407 = vmatpush1.msra.mxu0 0.0
      %408 = vmatprep.subr.mxu0 0.0
      %409 = vmatpush1.msra.mxu0 %v362
      %410 = vmatprep.subr.mxu0 0.0
      %411 = vmatpush1.msra.mxu0 %v359
      %412 = vmatprep.subr.mxu0 0.0
      %413 = vmatpush2.msra.mxu0 0.0
      %414 = vmatprep.subr.mxu0 0.0
      %415 = vmatpush2.msra.mxu0 0.0
      %416 = vmatprep.subr.mxu0 0.0
      %417 = vmatpush2.msra.mxu0 0.0
      %418 = vmatprep.subr.mxu0 0.0
      %419 = vmatpush2.msra.mxu0 0.0
      %420 = vmatprep.subr.mxu0 0.0
      %421 = vmatpush2.msra.mxu0 0.0
      %422 = vmatprep.subr.mxu0 0.0
      %423 = vmatpush2.msra.mxu0 0.0
      %424 = vmatprep.subr.mxu0 0.0
      %425 = vmatpush2.msra.mxu0 0.0
      %426 = vmatprep.subr.mxu0 0.0
      %427 = vmatpush2.msra.mxu0 0.0
      %428 = vmatprep.subr.mxu0 0.0
      %429 = vmatpush2.msra.mxu0 0.0
      %430 = vmatprep.subr.mxu0 0.0
      %431 = vmatpush2.msra.mxu0 0.0
      %432 = vmatprep.subr.mxu0 0.0
      %433 = vmatpush2.msra.mxu0 0.0
      %434 = vmatprep.subr.mxu0 0.0
      %435 = vmatpush2.msra.mxu0 0.0
      %436 = vmatprep.subr.mxu0 0.0
      %437 = vmatpush2.msra.mxu0 0.0
      %438 = vmatprep.subr.mxu0 0.0
      %439 = vmatpush2.msra.mxu0 0.0
      %440 = vmatprep.subr.mxu0 0.0
      %441 = vmatpush2.msra.mxu0 0.0
      %442 = vmatprep.subr.mxu0 0.0
      %443 = vmatpush2.msra.mxu0 0.0
      %444 = vmatprep.mubr.f32.mxu0 0.0
      %445 = vmatmul.mubr.f32.gmra.mxu0 %v375
      %v446 = vpop.f32.mrf.mxu0
      %v447 = vadd.f32 0.0, %v446
      %v448 = vpop.f32.mrf.mxu0
      %449 = vmatprep.mubr.f32.mxu0 0.0
      %450 = vmatmul.mubr.f32.gmra.mxu0 %v378
      %v451 = vpop.f32.mrf.mxu0
      %v452 = vadd.f32 0.0, %v451
      %v453 = vpop.f32.mrf.mxu0
      %454 = vdwg.mxu0
      %455 = vmatprep.subr.mxu0 0.0
      %456 = vmatpush1.msra.mxu0 0.0
      %457 = vmatprep.subr.mxu0 0.0
      %458 = vmatpush1.msra.mxu0 0.0
      %459 = vmatprep.subr.mxu0 0.0
      %460 = vmatpush1.msra.mxu0 0.0
      %461 = vmatprep.subr.mxu0 0.0
      %462 = vmatpush1.msra.mxu0 0.0
      %463 = vmatprep.subr.mxu0 0.0
      %464 = vmatpush1.msra.mxu0 0.0
      %465 = vmatprep.subr.mxu0 0.0
      %466 = vmatpush1.msra.mxu0 0.0
      %467 = vmatprep.subr.mxu0 0.0
      %468 = vmatpush1.msra.mxu0 0.0
      %469 = vmatprep.subr.mxu0 0.0
      %470 = vmatpush1.msra.mxu0 0.0
      %471 = vmatprep.subr.mxu0 0.0
      %472 = vmatpush1.msra.mxu0 0.0
      %473 = vmatprep.subr.mxu0 0.0
      %474 = vmatpush1.msra.mxu0 0.0
      %475 = vmatprep.subr.mxu0 0.0
      %476 = vmatpush1.msra.mxu0 0.0
      %477 = vmatprep.subr.mxu0 0.0
      %478 = vmatpush1.msra.mxu0 0.0
      %479 = vmatprep.subr.mxu0 0.0
      %480 = vmatpush1.msra.mxu0 0.0
      %481 = vmatprep.subr.mxu0 0.0
      %482 = vmatpush1.msra.mxu0 0.0
      %483 = vmatprep.subr.mxu0 0.0
      %484 = vmatpush1.msra.mxu0 %v372
      %485 = vmatprep.subr.mxu0 0.0
      %486 = vmatpush1.msra.mxu0 %v369
      %487 = vmatprep.subr.mxu0 0.0
      %488 = vmatpush2.msra.mxu0 0.0
      %489 = vmatprep.subr.mxu0 0.0
      %490 = vmatpush2.msra.mxu0 0.0
      %491 = vmatprep.subr.mxu0 0.0
      %492 = vmatpush2.msra.mxu0 0.0
      %493 = vmatprep.subr.mxu0 0.0
      %494 = vmatpush2.msra.mxu0 0.0
      %495 = vmatprep.subr.mxu0 0.0
      %496 = vmatpush2.msra.mxu0 0.0
      %497 = vmatprep.subr.mxu0 0.0
      %498 = vmatpush2.msra.mxu0 0.0
      %499 = vmatprep.subr.mxu0 0.0
      %500 = vmatpush2.msra.mxu0 0.0
      %501 = vmatprep.subr.mxu0 0.0
      %502 = vmatpush2.msra.mxu0 0.0
      %503 = vmatprep.subr.mxu0 0.0
      %504 = vmatpush2.msra.mxu0 0.0
      %505 = vmatprep.subr.mxu0 0.0
      %506 = vmatpush2.msra.mxu0 0.0
      %507 = vmatprep.subr.mxu0 0.0
      %508 = vmatpush2.msra.mxu0 0.0
      %509 = vmatprep.subr.mxu0 0.0
      %510 = vmatpush2.msra.mxu0 0.0
      %511 = vmatprep.subr.mxu0 0.0
      %512 = vmatpush2.msra.mxu0 0.0
      %513 = vmatprep.subr.mxu0 0.0
      %514 = vmatpush2.msra.mxu0 0.0
      %515 = vmatprep.subr.mxu0 0.0
      %516 = vmatpush2.msra.mxu0 0.0
      %517 = vmatprep.subr.mxu0 0.0
      %518 = vmatpush2.msra.mxu0 0.0
      %519 = vmatprep.mubr.f32.mxu0 0.0
      %520 = vmatmul.mubr.f32.gmra.mxu0 %v375
      %v521 = vpop.f32.mrf.mxu0
      %v522 = vadd.f32 0.0, %v521
      %v523 = vpop.f32.mrf.mxu0
      %524 = vmatprep.mubr.f32.mxu0 0.0
      %525 = vmatmul.mubr.f32.gmra.mxu0 %v378
      %v526 = vpop.f32.mrf.mxu0
      %v527 = vadd.f32 0.0, %v526
      %v528 = vpop.f32.mrf.mxu0
      %529 = vdwg.mxu0
      %v530 = vmul.f32 %v447, %v447
      %v531 = vmul.f32 %v452, %v452
      %v532 = vsub.f32 %v522, %v530
      %v533 = vsub.f32 %v527, %v531
      %v534 = vmax.f32 %v532, 0.0
      %v535 = vmax.f32 %v533, 0.0
      %v536 = vadd.f32 %v534, 1e-05
      %v537 = vadd.f32 %v535, 1e-05
      %v538 = vrsqrt.pop %v536
      %v539 = vrsqrt.pop %v537
      %541 = vset.pattern.permute.xlu0 0
      %542 = vperm.xlu0 %541, %v447
      %v543 = vpop.permute.xlu0 %542
      %546 = vset.pattern.permute.xlu0 0
      %547 = vperm.xlu0 %546, %v452
      %v548 = vpop.permute.xlu0 %547
      %v550 = vsub.f32 %v343, %v543
      %v551 = vsub.f32 %v345, %v543
      %v552 = vsub.f32 %v347, %v548
      %v553 = vsub.f32 %v349, %v548
      %v554 = vmul.f32 %v538, %v353
      %v555 = vmul.f32 %v539, %v354
      %557 = vset.pattern.permute.xlu0 0
      %558 = vperm.xlu0 %557, %v554
      %v559 = vpop.permute.xlu0 %558
      %562 = vset.pattern.permute.xlu0 0
      %563 = vperm.xlu0 %562, %v555
      %v564 = vpop.permute.xlu0 %563
      %v566 = vmul.f32 %v550, %v559
      %v567 = vmul.f32 %v551, %v559
      %v568 = vmul.f32 %v552, %v564
      %v569 = vmul.f32 %v553, %v564
      %571 = vset.pattern.permute.xlu0 0
      %572 = vperm.xlu0 %571, %v355
      %v573 = vpop.permute.xlu0 %572
      %576 = vset.pattern.permute.xlu0 0
      %577 = vperm.xlu0 %576, %v356
      %v578 = vpop.permute.xlu0 %577
      %v580 = vadd.f32 %v566, %v573
      %v581 = vadd.f32 %v567, %v573
      %v582 = vadd.f32 %v568, %v578
      %v583 = vadd.f32 %v569, %v578
      %v584 = vmax.f32 %v580, 0.0
      %v585 = vmax.f32 %v581, 0.0
      %v586 = vmax.f32 %v582, 0.0
      %v587 = vmax.f32 %v583, 0.0
      %v588 = vpack.c.bf16 %v586, %v584
      %v589 = vpack.c.bf16 %v587, %v585
      %v592 = vunpack.c.l.b16 %v588
      %v593 = vunpack.c.l.b16 %v589
      %v594 = vunpack.c.h.b16 %v588
      %v595 = vunpack.c.h.b16 %v589
      %v596 = vpack.c.b16 %v593, %v592
      %v597 = vpack.c.b16 %v595, %v594
      %600 = vst [vmem:[%s251] sm:$0xff] %v596
      %601 = vst [vmem:[%s251 + $0x8] sm:$0xff] %v597
      %p602 = scmp.lt.s32.totalorder %s17, 1
      %s603 = scalar_select %p602, %s17, 1
      %s604 = smul.addr %s603, 4
      %s605 = smul.addr %s604, 4
      %s606 = scalar_lea.vmem %s6, %s605
      // Predicated region
      $region45: #{unet2d_forward.12} parent=43 // pred_check
        %p607 = pneg %p166
      $region46: #{unet2d_forward.12} parent=43 // pred_check_branch
        %609 = sbr.rel (%p607) target = $region48
      $region47: #{unet2d_forward.12} parent=43 // pred_region
        _
      $region48: #{unet2d_forward.12} parent=43 // pred_fallthru
        _
    $region44: #{unet2d_forward.12} parent=5 // pred_fallthru
      _
    %p610 = scmp.le.s32.totalorder 2, %s12
    // Predicated region
    $region49: #{unet2d_forward.12} parent=5 // pred_check
      %p611 = pneg %p610
    $region50: #{unet2d_forward.12} parent=5 // pred_check_branch
      %613 = sbr.rel (%p611) target = $region52
    $region51: #{unet2d_forward.12} parent=5 // pred_region
      %s614 = ssub.s32 %s12, 2
      // Predicated region
      $region53: #{unet2d_forward.12} parent=51 // pred_check
        %p615 = pneg %p172
      $region54: #{unet2d_forward.12} parent=51 // pred_check_branch
        %617 = sbr.rel (%p615) target = $region56
      $region55: #{unet2d_forward.12} parent=51 // pred_region
        %p618 = scmp.lt.s32.totalorder %s18, 1
        %s619 = scalar_select %p618, %s18, 1
        %s620 = smul.addr %s619, 4
        %s621 = smul.addr %s620, 4
        %s622 = scalar_lea.vmem %s6, %s621
      $region56: #{unet2d_forward.12} parent=51 // pred_fallthru
        _
    $region52: #{unet2d_forward.12} parent=5 // pred_fallthru
      _
  $region6: #{unet2d_forward.12} parent=0 // loop_footer
    %s16 = sadd.s32 1, %s12
  $region7: #{unet2d_forward.12} parent=0 // loop_footer_branch
    %11 = sbr.rel target = $region3
  $region8: #{unet2d_forward.12} parent=0 // loop_exit
    _

// kernel: unet2d_forward.13
$region0: #{unet2d_forward.13}
  #allocation0 [shape = 'u32[]', space=smem, size = 0x4, offset = 0x4, fixed_abs, tag = 'smem constant byte address 0x4 - core index']
  #allocation1 [shape = 'u32[144,128]{1,0:T(1,128)}', space=vmem, size = 0x12000, scoped, tag = 'internal scratch']
  %s0 = inlined_call_operand.vmem [shape: bf16[2,144,256], index: 0, kind: input, shape index: {}]
  %s1 = inlined_call_operand.vmem [shape: bf16[16,144], index: 1, kind: input, shape index: {}]
  %s2 = inlined_call_operand.vmem [shape: f32[16,1], index: 2, kind: input, shape index: {}]
  %s3 = inlined_call_operand.vmem [shape: f32[16,1], index: 3, kind: input, shape index: {}]
  %s4 = inlined_call_operand.vmem [shape: f32[16,1], index: 4, kind: input, shape index: {}]
  %s5 = inlined_call_operand.vmem [shape: f32[16,16], index: 5, kind: input, shape index: {}]
  %s6 = inlined_call_operand.vmem [shape: bf16[2,16,256], index: 6, kind: output, shape index: {}]
  %s7 = sld [smem:[#allocation0]]
  $region57: #{unet2d_forward.13} parent=0
    _
  %s9 = ssub.s32 1, %s7
  %s10 = scalar_select 0, %s9, %s7
  loop: start=0, step=1, limit=4
  $region2: #{unet2d_forward.13} parent=0 // loop_pre_header
    _
  $region3: #{unet2d_forward.13} parent=0 // loop_header
    %s12 = sphi 0, %s16
    %p13 = scmp.ge.s32.totalorder %s12, 4
    %s22 = sphi 0, %s24
    %s25 = sphi 0, %s22
    %s26 = sphi 0, %s25
    %s42 = sphi 0, %s26
    %s46 = sphi 0, %s46
    %s48 = sphi 0, %s46
    %s49 = sphi 0, %s48
    %s63 = sphi 0, %s49
    %s67 = sphi 0, %s67
    %s69 = sphi 0, %s67
    %s70 = sphi 0, %s69
    %s84 = sphi 0, %s70
    %s88 = sphi 0, %s88
    %s90 = sphi 0, %s88
    %s91 = sphi 0, %s90
    %s105 = sphi 0, %s91
    %s109 = sphi 0, %s109
    %s111 = sphi 0, %s109
    %s112 = sphi 0, %s111
    %s126 = sphi 0, %s112
    %s130 = sphi 0, %s130
    %s132 = sphi 0, %s130
    %s133 = sphi 0, %s132
    %s147 = sphi 0, %s133
    %s153 = sphi 0, %s155
    %s156 = sphi 0, %s153
    %s157 = sphi 0, %s156
    %s173 = sphi 0, %s157
  $region4: #{unet2d_forward.13} parent=0 // loop_header_branch
    %15 = sbr.rel (%p13) target = $region8
  $region5: #{unet2d_forward.13} parent=0 // loop_body
    %s17 = ssub.s32 %s12, 1
    %s18 = ssub.s32 %s12, 2
    %s19 = sadd.s32 %s12, 1
    %s20 = ssub.s32 %s12, %s19
    %p21 = scmp.eq.s32.totalorder %s20, 0
    %s23 = sadd.s32 %s22, 1
    %s24 = scalar_select %p21, %s22, %s23
    %p27 = pneg %p21
    %p28 = scmp.eq.s32.totalorder %s12, 1
    %p29 = por %p27, %p28
    %p30 = scmp.ne.s32.totalorder %s22, %s25
    %p31 = scmp.eq.s32.totalorder %s12, 0
    %p32 = por %p30, %p31
    %p33 = scmp.ne.s32.totalorder %s22, %s25
    %p34 = scmp.eq.s32.totalorder %s17, 1
    %p35 = por %p33, %p34
    %p36 = scmp.ne.s32.totalorder %s25, %s26
    %p37 = scmp.eq.s32.totalorder %s17, 0
    %p38 = por %p36, %p37
    %p39 = scmp.ne.s32.totalorder %s25, %s26
    %p40 = scmp.eq.s32.totalorder %s18, 1
    %p41 = por %p39, %p40
    %p43 = scmp.ne.s32.totalorder %s26, %s42
    %p44 = scmp.eq.s32.totalorder %s18, 0
    %p45 = por %p43, %p44
    %s47 = sadd.s32 %s46, 1
    %p50 = scmp.eq.s32.totalorder %s12, 1
    %p51 = scmp.ne.s32.totalorder %s46, %s48
    %p52 = scmp.eq.s32.totalorder %s12, 0
    %p53 = por %p51, %p52
    %p54 = scmp.ne.s32.totalorder %s46, %s48
    %p55 = scmp.eq.s32.totalorder %s17, 1
    %p56 = por %p54, %p55
    %p57 = scmp.ne.s32.totalorder %s48, %s49
    %p58 = scmp.eq.s32.totalorder %s17, 0
    %p59 = por %p57, %p58
    %p60 = scmp.ne.s32.totalorder %s48, %s49
    %p61 = scmp.eq.s32.totalorder %s18, 1
    %p62 = por %p60, %p61
    %p64 = scmp.ne.s32.totalorder %s49, %s63
    %p65 = scmp.eq.s32.totalorder %s18, 0
    %p66 = por %p64, %p65
    %s68 = sadd.s32 %s67, 1
    %p71 = scmp.eq.s32.totalorder %s12, 1
    %p72 = scmp.ne.s32.totalorder %s67, %s69
    %p73 = scmp.eq.s32.totalorder %s12, 0
    %p74 = por %p72, %p73
    %p75 = scmp.ne.s32.totalorder %s67, %s69
    %p76 = scmp.eq.s32.totalorder %s17, 1
    %p77 = por %p75, %p76
    %p78 = scmp.ne.s32.totalorder %s69, %s70
    %p79 = scmp.eq.s32.totalorder %s17, 0
    %p80 = por %p78, %p79
    %p81 = scmp.ne.s32.totalorder %s69, %s70
    %p82 = scmp.eq.s32.totalorder %s18, 1
    %p83 = por %p81, %p82
    %p85 = scmp.ne.s32.totalorder %s70, %s84
    %p86 = scmp.eq.s32.totalorder %s18, 0
    %p87 = por %p85, %p86
    %s89 = sadd.s32 %s88, 1
    %p92 = scmp.eq.s32.totalorder %s12, 1
    %p93 = scmp.ne.s32.totalorder %s88, %s90
    %p94 = scmp.eq.s32.totalorder %s12, 0
    %p95 = por %p93, %p94
    %p96 = scmp.ne.s32.totalorder %s88, %s90
    %p97 = scmp.eq.s32.totalorder %s17, 1
    %p98 = por %p96, %p97
    %p99 = scmp.ne.s32.totalorder %s90, %s91
    %p100 = scmp.eq.s32.totalorder %s17, 0
    %p101 = por %p99, %p100
    %p102 = scmp.ne.s32.totalorder %s90, %s91
    %p103 = scmp.eq.s32.totalorder %s18, 1
    %p104 = por %p102, %p103
    %p106 = scmp.ne.s32.totalorder %s91, %s105
    %p107 = scmp.eq.s32.totalorder %s18, 0
    %p108 = por %p106, %p107
    %s110 = sadd.s32 %s109, 1
    %p113 = scmp.eq.s32.totalorder %s12, 1
    %p114 = scmp.ne.s32.totalorder %s109, %s111
    %p115 = scmp.eq.s32.totalorder %s12, 0
    %p116 = por %p114, %p115
    %p117 = scmp.ne.s32.totalorder %s109, %s111
    %p118 = scmp.eq.s32.totalorder %s17, 1
    %p119 = por %p117, %p118
    %p120 = scmp.ne.s32.totalorder %s111, %s112
    %p121 = scmp.eq.s32.totalorder %s17, 0
    %p122 = por %p120, %p121
    %p123 = scmp.ne.s32.totalorder %s111, %s112
    %p124 = scmp.eq.s32.totalorder %s18, 1
    %p125 = por %p123, %p124
    %p127 = scmp.ne.s32.totalorder %s112, %s126
    %p128 = scmp.eq.s32.totalorder %s18, 0
    %p129 = por %p127, %p128
    %s131 = sadd.s32 %s130, 1
    %p134 = scmp.eq.s32.totalorder %s12, 1
    %p135 = scmp.ne.s32.totalorder %s130, %s132
    %p136 = scmp.eq.s32.totalorder %s12, 0
    %p137 = por %p135, %p136
    %p138 = scmp.ne.s32.totalorder %s130, %s132
    %p139 = scmp.eq.s32.totalorder %s17, 1
    %p140 = por %p138, %p139
    %p141 = scmp.ne.s32.totalorder %s132, %s133
    %p142 = scmp.eq.s32.totalorder %s17, 0
    %p143 = por %p141, %p142
    %p144 = scmp.ne.s32.totalorder %s132, %s133
    %p145 = scmp.eq.s32.totalorder %s18, 1
    %p146 = por %p144, %p145
    %p148 = scmp.ne.s32.totalorder %s133, %s147
    %p149 = scmp.eq.s32.totalorder %s18, 0
    %p150 = por %p148, %p149
    %s151 = ssub.s32 %s12, %s19
    %p152 = scmp.eq.s32.totalorder %s151, 0
    %s154 = sadd.s32 %s153, 1
    %s155 = scalar_select %p152, %s153, %s154
    %p158 = pneg %p152
    %p159 = scmp.eq.s32.totalorder %s12, 1
    %p160 = por %p158, %p159
    %p161 = scmp.ne.s32.totalorder %s153, %s156
    %p162 = scmp.eq.s32.totalorder %s12, 0
    %p163 = por %p161, %p162
    %p164 = scmp.ne.s32.totalorder %s153, %s156
    %p165 = scmp.eq.s32.totalorder %s17, 1
    %p166 = por %p164, %p165
    %p167 = scmp.ne.s32.totalorder %s156, %s157
    %p168 = scmp.eq.s32.totalorder %s17, 0
    %p169 = por %p167, %p168
    %p170 = scmp.ne.s32.totalorder %s156, %s157
    %p171 = scmp.eq.s32.totalorder %s18, 1
    %p172 = por %p170, %p171
    %p174 = scmp.ne.s32.totalorder %s157, %s173
    %p175 = scmp.eq.s32.totalorder %s18, 0
    %p176 = por %p174, %p175
    %p177 = scmp.le.s32.totalorder 1, %s12
    %p178 = scmp.lt.s32.totalorder %s12, 3
    %p179 = pnand %p177, %p178
    %p180 = pneg %p179
    // Predicated region
    $region9: #{unet2d_forward.13} parent=5 // pred_check
      _
    $region10: #{unet2d_forward.13} parent=5 // pred_check_branch
      %182 = sbr.rel (%p179) target = $region12
    $region11: #{unet2d_forward.13} parent=5 // pred_region
      %s183 = ssub.s32 %s12, 1
      // Predicated region
      $region13: #{unet2d_forward.13} parent=11 // pred_check
        %p184 = pneg %p59
      $region14: #{unet2d_forward.13} parent=11 // pred_check_branch
        %186 = sbr.rel (%p184) target = $region16
      $region15: #{unet2d_forward.13} parent=11 // pred_region
        _
      $region16: #{unet2d_forward.13} parent=11 // pred_fallthru
        _
      // Predicated region
      $region17: #{unet2d_forward.13} parent=11 // pred_check
        %p187 = pneg %p80
      $region18: #{unet2d_forward.13} parent=11 // pred_check_branch
        %189 = sbr.rel (%p187) target = $region20
      $region19: #{unet2d_forward.13} parent=11 // pred_region
        _
      $region20: #{unet2d_forward.13} parent=11 // pred_fallthru
        _
      // Predicated region
      $region21: #{unet2d_forward.13} parent=11 // pred_check
        %p190 = pneg %p101
      $region22: #{unet2d_forward.13} parent=11 // pred_check_branch
        %192 = sbr.rel (%p190) target = $region24
      $region23: #{unet2d_forward.13} parent=11 // pred_region
        _
      $region24: #{unet2d_forward.13} parent=11 // pred_fallthru
        _
      // Predicated region
      $region25: #{unet2d_forward.13} parent=11 // pred_check
        %p193 = pneg %p122
      $region26: #{unet2d_forward.13} parent=11 // pred_check_branch
        %195 = sbr.rel (%p193) target = $region28
      $region27: #{unet2d_forward.13} parent=11 // pred_region
        _
      $region28: #{unet2d_forward.13} parent=11 // pred_fallthru
        _
      // Predicated region
      $region29: #{unet2d_forward.13} parent=11 // pred_check
        %p196 = pneg %p143
      $region30: #{unet2d_forward.13} parent=11 // pred_check_branch
        %198 = sbr.rel (%p196) target = $region32
      $region31: #{unet2d_forward.13} parent=11 // pred_region
        _
      $region32: #{unet2d_forward.13} parent=11 // pred_fallthru
        _
    $region12: #{unet2d_forward.13} parent=5 // pred_fallthru
      _
    %p199 = scmp.lt.s32.totalorder %s12, 2
    // Predicated region
    $region33: #{unet2d_forward.13} parent=5 // pred_check
      %p200 = pneg %p199
    $region34: #{unet2d_forward.13} parent=5 // pred_check_branch
      %202 = sbr.rel (%p200) target = $region36
    $region35: #{unet2d_forward.13} parent=5 // pred_region
      // Predicated region
      $region37: #{unet2d_forward.13} parent=35 // pred_check
        %p203 = pneg %p32
      $region38: #{unet2d_forward.13} parent=35 // pred_check_branch
        %205 = sbr.rel (%p203) target = $region40
      $region39: #{unet2d_forward.13} parent=35 // pred_region
        %p206 = scmp.lt.s32.totalorder %s12, 1
        %s207 = scalar_select %p206, %s12, 1
        %s208 = smul.addr %s207, 36
        %s209 = smul.addr %s208, 4
        %s210 = scalar_lea.vmem %s0, %s209
      $region40: #{unet2d_forward.13} parent=35 // pred_fallthru
        _
    $region36: #{unet2d_forward.13} parent=5 // pred_fallthru
      _
    %p211 = scmp.le.s32.totalorder 1, %s12
    %p212 = scmp.lt.s32.totalorder %s12, 3
    %p213 = pnand %p211, %p212
    %p214 = pneg %p213
    // Predicated region
    $region41: #{unet2d_forward.13} parent=5 // pred_check
      _
    $region42: #{unet2d_forward.13} parent=5 // pred_check_branch
      %216 = sbr.rel (%p213) target = $region44
    $region43: #{unet2d_forward.13} parent=5 // pred_region
      %s217 = ssub.s32 %s12, 1
      %p218 = scmp.lt.s32.totalorder %s17, 1
      %s219 = scalar_select %p218, %s17, 1
      %s220 = smul.addr %s219, 36
      %s221 = smul.addr %s220, 4
      %s222 = scalar_lea.vmem %s0, %s221
      %p223 = pneg %p38
      %p224 = pneg %p35
      %p225 = pneg %p59
      %p226 = pneg %p56
      %p227 = pneg %p80
      %p228 = pneg %p77
      %p229 = pneg %p101
      %p230 = pneg %p98
      %p231 = pneg %p122
      %p232 = pneg %p119
      %p233 = pneg %p143
      %p234 = pneg %p140
      %p235 = pneg %p169
      %p236 = pneg %p166
      %p237 = scmp.lt.s32.totalorder %s17, 1
      %s238 = scalar_select %p237, %s17, 1
      %s239 = smul.addr %s238, 4
      %s240 = smul.addr %s239, 4
      %s241 = scalar_lea.vmem %s6, %s240
      %p242 = scmp.lt.s32.totalorder %s17, 1
      %s243 = scalar_select %p242, %s17, 1
      %s244 = smul.addr %s243, 36
      %s245 = smul.addr %s244, 4
      %s246 = scalar_lea.vmem %s0, %s245
      %p247 = scmp.lt.s32.totalorder %s17, 1
      %s248 = scalar_select %p247, %s17, 1
      %s249 = smul.addr %s248, 4
      %s250 = smul.addr %s249, 4
      %s251 = scalar_lea.vmem %s6, %s250
      %v253 = vld [vmem:[%s1] sm:$0xff]
      %v254 = vld [vmem:[%s1 + $0x8] sm:$0xff]
      %v255 = vld [vmem:[%s246] sm:$0xff]
      %v256 = vld [vmem:[%s246 + $0x8] sm:$0xff]
      %v257 = vld [vmem:[%s246 + $0x10] sm:$0xff]
      %v258 = vld [vmem:[%s246 + $0x18] sm:$0xff]
      %v259 = vld [vmem:[%s246 + $0x20] sm:$0xff]
      %v260 = vld [vmem:[%s246 + $0x28] sm:$0xff]
      %v261 = vld [vmem:[%s246 + $0x30] sm:$0xff]
      %v262 = vld [vmem:[%s246 + $0x38] sm:$0xff]
      %v263 = vld [vmem:[%s246 + $0x40] sm:$0xff]
      %v264 = vld [vmem:[%s246 + $0x48] sm:$0xff]
      %v265 = vld [vmem:[%s246 + $0x50] sm:$0xff]
      %v266 = vld [vmem:[%s246 + $0x58] sm:$0xff]
      %v267 = vld [vmem:[%s246 + $0x60] sm:$0xff]
      %v268 = vld [vmem:[%s246 + $0x68] sm:$0xff]
      %v269 = vld [vmem:[%s246 + $0x70] sm:$0xff]
      %v270 = vld [vmem:[%s246 + $0x78] sm:$0xff]
      %v271 = vld [vmem:[%s246 + $0x80] sm:$0xff]
      %v272 = vld [vmem:[%s246 + $0x88] sm:$0xff]
      %v273 = vld [vmem:[%s2] sm:$0xff]
      %v274 = vld [vmem:[%s2 + $0x8] sm:$0xff]
      %276 = vset.pattern.permute.xlu0 0
      %277 = vperm.xlu0 %276, %v273
      %v278 = vpop.permute.xlu0 %277
      %281 = vset.pattern.permute.xlu0 0
      %282 = vperm.xlu0 %281, %v274
      %v283 = vpop.permute.xlu0 %282
      %v287 = vunpack.c.l.b16 %v253
      %v288 = vunpack.c.h.b16 %v253
      %v289 = vunpack.c.l.b16 %v254
      %v290 = vunpack.c.h.b16 %v254
      %v291 = vpack.c.b16 %v289, %v287
      %v292 = vpack.c.b16 %v290, %v288
      %v312 = vunpack.c.l.b16 %v255
      %v313 = vunpack.c.h.b16 %v255
      %v314 = vunpack.c.l.b16 %v256
      %v315 = vunpack.c.h.b16 %v256
      %v316 = vunpack.c.l.b16 %v257
      %v317 = vunpack.c.h.b16 %v257
      %v318 = vunpack.c.l.b16 %v258
      %v319 = vunpack.c.h.b16 %v258
      %v320 = vunpack.c.l.b16 %v259
      %v321 = vunpack.c.h.b16 %v259
      %v322 = vunpack.c.l.b16 %v260
      %v323 = vunpack.c.h.b16 %v260
      %v324 = vunpack.c.l.b16 %v261
      %v325 = vunpack.c.h.b16 %v261
      %v326 = vunpack.c.l.b16 %v262
      %v327 = vunpack.c.h.b16 %v262
      %v328 = vunpack.c.l.b16 %v263
      %v329 = vunpack.c.h.b16 %v263
      %v330 = vunpack.c.l.b16 %v264
      %v331 = vunpack.c.h.b16 %v264
      %v332 = vunpack.c.l.b16 %v265
      %v333 = vunpack.c.h.b16 %v265
      %v334 = vunpack.c.l.b16 %v266
      %v335 = vunpack.c.h.b16 %v266
      %v336 = vunpack.c.l.b16 %v267
      %v337 = vunpack.c.h.b16 %v267
      %v338 = vunpack.c.l.b16 %v268
      %v339 = vunpack.c.h.b16 %v268
      %v340 = vunpack.c.l.b16 %v269
      %v341 = vunpack.c.h.b16 %v269
      %v342 = vunpack.c.l.b16 %v270
      %v343 = vunpack.c.h.b16 %v270
      %v344 = vunpack.c.l.b16 %v271
      %v345 = vunpack.c.h.b16 %v271
      %v346 = vunpack.c.l.b16 %v272
      %v347 = vunpack.c.h.b16 %v272
      %v348 = vpack.c.b16 %v314, %v312
      %v349 = vpack.c.b16 %v315, %v313
      %v350 = vpack.c.b16 %v318, %v316
      %v351 = vpack.c.b16 %v319, %v317
      %v352 = vpack.c.b16 %v322, %v320
      %v353 = vpack.c.b16 %v323, %v321
      %v354 = vpack.c.b16 %v326, %v324
      %v355 = vpack.c.b16 %v327, %v325
      %v356 = vpack.c.b16 %v330, %v328
      %v357 = vpack.c.b16 %v331, %v329
      %v358 = vpack.c.b16 %v334, %v332
      %v359 = vpack.c.b16 %v335, %v333
      %v360 = vpack.c.b16 %v338, %v336
      %v361 = vpack.c.b16 %v339, %v337
      %v362 = vpack.c.b16 %v342, %v340
      %v363 = vpack.c.b16 %v343, %v341
      %v364 = vpack.c.b16 %v346, %v344
      %v365 = vpack.c.b16 %v347, %v345
      %vm384 = vcmask 130048
      %v386 = vsel %vm384, %v292, 0
      %388 = vmatprep.subr.bf16.mxu0 %v363
      %389 = vmatpush1.bf16.msra.mxu0 %v362
      %390 = vmatprep.subr.bf16.mxu0 %v361
      %391 = vmatpush1.bf16.msra.mxu0 %v360
      %392 = vmatprep.subr.bf16.mxu0 %v359
      %393 = vmatpush1.bf16.msra.mxu0 %v358
      %394 = vmatprep.subr.bf16.mxu0 %v357
      %395 = vmatpush1.bf16.msra.mxu0 %v356
      %396 = vmatprep.subr.bf16.mxu0 %v355
      %397 = vmatpush1.bf16.msra.mxu0 %v354
      %398 = vmatprep.subr.bf16.mxu0 %v353
      %399 = vmatpush1.bf16.msra.mxu0 %v352
      %400 = vmatprep.subr.bf16.mxu0 %v351
      %401 = vmatpush1.bf16.msra.mxu0 %v350
      %402 = vmatprep.subr.bf16.mxu0 %v349
      %403 = vmatpush1.bf16.msra.mxu0 %v348
      %404 = vmatprep.subr.bf16.mxu0 0
      %405 = vmatpush2.bf16.msra.mxu0 0
      %406 = vmatprep.subr.bf16.mxu0 0
      %407 = vmatpush2.bf16.msra.mxu0 0
      %408 = vmatprep.subr.bf16.mxu0 0
      %409 = vmatpush2.bf16.msra.mxu0 0
      %410 = vmatprep.subr.bf16.mxu0 0
      %411 = vmatpush2.bf16.msra.mxu0 0
      %412 = vmatprep.subr.bf16.mxu0 0
      %413 = vmatpush2.bf16.msra.mxu0 0
      %414 = vmatprep.subr.bf16.mxu0 0
      %415 = vmatpush2.bf16.msra.mxu0 0
      %416 = vmatprep.subr.bf16.mxu0 0
      %417 = vmatpush2.bf16.msra.mxu0 0
      %418 = vmatprep.subr.bf16.mxu0 %v365
      %419 = vmatpush2.bf16.msra.mxu0 %v364
      %420 = vmatprep.mubr.bf16.mxu0 %v386
      %421 = vmatmul.mubr.bf16.gmra.mxu0 %v291
      %v422 = vpop.f32.mrf.mxu0
      %v423 = vadd.f32 %v278, %v422
      %v424 = vpop.f32.mrf.mxu0
      %v425 = vadd.f32 %v278, %v424
      %v426 = vpop.f32.mrf.mxu0
      %v427 = vadd.f32 %v283, %v426
      %v428 = vpop.f32.mrf.mxu0
      %v429 = vadd.f32 %v283, %v428
      %430 = vdwg.mxu0
      %v431 = vld [vmem:[%s5] sm:$0xff]
      %v432 = vld [vmem:[%s5 + $0x8] sm:$0xff]
      %v433 = vld [vmem:[%s3] sm:$0xff]
      %v434 = vld [vmem:[%s3 + $0x8] sm:$0xff]
      %v435 = vld [vmem:[%s4] sm:$0xff]
      %v436 = vld [vmem:[%s4 + $0x8] sm:$0xff]
      %v437 = vadd.f32 %v423, %v425
      %438 = vadd.xlane.f32.xlu0 %v437
      %v439 = vpop.xlane.xlu0 %438
      %v440 = vadd.f32 %v427, %v429
      %441 = vadd.xlane.f32.xlu0 %v440
      %v442 = vpop.xlane.xlu0 %441
      %v443 = vmul.f32 %v423, %v423
      %v444 = vmul.f32 %v425, %v425
      %v445 = vmul.f32 %v427, %v427
      %v446 = vmul.f32 %v429, %v429
      %v447 = vadd.f32 %v443, %v444
      %448 = vadd.xlane.f32.xlu0 %v447
      %v449 = vpop.xlane.xlu0 %448
      %v450 = vadd.f32 %v445, %v446
      %451 = vadd.xlane.f32.xlu0 %v450
      %v452 = vpop.xlane.xlu0 %451
      %v454 = vsel %vm384, %v431, 0
      %v457 = vsel %vm384, %v432, 0
      %459 = vmatprep.subr.mxu0 0.0
      %460 = vmatpush1.msra.mxu0 0.0
      %461 = vmatprep.subr.mxu0 0.0
      %462 = vmatpush1.msra.mxu0 0.0
      %463 = vmatprep.subr.mxu0 0.0
      %464 = vmatpush1.msra.mxu0 0.0
      %465 = vmatprep.subr.mxu0 0.0
      %466 = vmatpush1.msra.mxu0 0.0
      %467 = vmatprep.subr.mxu0 0.0
      %468 = vmatpush1.msra.mxu0 0.0
      %469 = vmatprep.subr.mxu0 0.0
      %470 = vmatpush1.msra.mxu0 0.0
      %471 = vmatprep.subr.mxu0 0.0
      %472 = vmatpush1.msra.mxu0 0.0
      %473 = vmatprep.subr.mxu0 0.0
      %474 = vmatpush1.msra.mxu0 0.0
      %475 = vmatprep.subr.mxu0 0.0
      %476 = vmatpush1.msra.mxu0 0.0
      %477 = vmatprep.subr.mxu0 0.0
      %478 = vmatpush1.msra.mxu0 0.0
      %479 = vmatprep.subr.mxu0 0.0
      %480 = vmatpush1.msra.mxu0 0.0
      %481 = vmatprep.subr.mxu0 0.0
      %482 = vmatpush1.msra.mxu0 0.0
      %483 = vmatprep.subr.mxu0 0.0
      %484 = vmatpush1.msra.mxu0 0.0
      %485 = vmatprep.subr.mxu0 0.0
      %486 = vmatpush1.msra.mxu0 0.0
      %487 = vmatprep.subr.mxu0 0.0
      %488 = vmatpush1.msra.mxu0 %v442
      %489 = vmatprep.subr.mxu0 0.0
      %490 = vmatpush1.msra.mxu0 %v439
      %491 = vmatprep.subr.mxu0 0.0
      %492 = vmatpush2.msra.mxu0 0.0
      %493 = vmatprep.subr.mxu0 0.0
      %494 = vmatpush2.msra.mxu0 0.0
      %495 = vmatprep.subr.mxu0 0.0
      %496 = vmatpush2.msra.mxu0 0.0
      %497 = vmatprep.subr.mxu0 0.0
      %498 = vmatpush2.msra.mxu0 0.0
      %499 = vmatprep.subr.mxu0 0.0
      %500 = vmatpush2.msra.mxu0 0.0
      %501 = vmatprep.subr.mxu0 0.0
      %502 = vmatpush2.msra.mxu0 0.0
      %503 = vmatprep.subr.mxu0 0.0
      %504 = vmatpush2.msra.mxu0 0.0
      %505 = vmatprep.subr.mxu0 0.0
      %506 = vmatpush2.msra.mxu0 0.0
      %507 = vmatprep.subr.mxu0 0.0
      %508 = vmatpush2.msra.mxu0 0.0
      %509 = vmatprep.subr.mxu0 0.0
      %510 = vmatpush2.msra.mxu0 0.0
      %511 = vmatprep.subr.mxu0 0.0
      %512 = vmatpush2.msra.mxu0 0.0
      %513 = vmatprep.subr.mxu0 0.0
      %514 = vmatpush2.msra.mxu0 0.0
      %515 = vmatprep.subr.mxu0 0.0
      %516 = vmatpush2.msra.mxu0 0.0
      %517 = vmatprep.subr.mxu0 0.0
      %518 = vmatpush2.msra.mxu0 0.0
      %519 = vmatprep.subr.mxu0 0.0
      %520 = vmatpush2.msra.mxu0 0.0
      %521 = vmatprep.subr.mxu0 0.0
      %522 = vmatpush2.msra.mxu0 0.0
      %523 = vmatprep.mubr.f32.mxu0 0.0
      %524 = vmatmul.mubr.f32.gmra.mxu0 %v454
      %v525 = vpop.f32.mrf.mxu0
      %v526 = vadd.f32 0.0, %v525
      %v527 = vpop.f32.mrf.mxu0
      %528 = vmatprep.mubr.f32.mxu0 0.0
      %529 = vmatmul.mubr.f32.gmra.mxu0 %v457
      %v530 = vpop.f32.mrf.mxu0
      %v531 = vadd.f32 0.0, %v530
      %v532 = vpop.f32.mrf.mxu0
      %533 = vdwg.mxu0
      %534 = vmatprep.subr.mxu0 0.0
      %535 = vmatpush1.msra.mxu0 0.0
      %536 = vmatprep.subr.mxu0 0.0
      %537 = vmatpush1.msra.mxu0 0.0
      %538 = vmatprep.subr.mxu0 0.0
      %539 = vmatpush1.msra.mxu0 0.0
      %540 = vmatprep.subr.mxu0 0.0
      %541 = vmatpush1.msra.mxu0 0.0
      %542 = vmatprep.subr.mxu0 0.0
      %543 = vmatpush1.msra.mxu0 0.0
      %544 = vmatprep.subr.mxu0 0.0
      %545 = vmatpush1.msra.mxu0 0.0
      %546 = vmatprep.subr.mxu0 0.0
      %547 = vmatpush1.msra.mxu0 0.0
      %548 = vmatprep.subr.mxu0 0.0
      %549 = vmatpush1.msra.mxu0 0.0
      %550 = vmatprep.subr.mxu0 0.0
      %551 = vmatpush1.msra.mxu0 0.0
      %552 = vmatprep.subr.mxu0 0.0
      %553 = vmatpush1.msra.mxu0 0.0
      %554 = vmatprep.subr.mxu0 0.0
      %555 = vmatpush1.msra.mxu0 0.0
      %556 = vmatprep.subr.mxu0 0.0
      %557 = vmatpush1.msra.mxu0 0.0
      %558 = vmatprep.subr.mxu0 0.0
      %559 = vmatpush1.msra.mxu0 0.0
      %560 = vmatprep.subr.mxu0 0.0
      %561 = vmatpush1.msra.mxu0 0.0
      %562 = vmatprep.subr.mxu0 0.0
      %563 = vmatpush1.msra.mxu0 %v452
      %564 = vmatprep.subr.mxu0 0.0
      %565 = vmatpush1.msra.mxu0 %v449
      %566 = vmatprep.subr.mxu0 0.0
      %567 = vmatpush2.msra.mxu0 0.0
      %568 = vmatprep.subr.mxu0 0.0
      %569 = vmatpush2.msra.mxu0 0.0
      %570 = vmatprep.subr.mxu0 0.0
      %571 = vmatpush2.msra.mxu0 0.0
      %572 = vmatprep.subr.mxu0 0.0
      %573 = vmatpush2.msra.mxu0 0.0
      %574 = vmatprep.subr.mxu0 0.0
      %575 = vmatpush2.msra.mxu0 0.0
      %576 = vmatprep.subr.mxu0 0.0
      %577 = vmatpush2.msra.mxu0 0.0
      %578 = vmatprep.subr.mxu0 0.0
      %579 = vmatpush2.msra.mxu0 0.0
      %580 = vmatprep.subr.mxu0 0.0
      %581 = vmatpush2.msra.mxu0 0.0
      %582 = vmatprep.subr.mxu0 0.0
      %583 = vmatpush2.msra.mxu0 0.0
      %584 = vmatprep.subr.mxu0 0.0
      %585 = vmatpush2.msra.mxu0 0.0
      %586 = vmatprep.subr.mxu0 0.0
      %587 = vmatpush2.msra.mxu0 0.0
      %588 = vmatprep.subr.mxu0 0.0
      %589 = vmatpush2.msra.mxu0 0.0
      %590 = vmatprep.subr.mxu0 0.0
      %591 = vmatpush2.msra.mxu0 0.0
      %592 = vmatprep.subr.mxu0 0.0
      %593 = vmatpush2.msra.mxu0 0.0
      %594 = vmatprep.subr.mxu0 0.0
      %595 = vmatpush2.msra.mxu0 0.0
      %596 = vmatprep.subr.mxu0 0.0
      %597 = vmatpush2.msra.mxu0 0.0
      %598 = vmatprep.mubr.f32.mxu0 0.0
      %599 = vmatmul.mubr.f32.gmra.mxu0 %v454
      %v600 = vpop.f32.mrf.mxu0
      %v601 = vadd.f32 0.0, %v600
      %v602 = vpop.f32.mrf.mxu0
      %603 = vmatprep.mubr.f32.mxu0 0.0
      %604 = vmatmul.mubr.f32.gmra.mxu0 %v457
      %v605 = vpop.f32.mrf.mxu0
      %v606 = vadd.f32 0.0, %v605
      %v607 = vpop.f32.mrf.mxu0
      %608 = vdwg.mxu0
      %v609 = vmul.f32 %v526, %v526
      %v610 = vmul.f32 %v531, %v531
      %v611 = vsub.f32 %v601, %v609
      %v612 = vsub.f32 %v606, %v610
      %v613 = vmax.f32 %v611, 0.0
      %v614 = vmax.f32 %v612, 0.0
      %v615 = vadd.f32 %v613, 1e-05
      %v616 = vadd.f32 %v614, 1e-05
      %v617 = vrsqrt.pop %v615
      %v618 = vrsqrt.pop %v616
      %620 = vset.pattern.permute.xlu0 0
      %621 = vperm.xlu0 %620, %v526
      %v622 = vpop.permute.xlu0 %621
      %625 = vset.pattern.permute.xlu0 0
      %626 = vperm.xlu0 %625, %v531
      %v627 = vpop.permute.xlu0 %626
      %v629 = vsub.f32 %v423, %v622
      %v630 = vsub.f32 %v425, %v622
      %v631 = vsub.f32 %v427, %v627
      %v632 = vsub.f32 %v429, %v627
      %v633 = vmul.f32 %v617, %v433
      %v634 = vmul.f32 %v618, %v434
      %636 = vset.pattern.permute.xlu0 0
      %637 = vperm.xlu0 %636, %v633
      %v638 = vpop.permute.xlu0 %637
      %641 = vset.pattern.permute.xlu0 0
      %642 = vperm.xlu0 %641, %v634
      %v643 = vpop.permute.xlu0 %642
      %v645 = vmul.f32 %v629, %v638
      %v646 = vmul.f32 %v630, %v638
      %v647 = vmul.f32 %v631, %v643
      %v648 = vmul.f32 %v632, %v643
      %650 = vset.pattern.permute.xlu0 0
      %651 = vperm.xlu0 %650, %v435
      %v652 = vpop.permute.xlu0 %651
      %655 = vset.pattern.permute.xlu0 0
      %656 = vperm.xlu0 %655, %v436
      %v657 = vpop.permute.xlu0 %656
      %v659 = vadd.f32 %v645, %v652
      %v660 = vadd.f32 %v646, %v652
      %v661 = vadd.f32 %v647, %v657
      %v662 = vadd.f32 %v648, %v657
      %v663 = vmax.f32 %v659, 0.0
      %v664 = vmax.f32 %v660, 0.0
      %v665 = vmax.f32 %v661, 0.0
      %v666 = vmax.f32 %v662, 0.0
      %v667 = vpack.c.bf16 %v665, %v663
      %v668 = vpack.c.bf16 %v666, %v664
      %v671 = vunpack.c.l.b16 %v667
      %v672 = vunpack.c.l.b16 %v668
      %v673 = vunpack.c.h.b16 %v667
      %v674 = vunpack.c.h.b16 %v668
      %v675 = vpack.c.b16 %v672, %v671
      %v676 = vpack.c.b16 %v674, %v673
      %679 = vst [vmem:[%s251] sm:$0xff] %v675
      %680 = vst [vmem:[%s251 + $0x8] sm:$0xff] %v676
      %p681 = scmp.lt.s32.totalorder %s17, 1
      %s682 = scalar_select %p681, %s17, 1
      %s683 = smul.addr %s682, 4
      %s684 = smul.addr %s683, 4
      %s685 = scalar_lea.vmem %s6, %s684
      // Predicated region
      $region45: #{unet2d_forward.13} parent=43 // pred_check
        %p686 = pneg %p166
      $region46: #{unet2d_forward.13} parent=43 // pred_check_branch
        %688 = sbr.rel (%p686) target = $region48
      $region47: #{unet2d_forward.13} parent=43 // pred_region
        _
      $region48: #{unet2d_forward.13} parent=43 // pred_fallthru
        _
    $region44: #{unet2d_forward.13} parent=5 // pred_fallthru
      _
    %p689 = scmp.le.s32.totalorder 2, %s12
    // Predicated region
    $region49: #{unet2d_forward.13} parent=5 // pred_check
      %p690 = pneg %p689
    $region50: #{unet2d_forward.13} parent=5 // pred_check_branch
      %692 = sbr.rel (%p690) target = $region52
    $region51: #{unet2d_forward.13} parent=5 // pred_region
      %s693 = ssub.s32 %s12, 2
      // Predicated region
      $region53: #{unet2d_forward.13} parent=51 // pred_check
        %p694 = pneg %p172
      $region54: #{unet2d_forward.13} parent=51 // pred_check_branch
        %696 = sbr.rel (%p694) target = $region56
      $region55: #{unet2d_forward.13} parent=51 // pred_region
        %p697 = scmp.lt.s32.totalorder %s18, 1
        %s698 = scalar_select %p697, %s18, 1
        %s699 = smul.addr %s698, 4
        %s700 = smul.addr %s699, 4
        %s701 = scalar_lea.vmem %s6, %s700
      $region56: #{unet2d_forward.13} parent=51 // pred_fallthru
        _
    $region52: #{unet2d_forward.13} parent=5 // pred_fallthru
      _
  $region6: #{unet2d_forward.13} parent=0 // loop_footer
    %s16 = sadd.s32 1, %s12
  $region7: #{unet2d_forward.13} parent=0 // loop_footer_branch
    %11 = sbr.rel target = $region3
  $region8: #{unet2d_forward.13} parent=0 // loop_exit
    _

// kernel: unet2d_forward.14
$region0: #{unet2d_forward.14}
  #allocation0 [shape = 'u32[]', space=smem, size = 0x4, offset = 0x4, fixed_abs, tag = 'smem constant byte address 0x4 - core index']
  #allocation1 [shape = 'u32[144,128]{1,0:T(1,128)}', space=vmem, size = 0x12000, scoped, tag = 'internal scratch']
  %s0 = inlined_call_operand.vmem [shape: bf16[2,144,64], index: 0, kind: input, shape index: {}]
  %s1 = inlined_call_operand.vmem [shape: bf16[32,144], index: 1, kind: input, shape index: {}]
  %s2 = inlined_call_operand.vmem [shape: f32[32,1], index: 2, kind: input, shape index: {}]
  %s3 = inlined_call_operand.vmem [shape: f32[32,1], index: 3, kind: input, shape index: {}]
  %s4 = inlined_call_operand.vmem [shape: f32[32,1], index: 4, kind: input, shape index: {}]
  %s5 = inlined_call_operand.vmem [shape: f32[32,32], index: 5, kind: input, shape index: {}]
  %s6 = inlined_call_operand.vmem [shape: bf16[2,32,64], index: 6, kind: output, shape index: {}]
  %s7 = sld [smem:[#allocation0]]
  $region57: #{unet2d_forward.14} parent=0
    _
  %s9 = ssub.s32 1, %s7
  %s10 = scalar_select 0, %s9, %s7
  loop: start=0, step=1, limit=4
  $region2: #{unet2d_forward.14} parent=0 // loop_pre_header
    _
  $region3: #{unet2d_forward.14} parent=0 // loop_header
    %s12 = sphi 0, %s16
    %p13 = scmp.ge.s32.totalorder %s12, 4
    %s22 = sphi 0, %s24
    %s25 = sphi 0, %s22
    %s26 = sphi 0, %s25
    %s42 = sphi 0, %s26
    %s46 = sphi 0, %s46
    %s48 = sphi 0, %s46
    %s49 = sphi 0, %s48
    %s63 = sphi 0, %s49
    %s67 = sphi 0, %s67
    %s69 = sphi 0, %s67
    %s70 = sphi 0, %s69
    %s84 = sphi 0, %s70
    %s88 = sphi 0, %s88
    %s90 = sphi 0, %s88
    %s91 = sphi 0, %s90
    %s105 = sphi 0, %s91
    %s109 = sphi 0, %s109
    %s111 = sphi 0, %s109
    %s112 = sphi 0, %s111
    %s126 = sphi 0, %s112
    %s130 = sphi 0, %s130
    %s132 = sphi 0, %s130
    %s133 = sphi 0, %s132
    %s147 = sphi 0, %s133
    %s153 = sphi 0, %s155
    %s156 = sphi 0, %s153
    %s157 = sphi 0, %s156
    %s173 = sphi 0, %s157
  $region4: #{unet2d_forward.14} parent=0 // loop_header_branch
    %15 = sbr.rel (%p13) target = $region8
  $region5: #{unet2d_forward.14} parent=0 // loop_body
    %s17 = ssub.s32 %s12, 1
    %s18 = ssub.s32 %s12, 2
    %s19 = sadd.s32 %s12, 1
    %s20 = ssub.s32 %s12, %s19
    %p21 = scmp.eq.s32.totalorder %s20, 0
    %s23 = sadd.s32 %s22, 1
    %s24 = scalar_select %p21, %s22, %s23
    %p27 = pneg %p21
    %p28 = scmp.eq.s32.totalorder %s12, 1
    %p29 = por %p27, %p28
    %p30 = scmp.ne.s32.totalorder %s22, %s25
    %p31 = scmp.eq.s32.totalorder %s12, 0
    %p32 = por %p30, %p31
    %p33 = scmp.ne.s32.totalorder %s22, %s25
    %p34 = scmp.eq.s32.totalorder %s17, 1
    %p35 = por %p33, %p34
    %p36 = scmp.ne.s32.totalorder %s25, %s26
    %p37 = scmp.eq.s32.totalorder %s17, 0
    %p38 = por %p36, %p37
    %p39 = scmp.ne.s32.totalorder %s25, %s26
    %p40 = scmp.eq.s32.totalorder %s18, 1
    %p41 = por %p39, %p40
    %p43 = scmp.ne.s32.totalorder %s26, %s42
    %p44 = scmp.eq.s32.totalorder %s18, 0
    %p45 = por %p43, %p44
    %s47 = sadd.s32 %s46, 1
    %p50 = scmp.eq.s32.totalorder %s12, 1
    %p51 = scmp.ne.s32.totalorder %s46, %s48
    %p52 = scmp.eq.s32.totalorder %s12, 0
    %p53 = por %p51, %p52
    %p54 = scmp.ne.s32.totalorder %s46, %s48
    %p55 = scmp.eq.s32.totalorder %s17, 1
    %p56 = por %p54, %p55
    %p57 = scmp.ne.s32.totalorder %s48, %s49
    %p58 = scmp.eq.s32.totalorder %s17, 0
    %p59 = por %p57, %p58
    %p60 = scmp.ne.s32.totalorder %s48, %s49
    %p61 = scmp.eq.s32.totalorder %s18, 1
    %p62 = por %p60, %p61
    %p64 = scmp.ne.s32.totalorder %s49, %s63
    %p65 = scmp.eq.s32.totalorder %s18, 0
    %p66 = por %p64, %p65
    %s68 = sadd.s32 %s67, 1
    %p71 = scmp.eq.s32.totalorder %s12, 1
    %p72 = scmp.ne.s32.totalorder %s67, %s69
    %p73 = scmp.eq.s32.totalorder %s12, 0
    %p74 = por %p72, %p73
    %p75 = scmp.ne.s32.totalorder %s67, %s69
    %p76 = scmp.eq.s32.totalorder %s17, 1
    %p77 = por %p75, %p76
    %p78 = scmp.ne.s32.totalorder %s69, %s70
    %p79 = scmp.eq.s32.totalorder %s17, 0
    %p80 = por %p78, %p79
    %p81 = scmp.ne.s32.totalorder %s69, %s70
    %p82 = scmp.eq.s32.totalorder %s18, 1
    %p83 = por %p81, %p82
    %p85 = scmp.ne.s32.totalorder %s70, %s84
    %p86 = scmp.eq.s32.totalorder %s18, 0
    %p87 = por %p85, %p86
    %s89 = sadd.s32 %s88, 1
    %p92 = scmp.eq.s32.totalorder %s12, 1
    %p93 = scmp.ne.s32.totalorder %s88, %s90
    %p94 = scmp.eq.s32.totalorder %s12, 0
    %p95 = por %p93, %p94
    %p96 = scmp.ne.s32.totalorder %s88, %s90
    %p97 = scmp.eq.s32.totalorder %s17, 1
    %p98 = por %p96, %p97
    %p99 = scmp.ne.s32.totalorder %s90, %s91
    %p100 = scmp.eq.s32.totalorder %s17, 0
    %p101 = por %p99, %p100
    %p102 = scmp.ne.s32.totalorder %s90, %s91
    %p103 = scmp.eq.s32.totalorder %s18, 1
    %p104 = por %p102, %p103
    %p106 = scmp.ne.s32.totalorder %s91, %s105
    %p107 = scmp.eq.s32.totalorder %s18, 0
    %p108 = por %p106, %p107
    %s110 = sadd.s32 %s109, 1
    %p113 = scmp.eq.s32.totalorder %s12, 1
    %p114 = scmp.ne.s32.totalorder %s109, %s111
    %p115 = scmp.eq.s32.totalorder %s12, 0
    %p116 = por %p114, %p115
    %p117 = scmp.ne.s32.totalorder %s109, %s111
    %p118 = scmp.eq.s32.totalorder %s17, 1
    %p119 = por %p117, %p118
    %p120 = scmp.ne.s32.totalorder %s111, %s112
    %p121 = scmp.eq.s32.totalorder %s17, 0
    %p122 = por %p120, %p121
    %p123 = scmp.ne.s32.totalorder %s111, %s112
    %p124 = scmp.eq.s32.totalorder %s18, 1
    %p125 = por %p123, %p124
    %p127 = scmp.ne.s32.totalorder %s112, %s126
    %p128 = scmp.eq.s32.totalorder %s18, 0
    %p129 = por %p127, %p128
    %s131 = sadd.s32 %s130, 1
    %p134 = scmp.eq.s32.totalorder %s12, 1
    %p135 = scmp.ne.s32.totalorder %s130, %s132
    %p136 = scmp.eq.s32.totalorder %s12, 0
    %p137 = por %p135, %p136
    %p138 = scmp.ne.s32.totalorder %s130, %s132
    %p139 = scmp.eq.s32.totalorder %s17, 1
    %p140 = por %p138, %p139
    %p141 = scmp.ne.s32.totalorder %s132, %s133
    %p142 = scmp.eq.s32.totalorder %s17, 0
    %p143 = por %p141, %p142
    %p144 = scmp.ne.s32.totalorder %s132, %s133
    %p145 = scmp.eq.s32.totalorder %s18, 1
    %p146 = por %p144, %p145
    %p148 = scmp.ne.s32.totalorder %s133, %s147
    %p149 = scmp.eq.s32.totalorder %s18, 0
    %p150 = por %p148, %p149
    %s151 = ssub.s32 %s12, %s19
    %p152 = scmp.eq.s32.totalorder %s151, 0
    %s154 = sadd.s32 %s153, 1
    %s155 = scalar_select %p152, %s153, %s154
    %p158 = pneg %p152
    %p159 = scmp.eq.s32.totalorder %s12, 1
    %p160 = por %p158, %p159
    %p161 = scmp.ne.s32.totalorder %s153, %s156
    %p162 = scmp.eq.s32.totalorder %s12, 0
    %p163 = por %p161, %p162
    %p164 = scmp.ne.s32.totalorder %s153, %s156
    %p165 = scmp.eq.s32.totalorder %s17, 1
    %p166 = por %p164, %p165
    %p167 = scmp.ne.s32.totalorder %s156, %s157
    %p168 = scmp.eq.s32.totalorder %s17, 0
    %p169 = por %p167, %p168
    %p170 = scmp.ne.s32.totalorder %s156, %s157
    %p171 = scmp.eq.s32.totalorder %s18, 1
    %p172 = por %p170, %p171
    %p174 = scmp.ne.s32.totalorder %s157, %s173
    %p175 = scmp.eq.s32.totalorder %s18, 0
    %p176 = por %p174, %p175
    %p177 = scmp.le.s32.totalorder 1, %s12
    %p178 = scmp.lt.s32.totalorder %s12, 3
    %p179 = pnand %p177, %p178
    %p180 = pneg %p179
    // Predicated region
    $region9: #{unet2d_forward.14} parent=5 // pred_check
      _
    $region10: #{unet2d_forward.14} parent=5 // pred_check_branch
      %182 = sbr.rel (%p179) target = $region12
    $region11: #{unet2d_forward.14} parent=5 // pred_region
      %s183 = ssub.s32 %s12, 1
      // Predicated region
      $region13: #{unet2d_forward.14} parent=11 // pred_check
        %p184 = pneg %p59
      $region14: #{unet2d_forward.14} parent=11 // pred_check_branch
        %186 = sbr.rel (%p184) target = $region16
      $region15: #{unet2d_forward.14} parent=11 // pred_region
        _
      $region16: #{unet2d_forward.14} parent=11 // pred_fallthru
        _
      // Predicated region
      $region17: #{unet2d_forward.14} parent=11 // pred_check
        %p187 = pneg %p80
      $region18: #{unet2d_forward.14} parent=11 // pred_check_branch
        %189 = sbr.rel (%p187) target = $region20
      $region19: #{unet2d_forward.14} parent=11 // pred_region
        _
      $region20: #{unet2d_forward.14} parent=11 // pred_fallthru
        _
      // Predicated region
      $region21: #{unet2d_forward.14} parent=11 // pred_check
        %p190 = pneg %p101
      $region22: #{unet2d_forward.14} parent=11 // pred_check_branch
        %192 = sbr.rel (%p190) target = $region24
      $region23: #{unet2d_forward.14} parent=11 // pred_region
        _
      $region24: #{unet2d_forward.14} parent=11 // pred_fallthru
        _
      // Predicated region
      $region25: #{unet2d_forward.14} parent=11 // pred_check
        %p193 = pneg %p122
      $region26: #{unet2d_forward.14} parent=11 // pred_check_branch
        %195 = sbr.rel (%p193) target = $region28
      $region27: #{unet2d_forward.14} parent=11 // pred_region
        _
      $region28: #{unet2d_forward.14} parent=11 // pred_fallthru
        _
      // Predicated region
      $region29: #{unet2d_forward.14} parent=11 // pred_check
        %p196 = pneg %p143
      $region30: #{unet2d_forward.14} parent=11 // pred_check_branch
        %198 = sbr.rel (%p196) target = $region32
      $region31: #{unet2d_forward.14} parent=11 // pred_region
        _
      $region32: #{unet2d_forward.14} parent=11 // pred_fallthru
        _
    $region12: #{unet2d_forward.14} parent=5 // pred_fallthru
      _
    %p199 = scmp.lt.s32.totalorder %s12, 2
    // Predicated region
    $region33: #{unet2d_forward.14} parent=5 // pred_check
      %p200 = pneg %p199
    $region34: #{unet2d_forward.14} parent=5 // pred_check_branch
      %202 = sbr.rel (%p200) target = $region36
    $region35: #{unet2d_forward.14} parent=5 // pred_region
      // Predicated region
      $region37: #{unet2d_forward.14} parent=35 // pred_check
        %p203 = pneg %p32
      $region38: #{unet2d_forward.14} parent=35 // pred_check_branch
        %205 = sbr.rel (%p203) target = $region40
      $region39: #{unet2d_forward.14} parent=35 // pred_region
        %p206 = scmp.lt.s32.totalorder %s12, 1
        %s207 = scalar_select %p206, %s12, 1
        %s208 = smul.addr %s207, 18
        %s209 = smul.addr %s208, 4
        %s210 = scalar_lea.vmem %s0, %s209
      $region40: #{unet2d_forward.14} parent=35 // pred_fallthru
        _
    $region36: #{unet2d_forward.14} parent=5 // pred_fallthru
      _
    %p211 = scmp.le.s32.totalorder 1, %s12
    %p212 = scmp.lt.s32.totalorder %s12, 3
    %p213 = pnand %p211, %p212
    %p214 = pneg %p213
    // Predicated region
    $region41: #{unet2d_forward.14} parent=5 // pred_check
      _
    $region42: #{unet2d_forward.14} parent=5 // pred_check_branch
      %216 = sbr.rel (%p213) target = $region44
    $region43: #{unet2d_forward.14} parent=5 // pred_region
      %s217 = ssub.s32 %s12, 1
      %p218 = scmp.lt.s32.totalorder %s17, 1
      %s219 = scalar_select %p218, %s17, 1
      %s220 = smul.addr %s219, 18
      %s221 = smul.addr %s220, 4
      %s222 = scalar_lea.vmem %s0, %s221
      %p223 = pneg %p38
      %p224 = pneg %p35
      %p225 = pneg %p59
      %p226 = pneg %p56
      %p227 = pneg %p80
      %p228 = pneg %p77
      %p229 = pneg %p101
      %p230 = pneg %p98
      %p231 = pneg %p122
      %p232 = pneg %p119
      %p233 = pneg %p143
      %p234 = pneg %p140
      %p235 = pneg %p169
      %p236 = pneg %p166
      %p237 = scmp.lt.s32.totalorder %s17, 1
      %s238 = scalar_select %p237, %s17, 1
      %s239 = smul.addr %s238, 4
      %s240 = smul.addr %s239, 4
      %s241 = scalar_lea.vmem %s6, %s240
      %p242 = scmp.lt.s32.totalorder %s17, 1
      %s243 = scalar_select %p242, %s17, 1
      %s244 = smul.addr %s243, 18
      %s245 = smul.addr %s244, 4
      %s246 = scalar_lea.vmem %s0, %s245
      %p247 = scmp.lt.s32.totalorder %s17, 1
      %s248 = scalar_select %p247, %s17, 1
      %s249 = smul.addr %s248, 4
      %s250 = smul.addr %s249, 4
      %s251 = scalar_lea.vmem %s6, %s250
      %v253 = vld [vmem:[%s1] sm:$0xff]
      %v254 = vld [vmem:[%s1 + $0x8] sm:$0xff]
      %v255 = vld [vmem:[%s1 + $0x10] sm:$0xff]
      %v256 = vld [vmem:[%s1 + $0x18] sm:$0xff]
      %v257 = vld [vmem:[%s246] sm:$0xf]
      %v258 = vld [vmem:[%s246 + $0x4] sm:$0xf]
      %v259 = vld [vmem:[%s246 + $0x8] sm:$0xf]
      %v260 = vld [vmem:[%s246 + $0xc] sm:$0xf]
      %v261 = vld [vmem:[%s246 + $0x10] sm:$0xf]
      %v262 = vld [vmem:[%s246 + $0x14] sm:$0xf]
      %v263 = vld [vmem:[%s246 + $0x18] sm:$0xf]
      %v264 = vld [vmem:[%s246 + $0x1c] sm:$0xf]
      %v265 = vld [vmem:[%s246 + $0x20] sm:$0xf]
      %v266 = vld [vmem:[%s246 + $0x24] sm:$0xf]
      %v267 = vld [vmem:[%s246 + $0x28] sm:$0xf]
      %v268 = vld [vmem:[%s246 + $0x2c] sm:$0xf]
      %v269 = vld [vmem:[%s246 + $0x30] sm:$0xf]
      %v270 = vld [vmem:[%s246 + $0x34] sm:$0xf]
      %v271 = vld [vmem:[%s246 + $0x38] sm:$0xf]
      %v272 = vld [vmem:[%s246 + $0x3c] sm:$0xf]
      %v273 = vld [vmem:[%s246 + $0x40] sm:$0xf]
      %v274 = vld [vmem:[%s246 + $0x44] sm:$0xf]
      %v275 = vld [vmem:[%s2] sm:$0xff]
      %v276 = vld [vmem:[%s2 + $0x8] sm:$0xff]
      %v277 = vld [vmem:[%s2 + $0x10] sm:$0xff]
      %v278 = vld [vmem:[%s2 + $0x18] sm:$0xff]
      %280 = vset.pattern.permute.xlu0 0
      %281 = vperm.xlu0 %280, %v275
      %v282 = vpop.permute.xlu0 %281
      %285 = vset.pattern.permute.xlu0 0
      %286 = vperm.xlu0 %285, %v276
      %v287 = vpop.permute.xlu0 %286
      %290 = vset.pattern.permute.xlu0 0
      %291 = vperm.xlu0 %290, %v277
      %v292 = vpop.permute.xlu0 %291
      %295 = vset.pattern.permute.xlu0 0
      %296 = vperm.xlu0 %295, %v278
      %v297 = vpop.permute.xlu0 %296
      %v303 = vunpack.c.l.b16 %v253
      %v304 = vunpack.c.h.b16 %v253
      %v305 = vunpack.c.l.b16 %v254
      %v306 = vunpack.c.h.b16 %v254
      %v307 = vunpack.c.l.b16 %v255
      %v308 = vunpack.c.h.b16 %v255
      %v309 = vunpack.c.l.b16 %v256
      %v310 = vunpack.c.h.b16 %v256
      %v311 = vpack.c.b16 %v305, %v303
      %v312 = vpack.c.b16 %v306, %v304
      %v313 = vpack.c.b16 %v309, %v307
      %v314 = vpack.c.b16 %v310, %v308
      %v335 = vunpack.c.l.b16 %v257
      %v336 = vunpack.c.l.b16 %v258
      %v337 = vunpack.c.l.b16 %v259
      %v338 = vunpack.c.l.b16 %v260
      %v339 = vunpack.c.l.b16 %v261
      %v340 = vunpack.c.l.b16 %v262
      %v341 = vunpack.c.l.b16 %v263
      %v342 = vunpack.c.l.b16 %v264
      %v343 = vunpack.c.l.b16 %v265
      %v344 = vunpack.c.l.b16 %v266
      %v345 = vunpack.c.l.b16 %v267
      %v346 = vunpack.c.l.b16 %v268
      %v347 = vunpack.c.l.b16 %v269
      %v348 = vunpack.c.l.b16 %v270
      %v349 = vunpack.c.l.b16 %v271
      %v350 = vunpack.c.l.b16 %v272
      %v351 = vunpack.c.l.b16 %v273
      %v352 = vunpack.c.l.b16 %v274
      %v353 = vpack.c.b16 %v336, %v335
      %v354 = vpack.c.b16 %v338, %v337
      %v355 = vpack.c.b16 %v340, %v339
      %v356 = vpack.c.b16 %v342, %v341
      %v357 = vpack.c.b16 %v344, %v343
      %v358 = vpack.c.b16 %v346, %v345
      %v359 = vpack.c.b16 %v348, %v347
      %v360 = vpack.c.b16 %v350, %v349
      %v361 = vpack.c.b16 %v352, %v351
      %vm371 = vcmask 130048
      %v373 = vsel %vm371, %v312, 0
      %v376 = vsel %vm371, %v314, 0
      %378 = vmatprep.subr.bf16.mxu0 0
      %379 = vmatpush1.bf16.msra.mxu0 %v360
      %380 = vmatprep.subr.bf16.mxu0 0
      %381 = vmatpush1.bf16.msra.mxu0 %v359
      %382 = vmatprep.subr.bf16.mxu0 0
      %383 = vmatpush1.bf16.msra.mxu0 %v358
      %384 = vmatprep.subr.bf16.mxu0 0
      %385 = vmatpush1.bf16.msra.mxu0 %v357
      %386 = vmatprep.subr.bf16.mxu0 0
      %387 = vmatpush1.bf16.msra.mxu0 %v356
      %388 = vmatprep.subr.bf16.mxu0 0
      %389 = vmatpush1.bf16.msra.mxu0 %v355
      %390 = vmatprep.subr.bf16.mxu0 0
      %391 = vmatpush1.bf16.msra.mxu0 %v354
      %392 = vmatprep.subr.bf16.mxu0 0
      %393 = vmatpush1.bf16.msra.mxu0 %v353
      %394 = vmatprep.subr.bf16.mxu0 0
      %395 = vmatpush2.bf16.msra.mxu0 0
      %396 = vmatprep.subr.bf16.mxu0 0
      %397 = vmatpush2.bf16.msra.mxu0 0
      %398 = vmatprep.subr.bf16.mxu0 0
      %399 = vmatpush2.bf16.msra.mxu0 0
      %400 = vmatprep.subr.bf16.mxu0 0
      %401 = vmatpush2.bf16.msra.mxu0 0
      %402 = vmatprep.subr.bf16.mxu0 0
      %403 = vmatpush2.bf16.msra.mxu0 0
      %404 = vmatprep.subr.bf16.mxu0 0
      %405 = vmatpush2.bf16.msra.mxu0 0
      %406 = vmatprep.subr.bf16.mxu0 0
      %407 = vmatpush2.bf16.msra.mxu0 0
      %408 = vmatprep.subr.bf16.mxu0 0
      %409 = vmatpush2.bf16.msra.mxu0 %v361
      %410 = vmatprep.mubr.bf16.mxu0 %v373
      %411 = vmatmul.mubr.bf16.gmra.mxu0 %v311
      %v412 = vpop.f32.mrf.mxu0
      %v413 = vadd.f32 %v282, %v412
      %v414 = vpop.f32.mrf.mxu0
      %v415 = vpop.f32.mrf.mxu0
      %v416 = vadd.f32 %v287, %v415
      %v417 = vpop.f32.mrf.mxu0
      %418 = vmatprep.mubr.bf16.mxu0 %v376
      %419 = vmatmul.mubr.bf16.gmra.mxu0 %v313
      %v420 = vpop.f32.mrf.mxu0
      %v421 = vadd.f32 %v292, %v420
      %v422 = vpop.f32.mrf.mxu0
      %v423 = vpop.f32.mrf.mxu0
      %v424 = vadd.f32 %v297, %v423
      %v425 = vpop.f32.mrf.mxu0
      %426 = vdwg.mxu0
      %v427 = vld [vmem:[%s5] sm:$0xff]
      %v428 = vld [vmem:[%s5 + $0x8] sm:$0xff]
      %v429 = vld [vmem:[%s5 + $0x10] sm:$0xff]
      %v430 = vld [vmem:[%s5 + $0x18] sm:$0xff]
      %v431 = vld [vmem:[%s3] sm:$0xff]
      %v432 = vld [vmem:[%s3 + $0x8] sm:$0xff]
      %v433 = vld [vmem:[%s3 + $0x10] sm:$0xff]
      %v434 = vld [vmem:[%s3 + $0x18] sm:$0xff]
      %v435 = vld [vmem:[%s4] sm:$0xff]
      %v436 = vld [vmem:[%s4 + $0x8] sm:$0xff]
      %v437 = vld [vmem:[%s4 + $0x10] sm:$0xff]
      %v438 = vld [vmem:[%s4 + $0x18] sm:$0xff]
      %vm439 = vcmask 523264
      %v440 = vsel %vm439, %v413, 0.0
      %441 = vadd.xlane.f32.xlu0 %v440
      %v442 = vpop.xlane.xlu0 %441
      %v443 = vsel %vm439, %v416, 0.0
      %444 = vadd.xlane.f32.xlu0 %v443
      %v445 = vpop.xlane.xlu0 %444
      %v446 = vsel %vm439, %v421, 0.0
      %447 = vadd.xlane.f32.xlu0 %v446
      %v448 = vpop.xlane.xlu0 %447
      %v449 = vsel %vm439, %v424, 0.0
      %450 = vadd.xlane.f32.xlu0 %v449
      %v451 = vpop.xlane.xlu0 %450
      %v452 = vmul.f32 %v413, %v413
      %v453 = vmul.f32 %v416, %v416
      %v454 = vmul.f32 %v421, %v421
      %v455 = vmul.f32 %v424, %v424
      %v456 = vsel %vm439, %v452, 0.0
      %457 = vadd.xlane.f32.xlu0 %v456
      %v458 = vpop.xlane.xlu0 %457
      %v459 = vsel %vm439, %v453, 0.0
      %460 = vadd.xlane.f32.xlu0 %v459
      %v461 = vpop.xlane.xlu0 %460
      %v462 = vsel %vm439, %v454, 0.0
      %463 = vadd.xlane.f32.xlu0 %v462
      %v464 = vpop.xlane.xlu0 %463
      %v465 = vsel %vm439, %v455, 0.0
      %466 = vadd.xlane.f32.xlu0 %v465
      %v467 = vpop.xlane.xlu0 %466
      %vm468 = vcmask 261120
      %v470 = vsel %vm468, %v427, 0
      %v473 = vsel %vm468, %v428, 0
      %v476 = vsel %vm468, %v429, 0
      %v479 = vsel %vm468, %v430, 0
      %481 = vmatprep.subr.mxu0 0.0
      %482 = vmatpush1.msra.mxu0 0.0
      %483 = vmatprep.subr.mxu0 0.0
      %484 = vmatpush1.msra.mxu0 0.0
      %485 = vmatprep.subr.mxu0 0.0
      %486 = vmatpush1.msra.mxu0 0.0
      %487 = vmatprep.subr.mxu0 0.0
      %488 = vmatpush1.msra.mxu0 0.0
      %489 = vmatprep.subr.mxu0 0.0
      %490 = vmatpush1.msra.mxu0 0.0
      %491 = vmatprep.subr.mxu0 0.0
      %492 = vmatpush1.msra.mxu0 0.0
      %493 = vmatprep.subr.mxu0 0.0
      %494 = vmatpush1.msra.mxu0 0.0
      %495 = vmatprep.subr.mxu0 0.0
      %496 = vmatpush1.msra.mxu0 0.0
      %497 = vmatprep.subr.mxu0 0.0
      %498 = vmatpush1.msra.mxu0 0.0
      %499 = vmatprep.subr.mxu0 0.0
      %500 = vmatpush1.msra.mxu0 0.0
      %501 = vmatprep.subr.mxu0 0.0
      %502 = vmatpush1.msra.mxu0 0.0
      %503 = vmatprep.subr.mxu0 0.0
      %504 = vmatpush1.msra.mxu0 0.0
      %505 = vmatprep.subr.mxu0 0.0
      %506 = vmatpush1.msra.mxu0 %v451
      %507 = vmatprep.subr.mxu0 0.0
      %508 = vmatpush1.msra.mxu0 %v448
      %509 = vmatprep.subr.mxu0 0.0
      %510 = vmatpush1.msra.mxu0 %v445
      %511 = vmatprep.subr.mxu0 0.0
      %512 = vmatpush1.msra.mxu0 %v442
      %513 = vmatprep.subr.mxu0 0.0
      %514 = vmatpush2.msra.mxu0 0.0
      %515 = vmatprep.subr.mxu0 0.0
      %516 = vmatpush2.msra.mxu0 0.0
      %517 = vmatprep.subr.mxu0 0.0
      %518 = vmatpush2.msra.mxu0 0.0
      %519 = vmatprep.subr.mxu0 0.0
      %520 = vmatpush2.msra.mxu0 0.0
      %521 = vmatprep.subr.mxu0 0.0
      %522 = vmatpush2.msra.mxu0 0.0
      %523 = vmatprep.subr.mxu0 0.0
      %524 = vmatpush2.msra.mxu0 0.0
      %525 = vmatprep.subr.mxu0 0.0
      %526 = vmatpush2.msra.mxu0 0.0
      %527 = vmatprep.subr.mxu0 0.0
      %528 = vmatpush2.msra.mxu0 0.0
      %529 = vmatprep.subr.mxu0 0.0
      %530 = vmatpush2.msra.mxu0 0.0
      %531 = vmatprep.subr.mxu0 0.0
      %532 = vmatpush2.msra.mxu0 0.0
      %533 = vmatprep.subr.mxu0 0.0
      %534 = vmatpush2.msra.mxu0 0.0
      %535 = vmatprep.subr.mxu0 0.0
      %536 = vmatpush2.msra.mxu0 0.0
      %537 = vmatprep.subr.mxu0 0.0
      %538 = vmatpush2.msra.mxu0 0.0
      %539 = vmatprep.subr.mxu0 0.0
      %540 = vmatpush2.msra.mxu0 0.0
      %541 = vmatprep.subr.mxu0 0.0
      %542 = vmatpush2.msra.mxu0 0.0
      %543 = vmatprep.subr.mxu0 0.0
      %544 = vmatpush2.msra.mxu0 0.0
      %545 = vmatprep.mubr.f32.mxu0 0.0
      %546 = vmatmul.mubr.f32.gmra.mxu0 %v470
      %v547 = vpop.f32.mrf.mxu0
      %v548 = vadd.f32 0.0, %v547
      %v549 = vpop.f32.mrf.mxu0
      %550 = vmatprep.mubr.f32.mxu0 0.0
      %551 = vmatmul.mubr.f32.gmra.mxu0 %v473
      %v552 = vpop.f32.mrf.mxu0
      %v553 = vadd.f32 0.0, %v552
      %v554 = vpop.f32.mrf.mxu0
      %555 = vmatprep.mubr.f32.mxu0 0.0
      %556 = vmatmul.mubr.f32.gmra.mxu0 %v476
      %v557 = vpop.f32.mrf.mxu0
      %v558 = vadd.f32 0.0, %v557
      %v559 = vpop.f32.mrf.mxu0
      %560 = vmatprep.mubr.f32.mxu0 0.0
      %561 = vmatmul.mubr.f32.gmra.mxu0 %v479
      %v562 = vpop.f32.mrf.mxu0
      %v563 = vadd.f32 0.0, %v562
      %v564 = vpop.f32.mrf.mxu0
      %565 = vdwg.mxu0
      %566 = vmatprep.subr.mxu0 0.0
      %567 = vmatpush1.msra.mxu0 0.0
      %568 = vmatprep.subr.mxu0 0.0
      %569 = vmatpush1.msra.mxu0 0.0
      %570 = vmatprep.subr.mxu0 0.0
      %571 = vmatpush1.msra.mxu0 0.0
      %572 = vmatprep.subr.mxu0 0.0
      %573 = vmatpush1.msra.mxu0 0.0
      %574 = vmatprep.subr.mxu0 0.0
      %575 = vmatpush1.msra.mxu0 0.0
      %576 = vmatprep.subr.mxu0 0.0
      %577 = vmatpush1.msra.mxu0 0.0
      %578 = vmatprep.subr.mxu0 0.0
      %579 = vmatpush1.msra.mxu0 0.0
      %580 = vmatprep.subr.mxu0 0.0
      %581 = vmatpush1.msra.mxu0 0.0
      %582 = vmatprep.subr.mxu0 0.0
      %583 = vmatpush1.msra.mxu0 0.0
      %584 = vmatprep.subr.mxu0 0.0
      %585 = vmatpush1.msra.mxu0 0.0
      %586 = vmatprep.subr.mxu0 0.0
      %587 = vmatpush1.msra.mxu0 0.0
      %588 = vmatprep.subr.mxu0 0.0
      %589 = vmatpush1.msra.mxu0 0.0
      %590 = vmatprep.subr.mxu0 0.0
      %591 = vmatpush1.msra.mxu0 %v467
      %592 = vmatprep.subr.mxu0 0.0
      %593 = vmatpush1.msra.mxu0 %v464
      %594 = vmatprep.subr.mxu0 0.0
      %595 = vmatpush1.msra.mxu0 %v461
      %596 = vmatprep.subr.mxu0 0.0
      %597 = vmatpush1.msra.mxu0 %v458
      %598 = vmatprep.subr.mxu0 0.0
      %599 = vmatpush2.msra.mxu0 0.0
      %600 = vmatprep.subr.mxu0 0.0
      %601 = vmatpush2.msra.mxu0 0.0
      %602 = vmatprep.subr.mxu0 0.0
      %603 = vmatpush2.msra.mxu0 0.0
      %604 = vmatprep.subr.mxu0 0.0
      %605 = vmatpush2.msra.mxu0 0.0
      %606 = vmatprep.subr.mxu0 0.0
      %607 = vmatpush2.msra.mxu0 0.0
      %608 = vmatprep.subr.mxu0 0.0
      %609 = vmatpush2.msra.mxu0 0.0
      %610 = vmatprep.subr.mxu0 0.0
      %611 = vmatpush2.msra.mxu0 0.0
      %612 = vmatprep.subr.mxu0 0.0
      %613 = vmatpush2.msra.mxu0 0.0
      %614 = vmatprep.subr.mxu0 0.0
      %615 = vmatpush2.msra.mxu0 0.0
      %616 = vmatprep.subr.mxu0 0.0
      %617 = vmatpush2.msra.mxu0 0.0
      %618 = vmatprep.subr.mxu0 0.0
      %619 = vmatpush2.msra.mxu0 0.0
      %620 = vmatprep.subr.mxu0 0.0
      %621 = vmatpush2.msra.mxu0 0.0
      %622 = vmatprep.subr.mxu0 0.0
      %623 = vmatpush2.msra.mxu0 0.0
      %624 = vmatprep.subr.mxu0 0.0
      %625 = vmatpush2.msra.mxu0 0.0
      %626 = vmatprep.subr.mxu0 0.0
      %627 = vmatpush2.msra.mxu0 0.0
      %628 = vmatprep.subr.mxu0 0.0
      %629 = vmatpush2.msra.mxu0 0.0
      %630 = vmatprep.mubr.f32.mxu0 0.0
      %631 = vmatmul.mubr.f32.gmra.mxu0 %v470
      %v632 = vpop.f32.mrf.mxu0
      %v633 = vadd.f32 0.0, %v632
      %v634 = vpop.f32.mrf.mxu0
      %635 = vmatprep.mubr.f32.mxu0 0.0
      %636 = vmatmul.mubr.f32.gmra.mxu0 %v473
      %v637 = vpop.f32.mrf.mxu0
      %v638 = vadd.f32 0.0, %v637
      %v639 = vpop.f32.mrf.mxu0
      %640 = vmatprep.mubr.f32.mxu0 0.0
      %641 = vmatmul.mubr.f32.gmra.mxu0 %v476
      %v642 = vpop.f32.mrf.mxu0
      %v643 = vadd.f32 0.0, %v642
      %v644 = vpop.f32.mrf.mxu0
      %645 = vmatprep.mubr.f32.mxu0 0.0
      %646 = vmatmul.mubr.f32.gmra.mxu0 %v479
      %v647 = vpop.f32.mrf.mxu0
      %v648 = vadd.f32 0.0, %v647
      %v649 = vpop.f32.mrf.mxu0
      %650 = vdwg.mxu0
      %v651 = vmul.f32 %v548, %v548
      %v652 = vmul.f32 %v553, %v553
      %v653 = vmul.f32 %v558, %v558
      %v654 = vmul.f32 %v563, %v563
      %v655 = vsub.f32 %v633, %v651
      %v656 = vsub.f32 %v638, %v652
      %v657 = vsub.f32 %v643, %v653
      %v658 = vsub.f32 %v648, %v654
      %v659 = vmax.f32 %v655, 0.0
      %v660 = vmax.f32 %v656, 0.0
      %v661 = vmax.f32 %v657, 0.0
      %v662 = vmax.f32 %v658, 0.0
      %v663 = vadd.f32 %v659, 1e-05
      %v664 = vadd.f32 %v660, 1e-05
      %v665 = vadd.f32 %v661, 1e-05
      %v666 = vadd.f32 %v662, 1e-05
      %v667 = vrsqrt.pop %v663
      %v668 = vrsqrt.pop %v664
      %v669 = vrsqrt.pop %v665
      %v670 = vrsqrt.pop %v666
      %672 = vset.pattern.permute.xlu0 0
      %673 = vperm.xlu0 %672, %v548
      %v674 = vpop.permute.xlu0 %673
      %677 = vset.pattern.permute.xlu0 0
      %678 = vperm.xlu0 %677, %v553
      %v679 = vpop.permute.xlu0 %678
      %682 = vset.pattern.permute.xlu0 0
      %683 = vperm.xlu0 %682, %v558
      %v684 = vpop.permute.xlu0 %683
      %687 = vset.pattern.permute.xlu0 0
      %688 = vperm.xlu0 %687, %v563
      %v689 = vpop.permute.xlu0 %688
      %v691 = vsub.f32 %v413, %v674
      %v692 = vsub.f32 %v416, %v679
      %v693 = vsub.f32 %v421, %v684
      %v694 = vsub.f32 %v424, %v689
      %v695 = vmul.f32 %v667, %v431
      %v696 = vmul.f32 %v668, %v432
      %v697 = vmul.f32 %v669, %v433
      %v698 = vmul.f32 %v670, %v434
      %700 = vset.pattern.permute.xlu0 0
      %701 = vperm.xlu0 %700, %v695
      %v702 = vpop.permute.xlu0 %701
      %705 = vset.pattern.permute.xlu0 0
      %706 = vperm.xlu0 %705, %v696
      %v707 = vpop.permute.xlu0 %706
      %710 = vset.pattern.permute.xlu0 0
      %711 = vperm.xlu0 %710, %v697
      %v712 = vpop.permute.xlu0 %711
      %715 = vset.pattern.permute.xlu0 0
      %716 = vperm.xlu0 %715, %v698
      %v717 = vpop.permute.xlu0 %716
      %v719 = vmul.f32 %v691, %v702
      %v720 = vmul.f32 %v692, %v707
      %v721 = vmul.f32 %v693, %v712
      %v722 = vmul.f32 %v694, %v717
      %724 = vset.pattern.permute.xlu0 0
      %725 = vperm.xlu0 %724, %v435
      %v726 = vpop.permute.xlu0 %725
      %729 = vset.pattern.permute.xlu0 0
      %730 = vperm.xlu0 %729, %v436
      %v731 = vpop.permute.xlu0 %730
      %734 = vset.pattern.permute.xlu0 0
      %735 = vperm.xlu0 %734, %v437
      %v736 = vpop.permute.xlu0 %735
      %739 = vset.pattern.permute.xlu0 0
      %740 = vperm.xlu0 %739, %v438
      %v741 = vpop.permute.xlu0 %740
      %v743 = vadd.f32 %v719, %v726
      %v744 = vadd.f32 %v720, %v731
      %v745 = vadd.f32 %v721, %v736
      %v746 = vadd.f32 %v722, %v741
      %v747 = vmax.f32 %v743, 0.0
      %v748 = vmax.f32 %v744, 0.0
      %v749 = vmax.f32 %v745, 0.0
      %v750 = vmax.f32 %v746, 0.0
      %v751 = vpack.c.bf16 %v748, %v747
      %v752 = vpack.c.bf16 %v750, %v749
      %v755 = vunpack.c.l.b16 %v751
      %v756 = vunpack.c.h.b16 %v751
      %v757 = vunpack.c.l.b16 %v752
      %v758 = vunpack.c.h.b16 %v752
      %v759 = vpack.c.b16 %v755, %v755
      %v760 = vpack.c.b16 %v756, %v756
      %v761 = vpack.c.b16 %v757, %v757
      %v762 = vpack.c.b16 %v758, %v758
      %vm767 = vcmask 519168
      %768 = vst.msk [vmem:[%s251] sm:$0xf] %vm767, %v759
      %769 = vst.msk [vmem:[%s251 + $0x4] sm:$0xf] %vm767, %v760
      %770 = vst.msk [vmem:[%s251 + $0x8] sm:$0xf] %vm767, %v761
      %771 = vst.msk [vmem:[%s251 + $0xc] sm:$0xf] %vm767, %v762
      %p772 = scmp.lt.s32.totalorder %s17, 1
      %s773 = scalar_select %p772, %s17, 1
      %s774 = smul.addr %s773, 4
      %s775 = smul.addr %s774, 4
      %s776 = scalar_lea.vmem %s6, %s775
      // Predicated region
      $region45: #{unet2d_forward.14} parent=43 // pred_check
        %p777 = pneg %p166
      $region46: #{unet2d_forward.14} parent=43 // pred_check_branch
        %779 = sbr.rel (%p777) target = $region48
      $region47: #{unet2d_forward.14} parent=43 // pred_region
        _
      $region48: #{unet2d_forward.14} parent=43 // pred_fallthru
        _
    $region44: #{unet2d_forward.14} parent=5 // pred_fallthru
      _
    %p780 = scmp.le.s32.totalorder 2, %s12
    // Predicated region
    $region49: #{unet2d_forward.14} parent=5 // pred_check
      %p781 = pneg %p780
    $region50: #{unet2d_forward.14} parent=5 // pred_check_branch
      %783 = sbr.rel (%p781) target = $region52
    $region51: #{unet2d_forward.14} parent=5 // pred_region
      %s784 = ssub.s32 %s12, 2
      // Predicated region
      $region53: #{unet2d_forward.14} parent=51 // pred_check
        %p785 = pneg %p172
      $region54: #{unet2d_forward.14} parent=51 // pred_check_branch
        %787 = sbr.rel (%p785) target = $region56
      $region55: #{unet2d_forward.14} parent=51 // pred_region
        %p788 = scmp.lt.s32.totalorder %s18, 1
        %s789 = scalar_select %p788, %s18, 1
        %s790 = smul.addr %s789, 4
        %s791 = smul.addr %s790, 4
        %s792 = scalar_lea.vmem %s6, %s791
      $region56: #{unet2d_forward.14} parent=51 // pred_fallthru
        _
    $region52: #{unet2d_forward.14} parent=5 // pred_fallthru
      _
  $region6: #{unet2d_forward.14} parent=0 // loop_footer
    %s16 = sadd.s32 1, %s12
  $region7: #{unet2d_forward.14} parent=0 // loop_footer_branch
    %11 = sbr.rel target = $region3
  $region8: #{unet2d_forward.14} parent=0 // loop_exit
    _

// kernel: unet2d_forward.15
$region0: #{unet2d_forward.15}
  #allocation0 [shape = 'u32[]', space=smem, size = 0x4, offset = 0x4, fixed_abs, tag = 'smem constant byte address 0x4 - core index']
  #allocation1 [shape = 'u32[144,128]{1,0:T(1,128)}', space=vmem, size = 0x12000, scoped, tag = 'internal scratch']
  %s0 = inlined_call_operand.vmem [shape: bf16[2,288,64], index: 0, kind: input, shape index: {}]
  %s1 = inlined_call_operand.vmem [shape: bf16[32,288], index: 1, kind: input, shape index: {}]
  %s2 = inlined_call_operand.vmem [shape: f32[32,1], index: 2, kind: input, shape index: {}]
  %s3 = inlined_call_operand.vmem [shape: f32[32,1], index: 3, kind: input, shape index: {}]
  %s4 = inlined_call_operand.vmem [shape: f32[32,1], index: 4, kind: input, shape index: {}]
  %s5 = inlined_call_operand.vmem [shape: f32[32,32], index: 5, kind: input, shape index: {}]
  %s6 = inlined_call_operand.vmem [shape: bf16[2,32,64], index: 6, kind: output, shape index: {}]
  %s7 = sld [smem:[#allocation0]]
  $region57: #{unet2d_forward.15} parent=0
    _
  %s9 = ssub.s32 1, %s7
  %s10 = scalar_select 0, %s9, %s7
  loop: start=0, step=1, limit=4
  $region2: #{unet2d_forward.15} parent=0 // loop_pre_header
    _
  $region3: #{unet2d_forward.15} parent=0 // loop_header
    %s12 = sphi 0, %s16
    %p13 = scmp.ge.s32.totalorder %s12, 4
    %s22 = sphi 0, %s24
    %s25 = sphi 0, %s22
    %s26 = sphi 0, %s25
    %s42 = sphi 0, %s26
    %s46 = sphi 0, %s46
    %s48 = sphi 0, %s46
    %s49 = sphi 0, %s48
    %s63 = sphi 0, %s49
    %s67 = sphi 0, %s67
    %s69 = sphi 0, %s67
    %s70 = sphi 0, %s69
    %s84 = sphi 0, %s70
    %s88 = sphi 0, %s88
    %s90 = sphi 0, %s88
    %s91 = sphi 0, %s90
    %s105 = sphi 0, %s91
    %s109 = sphi 0, %s109
    %s111 = sphi 0, %s109
    %s112 = sphi 0, %s111
    %s126 = sphi 0, %s112
    %s130 = sphi 0, %s130
    %s132 = sphi 0, %s130
    %s133 = sphi 0, %s132
    %s147 = sphi 0, %s133
    %s153 = sphi 0, %s155
    %s156 = sphi 0, %s153
    %s157 = sphi 0, %s156
    %s173 = sphi 0, %s157
  $region4: #{unet2d_forward.15} parent=0 // loop_header_branch
    %15 = sbr.rel (%p13) target = $region8
  $region5: #{unet2d_forward.15} parent=0 // loop_body
    %s17 = ssub.s32 %s12, 1
    %s18 = ssub.s32 %s12, 2
    %s19 = sadd.s32 %s12, 1
    %s20 = ssub.s32 %s12, %s19
    %p21 = scmp.eq.s32.totalorder %s20, 0
    %s23 = sadd.s32 %s22, 1
    %s24 = scalar_select %p21, %s22, %s23
    %p27 = pneg %p21
    %p28 = scmp.eq.s32.totalorder %s12, 1
    %p29 = por %p27, %p28
    %p30 = scmp.ne.s32.totalorder %s22, %s25
    %p31 = scmp.eq.s32.totalorder %s12, 0
    %p32 = por %p30, %p31
    %p33 = scmp.ne.s32.totalorder %s22, %s25
    %p34 = scmp.eq.s32.totalorder %s17, 1
    %p35 = por %p33, %p34
    %p36 = scmp.ne.s32.totalorder %s25, %s26
    %p37 = scmp.eq.s32.totalorder %s17, 0
    %p38 = por %p36, %p37
    %p39 = scmp.ne.s32.totalorder %s25, %s26
    %p40 = scmp.eq.s32.totalorder %s18, 1
    %p41 = por %p39, %p40
    %p43 = scmp.ne.s32.totalorder %s26, %s42
    %p44 = scmp.eq.s32.totalorder %s18, 0
    %p45 = por %p43, %p44
    %s47 = sadd.s32 %s46, 1
    %p50 = scmp.eq.s32.totalorder %s12, 1
    %p51 = scmp.ne.s32.totalorder %s46, %s48
    %p52 = scmp.eq.s32.totalorder %s12, 0
    %p53 = por %p51, %p52
    %p54 = scmp.ne.s32.totalorder %s46, %s48
    %p55 = scmp.eq.s32.totalorder %s17, 1
    %p56 = por %p54, %p55
    %p57 = scmp.ne.s32.totalorder %s48, %s49
    %p58 = scmp.eq.s32.totalorder %s17, 0
    %p59 = por %p57, %p58
    %p60 = scmp.ne.s32.totalorder %s48, %s49
    %p61 = scmp.eq.s32.totalorder %s18, 1
    %p62 = por %p60, %p61
    %p64 = scmp.ne.s32.totalorder %s49, %s63
    %p65 = scmp.eq.s32.totalorder %s18, 0
    %p66 = por %p64, %p65
    %s68 = sadd.s32 %s67, 1
    %p71 = scmp.eq.s32.totalorder %s12, 1
    %p72 = scmp.ne.s32.totalorder %s67, %s69
    %p73 = scmp.eq.s32.totalorder %s12, 0
    %p74 = por %p72, %p73
    %p75 = scmp.ne.s32.totalorder %s67, %s69
    %p76 = scmp.eq.s32.totalorder %s17, 1
    %p77 = por %p75, %p76
    %p78 = scmp.ne.s32.totalorder %s69, %s70
    %p79 = scmp.eq.s32.totalorder %s17, 0
    %p80 = por %p78, %p79
    %p81 = scmp.ne.s32.totalorder %s69, %s70
    %p82 = scmp.eq.s32.totalorder %s18, 1
    %p83 = por %p81, %p82
    %p85 = scmp.ne.s32.totalorder %s70, %s84
    %p86 = scmp.eq.s32.totalorder %s18, 0
    %p87 = por %p85, %p86
    %s89 = sadd.s32 %s88, 1
    %p92 = scmp.eq.s32.totalorder %s12, 1
    %p93 = scmp.ne.s32.totalorder %s88, %s90
    %p94 = scmp.eq.s32.totalorder %s12, 0
    %p95 = por %p93, %p94
    %p96 = scmp.ne.s32.totalorder %s88, %s90
    %p97 = scmp.eq.s32.totalorder %s17, 1
    %p98 = por %p96, %p97
    %p99 = scmp.ne.s32.totalorder %s90, %s91
    %p100 = scmp.eq.s32.totalorder %s17, 0
    %p101 = por %p99, %p100
    %p102 = scmp.ne.s32.totalorder %s90, %s91
    %p103 = scmp.eq.s32.totalorder %s18, 1
    %p104 = por %p102, %p103
    %p106 = scmp.ne.s32.totalorder %s91, %s105
    %p107 = scmp.eq.s32.totalorder %s18, 0
    %p108 = por %p106, %p107
    %s110 = sadd.s32 %s109, 1
    %p113 = scmp.eq.s32.totalorder %s12, 1
    %p114 = scmp.ne.s32.totalorder %s109, %s111
    %p115 = scmp.eq.s32.totalorder %s12, 0
    %p116 = por %p114, %p115
    %p117 = scmp.ne.s32.totalorder %s109, %s111
    %p118 = scmp.eq.s32.totalorder %s17, 1
    %p119 = por %p117, %p118
    %p120 = scmp.ne.s32.totalorder %s111, %s112
    %p121 = scmp.eq.s32.totalorder %s17, 0
    %p122 = por %p120, %p121
    %p123 = scmp.ne.s32.totalorder %s111, %s112
    %p124 = scmp.eq.s32.totalorder %s18, 1
    %p125 = por %p123, %p124
    %p127 = scmp.ne.s32.totalorder %s112, %s126
    %p128 = scmp.eq.s32.totalorder %s18, 0
    %p129 = por %p127, %p128
    %s131 = sadd.s32 %s130, 1
    %p134 = scmp.eq.s32.totalorder %s12, 1
    %p135 = scmp.ne.s32.totalorder %s130, %s132
    %p136 = scmp.eq.s32.totalorder %s12, 0
    %p137 = por %p135, %p136
    %p138 = scmp.ne.s32.totalorder %s130, %s132
    %p139 = scmp.eq.s32.totalorder %s17, 1
    %p140 = por %p138, %p139
    %p141 = scmp.ne.s32.totalorder %s132, %s133
    %p142 = scmp.eq.s32.totalorder %s17, 0
    %p143 = por %p141, %p142
    %p144 = scmp.ne.s32.totalorder %s132, %s133
    %p145 = scmp.eq.s32.totalorder %s18, 1
    %p146 = por %p144, %p145
    %p148 = scmp.ne.s32.totalorder %s133, %s147
    %p149 = scmp.eq.s32.totalorder %s18, 0
    %p150 = por %p148, %p149
    %s151 = ssub.s32 %s12, %s19
    %p152 = scmp.eq.s32.totalorder %s151, 0
    %s154 = sadd.s32 %s153, 1
    %s155 = scalar_select %p152, %s153, %s154
    %p158 = pneg %p152
    %p159 = scmp.eq.s32.totalorder %s12, 1
    %p160 = por %p158, %p159
    %p161 = scmp.ne.s32.totalorder %s153, %s156
    %p162 = scmp.eq.s32.totalorder %s12, 0
    %p163 = por %p161, %p162
    %p164 = scmp.ne.s32.totalorder %s153, %s156
    %p165 = scmp.eq.s32.totalorder %s17, 1
    %p166 = por %p164, %p165
    %p167 = scmp.ne.s32.totalorder %s156, %s157
    %p168 = scmp.eq.s32.totalorder %s17, 0
    %p169 = por %p167, %p168
    %p170 = scmp.ne.s32.totalorder %s156, %s157
    %p171 = scmp.eq.s32.totalorder %s18, 1
    %p172 = por %p170, %p171
    %p174 = scmp.ne.s32.totalorder %s157, %s173
    %p175 = scmp.eq.s32.totalorder %s18, 0
    %p176 = por %p174, %p175
    %p177 = scmp.le.s32.totalorder 1, %s12
    %p178 = scmp.lt.s32.totalorder %s12, 3
    %p179 = pnand %p177, %p178
    %p180 = pneg %p179
    // Predicated region
    $region9: #{unet2d_forward.15} parent=5 // pred_check
      _
    $region10: #{unet2d_forward.15} parent=5 // pred_check_branch
      %182 = sbr.rel (%p179) target = $region12
    $region11: #{unet2d_forward.15} parent=5 // pred_region
      %s183 = ssub.s32 %s12, 1
      // Predicated region
      $region13: #{unet2d_forward.15} parent=11 // pred_check
        %p184 = pneg %p59
      $region14: #{unet2d_forward.15} parent=11 // pred_check_branch
        %186 = sbr.rel (%p184) target = $region16
      $region15: #{unet2d_forward.15} parent=11 // pred_region
        _
      $region16: #{unet2d_forward.15} parent=11 // pred_fallthru
        _
      // Predicated region
      $region17: #{unet2d_forward.15} parent=11 // pred_check
        %p187 = pneg %p80
      $region18: #{unet2d_forward.15} parent=11 // pred_check_branch
        %189 = sbr.rel (%p187) target = $region20
      $region19: #{unet2d_forward.15} parent=11 // pred_region
        _
      $region20: #{unet2d_forward.15} parent=11 // pred_fallthru
        _
      // Predicated region
      $region21: #{unet2d_forward.15} parent=11 // pred_check
        %p190 = pneg %p101
      $region22: #{unet2d_forward.15} parent=11 // pred_check_branch
        %192 = sbr.rel (%p190) target = $region24
      $region23: #{unet2d_forward.15} parent=11 // pred_region
        _
      $region24: #{unet2d_forward.15} parent=11 // pred_fallthru
        _
      // Predicated region
      $region25: #{unet2d_forward.15} parent=11 // pred_check
        %p193 = pneg %p122
      $region26: #{unet2d_forward.15} parent=11 // pred_check_branch
        %195 = sbr.rel (%p193) target = $region28
      $region27: #{unet2d_forward.15} parent=11 // pred_region
        _
      $region28: #{unet2d_forward.15} parent=11 // pred_fallthru
        _
      // Predicated region
      $region29: #{unet2d_forward.15} parent=11 // pred_check
        %p196 = pneg %p143
      $region30: #{unet2d_forward.15} parent=11 // pred_check_branch
        %198 = sbr.rel (%p196) target = $region32
      $region31: #{unet2d_forward.15} parent=11 // pred_region
        _
      $region32: #{unet2d_forward.15} parent=11 // pred_fallthru
        _
    $region12: #{unet2d_forward.15} parent=5 // pred_fallthru
      _
    %p199 = scmp.lt.s32.totalorder %s12, 2
    // Predicated region
    $region33: #{unet2d_forward.15} parent=5 // pred_check
      %p200 = pneg %p199
    $region34: #{unet2d_forward.15} parent=5 // pred_check_branch
      %202 = sbr.rel (%p200) target = $region36
    $region35: #{unet2d_forward.15} parent=5 // pred_region
      // Predicated region
      $region37: #{unet2d_forward.15} parent=35 // pred_check
        %p203 = pneg %p32
      $region38: #{unet2d_forward.15} parent=35 // pred_check_branch
        %205 = sbr.rel (%p203) target = $region40
      $region39: #{unet2d_forward.15} parent=35 // pred_region
        %p206 = scmp.lt.s32.totalorder %s12, 1
        %s207 = scalar_select %p206, %s12, 1
        %s208 = smul.addr %s207, 36
        %s209 = smul.addr %s208, 4
        %s210 = scalar_lea.vmem %s0, %s209
      $region40: #{unet2d_forward.15} parent=35 // pred_fallthru
        _
    $region36: #{unet2d_forward.15} parent=5 // pred_fallthru
      _
    %p211 = scmp.le.s32.totalorder 1, %s12
    %p212 = scmp.lt.s32.totalorder %s12, 3
    %p213 = pnand %p211, %p212
    %p214 = pneg %p213
    // Predicated region
    $region41: #{unet2d_forward.15} parent=5 // pred_check
      _
    $region42: #{unet2d_forward.15} parent=5 // pred_check_branch
      %216 = sbr.rel (%p213) target = $region44
    $region43: #{unet2d_forward.15} parent=5 // pred_region
      %s217 = ssub.s32 %s12, 1
      %p218 = scmp.lt.s32.totalorder %s17, 1
      %s219 = scalar_select %p218, %s17, 1
      %s220 = smul.addr %s219, 36
      %s221 = smul.addr %s220, 4
      %s222 = scalar_lea.vmem %s0, %s221
      %p223 = pneg %p38
      %p224 = pneg %p35
      %p225 = pneg %p59
      %p226 = pneg %p56
      %p227 = pneg %p80
      %p228 = pneg %p77
      %p229 = pneg %p101
      %p230 = pneg %p98
      %p231 = pneg %p122
      %p232 = pneg %p119
      %p233 = pneg %p143
      %p234 = pneg %p140
      %p235 = pneg %p169
      %p236 = pneg %p166
      %p237 = scmp.lt.s32.totalorder %s17, 1
      %s238 = scalar_select %p237, %s17, 1
      %s239 = smul.addr %s238, 4
      %s240 = smul.addr %s239, 4
      %s241 = scalar_lea.vmem %s6, %s240
      %p242 = scmp.lt.s32.totalorder %s17, 1
      %s243 = scalar_select %p242, %s17, 1
      %s244 = smul.addr %s243, 36
      %s245 = smul.addr %s244, 4
      %s246 = scalar_lea.vmem %s0, %s245
      %p247 = scmp.lt.s32.totalorder %s17, 1
      %s248 = scalar_select %p247, %s17, 1
      %s249 = smul.addr %s248, 4
      %s250 = smul.addr %s249, 4
      %s251 = scalar_lea.vmem %s6, %s250
      %v253 = vld [vmem:[%s1] sm:$0xff]
      %v254 = vld [vmem:[%s1 + $0x8] sm:$0xf]
      %v255 = vld [vmem:[%s1 + $0xc] sm:$0xff]
      %v256 = vld [vmem:[%s1 + $0x14] sm:$0xf]
      %v257 = vld [vmem:[%s1 + $0x18] sm:$0xff]
      %v258 = vld [vmem:[%s1 + $0x20] sm:$0xf]
      %v259 = vld [vmem:[%s1 + $0x24] sm:$0xff]
      %v260 = vld [vmem:[%s1 + $0x2c] sm:$0xf]
      %v261 = vld [vmem:[%s246] sm:$0xf]
      %v262 = vld [vmem:[%s246 + $0x4] sm:$0xf]
      %v263 = vld [vmem:[%s246 + $0x8] sm:$0xf]
      %v264 = vld [vmem:[%s246 + $0xc] sm:$0xf]
      %v265 = vld [vmem:[%s246 + $0x10] sm:$0xf]
      %v266 = vld [vmem:[%s246 + $0x14] sm:$0xf]
      %v267 = vld [vmem:[%s246 + $0x18] sm:$0xf]
      %v268 = vld [vmem:[%s246 + $0x1c] sm:$0xf]
      %v269 = vld [vmem:[%s246 + $0x20] sm:$0xf]
      %v270 = vld [vmem:[%s246 + $0x24] sm:$0xf]
      %v271 = vld [vmem:[%s246 + $0x28] sm:$0xf]
      %v272 = vld [vmem:[%s246 + $0x2c] sm:$0xf]
      %v273 = vld [vmem:[%s246 + $0x30] sm:$0xf]
      %v274 = vld [vmem:[%s246 + $0x34] sm:$0xf]
      %v275 = vld [vmem:[%s246 + $0x38] sm:$0xf]
      %v276 = vld [vmem:[%s246 + $0x3c] sm:$0xf]
      %v277 = vld [vmem:[%s246 + $0x40] sm:$0xf]
      %v278 = vld [vmem:[%s246 + $0x44] sm:$0xf]
      %v279 = vld [vmem:[%s246 + $0x48] sm:$0xf]
      %v280 = vld [vmem:[%s246 + $0x4c] sm:$0xf]
      %v281 = vld [vmem:[%s246 + $0x50] sm:$0xf]
      %v282 = vld [vmem:[%s246 + $0x54] sm:$0xf]
      %v283 = vld [vmem:[%s246 + $0x58] sm:$0xf]
      %v284 = vld [vmem:[%s246 + $0x5c] sm:$0xf]
      %v285 = vld [vmem:[%s246 + $0x60] sm:$0xf]
      %v286 = vld [vmem:[%s246 + $0x64] sm:$0xf]
      %v287 = vld [vmem:[%s246 + $0x68] sm:$0xf]
      %v288 = vld [vmem:[%s246 + $0x6c] sm:$0xf]
      %v289 = vld [vmem:[%s246 + $0x70] sm:$0xf]
      %v290 = vld [vmem:[%s246 + $0x74] sm:$0xf]
      %v291 = vld [vmem:[%s246 + $0x78] sm:$0xf]
      %v292 = vld [vmem:[%s246 + $0x7c] sm:$0xf]
      %v293 = vld [vmem:[%s246 + $0x80] sm:$0xf]
      %v294 = vld [vmem:[%s246 + $0x84] sm:$0xf]
      %v295 = vld [vmem:[%s246 + $0x88] sm:$0xf]
      %v296 = vld [vmem:[%s246 + $0x8c] sm:$0xf]
      %v297 = vld [vmem:[%s2] sm:$0xff]
      %v298 = vld [vmem:[%s2 + $0x8] sm:$0xff]
      %v299 = vld [vmem:[%s2 + $0x10] sm:$0xff]
      %v300 = vld [vmem:[%s2 + $0x18] sm:$0xff]
      %302 = vset.pattern.permute.xlu0 0
      %303 = vperm.xlu0 %302, %v297
      %v304 = vpop.permute.xlu0 %303
      %307 = vset.pattern.permute.xlu0 0
      %308 = vperm.xlu0 %307, %v298
      %v309 = vpop.permute.xlu0 %308
      %312 = vset.pattern.permute.xlu0 0
      %313 = vperm.xlu0 %312, %v299
      %v314 = vpop.permute.xlu0 %313
      %317 = vset.pattern.permute.xlu0 0
      %318 = vperm.xlu0 %317, %v300
      %v319 = vpop.permute.xlu0 %318
      %v329 = vunpack.c.l.b16 %v253
      %v330 = vunpack.c.h.b16 %v253
      %v331 = vunpack.c.l.b16 %v254
      %v332 = vunpack.c.l.b16 %v255
      %v333 = vunpack.c.h.b16 %v255
      %v334 = vunpack.c.l.b16 %v256
      %v335 = vunpack.c.l.b16 %v257
      %v336 = vunpack.c.h.b16 %v257
      %v337 = vunpack.c.l.b16 %v258
      %v338 = vunpack.c.l.b16 %v259
      %v339 = vunpack.c.h.b16 %v259
      %v340 = vunpack.c.l.b16 %v260
      %v341 = vpack.c.b16 %v332, %v329
      %v342 = vpack.c.b16 %v333, %v330
      %v343 = vpack.c.b16 %v334, %v331
      %v344 = vpack.c.b16 %v338, %v335
      %v345 = vpack.c.b16 %v339, %v336
      %v346 = vpack.c.b16 %v340, %v337
      %v387 = vunpack.c.l.b16 %v261
      %v388 = vunpack.c.l.b16 %v262
      %v389 = vunpack.c.l.b16 %v263
      %v390 = vunpack.c.l.b16 %v264
      %v391 = vunpack.c.l.b16 %v265
      %v392 = vunpack.c.l.b16 %v266
      %v393 = vunpack.c.l.b16 %v267
      %v394 = vunpack.c.l.b16 %v268
      %v395 = vunpack.c.l.b16 %v269
      %v396 = vunpack.c.l.b16 %v270
      %v397 = vunpack.c.l.b16 %v271
      %v398 = vunpack.c.l.b16 %v272
      %v399 = vunpack.c.l.b16 %v273
      %v400 = vunpack.c.l.b16 %v274
      %v401 = vunpack.c.l.b16 %v275
      %v402 = vunpack.c.l.b16 %v276
      %v403 = vunpack.c.l.b16 %v277
      %v404 = vunpack.c.l.b16 %v278
      %v405 = vunpack.c.l.b16 %v279
      %v406 = vunpack.c.l.b16 %v280
      %v407 = vunpack.c.l.b16 %v281
      %v408 = vunpack.c.l.b16 %v282
      %v409 = vunpack.c.l.b16 %v283
      %v410 = vunpack.c.l.b16 %v284
      %v411 = vunpack.c.l.b16 %v285
      %v412 = vunpack.c.l.b16 %v286
      %v413 = vunpack.c.l.b16 %v287
      %v414 = vunpack.c.l.b16 %v288
      %v415 = vunpack.c.l.b16 %v289
      %v416 = vunpack.c.l.b16 %v290
      %v417 = vunpack.c.l.b16 %v291
      %v418 = vunpack.c.l.b16 %v292
      %v419 = vunpack.c.l.b16 %v293
      %v420 = vunpack.c.l.b16 %v294
      %v421 = vunpack.c.l.b16 %v295
      %v422 = vunpack.c.l.b16 %v296
      %v423 = vpack.c.b16 %v388, %v387
      %v424 = vpack.c.b16 %v390, %v389
      %v425 = vpack.c.b16 %v392, %v391
      %v426 = vpack.c.b16 %v394, %v393
      %v427 = vpack.c.b16 %v396, %v395
      %v428 = vpack.c.b16 %v398, %v397
      %v429 = vpack.c.b16 %v400, %v399
      %v430 = vpack.c.b16 %v402, %v401
      %v431 = vpack.c.b16 %v404, %v403
      %v432 = vpack.c.b16 %v406, %v405
      %v433 = vpack.c.b16 %v408, %v407
      %v434 = vpack.c.b16 %v410, %v409
      %v435 = vpack.c.b16 %v412, %v411
      %v436 = vpack.c.b16 %v414, %v413
      %v437 = vpack.c.b16 %v416, %v415
      %v438 = vpack.c.b16 %v418, %v417
      %v439 = vpack.c.b16 %v420, %v419
      %v440 = vpack.c.b16 %v422, %v421
      %vm459 = vcmask 261120
      %v461 = vsel %vm459, %v343, 0
      %v464 = vsel %vm459, %v346, 0
      %466 = vmatprep.subr.bf16.mxu0 0
      %467 = vmatpush1.bf16.msra.mxu0 %v430
      %468 = vmatprep.subr.bf16.mxu0 0
      %469 = vmatpush1.bf16.msra.mxu0 %v429
      %470 = vmatprep.subr.bf16.mxu0 0
      %471 = vmatpush1.bf16.msra.mxu0 %v428
      %472 = vmatprep.subr.bf16.mxu0 0
      %473 = vmatpush1.bf16.msra.mxu0 %v427
      %474 = vmatprep.subr.bf16.mxu0 0
      %475 = vmatpush1.bf16.msra.mxu0 %v426
      %476 = vmatprep.subr.bf16.mxu0 0
      %477 = vmatpush1.bf16.msra.mxu0 %v425
      %478 = vmatprep.subr.bf16.mxu0 0
      %479 = vmatpush1.bf16.msra.mxu0 %v424
      %480 = vmatprep.subr.bf16.mxu0 0
      %481 = vmatpush1.bf16.msra.mxu0 %v423
      %482 = vmatprep.subr.bf16.mxu0 0
      %483 = vmatpush2.bf16.msra.mxu0 %v438
      %484 = vmatprep.subr.bf16.mxu0 0
      %485 = vmatpush2.bf16.msra.mxu0 %v437
      %486 = vmatprep.subr.bf16.mxu0 0
      %487 = vmatpush2.bf16.msra.mxu0 %v436
      %488 = vmatprep.subr.bf16.mxu0 0
      %489 = vmatpush2.bf16.msra.mxu0 %v435
      %490 = vmatprep.subr.bf16.mxu0 0
      %491 = vmatpush2.bf16.msra.mxu0 %v434
      %492 = vmatprep.subr.bf16.mxu0 0
      %493 = vmatpush2.bf16.msra.mxu0 %v433
      %494 = vmatprep.subr.bf16.mxu0 0
      %495 = vmatpush2.bf16.msra.mxu0 %v432
      %496 = vmatprep.subr.bf16.mxu0 0
      %497 = vmatpush2.bf16.msra.mxu0 %v431
      %498 = vmatprep.mubr.bf16.mxu0 %v342
      %499 = vmatmul.mubr.bf16.gmra.mxu0 %v341
      %v500 = vpop.f32.mrf.mxu0
      %v501 = vadd.f32 %v304, %v500
      %v502 = vpop.f32.mrf.mxu0
      %v503 = vpop.f32.mrf.mxu0
      %v504 = vadd.f32 %v309, %v503
      %v505 = vpop.f32.mrf.mxu0
      %506 = vmatprep.mubr.bf16.mxu0 %v345
      %507 = vmatmul.mubr.bf16.gmra.mxu0 %v344
      %v508 = vpop.f32.mrf.mxu0
      %v509 = vadd.f32 %v314, %v508
      %v510 = vpop.f32.mrf.mxu0
      %v511 = vpop.f32.mrf.mxu0
      %v512 = vadd.f32 %v319, %v511
      %v513 = vpop.f32.mrf.mxu0
      %514 = vdwg.mxu0
      %515 = vmatprep.subr.bf16.mxu0 0
      %516 = vmatpush1.bf16.msra.mxu0 0
      %517 = vmatprep.subr.bf16.mxu0 0
      %518 = vmatpush1.bf16.msra.mxu0 0
      %519 = vmatprep.subr.bf16.mxu0 0
      %520 = vmatpush1.bf16.msra.mxu0 0
      %521 = vmatprep.subr.bf16.mxu0 0
      %522 = vmatpush1.bf16.msra.mxu0 0
      %523 = vmatprep.subr.bf16.mxu0 0
      %524 = vmatpush1.bf16.msra.mxu0 0
      %525 = vmatprep.subr.bf16.mxu0 0
      %526 = vmatpush1.bf16.msra.mxu0 0
      %527 = vmatprep.subr.bf16.mxu0 0
      %528 = vmatpush1.bf16.msra.mxu0 %v440
      %529 = vmatprep.subr.bf16.mxu0 0
      %530 = vmatpush1.bf16.msra.mxu0 %v439
      %531 = vmatprep.subr.bf16.mxu0 0
      %532 = vmatpush2.bf16.msra.mxu0 0
      %533 = vmatprep.subr.bf16.mxu0 0
      %534 = vmatpush2.bf16.msra.mxu0 0
      %535 = vmatprep.subr.bf16.mxu0 0
      %536 = vmatpush2.bf16.msra.mxu0 0
      %537 = vmatprep.subr.bf16.mxu0 0
      %538 = vmatpush2.bf16.msra.mxu0 0
      %539 = vmatprep.subr.bf16.mxu0 0
      %540 = vmatpush2.bf16.msra.mxu0 0
      %541 = vmatprep.subr.bf16.mxu0 0
      %542 = vmatpush2.bf16.msra.mxu0 0
      %543 = vmatprep.subr.bf16.mxu0 0
      %544 = vmatpush2.bf16.msra.mxu0 0
      %545 = vmatprep.subr.bf16.mxu0 0
      %546 = vmatpush2.bf16.msra.mxu0 0
      %547 = vmatprep.mubr.bf16.mxu0 0
      %548 = vmatmul.mubr.bf16.gmra.mxu0 %v461
      %v549 = vpop.f32.mrf.mxu0
      %v550 = vadd.f32 %v501, %v549
      %v551 = vpop.f32.mrf.mxu0
      %v552 = vpop.f32.mrf.mxu0
      %v553 = vadd.f32 %v504, %v552
      %v554 = vpop.f32.mrf.mxu0
      %555 = vmatprep.mubr.bf16.mxu0 0
      %556 = vmatmul.mubr.bf16.gmra.mxu0 %v464
      %v557 = vpop.f32.mrf.mxu0
      %v558 = vadd.f32 %v509, %v557
      %v559 = vpop.f32.mrf.mxu0
      %v560 = vpop.f32.mrf.mxu0
      %v561 = vadd.f32 %v512, %v560
      %v562 = vpop.f32.mrf.mxu0
      %563 = vdwg.mxu0
      %v564 = vld [vmem:[%s5] sm:$0xff]
      %v565 = vld [vmem:[%s5 + $0x8] sm:$0xff]
      %v566 = vld [vmem:[%s5 + $0x10] sm:$0xff]
      %v567 = vld [vmem:[%s5 + $0x18] sm:$0xff]
      %v568 = vld [vmem:[%s3] sm:$0xff]
      %v569 = vld [vmem:[%s3 + $0x8] sm:$0xff]
      %v570 = vld [vmem:[%s3 + $0x10] sm:$0xff]
      %v571 = vld [vmem:[%s3 + $0x18] sm:$0xff]
      %v572 = vld [vmem:[%s4] sm:$0xff]
      %v573 = vld [vmem:[%s4 + $0x8] sm:$0xff]
      %v574 = vld [vmem:[%s4 + $0x10] sm:$0xff]
      %v575 = vld [vmem:[%s4 + $0x18] sm:$0xff]
      %vm576 = vcmask 523264
      %v577 = vsel %vm576, %v550, 0.0
      %578 = vadd.xlane.f32.xlu0 %v577
      %v579 = vpop.xlane.xlu0 %578
      %v580 = vsel %vm576, %v553, 0.0
      %581 = vadd.xlane.f32.xlu0 %v580
      %v582 = vpop.xlane.xlu0 %581
      %v583 = vsel %vm576, %v558, 0.0
      %584 = vadd.xlane.f32.xlu0 %v583
      %v585 = vpop.xlane.xlu0 %584
      %v586 = vsel %vm576, %v561, 0.0
      %587 = vadd.xlane.f32.xlu0 %v586
      %v588 = vpop.xlane.xlu0 %587
      %v589 = vmul.f32 %v550, %v550
      %v590 = vmul.f32 %v553, %v553
      %v591 = vmul.f32 %v558, %v558
      %v592 = vmul.f32 %v561, %v561
      %v593 = vsel %vm576, %v589, 0.0
      %594 = vadd.xlane.f32.xlu0 %v593
      %v595 = vpop.xlane.xlu0 %594
      %v596 = vsel %vm576, %v590, 0.0
      %597 = vadd.xlane.f32.xlu0 %v596
      %v598 = vpop.xlane.xlu0 %597
      %v599 = vsel %vm576, %v591, 0.0
      %600 = vadd.xlane.f32.xlu0 %v599
      %v601 = vpop.xlane.xlu0 %600
      %v602 = vsel %vm576, %v592, 0.0
      %603 = vadd.xlane.f32.xlu0 %v602
      %v604 = vpop.xlane.xlu0 %603
      %v606 = vsel %vm459, %v564, 0
      %v609 = vsel %vm459, %v565, 0
      %v612 = vsel %vm459, %v566, 0
      %v615 = vsel %vm459, %v567, 0
      %617 = vmatprep.subr.mxu0 0.0
      %618 = vmatpush1.msra.mxu0 0.0
      %619 = vmatprep.subr.mxu0 0.0
      %620 = vmatpush1.msra.mxu0 0.0
      %621 = vmatprep.subr.mxu0 0.0
      %622 = vmatpush1.msra.mxu0 0.0
      %623 = vmatprep.subr.mxu0 0.0
      %624 = vmatpush1.msra.mxu0 0.0
      %625 = vmatprep.subr.mxu0 0.0
      %626 = vmatpush1.msra.mxu0 0.0
      %627 = vmatprep.subr.mxu0 0.0
      %628 = vmatpush1.msra.mxu0 0.0
      %629 = vmatprep.subr.mxu0 0.0
      %630 = vmatpush1.msra.mxu0 0.0
      %631 = vmatprep.subr.mxu0 0.0
      %632 = vmatpush1.msra.mxu0 0.0
      %633 = vmatprep.subr.mxu0 0.0
      %634 = vmatpush1.msra.mxu0 0.0
      %635 = vmatprep.subr.mxu0 0.0
      %636 = vmatpush1.msra.mxu0 0.0
      %637 = vmatprep.subr.mxu0 0.0
      %638 = vmatpush1.msra.mxu0 0.0
      %639 = vmatprep.subr.mxu0 0.0
      %640 = vmatpush1.msra.mxu0 0.0
      %641 = vmatprep.subr.mxu0 0.0
      %642 = vmatpush1.msra.mxu0 %v588
      %643 = vmatprep.subr.mxu0 0.0
      %644 = vmatpush1.msra.mxu0 %v585
      %645 = vmatprep.subr.mxu0 0.0
      %646 = vmatpush1.msra.mxu0 %v582
      %647 = vmatprep.subr.mxu0 0.0
      %648 = vmatpush1.msra.mxu0 %v579
      %649 = vmatprep.subr.mxu0 0.0
      %650 = vmatpush2.msra.mxu0 0.0
      %651 = vmatprep.subr.mxu0 0.0
      %652 = vmatpush2.msra.mxu0 0.0
      %653 = vmatprep.subr.mxu0 0.0
      %654 = vmatpush2.msra.mxu0 0.0
      %655 = vmatprep.subr.mxu0 0.0
      %656 = vmatpush2.msra.mxu0 0.0
      %657 = vmatprep.subr.mxu0 0.0
      %658 = vmatpush2.msra.mxu0 0.0
      %659 = vmatprep.subr.mxu0 0.0
      %660 = vmatpush2.msra.mxu0 0.0
      %661 = vmatprep.subr.mxu0 0.0
      %662 = vmatpush2.msra.mxu0 0.0
      %663 = vmatprep.subr.mxu0 0.0
      %664 = vmatpush2.msra.mxu0 0.0
      %665 = vmatprep.subr.mxu0 0.0
      %666 = vmatpush2.msra.mxu0 0.0
      %667 = vmatprep.subr.mxu0 0.0
      %668 = vmatpush2.msra.mxu0 0.0
      %669 = vmatprep.subr.mxu0 0.0
      %670 = vmatpush2.msra.mxu0 0.0
      %671 = vmatprep.subr.mxu0 0.0
      %672 = vmatpush2.msra.mxu0 0.0
      %673 = vmatprep.subr.mxu0 0.0
      %674 = vmatpush2.msra.mxu0 0.0
      %675 = vmatprep.subr.mxu0 0.0
      %676 = vmatpush2.msra.mxu0 0.0
      %677 = vmatprep.subr.mxu0 0.0
      %678 = vmatpush2.msra.mxu0 0.0
      %679 = vmatprep.subr.mxu0 0.0
      %680 = vmatpush2.msra.mxu0 0.0
      %681 = vmatprep.mubr.f32.mxu0 0.0
      %682 = vmatmul.mubr.f32.gmra.mxu0 %v606
      %v683 = vpop.f32.mrf.mxu0
      %v684 = vadd.f32 0.0, %v683
      %v685 = vpop.f32.mrf.mxu0
      %686 = vmatprep.mubr.f32.mxu0 0.0
      %687 = vmatmul.mubr.f32.gmra.mxu0 %v609
      %v688 = vpop.f32.mrf.mxu0
      %v689 = vadd.f32 0.0, %v688
      %v690 = vpop.f32.mrf.mxu0
      %691 = vmatprep.mubr.f32.mxu0 0.0
      %692 = vmatmul.mubr.f32.gmra.mxu0 %v612
      %v693 = vpop.f32.mrf.mxu0
      %v694 = vadd.f32 0.0, %v693
      %v695 = vpop.f32.mrf.mxu0
      %696 = vmatprep.mubr.f32.mxu0 0.0
      %697 = vmatmul.mubr.f32.gmra.mxu0 %v615
      %v698 = vpop.f32.mrf.mxu0
      %v699 = vadd.f32 0.0, %v698
      %v700 = vpop.f32.mrf.mxu0
      %701 = vdwg.mxu0
      %702 = vmatprep.subr.mxu0 0.0
      %703 = vmatpush1.msra.mxu0 0.0
      %704 = vmatprep.subr.mxu0 0.0
      %705 = vmatpush1.msra.mxu0 0.0
      %706 = vmatprep.subr.mxu0 0.0
      %707 = vmatpush1.msra.mxu0 0.0
      %708 = vmatprep.subr.mxu0 0.0
      %709 = vmatpush1.msra.mxu0 0.0
      %710 = vmatprep.subr.mxu0 0.0
      %711 = vmatpush1.msra.mxu0 0.0
      %712 = vmatprep.subr.mxu0 0.0
      %713 = vmatpush1.msra.mxu0 0.0
      %714 = vmatprep.subr.mxu0 0.0
      %715 = vmatpush1.msra.mxu0 0.0
      %716 = vmatprep.subr.mxu0 0.0
      %717 = vmatpush1.msra.mxu0 0.0
      %718 = vmatprep.subr.mxu0 0.0
      %719 = vmatpush1.msra.mxu0 0.0
      %720 = vmatprep.subr.mxu0 0.0
      %721 = vmatpush1.msra.mxu0 0.0
      %722 = vmatprep.subr.mxu0 0.0
      %723 = vmatpush1.msra.mxu0 0.0
      %724 = vmatprep.subr.mxu0 0.0
      %725 = vmatpush1.msra.mxu0 0.0
      %726 = vmatprep.subr.mxu0 0.0
      %727 = vmatpush1.msra.mxu0 %v604
      %728 = vmatprep.subr.mxu0 0.0
      %729 = vmatpush1.msra.mxu0 %v601
      %730 = vmatprep.subr.mxu0 0.0
      %731 = vmatpush1.msra.mxu0 %v598
      %732 = vmatprep.subr.mxu0 0.0
      %733 = vmatpush1.msra.mxu0 %v595
      %734 = vmatprep.subr.mxu0 0.0
      %735 = vmatpush2.msra.mxu0 0.0
      %736 = vmatprep.subr.mxu0 0.0
      %737 = vmatpush2.msra.mxu0 0.0
      %738 = vmatprep.subr.mxu0 0.0
      %739 = vmatpush2.msra.mxu0 0.0
      %740 = vmatprep.subr.mxu0 0.0
      %741 = vmatpush2.msra.mxu0 0.0
      %742 = vmatprep.subr.mxu0 0.0
      %743 = vmatpush2.msra.mxu0 0.0
      %744 = vmatprep.subr.mxu0 0.0
      %745 = vmatpush2.msra.mxu0 0.0
      %746 = vmatprep.subr.mxu0 0.0
      %747 = vmatpush2.msra.mxu0 0.0
      %748 = vmatprep.subr.mxu0 0.0
      %749 = vmatpush2.msra.mxu0 0.0
      %750 = vmatprep.subr.mxu0 0.0
      %751 = vmatpush2.msra.mxu0 0.0
      %752 = vmatprep.subr.mxu0 0.0
      %753 = vmatpush2.msra.mxu0 0.0
      %754 = vmatprep.subr.mxu0 0.0
      %755 = vmatpush2.msra.mxu0 0.0
      %756 = vmatprep.subr.mxu0 0.0
      %757 = vmatpush2.msra.mxu0 0.0
      %758 = vmatprep.subr.mxu0 0.0
      %759 = vmatpush2.msra.mxu0 0.0
      %760 = vmatprep.subr.mxu0 0.0
      %761 = vmatpush2.msra.mxu0 0.0
      %762 = vmatprep.subr.mxu0 0.0
      %763 = vmatpush2.msra.mxu0 0.0
      %764 = vmatprep.subr.mxu0 0.0
      %765 = vmatpush2.msra.mxu0 0.0
      %766 = vmatprep.mubr.f32.mxu0 0.0
      %767 = vmatmul.mubr.f32.gmra.mxu0 %v606
      %v768 = vpop.f32.mrf.mxu0
      %v769 = vadd.f32 0.0, %v768
      %v770 = vpop.f32.mrf.mxu0
      %771 = vmatprep.mubr.f32.mxu0 0.0
      %772 = vmatmul.mubr.f32.gmra.mxu0 %v609
      %v773 = vpop.f32.mrf.mxu0
      %v774 = vadd.f32 0.0, %v773
      %v775 = vpop.f32.mrf.mxu0
      %776 = vmatprep.mubr.f32.mxu0 0.0
      %777 = vmatmul.mubr.f32.gmra.mxu0 %v612
      %v778 = vpop.f32.mrf.mxu0
      %v779 = vadd.f32 0.0, %v778
      %v780 = vpop.f32.mrf.mxu0
      %781 = vmatprep.mubr.f32.mxu0 0.0
      %782 = vmatmul.mubr.f32.gmra.mxu0 %v615
      %v783 = vpop.f32.mrf.mxu0
      %v784 = vadd.f32 0.0, %v783
      %v785 = vpop.f32.mrf.mxu0
      %786 = vdwg.mxu0
      %v787 = vmul.f32 %v684, %v684
      %v788 = vmul.f32 %v689, %v689
      %v789 = vmul.f32 %v694, %v694
      %v790 = vmul.f32 %v699, %v699
      %v791 = vsub.f32 %v769, %v787
      %v792 = vsub.f32 %v774, %v788
      %v793 = vsub.f32 %v779, %v789
      %v794 = vsub.f32 %v784, %v790
      %v795 = vmax.f32 %v791, 0.0
      %v796 = vmax.f32 %v792, 0.0
      %v797 = vmax.f32 %v793, 0.0
      %v798 = vmax.f32 %v794, 0.0
      %v799 = vadd.f32 %v795, 1e-05
      %v800 = vadd.f32 %v796, 1e-05
      %v801 = vadd.f32 %v797, 1e-05
      %v802 = vadd.f32 %v798, 1e-05
      %v803 = vrsqrt.pop %v799
      %v804 = vrsqrt.pop %v800
      %v805 = vrsqrt.pop %v801
      %v806 = vrsqrt.pop %v802
      %808 = vset.pattern.permute.xlu0 0
      %809 = vperm.xlu0 %808, %v684
      %v810 = vpop.permute.xlu0 %809
      %813 = vset.pattern.permute.xlu0 0
      %814 = vperm.xlu0 %813, %v689
      %v815 = vpop.permute.xlu0 %814
      %818 = vset.pattern.permute.xlu0 0
      %819 = vperm.xlu0 %818, %v694
      %v820 = vpop.permute.xlu0 %819
      %823 = vset.pattern.permute.xlu0 0
      %824 = vperm.xlu0 %823, %v699
      %v825 = vpop.permute.xlu0 %824
      %v827 = vsub.f32 %v550, %v810
      %v828 = vsub.f32 %v553, %v815
      %v829 = vsub.f32 %v558, %v820
      %v830 = vsub.f32 %v561, %v825
      %v831 = vmul.f32 %v803, %v568
      %v832 = vmul.f32 %v804, %v569
      %v833 = vmul.f32 %v805, %v570
      %v834 = vmul.f32 %v806, %v571
      %836 = vset.pattern.permute.xlu0 0
      %837 = vperm.xlu0 %836, %v831
      %v838 = vpop.permute.xlu0 %837
      %841 = vset.pattern.permute.xlu0 0
      %842 = vperm.xlu0 %841, %v832
      %v843 = vpop.permute.xlu0 %842
      %846 = vset.pattern.permute.xlu0 0
      %847 = vperm.xlu0 %846, %v833
      %v848 = vpop.permute.xlu0 %847
      %851 = vset.pattern.permute.xlu0 0
      %852 = vperm.xlu0 %851, %v834
      %v853 = vpop.permute.xlu0 %852
      %v855 = vmul.f32 %v827, %v838
      %v856 = vmul.f32 %v828, %v843
      %v857 = vmul.f32 %v829, %v848
      %v858 = vmul.f32 %v830, %v853
      %860 = vset.pattern.permute.xlu0 0
      %861 = vperm.xlu0 %860, %v572
      %v862 = vpop.permute.xlu0 %861
      %865 = vset.pattern.permute.xlu0 0
      %866 = vperm.xlu0 %865, %v573
      %v867 = vpop.permute.xlu0 %866
      %870 = vset.pattern.permute.xlu0 0
      %871 = vperm.xlu0 %870, %v574
      %v872 = vpop.permute.xlu0 %871
      %875 = vset.pattern.permute.xlu0 0
      %876 = vperm.xlu0 %875, %v575
      %v877 = vpop.permute.xlu0 %876
      %v879 = vadd.f32 %v855, %v862
      %v880 = vadd.f32 %v856, %v867
      %v881 = vadd.f32 %v857, %v872
      %v882 = vadd.f32 %v858, %v877
      %v883 = vmax.f32 %v879, 0.0
      %v884 = vmax.f32 %v880, 0.0
      %v885 = vmax.f32 %v881, 0.0
      %v886 = vmax.f32 %v882, 0.0
      %v887 = vpack.c.bf16 %v884, %v883
      %v888 = vpack.c.bf16 %v886, %v885
      %v891 = vunpack.c.l.b16 %v887
      %v892 = vunpack.c.h.b16 %v887
      %v893 = vunpack.c.l.b16 %v888
      %v894 = vunpack.c.h.b16 %v888
      %v895 = vpack.c.b16 %v891, %v891
      %v896 = vpack.c.b16 %v892, %v892
      %v897 = vpack.c.b16 %v893, %v893
      %v898 = vpack.c.b16 %v894, %v894
      %vm903 = vcmask 519168
      %904 = vst.msk [vmem:[%s251] sm:$0xf] %vm903, %v895
      %905 = vst.msk [vmem:[%s251 + $0x4] sm:$0xf] %vm903, %v896
      %906 = vst.msk [vmem:[%s251 + $0x8] sm:$0xf] %vm903, %v897
      %907 = vst.msk [vmem:[%s251 + $0xc] sm:$0xf] %vm903, %v898
      %p908 = scmp.lt.s32.totalorder %s17, 1
      %s909 = scalar_select %p908, %s17, 1
      %s910 = smul.addr %s909, 4
      %s911 = smul.addr %s910, 4
      %s912 = scalar_lea.vmem %s6, %s911
      // Predicated region
      $region45: #{unet2d_forward.15} parent=43 // pred_check
        %p913 = pneg %p166
      $region46: #{unet2d_forward.15} parent=43 // pred_check_branch
        %915 = sbr.rel (%p913) target = $region48
      $region47: #{unet2d_forward.15} parent=43 // pred_region
        _
      $region48: #{unet2d_forward.15} parent=43 // pred_fallthru
        _
    $region44: #{unet2d_forward.15} parent=5 // pred_fallthru
      _
    %p916 = scmp.le.s32.totalorder 2, %s12
    // Predicated region
    $region49: #{unet2d_forward.15} parent=5 // pred_check
      %p917 = pneg %p916
    $region50: #{unet2d_forward.15} parent=5 // pred_check_branch
      %919 = sbr.rel (%p917) target = $region52
    $region51: #{unet2d_forward.15} parent=5 // pred_region
      %s920 = ssub.s32 %s12, 2
      // Predicated region
      $region53: #{unet2d_forward.15} parent=51 // pred_check
        %p921 = pneg %p172
      $region54: #{unet2d_forward.15} parent=51 // pred_check_branch
        %923 = sbr.rel (%p921) target = $region56
      $region55: #{unet2d_forward.15} parent=51 // pred_region
        %p924 = scmp.lt.s32.totalorder %s18, 1
        %s925 = scalar_select %p924, %s18, 1
        %s926 = smul.addr %s925, 4
        %s927 = smul.addr %s926, 4
        %s928 = scalar_lea.vmem %s6, %s927
      $region56: #{unet2d_forward.15} parent=51 // pred_fallthru
        _
    $region52: #{unet2d_forward.15} parent=5 // pred_fallthru
      _
  $region6: #{unet2d_forward.15} parent=0 // loop_footer
    %s16 = sadd.s32 1, %s12
  $region7: #{unet2d_forward.15} parent=0 // loop_footer_branch
    %11 = sbr.rel target = $region3
  $region8: #{unet2d_forward.15} parent=0 // loop_exit
    _

// kernel: unet2d_forward.16
$region0: #{unet2d_forward.16}
  #allocation0 [shape = 'u32[]', space=smem, size = 0x4, offset = 0x4, fixed_abs, tag = 'smem constant byte address 0x4 - core index']
  #allocation1 [shape = 'u32[144,128]{1,0:T(1,128)}', space=vmem, size = 0x12000, scoped, tag = 'internal scratch']
  %s0 = inlined_call_operand.vmem [shape: bf16[2,288,16], index: 0, kind: input, shape index: {}]
  %s1 = inlined_call_operand.vmem [shape: bf16[64,288], index: 1, kind: input, shape index: {}]
  %s2 = inlined_call_operand.vmem [shape: f32[64,1], index: 2, kind: input, shape index: {}]
  %s3 = inlined_call_operand.vmem [shape: f32[64,1], index: 3, kind: input, shape index: {}]
  %s4 = inlined_call_operand.vmem [shape: f32[64,1], index: 4, kind: input, shape index: {}]
  %s5 = inlined_call_operand.vmem [shape: f32[64,64], index: 5, kind: input, shape index: {}]
  %s6 = inlined_call_operand.vmem [shape: bf16[2,64,16], index: 6, kind: output, shape index: {}]
  %s7 = sld [smem:[#allocation0]]
  $region57: #{unet2d_forward.16} parent=0
    _
  %s9 = ssub.s32 1, %s7
  %s10 = scalar_select 0, %s9, %s7
  loop: start=0, step=1, limit=4
  $region2: #{unet2d_forward.16} parent=0 // loop_pre_header
    _
  $region3: #{unet2d_forward.16} parent=0 // loop_header
    %s12 = sphi 0, %s16
    %p13 = scmp.ge.s32.totalorder %s12, 4
    %s22 = sphi 0, %s24
    %s25 = sphi 0, %s22
    %s26 = sphi 0, %s25
    %s42 = sphi 0, %s26
    %s46 = sphi 0, %s46
    %s48 = sphi 0, %s46
    %s49 = sphi 0, %s48
    %s63 = sphi 0, %s49
    %s67 = sphi 0, %s67
    %s69 = sphi 0, %s67
    %s70 = sphi 0, %s69
    %s84 = sphi 0, %s70
    %s88 = sphi 0, %s88
    %s90 = sphi 0, %s88
    %s91 = sphi 0, %s90
    %s105 = sphi 0, %s91
    %s109 = sphi 0, %s109
    %s111 = sphi 0, %s109
    %s112 = sphi 0, %s111
    %s126 = sphi 0, %s112
    %s130 = sphi 0, %s130
    %s132 = sphi 0, %s130
    %s133 = sphi 0, %s132
    %s147 = sphi 0, %s133
    %s153 = sphi 0, %s155
    %s156 = sphi 0, %s153
    %s157 = sphi 0, %s156
    %s173 = sphi 0, %s157
  $region4: #{unet2d_forward.16} parent=0 // loop_header_branch
    %15 = sbr.rel (%p13) target = $region8
  $region5: #{unet2d_forward.16} parent=0 // loop_body
    %s17 = ssub.s32 %s12, 1
    %s18 = ssub.s32 %s12, 2
    %s19 = sadd.s32 %s12, 1
    %s20 = ssub.s32 %s12, %s19
    %p21 = scmp.eq.s32.totalorder %s20, 0
    %s23 = sadd.s32 %s22, 1
    %s24 = scalar_select %p21, %s22, %s23
    %p27 = pneg %p21
    %p28 = scmp.eq.s32.totalorder %s12, 1
    %p29 = por %p27, %p28
    %p30 = scmp.ne.s32.totalorder %s22, %s25
    %p31 = scmp.eq.s32.totalorder %s12, 0
    %p32 = por %p30, %p31
    %p33 = scmp.ne.s32.totalorder %s22, %s25
    %p34 = scmp.eq.s32.totalorder %s17, 1
    %p35 = por %p33, %p34
    %p36 = scmp.ne.s32.totalorder %s25, %s26
    %p37 = scmp.eq.s32.totalorder %s17, 0
    %p38 = por %p36, %p37
    %p39 = scmp.ne.s32.totalorder %s25, %s26
    %p40 = scmp.eq.s32.totalorder %s18, 1
    %p41 = por %p39, %p40
    %p43 = scmp.ne.s32.totalorder %s26, %s42
    %p44 = scmp.eq.s32.totalorder %s18, 0
    %p45 = por %p43, %p44
    %s47 = sadd.s32 %s46, 1
    %p50 = scmp.eq.s32.totalorder %s12, 1
    %p51 = scmp.ne.s32.totalorder %s46, %s48
    %p52 = scmp.eq.s32.totalorder %s12, 0
    %p53 = por %p51, %p52
    %p54 = scmp.ne.s32.totalorder %s46, %s48
    %p55 = scmp.eq.s32.totalorder %s17, 1
    %p56 = por %p54, %p55
    %p57 = scmp.ne.s32.totalorder %s48, %s49
    %p58 = scmp.eq.s32.totalorder %s17, 0
    %p59 = por %p57, %p58
    %p60 = scmp.ne.s32.totalorder %s48, %s49
    %p61 = scmp.eq.s32.totalorder %s18, 1
    %p62 = por %p60, %p61
    %p64 = scmp.ne.s32.totalorder %s49, %s63
    %p65 = scmp.eq.s32.totalorder %s18, 0
    %p66 = por %p64, %p65
    %s68 = sadd.s32 %s67, 1
    %p71 = scmp.eq.s32.totalorder %s12, 1
    %p72 = scmp.ne.s32.totalorder %s67, %s69
    %p73 = scmp.eq.s32.totalorder %s12, 0
    %p74 = por %p72, %p73
    %p75 = scmp.ne.s32.totalorder %s67, %s69
    %p76 = scmp.eq.s32.totalorder %s17, 1
    %p77 = por %p75, %p76
    %p78 = scmp.ne.s32.totalorder %s69, %s70
    %p79 = scmp.eq.s32.totalorder %s17, 0
    %p80 = por %p78, %p79
    %p81 = scmp.ne.s32.totalorder %s69, %s70
    %p82 = scmp.eq.s32.totalorder %s18, 1
    %p83 = por %p81, %p82
    %p85 = scmp.ne.s32.totalorder %s70, %s84
    %p86 = scmp.eq.s32.totalorder %s18, 0
    %p87 = por %p85, %p86
    %s89 = sadd.s32 %s88, 1
    %p92 = scmp.eq.s32.totalorder %s12, 1
    %p93 = scmp.ne.s32.totalorder %s88, %s90
    %p94 = scmp.eq.s32.totalorder %s12, 0
    %p95 = por %p93, %p94
    %p96 = scmp.ne.s32.totalorder %s88, %s90
    %p97 = scmp.eq.s32.totalorder %s17, 1
    %p98 = por %p96, %p97
    %p99 = scmp.ne.s32.totalorder %s90, %s91
    %p100 = scmp.eq.s32.totalorder %s17, 0
    %p101 = por %p99, %p100
    %p102 = scmp.ne.s32.totalorder %s90, %s91
    %p103 = scmp.eq.s32.totalorder %s18, 1
    %p104 = por %p102, %p103
    %p106 = scmp.ne.s32.totalorder %s91, %s105
    %p107 = scmp.eq.s32.totalorder %s18, 0
    %p108 = por %p106, %p107
    %s110 = sadd.s32 %s109, 1
    %p113 = scmp.eq.s32.totalorder %s12, 1
    %p114 = scmp.ne.s32.totalorder %s109, %s111
    %p115 = scmp.eq.s32.totalorder %s12, 0
    %p116 = por %p114, %p115
    %p117 = scmp.ne.s32.totalorder %s109, %s111
    %p118 = scmp.eq.s32.totalorder %s17, 1
    %p119 = por %p117, %p118
    %p120 = scmp.ne.s32.totalorder %s111, %s112
    %p121 = scmp.eq.s32.totalorder %s17, 0
    %p122 = por %p120, %p121
    %p123 = scmp.ne.s32.totalorder %s111, %s112
    %p124 = scmp.eq.s32.totalorder %s18, 1
    %p125 = por %p123, %p124
    %p127 = scmp.ne.s32.totalorder %s112, %s126
    %p128 = scmp.eq.s32.totalorder %s18, 0
    %p129 = por %p127, %p128
    %s131 = sadd.s32 %s130, 1
    %p134 = scmp.eq.s32.totalorder %s12, 1
    %p135 = scmp.ne.s32.totalorder %s130, %s132
    %p136 = scmp.eq.s32.totalorder %s12, 0
    %p137 = por %p135, %p136
    %p138 = scmp.ne.s32.totalorder %s130, %s132
    %p139 = scmp.eq.s32.totalorder %s17, 1
    %p140 = por %p138, %p139
    %p141 = scmp.ne.s32.totalorder %s132, %s133
    %p142 = scmp.eq.s32.totalorder %s17, 0
    %p143 = por %p141, %p142
    %p144 = scmp.ne.s32.totalorder %s132, %s133
    %p145 = scmp.eq.s32.totalorder %s18, 1
    %p146 = por %p144, %p145
    %p148 = scmp.ne.s32.totalorder %s133, %s147
    %p149 = scmp.eq.s32.totalorder %s18, 0
    %p150 = por %p148, %p149
    %s151 = ssub.s32 %s12, %s19
    %p152 = scmp.eq.s32.totalorder %s151, 0
    %s154 = sadd.s32 %s153, 1
    %s155 = scalar_select %p152, %s153, %s154
    %p158 = pneg %p152
    %p159 = scmp.eq.s32.totalorder %s12, 1
    %p160 = por %p158, %p159
    %p161 = scmp.ne.s32.totalorder %s153, %s156
    %p162 = scmp.eq.s32.totalorder %s12, 0
    %p163 = por %p161, %p162
    %p164 = scmp.ne.s32.totalorder %s153, %s156
    %p165 = scmp.eq.s32.totalorder %s17, 1
    %p166 = por %p164, %p165
    %p167 = scmp.ne.s32.totalorder %s156, %s157
    %p168 = scmp.eq.s32.totalorder %s17, 0
    %p169 = por %p167, %p168
    %p170 = scmp.ne.s32.totalorder %s156, %s157
    %p171 = scmp.eq.s32.totalorder %s18, 1
    %p172 = por %p170, %p171
    %p174 = scmp.ne.s32.totalorder %s157, %s173
    %p175 = scmp.eq.s32.totalorder %s18, 0
    %p176 = por %p174, %p175
    %p177 = scmp.le.s32.totalorder 1, %s12
    %p178 = scmp.lt.s32.totalorder %s12, 3
    %p179 = pnand %p177, %p178
    %p180 = pneg %p179
    // Predicated region
    $region9: #{unet2d_forward.16} parent=5 // pred_check
      _
    $region10: #{unet2d_forward.16} parent=5 // pred_check_branch
      %182 = sbr.rel (%p179) target = $region12
    $region11: #{unet2d_forward.16} parent=5 // pred_region
      %s183 = ssub.s32 %s12, 1
      // Predicated region
      $region13: #{unet2d_forward.16} parent=11 // pred_check
        %p184 = pneg %p59
      $region14: #{unet2d_forward.16} parent=11 // pred_check_branch
        %186 = sbr.rel (%p184) target = $region16
      $region15: #{unet2d_forward.16} parent=11 // pred_region
        _
      $region16: #{unet2d_forward.16} parent=11 // pred_fallthru
        _
      // Predicated region
      $region17: #{unet2d_forward.16} parent=11 // pred_check
        %p187 = pneg %p80
      $region18: #{unet2d_forward.16} parent=11 // pred_check_branch
        %189 = sbr.rel (%p187) target = $region20
      $region19: #{unet2d_forward.16} parent=11 // pred_region
        _
      $region20: #{unet2d_forward.16} parent=11 // pred_fallthru
        _
      // Predicated region
      $region21: #{unet2d_forward.16} parent=11 // pred_check
        %p190 = pneg %p101
      $region22: #{unet2d_forward.16} parent=11 // pred_check_branch
        %192 = sbr.rel (%p190) target = $region24
      $region23: #{unet2d_forward.16} parent=11 // pred_region
        _
      $region24: #{unet2d_forward.16} parent=11 // pred_fallthru
        _
      // Predicated region
      $region25: #{unet2d_forward.16} parent=11 // pred_check
        %p193 = pneg %p122
      $region26: #{unet2d_forward.16} parent=11 // pred_check_branch
        %195 = sbr.rel (%p193) target = $region28
      $region27: #{unet2d_forward.16} parent=11 // pred_region
        _
      $region28: #{unet2d_forward.16} parent=11 // pred_fallthru
        _
      // Predicated region
      $region29: #{unet2d_forward.16} parent=11 // pred_check
        %p196 = pneg %p143
      $region30: #{unet2d_forward.16} parent=11 // pred_check_branch
        %198 = sbr.rel (%p196) target = $region32
      $region31: #{unet2d_forward.16} parent=11 // pred_region
        _
      $region32: #{unet2d_forward.16} parent=11 // pred_fallthru
        _
    $region12: #{unet2d_forward.16} parent=5 // pred_fallthru
      _
    %p199 = scmp.lt.s32.totalorder %s12, 2
    // Predicated region
    $region33: #{unet2d_forward.16} parent=5 // pred_check
      %p200 = pneg %p199
    $region34: #{unet2d_forward.16} parent=5 // pred_check_branch
      %202 = sbr.rel (%p200) target = $region36
    $region35: #{unet2d_forward.16} parent=5 // pred_region
      // Predicated region
      $region37: #{unet2d_forward.16} parent=35 // pred_check
        %p203 = pneg %p32
      $region38: #{unet2d_forward.16} parent=35 // pred_check_branch
        %205 = sbr.rel (%p203) target = $region40
      $region39: #{unet2d_forward.16} parent=35 // pred_region
        %p206 = scmp.lt.s32.totalorder %s12, 1
        %s207 = scalar_select %p206, %s12, 1
        %s208 = smul.addr %s207, 36
        %s209 = smul.addr %s208, 4
        %s210 = scalar_lea.vmem %s0, %s209
      $region40: #{unet2d_forward.16} parent=35 // pred_fallthru
        _
    $region36: #{unet2d_forward.16} parent=5 // pred_fallthru
      _
    %p211 = scmp.le.s32.totalorder 1, %s12
    %p212 = scmp.lt.s32.totalorder %s12, 3
    %p213 = pnand %p211, %p212
    %p214 = pneg %p213
    // Predicated region
    $region41: #{unet2d_forward.16} parent=5 // pred_check
      _
    $region42: #{unet2d_forward.16} parent=5 // pred_check_branch
      %216 = sbr.rel (%p213) target = $region44
    $region43: #{unet2d_forward.16} parent=5 // pred_region
      %s217 = ssub.s32 %s12, 1
      %p218 = scmp.lt.s32.totalorder %s17, 1
      %s219 = scalar_select %p218, %s17, 1
      %s220 = smul.addr %s219, 36
      %s221 = smul.addr %s220, 4
      %s222 = scalar_lea.vmem %s0, %s221
      %p223 = pneg %p38
      %p224 = pneg %p35
      %p225 = pneg %p59
      %p226 = pneg %p56
      %p227 = pneg %p80
      %p228 = pneg %p77
      %p229 = pneg %p101
      %p230 = pneg %p98
      %p231 = pneg %p122
      %p232 = pneg %p119
      %p233 = pneg %p143
      %p234 = pneg %p140
      %p235 = pneg %p169
      %p236 = pneg %p166
      %p237 = scmp.lt.s32.totalorder %s17, 1
      %s238 = scalar_select %p237, %s17, 1
      %s239 = smul.addr %s238, 8
      %s240 = smul.addr %s239, 4
      %s241 = scalar_lea.vmem %s6, %s240
      %p242 = scmp.lt.s32.totalorder %s17, 1
      %s243 = scalar_select %p242, %s17, 1
      %s244 = smul.addr %s243, 36
      %s245 = smul.addr %s244, 4
      %s246 = scalar_lea.vmem %s0, %s245
      %p247 = scmp.lt.s32.totalorder %s17, 1
      %s248 = scalar_select %p247, %s17, 1
      %s249 = smul.addr %s248, 8
      %s250 = smul.addr %s249, 4
      %s251 = scalar_lea.vmem %s6, %s250
      %v253 = vld [vmem:[%s1] sm:$0xff]
      %v254 = vld [vmem:[%s1 + $0x8] sm:$0xf]
      %v255 = vld [vmem:[%s1 + $0xc] sm:$0xff]
      %v256 = vld [vmem:[%s1 + $0x14] sm:$0xf]
      %v257 = vld [vmem:[%s1 + $0x18] sm:$0xff]
      %v258 = vld [vmem:[%s1 + $0x20] sm:$0xf]
      %v259 = vld [vmem:[%s1 + $0x24] sm:$0xff]
      %v260 = vld [vmem:[%s1 + $0x2c] sm:$0xf]
      %v261 = vld [vmem:[%s1 + $0x30] sm:$0xff]
      %v262 = vld [vmem:[%s1 + $0x38] sm:$0xf]
      %v263 = vld [vmem:[%s1 + $0x3c] sm:$0xff]
      %v264 = vld [vmem:[%s1 + $0x44] sm:$0xf]
      %v265 = vld [vmem:[%s1 + $0x48] sm:$0xff]
      %v266 = vld [vmem:[%s1 + $0x50] sm:$0xf]
      %v267 = vld [vmem:[%s1 + $0x54] sm:$0xff]
      %v268 = vld [vmem:[%s1 + $0x5c] sm:$0xf]
      %v269 = vld [vmem:[%s246] sm:$0xf]
      %v270 = vld [vmem:[%s246 + $0x4] sm:$0xf]
      %v271 = vld [vmem:[%s246 + $0x8] sm:$0xf]
      %v272 = vld [vmem:[%s246 + $0xc] sm:$0xf]
      %v273 = vld [vmem:[%s246 + $0x10] sm:$0xf]
      %v274 = vld [vmem:[%s246 + $0x14] sm:$0xf]
      %v275 = vld [vmem:[%s246 + $0x18] sm:$0xf]
      %v276 = vld [vmem:[%s246 + $0x1c] sm:$0xf]
      %v277 = vld [vmem:[%s246 + $0x20] sm:$0xf]
      %v278 = vld [vmem:[%s246 + $0x24] sm:$0xf]
      %v279 = vld [vmem:[%s246 + $0x28] sm:$0xf]
      %v280 = vld [vmem:[%s246 + $0x2c] sm:$0xf]
      %v281 = vld [vmem:[%s246 + $0x30] sm:$0xf]
      %v282 = vld [vmem:[%s246 + $0x34] sm:$0xf]
      %v283 = vld [vmem:[%s246 + $0x38] sm:$0xf]
      %v284 = vld [vmem:[%s246 + $0x3c] sm:$0xf]
      %v285 = vld [vmem:[%s246 + $0x40] sm:$0xf]
      %v286 = vld [vmem:[%s246 + $0x44] sm:$0xf]
      %v287 = vld [vmem:[%s246 + $0x48] sm:$0xf]
      %v288 = vld [vmem:[%s246 + $0x4c] sm:$0xf]
      %v289 = vld [vmem:[%s246 + $0x50] sm:$0xf]
      %v290 = vld [vmem:[%s246 + $0x54] sm:$0xf]
      %v291 = vld [vmem:[%s246 + $0x58] sm:$0xf]
      %v292 = vld [vmem:[%s246 + $0x5c] sm:$0xf]
      %v293 = vld [vmem:[%s246 + $0x60] sm:$0xf]
      %v294 = vld [vmem:[%s246 + $0x64] sm:$0xf]
      %v295 = vld [vmem:[%s246 + $0x68] sm:$0xf]
      %v296 = vld [vmem:[%s246 + $0x6c] sm:$0xf]
      %v297 = vld [vmem:[%s246 + $0x70] sm:$0xf]
      %v298 = vld [vmem:[%s246 + $0x74] sm:$0xf]
      %v299 = vld [vmem:[%s246 + $0x78] sm:$0xf]
      %v300 = vld [vmem:[%s246 + $0x7c] sm:$0xf]
      %v301 = vld [vmem:[%s246 + $0x80] sm:$0xf]
      %v302 = vld [vmem:[%s246 + $0x84] sm:$0xf]
      %v303 = vld [vmem:[%s246 + $0x88] sm:$0xf]
      %v304 = vld [vmem:[%s246 + $0x8c] sm:$0xf]
      %v305 = vld [vmem:[%s2] sm:$0xff]
      %v306 = vld [vmem:[%s2 + $0x8] sm:$0xff]
      %v307 = vld [vmem:[%s2 + $0x10] sm:$0xff]
      %v308 = vld [vmem:[%s2 + $0x18] sm:$0xff]
      %v309 = vld [vmem:[%s2 + $0x20] sm:$0xff]
      %v310 = vld [vmem:[%s2 + $0x28] sm:$0xff]
      %v311 = vld [vmem:[%s2 + $0x30] sm:$0xff]
      %v312 = vld [vmem:[%s2 + $0x38] sm:$0xff]
      %314 = vset.pattern.permute.xlu0 0
      %315 = vperm.xlu0 %314, %v305
      %v316 = vpop.permute.xlu0 %315
      %319 = vset.pattern.permute.xlu0 0
      %320 = vperm.xlu0 %319, %v306
      %v321 = vpop.permute.xlu0 %320
      %324 = vset.pattern.permute.xlu0 0
      %325 = vperm.xlu0 %324, %v307
      %v326 = vpop.permute.xlu0 %325
      %329 = vset.pattern.permute.xlu0 0
      %330 = vperm.xlu0 %329, %v308
      %v331 = vpop.permute.xlu0 %330
      %334 = vset.pattern.permute.xlu0 0
      %335 = vperm.xlu0 %334, %v309
      %v336 = vpop.permute.xlu0 %335
      %339 = vset.pattern.permute.xlu0 0
      %340 = vperm.xlu0 %339, %v310
      %v341 = vpop.permute.xlu0 %340
      %344 = vset.pattern.permute.xlu0 0
      %345 = vperm.xlu0 %344, %v311
      %v346 = vpop.permute.xlu0 %345
      %349 = vset.pattern.permute.xlu0 0
      %350 = vperm.xlu0 %349, %v312
      %v351 = vpop.permute.xlu0 %350
      %v369 = vunpack.c.l.b16 %v253
      %v370 = vunpack.c.h.b16 %v253
      %v371 = vunpack.c.l.b16 %v254
      %v372 = vunpack.c.l.b16 %v255
      %v373 = vunpack.c.h.b16 %v255
      %v374 = vunpack.c.l.b16 %v256
      %v375 = vunpack.c.l.b16 %v257
      %v376 = vunpack.c.h.b16 %v257
      %v377 = vunpack.c.l.b16 %v258
      %v378 = vunpack.c.l.b16 %v259
      %v379 = vunpack.c.h.b16 %v259
      %v380 = vunpack.c.l.b16 %v260
      %v381 = vunpack.c.l.b16 %v261
      %v382 = vunpack.c.h.b16 %v261
      %v383 = vunpack.c.l.b16 %v262
      %v384 = vunpack.c.l.b16 %v263
      %v385 = vunpack.c.h.b16 %v263
      %v386 = vunpack.c.l.b16 %v264
      %v387 = vunpack.c.l.b16 %v265
      %v388 = vunpack.c.h.b16 %v265
      %v389 = vunpack.c.l.b16 %v266
      %v390 = vunpack.c.l.b16 %v267
      %v391 = vunpack.c.h.b16 %v267
      %v392 = vunpack.c.l.b16 %v268
      %v393 = vpack.c.b16 %v372, %v369
      %v394 = vpack.c.b16 %v373, %v370
      %v395 = vpack.c.b16 %v374, %v371
      %v396 = vpack.c.b16 %v378, %v375
      %v397 = vpack.c.b16 %v379, %v376
      %v398 = vpack.c.b16 %v380, %v377
      %v399 = vpack.c.b16 %v384, %v381
      %v400 = vpack.c.b16 %v385, %v382
      %v401 = vpack.c.b16 %v386, %v383
      %v402 = vpack.c.b16 %v390, %v387
      %v403 = vpack.c.b16 %v391, %v388
      %v404 = vpack.c.b16 %v392, %v389
      %v449 = vunpack.c.l.b16 %v269
      %v450 = vunpack.c.l.b16 %v270
      %v451 = vunpack.c.l.b16 %v271
      %v452 = vunpack.c.l.b16 %v272
      %v453 = vunpack.c.l.b16 %v273
      %v454 = vunpack.c.l.b16 %v274
      %v455 = vunpack.c.l.b16 %v275
      %v456 = vunpack.c.l.b16 %v276
      %v457 = vunpack.c.l.b16 %v277
      %v458 = vunpack.c.l.b16 %v278
      %v459 = vunpack.c.l.b16 %v279
      %v460 = vunpack.c.l.b16 %v280
      %v461 = vunpack.c.l.b16 %v281
      %v462 = vunpack.c.l.b16 %v282
      %v463 = vunpack.c.l.b16 %v283
      %v464 = vunpack.c.l.b16 %v284
      %v465 = vunpack.c.l.b16 %v285
      %v466 = vunpack.c.l.b16 %v286
      %v467 = vunpack.c.l.b16 %v287
      %v468 = vunpack.c.l.b16 %v288
      %v469 = vunpack.c.l.b16 %v289
      %v470 = vunpack.c.l.b16 %v290
      %v471 = vunpack.c.l.b16 %v291
      %v472 = vunpack.c.l.b16 %v292
      %v473 = vunpack.c.l.b16 %v293
      %v474 = vunpack.c.l.b16 %v294
      %v475 = vunpack.c.l.b16 %v295
      %v476 = vunpack.c.l.b16 %v296
      %v477 = vunpack.c.l.b16 %v297
      %v478 = vunpack.c.l.b16 %v298
      %v479 = vunpack.c.l.b16 %v299
      %v480 = vunpack.c.l.b16 %v300
      %v481 = vunpack.c.l.b16 %v301
      %v482 = vunpack.c.l.b16 %v302
      %v483 = vunpack.c.l.b16 %v303
      %v484 = vunpack.c.l.b16 %v304
      %v485 = vpack.c.b16 %v450, %v449
      %v486 = vpack.c.b16 %v452, %v451
      %v487 = vpack.c.b16 %v454, %v453
      %v488 = vpack.c.b16 %v456, %v455
      %v489 = vpack.c.b16 %v458, %v457
      %v490 = vpack.c.b16 %v460, %v459
      %v491 = vpack.c.b16 %v462, %v461
      %v492 = vpack.c.b16 %v464, %v463
      %v493 = vpack.c.b16 %v466, %v465
      %v494 = vpack.c.b16 %v468, %v467
      %v495 = vpack.c.b16 %v470, %v469
      %v496 = vpack.c.b16 %v472, %v471
      %v497 = vpack.c.b16 %v474, %v473
      %v498 = vpack.c.b16 %v476, %v475
      %v499 = vpack.c.b16 %v478, %v477
      %v500 = vpack.c.b16 %v480, %v479
      %v501 = vpack.c.b16 %v482, %v481
      %v502 = vpack.c.b16 %v484, %v483
      %vm521 = vcmask 261120
      %v523 = vsel %vm521, %v395, 0
      %v526 = vsel %vm521, %v398, 0
      %v529 = vsel %vm521, %v401, 0
      %v532 = vsel %vm521, %v404, 0
      %534 = vmatprep.subr.bf16.mxu0 0
      %535 = vmatpush1.bf16.msra.mxu0 %v492
      %536 = vmatprep.subr.bf16.mxu0 0
      %537 = vmatpush1.bf16.msra.mxu0 %v491
      %538 = vmatprep.subr.bf16.mxu0 0
      %539 = vmatpush1.bf16.msra.mxu0 %v490
      %540 = vmatprep.subr.bf16.mxu0 0
      %541 = vmatpush1.bf16.msra.mxu0 %v489
      %542 = vmatprep.subr.bf16.mxu0 0
      %543 = vmatpush1.bf16.msra.mxu0 %v488
      %544 = vmatprep.subr.bf16.mxu0 0
      %545 = vmatpush1.bf16.msra.mxu0 %v487
      %546 = vmatprep.subr.bf16.mxu0 0
      %547 = vmatpush1.bf16.msra.mxu0 %v486
      %548 = vmatprep.subr.bf16.mxu0 0
      %549 = vmatpush1.bf16.msra.mxu0 %v485
      %550 = vmatprep.subr.bf16.mxu0 0
      %551 = vmatpush2.bf16.msra.mxu0 %v500
      %552 = vmatprep.subr.bf16.mxu0 0
      %553 = vmatpush2.bf16.msra.mxu0 %v499
      %554 = vmatprep.subr.bf16.mxu0 0
      %555 = vmatpush2.bf16.msra.mxu0 %v498
      %556 = vmatprep.subr.bf16.mxu0 0
      %557 = vmatpush2.bf16.msra.mxu0 %v497
      %558 = vmatprep.subr.bf16.mxu0 0
      %559 = vmatpush2.bf16.msra.mxu0 %v496
      %560 = vmatprep.subr.bf16.mxu0 0
      %561 = vmatpush2.bf16.msra.mxu0 %v495
      %562 = vmatprep.subr.bf16.mxu0 0
      %563 = vmatpush2.bf16.msra.mxu0 %v494
      %564 = vmatprep.subr.bf16.mxu0 0
      %565 = vmatpush2.bf16.msra.mxu0 %v493
      %566 = vmatprep.mubr.bf16.mxu0 %v394
      %567 = vmatmul.mubr.bf16.gmra.mxu0 %v393
      %v568 = vpop.f32.mrf.mxu0
      %v569 = vadd.f32 %v316, %v568
      %v570 = vpop.f32.mrf.mxu0
      %v571 = vpop.f32.mrf.mxu0
      %v572 = vadd.f32 %v321, %v571
      %v573 = vpop.f32.mrf.mxu0
      %574 = vmatprep.mubr.bf16.mxu0 %v397
      %575 = vmatmul.mubr.bf16.gmra.mxu0 %v396
      %v576 = vpop.f32.mrf.mxu0
      %v577 = vadd.f32 %v326, %v576
      %v578 = vpop.f32.mrf.mxu0
      %v579 = vpop.f32.mrf.mxu0
      %v580 = vadd.f32 %v331, %v579
      %v581 = vpop.f32.mrf.mxu0
      %582 = vmatprep.mubr.bf16.mxu0 %v400
      %583 = vmatmul.mubr.bf16.gmra.mxu0 %v399
      %v584 = vpop.f32.mrf.mxu0
      %v585 = vadd.f32 %v336, %v584
      %v586 = vpop.f32.mrf.mxu0
      %v587 = vpop.f32.mrf.mxu0
      %v588 = vadd.f32 %v341, %v587
      %v589 = vpop.f32.mrf.mxu0
      %590 = vmatprep.mubr.bf16.mxu0 %v403
      %591 = vmatmul.mubr.bf16.gmra.mxu0 %v402
      %v592 = vpop.f32.mrf.mxu0
      %v593 = vadd.f32 %v346, %v592
      %v594 = vpop.f32.mrf.mxu0
      %v595 = vpop.f32.mrf.mxu0
      %v596 = vadd.f32 %v351, %v595
      %v597 = vpop.f32.mrf.mxu0
      %598 = vdwg.mxu0
      %599 = vmatprep.subr.bf16.mxu0 0
      %600 = vmatpush1.bf16.msra.mxu0 0
      %601 = vmatprep.subr.bf16.mxu0 0
      %602 = vmatpush1.bf16.msra.mxu0 0
      %603 = vmatprep.subr.bf16.mxu0 0
      %604 = vmatpush1.bf16.msra.mxu0 0
      %605 = vmatprep.subr.bf16.mxu0 0
      %606 = vmatpush1.bf16.msra.mxu0 0
      %607 = vmatprep.subr.bf16.mxu0 0
      %608 = vmatpush1.bf16.msra.mxu0 0
      %609 = vmatprep.subr.bf16.mxu0 0
      %610 = vmatpush1.bf16.msra.mxu0 0
      %611 = vmatprep.subr.bf16.mxu0 0
      %612 = vmatpush1.bf16.msra.mxu0 %v502
      %613 = vmatprep.subr.bf16.mxu0 0
      %614 = vmatpush1.bf16.msra.mxu0 %v501
      %615 = vmatprep.subr.bf16.mxu0 0
      %616 = vmatpush2.bf16.msra.mxu0 0
      %617 = vmatprep.subr.bf16.mxu0 0
      %618 = vmatpush2.bf16.msra.mxu0 0
      %619 = vmatprep.subr.bf16.mxu0 0
      %620 = vmatpush2.bf16.msra.mxu0 0
      %621 = vmatprep.subr.bf16.mxu0 0
      %622 = vmatpush2.bf16.msra.mxu0 0
      %623 = vmatprep.subr.bf16.mxu0 0
      %624 = vmatpush2.bf16.msra.mxu0 0
      %625 = vmatprep.subr.bf16.mxu0 0
      %626 = vmatpush2.bf16.msra.mxu0 0
      %627 = vmatprep.subr.bf16.mxu0 0
      %628 = vmatpush2.bf16.msra.mxu0 0
      %629 = vmatprep.subr.bf16.mxu0 0
      %630 = vmatpush2.bf16.msra.mxu0 0
      %631 = vmatprep.mubr.bf16.mxu0 0
      %632 = vmatmul.mubr.bf16.gmra.mxu0 %v523
      %v633 = vpop.f32.mrf.mxu0
      %v634 = vadd.f32 %v569, %v633
      %v635 = vpop.f32.mrf.mxu0
      %v636 = vpop.f32.mrf.mxu0
      %v637 = vadd.f32 %v572, %v636
      %v638 = vpop.f32.mrf.mxu0
      %639 = vmatprep.mubr.bf16.mxu0 0
      %640 = vmatmul.mubr.bf16.gmra.mxu0 %v526
      %v641 = vpop.f32.mrf.mxu0
      %v642 = vadd.f32 %v577, %v641
      %v643 = vpop.f32.mrf.mxu0
      %v644 = vpop.f32.mrf.mxu0
      %v645 = vadd.f32 %v580, %v644
      %v646 = vpop.f32.mrf.mxu0
      %647 = vmatprep.mubr.bf16.mxu0 0
      %648 = vmatmul.mubr.bf16.gmra.mxu0 %v529
      %v649 = vpop.f32.mrf.mxu0
      %v650 = vadd.f32 %v585, %v649
      %v651 = vpop.f32.mrf.mxu0
      %v652 = vpop.f32.mrf.mxu0
      %v653 = vadd.f32 %v588, %v652
      %v654 = vpop.f32.mrf.mxu0
      %655 = vmatprep.mubr.bf16.mxu0 0
      %656 = vmatmul.mubr.bf16.gmra.mxu0 %v532
      %v657 = vpop.f32.mrf.mxu0
      %v658 = vadd.f32 %v593, %v657
      %v659 = vpop.f32.mrf.mxu0
      %v660 = vpop.f32.mrf.mxu0
      %v661 = vadd.f32 %v596, %v660
      %v662 = vpop.f32.mrf.mxu0
      %663 = vdwg.mxu0
      %v664 = vld [vmem:[%s5] sm:$0xff]
      %v665 = vld [vmem:[%s5 + $0x8] sm:$0xff]
      %v666 = vld [vmem:[%s5 + $0x10] sm:$0xff]
      %v667 = vld [vmem:[%s5 + $0x18] sm:$0xff]
      %v668 = vld [vmem:[%s5 + $0x20] sm:$0xff]
      %v669 = vld [vmem:[%s5 + $0x28] sm:$0xff]
      %v670 = vld [vmem:[%s5 + $0x30] sm:$0xff]
      %v671 = vld [vmem:[%s5 + $0x38] sm:$0xff]
      %v672 = vld [vmem:[%s3] sm:$0xff]
      %v673 = vld [vmem:[%s3 + $0x8] sm:$0xff]
      %v674 = vld [vmem:[%s3 + $0x10] sm:$0xff]
      %v675 = vld [vmem:[%s3 + $0x18] sm:$0xff]
      %v676 = vld [vmem:[%s3 + $0x20] sm:$0xff]
      %v677 = vld [vmem:[%s3 + $0x28] sm:$0xff]
      %v678 = vld [vmem:[%s3 + $0x30] sm:$0xff]
      %v679 = vld [vmem:[%s3 + $0x38] sm:$0xff]
      %v680 = vld [vmem:[%s4] sm:$0xff]
      %v681 = vld [vmem:[%s4 + $0x8] sm:$0xff]
      %v682 = vld [vmem:[%s4 + $0x10] sm:$0xff]
      %v683 = vld [vmem:[%s4 + $0x18] sm:$0xff]
      %v684 = vld [vmem:[%s4 + $0x20] sm:$0xff]
      %v685 = vld [vmem:[%s4 + $0x28] sm:$0xff]
      %v686 = vld [vmem:[%s4 + $0x30] sm:$0xff]
      %v687 = vld [vmem:[%s4 + $0x38] sm:$0xff]
      %vm688 = vcmask 130048
      %v689 = vsel %vm688, %v634, 0.0
      %690 = vadd.xlane.f32.xlu0 %v689
      %v691 = vpop.xlane.xlu0 %690
      %v692 = vsel %vm688, %v637, 0.0
      %693 = vadd.xlane.f32.xlu0 %v692
      %v694 = vpop.xlane.xlu0 %693
      %v695 = vsel %vm688, %v642, 0.0
      %696 = vadd.xlane.f32.xlu0 %v695
      %v697 = vpop.xlane.xlu0 %696
      %v698 = vsel %vm688, %v645, 0.0
      %699 = vadd.xlane.f32.xlu0 %v698
      %v700 = vpop.xlane.xlu0 %699
      %v701 = vsel %vm688, %v650, 0.0
      %702 = vadd.xlane.f32.xlu0 %v701
      %v703 = vpop.xlane.xlu0 %702
      %v704 = vsel %vm688, %v653, 0.0
      %705 = vadd.xlane.f32.xlu0 %v704
      %v706 = vpop.xlane.xlu0 %705
      %v707 = vsel %vm688, %v658, 0.0
      %708 = vadd.xlane.f32.xlu0 %v707
      %v709 = vpop.xlane.xlu0 %708
      %v710 = vsel %vm688, %v661, 0.0
      %711 = vadd.xlane.f32.xlu0 %v710
      %v712 = vpop.xlane.xlu0 %711
      %v713 = vmul.f32 %v634, %v634
      %v714 = vmul.f32 %v637, %v637
      %v715 = vmul.f32 %v642, %v642
      %v716 = vmul.f32 %v645, %v645
      %v717 = vmul.f32 %v650, %v650
      %v718 = vmul.f32 %v653, %v653
      %v719 = vmul.f32 %v658, %v658
      %v720 = vmul.f32 %v661, %v661
      %v721 = vsel %vm688, %v713, 0.0
      %722 = vadd.xlane.f32.xlu0 %v721
      %v723 = vpop.xlane.xlu0 %722
      %v724 = vsel %vm688, %v714, 0.0
      %725 = vadd.xlane.f32.xlu0 %v724
      %v726 = vpop.xlane.xlu0 %725
      %v727 = vsel %vm688, %v715, 0.0
      %728 = vadd.xlane.f32.xlu0 %v727
      %v729 = vpop.xlane.xlu0 %728
      %v730 = vsel %vm688, %v716, 0.0
      %731 = vadd.xlane.f32.xlu0 %v730
      %v732 = vpop.xlane.xlu0 %731
      %v733 = vsel %vm688, %v717, 0.0
      %734 = vadd.xlane.f32.xlu0 %v733
      %v735 = vpop.xlane.xlu0 %734
      %v736 = vsel %vm688, %v718, 0.0
      %737 = vadd.xlane.f32.xlu0 %v736
      %v738 = vpop.xlane.xlu0 %737
      %v739 = vsel %vm688, %v719, 0.0
      %740 = vadd.xlane.f32.xlu0 %v739
      %v741 = vpop.xlane.xlu0 %740
      %v742 = vsel %vm688, %v720, 0.0
      %743 = vadd.xlane.f32.xlu0 %v742
      %v744 = vpop.xlane.xlu0 %743
      %vm745 = vcmask 523264
      %v747 = vsel %vm745, %v664, 0
      %v750 = vsel %vm745, %v665, 0
      %v753 = vsel %vm745, %v666, 0
      %v756 = vsel %vm745, %v667, 0
      %v759 = vsel %vm745, %v668, 0
      %v762 = vsel %vm745, %v669, 0
      %v765 = vsel %vm745, %v670, 0
      %v768 = vsel %vm745, %v671, 0
      %770 = vmatprep.subr.mxu0 0.0
      %771 = vmatpush1.msra.mxu0 0.0
      %772 = vmatprep.subr.mxu0 0.0
      %773 = vmatpush1.msra.mxu0 0.0
      %774 = vmatprep.subr.mxu0 0.0
      %775 = vmatpush1.msra.mxu0 0.0
      %776 = vmatprep.subr.mxu0 0.0
      %777 = vmatpush1.msra.mxu0 0.0
      %778 = vmatprep.subr.mxu0 0.0
      %779 = vmatpush1.msra.mxu0 0.0
      %780 = vmatprep.subr.mxu0 0.0
      %781 = vmatpush1.msra.mxu0 0.0
      %782 = vmatprep.subr.mxu0 0.0
      %783 = vmatpush1.msra.mxu0 0.0
      %784 = vmatprep.subr.mxu0 0.0
      %785 = vmatpush1.msra.mxu0 0.0
      %786 = vmatprep.subr.mxu0 0.0
      %787 = vmatpush1.msra.mxu0 %v712
      %788 = vmatprep.subr.mxu0 0.0
      %789 = vmatpush1.msra.mxu0 %v709
      %790 = vmatprep.subr.mxu0 0.0
      %791 = vmatpush1.msra.mxu0 %v706
      %792 = vmatprep.subr.mxu0 0.0
      %793 = vmatpush1.msra.mxu0 %v703
      %794 = vmatprep.subr.mxu0 0.0
      %795 = vmatpush1.msra.mxu0 %v700
      %796 = vmatprep.subr.mxu0 0.0
      %797 = vmatpush1.msra.mxu0 %v697
      %798 = vmatprep.subr.mxu0 0.0
      %799 = vmatpush1.msra.mxu0 %v694
      %800 = vmatprep.subr.mxu0 0.0
      %801 = vmatpush1.msra.mxu0 %v691
      %802 = vmatprep.subr.mxu0 0.0
      %803 = vmatpush2.msra.mxu0 0.0
      %804 = vmatprep.subr.mxu0 0.0
      %805 = vmatpush2.msra.mxu0 0.0
      %806 = vmatprep.subr.mxu0 0.0
      %807 = vmatpush2.msra.mxu0 0.0
      %808 = vmatprep.subr.mxu0 0.0
      %809 = vmatpush2.msra.mxu0 0.0
      %810 = vmatprep.subr.mxu0 0.0
      %811 = vmatpush2.msra.mxu0 0.0
      %812 = vmatprep.subr.mxu0 0.0
      %813 = vmatpush2.msra.mxu0 0.0
      %814 = vmatprep.subr.mxu0 0.0
      %815 = vmatpush2.msra.mxu0 0.0
      %816 = vmatprep.subr.mxu0 0.0
      %817 = vmatpush2.msra.mxu0 0.0
      %818 = vmatprep.subr.mxu0 0.0
      %819 = vmatpush2.msra.mxu0 0.0
      %820 = vmatprep.subr.mxu0 0.0
      %821 = vmatpush2.msra.mxu0 0.0
      %822 = vmatprep.subr.mxu0 0.0
      %823 = vmatpush2.msra.mxu0 0.0
      %824 = vmatprep.subr.mxu0 0.0
      %825 = vmatpush2.msra.mxu0 0.0
      %826 = vmatprep.subr.mxu0 0.0
      %827 = vmatpush2.msra.mxu0 0.0
      %828 = vmatprep.subr.mxu0 0.0
      %829 = vmatpush2.msra.mxu0 0.0
      %830 = vmatprep.subr.mxu0 0.0
      %831 = vmatpush2.msra.mxu0 0.0
      %832 = vmatprep.subr.mxu0 0.0
      %833 = vmatpush2.msra.mxu0 0.0
      %834 = vmatprep.mubr.f32.mxu0 0.0
      %835 = vmatmul.mubr.f32.gmra.mxu0 %v747
      %v836 = vpop.f32.mrf.mxu0
      %v837 = vadd.f32 0.0, %v836
      %v838 = vpop.f32.mrf.mxu0
      %839 = vmatprep.mubr.f32.mxu0 0.0
      %840 = vmatmul.mubr.f32.gmra.mxu0 %v750
      %v841 = vpop.f32.mrf.mxu0
      %v842 = vadd.f32 0.0, %v841
      %v843 = vpop.f32.mrf.mxu0
      %844 = vmatprep.mubr.f32.mxu0 0.0
      %845 = vmatmul.mubr.f32.gmra.mxu0 %v753
      %v846 = vpop.f32.mrf.mxu0
      %v847 = vadd.f32 0.0, %v846
      %v848 = vpop.f32.mrf.mxu0
      %849 = vmatprep.mubr.f32.mxu0 0.0
      %850 = vmatmul.mubr.f32.gmra.mxu0 %v756
      %v851 = vpop.f32.mrf.mxu0
      %v852 = vadd.f32 0.0, %v851
      %v853 = vpop.f32.mrf.mxu0
      %854 = vmatprep.mubr.f32.mxu0 0.0
      %855 = vmatmul.mubr.f32.gmra.mxu0 %v759
      %v856 = vpop.f32.mrf.mxu0
      %v857 = vadd.f32 0.0, %v856
      %v858 = vpop.f32.mrf.mxu0
      %859 = vmatprep.mubr.f32.mxu0 0.0
      %860 = vmatmul.mubr.f32.gmra.mxu0 %v762
      %v861 = vpop.f32.mrf.mxu0
      %v862 = vadd.f32 0.0, %v861
      %v863 = vpop.f32.mrf.mxu0
      %864 = vmatprep.mubr.f32.mxu0 0.0
      %865 = vmatmul.mubr.f32.gmra.mxu0 %v765
      %v866 = vpop.f32.mrf.mxu0
      %v867 = vadd.f32 0.0, %v866
      %v868 = vpop.f32.mrf.mxu0
      %869 = vmatprep.mubr.f32.mxu0 0.0
      %870 = vmatmul.mubr.f32.gmra.mxu0 %v768
      %v871 = vpop.f32.mrf.mxu0
      %v872 = vadd.f32 0.0, %v871
      %v873 = vpop.f32.mrf.mxu0
      %874 = vdwg.mxu0
      %875 = vmatprep.subr.mxu0 0.0
      %876 = vmatpush1.msra.mxu0 0.0
      %877 = vmatprep.subr.mxu0 0.0
      %878 = vmatpush1.msra.mxu0 0.0
      %879 = vmatprep.subr.mxu0 0.0
      %880 = vmatpush1.msra.mxu0 0.0
      %881 = vmatprep.subr.mxu0 0.0
      %882 = vmatpush1.msra.mxu0 0.0
      %883 = vmatprep.subr.mxu0 0.0
      %884 = vmatpush1.msra.mxu0 0.0
      %885 = vmatprep.subr.mxu0 0.0
      %886 = vmatpush1.msra.mxu0 0.0
      %887 = vmatprep.subr.mxu0 0.0
      %888 = vmatpush1.msra.mxu0 0.0
      %889 = vmatprep.subr.mxu0 0.0
      %890 = vmatpush1.msra.mxu0 0.0
      %891 = vmatprep.subr.mxu0 0.0
      %892 = vmatpush1.msra.mxu0 %v744
      %893 = vmatprep.subr.mxu0 0.0
      %894 = vmatpush1.msra.mxu0 %v741
      %895 = vmatprep.subr.mxu0 0.0
      %896 = vmatpush1.msra.mxu0 %v738
      %897 = vmatprep.subr.mxu0 0.0
      %898 = vmatpush1.msra.mxu0 %v735
      %899 = vmatprep.subr.mxu0 0.0
      %900 = vmatpush1.msra.mxu0 %v732
      %901 = vmatprep.subr.mxu0 0.0
      %902 = vmatpush1.msra.mxu0 %v729
      %903 = vmatprep.subr.mxu0 0.0
      %904 = vmatpush1.msra.mxu0 %v726
      %905 = vmatprep.subr.mxu0 0.0
      %906 = vmatpush1.msra.mxu0 %v723
      %907 = vmatprep.subr.mxu0 0.0
      %908 = vmatpush2.msra.mxu0 0.0
      %909 = vmatprep.subr.mxu0 0.0
      %910 = vmatpush2.msra.mxu0 0.0
      %911 = vmatprep.subr.mxu0 0.0
      %912 = vmatpush2.msra.mxu0 0.0
      %913 = vmatprep.subr.mxu0 0.0
      %914 = vmatpush2.msra.mxu0 0.0
      %915 = vmatprep.subr.mxu0 0.0
      %916 = vmatpush2.msra.mxu0 0.0
      %917 = vmatprep.subr.mxu0 0.0
      %918 = vmatpush2.msra.mxu0 0.0
      %919 = vmatprep.subr.mxu0 0.0
      %920 = vmatpush2.msra.mxu0 0.0
      %921 = vmatprep.subr.mxu0 0.0
      %922 = vmatpush2.msra.mxu0 0.0
      %923 = vmatprep.subr.mxu0 0.0
      %924 = vmatpush2.msra.mxu0 0.0
      %925 = vmatprep.subr.mxu0 0.0
      %926 = vmatpush2.msra.mxu0 0.0
      %927 = vmatprep.subr.mxu0 0.0
      %928 = vmatpush2.msra.mxu0 0.0
      %929 = vmatprep.subr.mxu0 0.0
      %930 = vmatpush2.msra.mxu0 0.0
      %931 = vmatprep.subr.mxu0 0.0
      %932 = vmatpush2.msra.mxu0 0.0
      %933 = vmatprep.subr.mxu0 0.0
      %934 = vmatpush2.msra.mxu0 0.0
      %935 = vmatprep.subr.mxu0 0.0
      %936 = vmatpush2.msra.mxu0 0.0
      %937 = vmatprep.subr.mxu0 0.0
      %938 = vmatpush2.msra.mxu0 0.0
      %939 = vmatprep.mubr.f32.mxu0 0.0
      %940 = vmatmul.mubr.f32.gmra.mxu0 %v747
      %v941 = vpop.f32.mrf.mxu0
      %v942 = vadd.f32 0.0, %v941
      %v943 = vpop.f32.mrf.mxu0
      %944 = vmatprep.mubr.f32.mxu0 0.0
      %945 = vmatmul.mubr.f32.gmra.mxu0 %v750
      %v946 = vpop.f32.mrf.mxu0
      %v947 = vadd.f32 0.0, %v946
      %v948 = vpop.f32.mrf.mxu0
      %949 = vmatprep.mubr.f32.mxu0 0.0
      %950 = vmatmul.mubr.f32.gmra.mxu0 %v753
      %v951 = vpop.f32.mrf.mxu0
      %v952 = vadd.f32 0.0, %v951
      %v953 = vpop.f32.mrf.mxu0
      %954 = vmatprep.mubr.f32.mxu0 0.0
      %955 = vmatmul.mubr.f32.gmra.mxu0 %v756
      %v956 = vpop.f32.mrf.mxu0
      %v957 = vadd.f32 0.0, %v956
      %v958 = vpop.f32.mrf.mxu0
      %959 = vmatprep.mubr.f32.mxu0 0.0
      %960 = vmatmul.mubr.f32.gmra.mxu0 %v759
      %v961 = vpop.f32.mrf.mxu0
      %v962 = vadd.f32 0.0, %v961
      %v963 = vpop.f32.mrf.mxu0
      %964 = vmatprep.mubr.f32.mxu0 0.0
      %965 = vmatmul.mubr.f32.gmra.mxu0 %v762
      %v966 = vpop.f32.mrf.mxu0
      %v967 = vadd.f32 0.0, %v966
      %v968 = vpop.f32.mrf.mxu0
      %969 = vmatprep.mubr.f32.mxu0 0.0
      %970 = vmatmul.mubr.f32.gmra.mxu0 %v765
      %v971 = vpop.f32.mrf.mxu0
      %v972 = vadd.f32 0.0, %v971
      %v973 = vpop.f32.mrf.mxu0
      %974 = vmatprep.mubr.f32.mxu0 0.0
      %975 = vmatmul.mubr.f32.gmra.mxu0 %v768
      %v976 = vpop.f32.mrf.mxu0
      %v977 = vadd.f32 0.0, %v976
      %v978 = vpop.f32.mrf.mxu0
      %979 = vdwg.mxu0
      %v980 = vmul.f32 %v837, %v837
      %v981 = vmul.f32 %v842, %v842
      %v982 = vmul.f32 %v847, %v847
      %v983 = vmul.f32 %v852, %v852
      %v984 = vmul.f32 %v857, %v857
      %v985 = vmul.f32 %v862, %v862
      %v986 = vmul.f32 %v867, %v867
      %v987 = vmul.f32 %v872, %v872
      %v988 = vsub.f32 %v942, %v980
      %v989 = vsub.f32 %v947, %v981
      %v990 = vsub.f32 %v952, %v982
      %v991 = vsub.f32 %v957, %v983
      %v992 = vsub.f32 %v962, %v984
      %v993 = vsub.f32 %v967, %v985
      %v994 = vsub.f32 %v972, %v986
      %v995 = vsub.f32 %v977, %v987
      %v996 = vmax.f32 %v988, 0.0
      %v997 = vmax.f32 %v989, 0.0
      %v998 = vmax.f32 %v990, 0.0
      %v999 = vmax.f32 %v991, 0.0
      %v1000 = vmax.f32 %v992, 0.0
      %v1001 = vmax.f32 %v993, 0.0
      %v1002 = vmax.f32 %v994, 0.0
      %v1003 = vmax.f32 %v995, 0.0
      %v1004 = vadd.f32 %v996, 1e-05
      %v1005 = vadd.f32 %v997, 1e-05
      %v1006 = vadd.f32 %v998, 1e-05
      %v1007 = vadd.f32 %v999, 1e-05
      %v1008 = vadd.f32 %v1000, 1e-05
      %v1009 = vadd.f32 %v1001, 1e-05
      %v1010 = vadd.f32 %v1002, 1e-05
      %v1011 = vadd.f32 %v1003, 1e-05
      %v1012 = vrsqrt.pop %v1004
      %v1013 = vrsqrt.pop %v1005
      %v1014 = vrsqrt.pop %v1006
      %v1015 = vrsqrt.pop %v1007
      %v1016 = vrsqrt.pop %v1008
      %v1017 = vrsqrt.pop %v1009
      %v1018 = vrsqrt.pop %v1010
      %v1019 = vrsqrt.pop %v1011
      %1021 = vset.pattern.permute.xlu0 0
      %1022 = vperm.xlu0 %1021, %v837
      %v1023 = vpop.permute.xlu0 %1022
      %1026 = vset.pattern.permute.xlu0 0
      %1027 = vperm.xlu0 %1026, %v842
      %v1028 = vpop.permute.xlu0 %1027
      %1031 = vset.pattern.permute.xlu0 0
      %1032 = vperm.xlu0 %1031, %v847
      %v1033 = vpop.permute.xlu0 %1032
      %1036 = vset.pattern.permute.xlu0 0
      %1037 = vperm.xlu0 %1036, %v852
      %v1038 = vpop.permute.xlu0 %1037
      %1041 = vset.pattern.permute.xlu0 0
      %1042 = vperm.xlu0 %1041, %v857
      %v1043 = vpop.permute.xlu0 %1042
      %1046 = vset.pattern.permute.xlu0 0
      %1047 = vperm.xlu0 %1046, %v862
      %v1048 = vpop.permute.xlu0 %1047
      %1051 = vset.pattern.permute.xlu0 0
      %1052 = vperm.xlu0 %1051, %v867
      %v1053 = vpop.permute.xlu0 %1052
      %1056 = vset.pattern.permute.xlu0 0
      %1057 = vperm.xlu0 %1056, %v872
      %v1058 = vpop.permute.xlu0 %1057
      %v1060 = vsub.f32 %v634, %v1023
      %v1061 = vsub.f32 %v637, %v1028
      %v1062 = vsub.f32 %v642, %v1033
      %v1063 = vsub.f32 %v645, %v1038
      %v1064 = vsub.f32 %v650, %v1043
      %v1065 = vsub.f32 %v653, %v1048
      %v1066 = vsub.f32 %v658, %v1053
      %v1067 = vsub.f32 %v661, %v1058
      %v1068 = vmul.f32 %v1012, %v672
      %v1069 = vmul.f32 %v1013, %v673
      %v1070 = vmul.f32 %v1014, %v674
      %v1071 = vmul.f32 %v1015, %v675
      %v1072 = vmul.f32 %v1016, %v676
      %v1073 = vmul.f32 %v1017, %v677
      %v1074 = vmul.f32 %v1018, %v678
      %v1075 = vmul.f32 %v1019, %v679
      %1077 = vset.pattern.permute.xlu0 0
      %1078 = vperm.xlu0 %1077, %v1068
      %v1079 = vpop.permute.xlu0 %1078
      %1082 = vset.pattern.permute.xlu0 0
      %1083 = vperm.xlu0 %1082, %v1069
      %v1084 = vpop.permute.xlu0 %1083
      %1087 = vset.pattern.permute.xlu0 0
      %1088 = vperm.xlu0 %1087, %v1070
      %v1089 = vpop.permute.xlu0 %1088
      %1092 = vset.pattern.permute.xlu0 0
      %1093 = vperm.xlu0 %1092, %v1071
      %v1094 = vpop.permute.xlu0 %1093
      %1097 = vset.pattern.permute.xlu0 0
      %1098 = vperm.xlu0 %1097, %v1072
      %v1099 = vpop.permute.xlu0 %1098
      %1102 = vset.pattern.permute.xlu0 0
      %1103 = vperm.xlu0 %1102, %v1073
      %v1104 = vpop.permute.xlu0 %1103
      %1107 = vset.pattern.permute.xlu0 0
      %1108 = vperm.xlu0 %1107, %v1074
      %v1109 = vpop.permute.xlu0 %1108
      %1112 = vset.pattern.permute.xlu0 0
      %1113 = vperm.xlu0 %1112, %v1075
      %v1114 = vpop.permute.xlu0 %1113
      %v1116 = vmul.f32 %v1060, %v1079
      %v1117 = vmul.f32 %v1061, %v1084
      %v1118 = vmul.f32 %v1062, %v1089
      %v1119 = vmul.f32 %v1063, %v1094
      %v1120 = vmul.f32 %v1064, %v1099
      %v1121 = vmul.f32 %v1065, %v1104
      %v1122 = vmul.f32 %v1066, %v1109
      %v1123 = vmul.f32 %v1067, %v1114
      %1125 = vset.pattern.permute.xlu0 0
      %1126 = vperm.xlu0 %1125, %v680
      %v1127 = vpop.permute.xlu0 %1126
      %1130 = vset.pattern.permute.xlu0 0
      %1131 = vperm.xlu0 %1130, %v681
      %v1132 = vpop.permute.xlu0 %1131
      %1135 = vset.pattern.permute.xlu0 0
      %1136 = vperm.xlu0 %1135, %v682
      %v1137 = vpop.permute.xlu0 %1136
      %1140 = vset.pattern.permute.xlu0 0
      %1141 = vperm.xlu0 %1140, %v683
      %v1142 = vpop.permute.xlu0 %1141
      %1145 = vset.pattern.permute.xlu0 0
      %1146 = vperm.xlu0 %1145, %v684
      %v1147 = vpop.permute.xlu0 %1146
      %1150 = vset.pattern.permute.xlu0 0
      %1151 = vperm.xlu0 %1150, %v685
      %v1152 = vpop.permute.xlu0 %1151
      %1155 = vset.pattern.permute.xlu0 0
      %1156 = vperm.xlu0 %1155, %v686
      %v1157 = vpop.permute.xlu0 %1156
      %1160 = vset.pattern.permute.xlu0 0
      %1161 = vperm.xlu0 %1160, %v687
      %v1162 = vpop.permute.xlu0 %1161
      %v1164 = vadd.f32 %v1116, %v1127
      %v1165 = vadd.f32 %v1117, %v1132
      %v1166 = vadd.f32 %v1118, %v1137
      %v1167 = vadd.f32 %v1119, %v1142
      %v1168 = vadd.f32 %v1120, %v1147
      %v1169 = vadd.f32 %v1121, %v1152
      %v1170 = vadd.f32 %v1122, %v1157
      %v1171 = vadd.f32 %v1123, %v1162
      %v1172 = vmax.f32 %v1164, 0.0
      %v1173 = vmax.f32 %v1165, 0.0
      %v1174 = vmax.f32 %v1166, 0.0
      %v1175 = vmax.f32 %v1167, 0.0
      %v1176 = vmax.f32 %v1168, 0.0
      %v1177 = vmax.f32 %v1169, 0.0
      %v1178 = vmax.f32 %v1170, 0.0
      %v1179 = vmax.f32 %v1171, 0.0
      %v1180 = vpack.c.bf16 %v1173, %v1172
      %v1181 = vpack.c.bf16 %v1175, %v1174
      %v1182 = vpack.c.bf16 %v1177, %v1176
      %v1183 = vpack.c.bf16 %v1179, %v1178
      %v1188 = vunpack.c.l.b16 %v1180
      %v1189 = vunpack.c.h.b16 %v1180
      %v1190 = vunpack.c.l.b16 %v1181
      %v1191 = vunpack.c.h.b16 %v1181
      %v1192 = vunpack.c.l.b16 %v1182
      %v1193 = vunpack.c.h.b16 %v1182
      %v1194 = vunpack.c.l.b16 %v1183
      %v1195 = vunpack.c.h.b16 %v1183
      %v1196 = vpack.c.b16 %v1188, %v1188
      %v1197 = vpack.c.b16 %v1189, %v1189
      %v1198 = vpack.c.b16 %v1190, %v1190
      %v1199 = vpack.c.b16 %v1191, %v1191
      %v1200 = vpack.c.b16 %v1192, %v1192
      %v1201 = vpack.c.b16 %v1193, %v1193
      %v1202 = vpack.c.b16 %v1194, %v1194
      %v1203 = vpack.c.b16 %v1195, %v1195
      %vm1212 = vcmask 125952
      %1213 = vst.msk [vmem:[%s251] sm:$0xf] %vm1212, %v1196
      %1214 = vst.msk [vmem:[%s251 + $0x4] sm:$0xf] %vm1212, %v1197
      %1215 = vst.msk [vmem:[%s251 + $0x8] sm:$0xf] %vm1212, %v1198
      %1216 = vst.msk [vmem:[%s251 + $0xc] sm:$0xf] %vm1212, %v1199
      %1217 = vst.msk [vmem:[%s251 + $0x10] sm:$0xf] %vm1212, %v1200
      %1218 = vst.msk [vmem:[%s251 + $0x14] sm:$0xf] %vm1212, %v1201
      %1219 = vst.msk [vmem:[%s251 + $0x18] sm:$0xf] %vm1212, %v1202
      %1220 = vst.msk [vmem:[%s251 + $0x1c] sm:$0xf] %vm1212, %v1203
      %p1221 = scmp.lt.s32.totalorder %s17, 1
      %s1222 = scalar_select %p1221, %s17, 1
      %s1223 = smul.addr %s1222, 8
      %s1224 = smul.addr %s1223, 4
      %s1225 = scalar_lea.vmem %s6, %s1224
      // Predicated region
      $region45: #{unet2d_forward.16} parent=43 // pred_check
        %p1226 = pneg %p166
      $region46: #{unet2d_forward.16} parent=43 // pred_check_branch
        %1228 = sbr.rel (%p1226) target = $region48
      $region47: #{unet2d_forward.16} parent=43 // pred_region
        _
      $region48: #{unet2d_forward.16} parent=43 // pred_fallthru
        _
    $region44: #{unet2d_forward.16} parent=5 // pred_fallthru
      _
    %p1229 = scmp.le.s32.totalorder 2, %s12
    // Predicated region
    $region49: #{unet2d_forward.16} parent=5 // pred_check
      %p1230 = pneg %p1229
    $region50: #{unet2d_forward.16} parent=5 // pred_check_branch
      %1232 = sbr.rel (%p1230) target = $region52
    $region51: #{unet2d_forward.16} parent=5 // pred_region
      %s1233 = ssub.s32 %s12, 2
      // Predicated region
      $region53: #{unet2d_forward.16} parent=51 // pred_check
        %p1234 = pneg %p172
      $region54: #{unet2d_forward.16} parent=51 // pred_check_branch
        %1236 = sbr.rel (%p1234) target = $region56
      $region55: #{unet2d_forward.16} parent=51 // pred_region
        %p1237 = scmp.lt.s32.totalorder %s18, 1
        %s1238 = scalar_select %p1237, %s18, 1
        %s1239 = smul.addr %s1238, 8
        %s1240 = smul.addr %s1239, 4
        %s1241 = scalar_lea.vmem %s6, %s1240
      $region56: #{unet2d_forward.16} parent=51 // pred_fallthru
        _
    $region52: #{unet2d_forward.16} parent=5 // pred_fallthru
      _
  $region6: #{unet2d_forward.16} parent=0 // loop_footer
    %s16 = sadd.s32 1, %s12
  $region7: #{unet2d_forward.16} parent=0 // loop_footer_branch
    %11 = sbr.rel target = $region3
  $region8: #{unet2d_forward.16} parent=0 // loop_exit
    _

// kernel: unet2d_forward.18
$region0: #{unet2d_forward.18}
  #allocation0 [shape = 'u32[]', space=smem, size = 0x4, offset = 0x4, fixed_abs, tag = 'smem constant byte address 0x4 - core index']
  #allocation1 [shape = 'u32[144,128]{1,0:T(1,128)}', space=vmem, size = 0x12000, scoped, tag = 'internal scratch']
  %s0 = inlined_call_operand.vmem [shape: bf16[2,64,16], index: 0, kind: input, shape index: {}]
  %s1 = inlined_call_operand.vmem [shape: bf16[128,64], index: 1, kind: input, shape index: {}]
  %s2 = inlined_call_operand.vmem [shape: f32[128,1], index: 2, kind: input, shape index: {}]
  %s3 = inlined_call_operand.vmem [shape: bf16[2,128,16], index: 3, kind: output, shape index: {}]
  %s4 = sld [smem:[#allocation0]]
  $region45: #{unet2d_forward.18} parent=0
    _
  %s6 = ssub.s32 1, %s4
  %s7 = scalar_select 0, %s6, %s4
  loop: start=0, step=1, limit=4
  $region2: #{unet2d_forward.18} parent=0 // loop_pre_header
    _
  $region3: #{unet2d_forward.18} parent=0 // loop_header
    %s9 = sphi 0, %s13
    %p10 = scmp.ge.s32.totalorder %s9, 4
    %s19 = sphi 0, %s21
    %s22 = sphi 0, %s19
    %s23 = sphi 0, %s22
    %s39 = sphi 0, %s23
    %s43 = sphi 0, %s43
    %s45 = sphi 0, %s43
    %s46 = sphi 0, %s45
    %s60 = sphi 0, %s46
    %s64 = sphi 0, %s64
    %s66 = sphi 0, %s64
    %s67 = sphi 0, %s66
    %s81 = sphi 0, %s67
    %s87 = sphi 0, %s89
    %s90 = sphi 0, %s87
    %s91 = sphi 0, %s90
    %s107 = sphi 0, %s91
  $region4: #{unet2d_forward.18} parent=0 // loop_header_branch
    %12 = sbr.rel (%p10) target = $region8
  $region5: #{unet2d_forward.18} parent=0 // loop_body
    %s14 = ssub.s32 %s9, 1
    %s15 = ssub.s32 %s9, 2
    %s16 = sadd.s32 %s9, 1
    %s17 = ssub.s32 %s9, %s16
    %p18 = scmp.eq.s32.totalorder %s17, 0
    %s20 = sadd.s32 %s19, 1
    %s21 = scalar_select %p18, %s19, %s20
    %p24 = pneg %p18
    %p25 = scmp.eq.s32.totalorder %s9, 1
    %p26 = por %p24, %p25
    %p27 = scmp.ne.s32.totalorder %s19, %s22
    %p28 = scmp.eq.s32.totalorder %s9, 0
    %p29 = por %p27, %p28
    %p30 = scmp.ne.s32.totalorder %s19, %s22
    %p31 = scmp.eq.s32.totalorder %s14, 1
    %p32 = por %p30, %p31
    %p33 = scmp.ne.s32.totalorder %s22, %s23
    %p34 = scmp.eq.s32.totalorder %s14, 0
    %p35 = por %p33, %p34
    %p36 = scmp.ne.s32.totalorder %s22, %s23
    %p37 = scmp.eq.s32.totalorder %s15, 1
    %p38 = por %p36, %p37
    %p40 = scmp.ne.s32.totalorder %s23, %s39
    %p41 = scmp.eq.s32.totalorder %s15, 0
    %p42 = por %p40, %p41
    %s44 = sadd.s32 %s43, 1
    %p47 = scmp.eq.s32.totalorder %s9, 1
    %p48 = scmp.ne.s32.totalorder %s43, %s45
    %p49 = scmp.eq.s32.totalorder %s9, 0
    %p50 = por %p48, %p49
    %p51 = scmp.ne.s32.totalorder %s43, %s45
    %p52 = scmp.eq.s32.totalorder %s14, 1
    %p53 = por %p51, %p52
    %p54 = scmp.ne.s32.totalorder %s45, %s46
    %p55 = scmp.eq.s32.totalorder %s14, 0
    %p56 = por %p54, %p55
    %p57 = scmp.ne.s32.totalorder %s45, %s46
    %p58 = scmp.eq.s32.totalorder %s15, 1
    %p59 = por %p57, %p58
    %p61 = scmp.ne.s32.totalorder %s46, %s60
    %p62 = scmp.eq.s32.totalorder %s15, 0
    %p63 = por %p61, %p62
    %s65 = sadd.s32 %s64, 1
    %p68 = scmp.eq.s32.totalorder %s9, 1
    %p69 = scmp.ne.s32.totalorder %s64, %s66
    %p70 = scmp.eq.s32.totalorder %s9, 0
    %p71 = por %p69, %p70
    %p72 = scmp.ne.s32.totalorder %s64, %s66
    %p73 = scmp.eq.s32.totalorder %s14, 1
    %p74 = por %p72, %p73
    %p75 = scmp.ne.s32.totalorder %s66, %s67
    %p76 = scmp.eq.s32.totalorder %s14, 0
    %p77 = por %p75, %p76
    %p78 = scmp.ne.s32.totalorder %s66, %s67
    %p79 = scmp.eq.s32.totalorder %s15, 1
    %p80 = por %p78, %p79
    %p82 = scmp.ne.s32.totalorder %s67, %s81
    %p83 = scmp.eq.s32.totalorder %s15, 0
    %p84 = por %p82, %p83
    %s85 = ssub.s32 %s9, %s16
    %p86 = scmp.eq.s32.totalorder %s85, 0
    %s88 = sadd.s32 %s87, 1
    %s89 = scalar_select %p86, %s87, %s88
    %p92 = pneg %p86
    %p93 = scmp.eq.s32.totalorder %s9, 1
    %p94 = por %p92, %p93
    %p95 = scmp.ne.s32.totalorder %s87, %s90
    %p96 = scmp.eq.s32.totalorder %s9, 0
    %p97 = por %p95, %p96
    %p98 = scmp.ne.s32.totalorder %s87, %s90
    %p99 = scmp.eq.s32.totalorder %s14, 1
    %p100 = por %p98, %p99
    %p101 = scmp.ne.s32.totalorder %s90, %s91
    %p102 = scmp.eq.s32.totalorder %s14, 0
    %p103 = por %p101, %p102
    %p104 = scmp.ne.s32.totalorder %s90, %s91
    %p105 = scmp.eq.s32.totalorder %s15, 1
    %p106 = por %p104, %p105
    %p108 = scmp.ne.s32.totalorder %s91, %s107
    %p109 = scmp.eq.s32.totalorder %s15, 0
    %p110 = por %p108, %p109
    %p111 = scmp.le.s32.totalorder 1, %s9
    %p112 = scmp.lt.s32.totalorder %s9, 3
    %p113 = pnand %p111, %p112
    %p114 = pneg %p113
    // Predicated region
    $region9: #{unet2d_forward.18} parent=5 // pred_check
      _
    $region10: #{unet2d_forward.18} parent=5 // pred_check_branch
      %116 = sbr.rel (%p113) target = $region12
    $region11: #{unet2d_forward.18} parent=5 // pred_region
      %s117 = ssub.s32 %s9, 1
      // Predicated region
      $region13: #{unet2d_forward.18} parent=11 // pred_check
        %p118 = pneg %p56
      $region14: #{unet2d_forward.18} parent=11 // pred_check_branch
        %120 = sbr.rel (%p118) target = $region16
      $region15: #{unet2d_forward.18} parent=11 // pred_region
        _
      $region16: #{unet2d_forward.18} parent=11 // pred_fallthru
        _
      // Predicated region
      $region17: #{unet2d_forward.18} parent=11 // pred_check
        %p121 = pneg %p77
      $region18: #{unet2d_forward.18} parent=11 // pred_check_branch
        %123 = sbr.rel (%p121) target = $region20
      $region19: #{unet2d_forward.18} parent=11 // pred_region
        _
      $region20: #{unet2d_forward.18} parent=11 // pred_fallthru
        _
    $region12: #{unet2d_forward.18} parent=5 // pred_fallthru
      _
    %p124 = scmp.lt.s32.totalorder %s9, 2
    // Predicated region
    $region21: #{unet2d_forward.18} parent=5 // pred_check
      %p125 = pneg %p124
    $region22: #{unet2d_forward.18} parent=5 // pred_check_branch
      %127 = sbr.rel (%p125) target = $region24
    $region23: #{unet2d_forward.18} parent=5 // pred_region
      // Predicated region
      $region25: #{unet2d_forward.18} parent=23 // pred_check
        %p128 = pneg %p29
      $region26: #{unet2d_forward.18} parent=23 // pred_check_branch
        %130 = sbr.rel (%p128) target = $region28
      $region27: #{unet2d_forward.18} parent=23 // pred_region
        %p131 = scmp.lt.s32.totalorder %s9, 1
        %s132 = scalar_select %p131, %s9, 1
        %s133 = smul.addr %s132, 8
        %s134 = smul.addr %s133, 4
        %s135 = scalar_lea.vmem %s0, %s134
      $region28: #{unet2d_forward.18} parent=23 // pred_fallthru
        _
    $region24: #{unet2d_forward.18} parent=5 // pred_fallthru
      _
    %p136 = scmp.le.s32.totalorder 1, %s9
    %p137 = scmp.lt.s32.totalorder %s9, 3
    %p138 = pnand %p136, %p137
    %p139 = pneg %p138
    // Predicated region
    $region29: #{unet2d_forward.18} parent=5 // pred_check
      _
    $region30: #{unet2d_forward.18} parent=5 // pred_check_branch
      %141 = sbr.rel (%p138) target = $region32
    $region31: #{unet2d_forward.18} parent=5 // pred_region
      %s142 = ssub.s32 %s9, 1
      %p143 = scmp.lt.s32.totalorder %s14, 1
      %s144 = scalar_select %p143, %s14, 1
      %s145 = smul.addr %s144, 8
      %s146 = smul.addr %s145, 4
      %s147 = scalar_lea.vmem %s0, %s146
      %p148 = pneg %p35
      %p149 = pneg %p32
      %p150 = pneg %p56
      %p151 = pneg %p53
      %p152 = pneg %p77
      %p153 = pneg %p74
      %p154 = pneg %p103
      %p155 = pneg %p100
      %p156 = scmp.lt.s32.totalorder %s14, 1
      %s157 = scalar_select %p156, %s14, 1
      %s158 = smul.addr %s157, 16
      %s159 = smul.addr %s158, 4
      %s160 = scalar_lea.vmem %s3, %s159
      %p161 = scmp.lt.s32.totalorder %s14, 1
      %s162 = scalar_select %p161, %s14, 1
      %s163 = smul.addr %s162, 8
      %s164 = smul.addr %s163, 4
      %s165 = scalar_lea.vmem %s0, %s164
      %p166 = scmp.lt.s32.totalorder %s14, 1
      %s167 = scalar_select %p166, %s14, 1
      %s168 = smul.addr %s167, 16
      %s169 = smul.addr %s168, 4
      %s170 = scalar_lea.vmem %s3, %s169
      %v172 = vld [vmem:[%s1] sm:$0xf]
      %v173 = vld [vmem:[%s1 + $0x4] sm:$0xf]
      %v174 = vld [vmem:[%s1 + $0x8] sm:$0xf]
      %v175 = vld [vmem:[%s1 + $0xc] sm:$0xf]
      %v176 = vld [vmem:[%s1 + $0x10] sm:$0xf]
      %v177 = vld [vmem:[%s1 + $0x14] sm:$0xf]
      %v178 = vld [vmem:[%s1 + $0x18] sm:$0xf]
      %v179 = vld [vmem:[%s1 + $0x1c] sm:$0xf]
      %v180 = vld [vmem:[%s1 + $0x20] sm:$0xf]
      %v181 = vld [vmem:[%s1 + $0x24] sm:$0xf]
      %v182 = vld [vmem:[%s1 + $0x28] sm:$0xf]
      %v183 = vld [vmem:[%s1 + $0x2c] sm:$0xf]
      %v184 = vld [vmem:[%s1 + $0x30] sm:$0xf]
      %v185 = vld [vmem:[%s1 + $0x34] sm:$0xf]
      %v186 = vld [vmem:[%s1 + $0x38] sm:$0xf]
      %v187 = vld [vmem:[%s1 + $0x3c] sm:$0xf]
      %v188 = vld [vmem:[%s165] sm:$0xf]
      %v189 = vld [vmem:[%s165 + $0x4] sm:$0xf]
      %v190 = vld [vmem:[%s165 + $0x8] sm:$0xf]
      %v191 = vld [vmem:[%s165 + $0xc] sm:$0xf]
      %v192 = vld [vmem:[%s165 + $0x10] sm:$0xf]
      %v193 = vld [vmem:[%s165 + $0x14] sm:$0xf]
      %v194 = vld [vmem:[%s165 + $0x18] sm:$0xf]
      %v195 = vld [vmem:[%s165 + $0x1c] sm:$0xf]
      %v196 = vld [vmem:[%s2] sm:$0xff]
      %v197 = vld [vmem:[%s2 + $0x8] sm:$0xff]
      %v198 = vld [vmem:[%s2 + $0x10] sm:$0xff]
      %v199 = vld [vmem:[%s2 + $0x18] sm:$0xff]
      %v200 = vld [vmem:[%s2 + $0x20] sm:$0xff]
      %v201 = vld [vmem:[%s2 + $0x28] sm:$0xff]
      %v202 = vld [vmem:[%s2 + $0x30] sm:$0xff]
      %v203 = vld [vmem:[%s2 + $0x38] sm:$0xff]
      %v204 = vld [vmem:[%s2 + $0x40] sm:$0xff]
      %v205 = vld [vmem:[%s2 + $0x48] sm:$0xff]
      %v206 = vld [vmem:[%s2 + $0x50] sm:$0xff]
      %v207 = vld [vmem:[%s2 + $0x58] sm:$0xff]
      %v208 = vld [vmem:[%s2 + $0x60] sm:$0xff]
      %v209 = vld [vmem:[%s2 + $0x68] sm:$0xff]
      %v210 = vld [vmem:[%s2 + $0x70] sm:$0xff]
      %v211 = vld [vmem:[%s2 + $0x78] sm:$0xff]
      %213 = vset.pattern.permute.xlu0 0
      %214 = vperm.xlu0 %213, %v196
      %v215 = vpop.permute.xlu0 %214
      %218 = vset.pattern.permute.xlu0 0
      %219 = vperm.xlu0 %218, %v197
      %v220 = vpop.permute.xlu0 %219
      %223 = vset.pattern.permute.xlu0 0
      %224 = vperm.xlu0 %223, %v198
      %v225 = vpop.permute.xlu0 %224
      %228 = vset.pattern.permute.xlu0 0
      %229 = vperm.xlu0 %228, %v199
      %v230 = vpop.permute.xlu0 %229
      %233 = vset.pattern.permute.xlu0 0
      %234 = vperm.xlu0 %233, %v200
      %v235 = vpop.permute.xlu0 %234
      %238 = vset.pattern.permute.xlu0 0
      %239 = vperm.xlu0 %238, %v201
      %v240 = vpop.permute.xlu0 %239
      %243 = vset.pattern.permute.xlu0 0
      %244 = vperm.xlu0 %243, %v202
      %v245 = vpop.permute.xlu0 %244
      %248 = vset.pattern.permute.xlu0 0
      %249 = vperm.xlu0 %248, %v203
      %v250 = vpop.permute.xlu0 %249
      %253 = vset.pattern.permute.xlu0 0
      %254 = vperm.xlu0 %253, %v204
      %v255 = vpop.permute.xlu0 %254
      %258 = vset.pattern.permute.xlu0 0
      %259 = vperm.xlu0 %258, %v205
      %v260 = vpop.permute.xlu0 %259
      %263 = vset.pattern.permute.xlu0 0
      %264 = vperm.xlu0 %263, %v206
      %v265 = vpop.permute.xlu0 %264
      %268 = vset.pattern.permute.xlu0 0
      %269 = vperm.xlu0 %268, %v207
      %v270 = vpop.permute.xlu0 %269
      %273 = vset.pattern.permute.xlu0 0
      %274 = vperm.xlu0 %273, %v208
      %v275 = vpop.permute.xlu0 %274
      %278 = vset.pattern.permute.xlu0 0
      %279 = vperm.xlu0 %278, %v209
      %v280 = vpop.permute.xlu0 %279
      %283 = vset.pattern.permute.xlu0 0
      %284 = vperm.xlu0 %283, %v210
      %v285 = vpop.permute.xlu0 %284
      %288 = vset.pattern.permute.xlu0 0
      %289 = vperm.xlu0 %288, %v211
      %v290 = vpop.permute.xlu0 %289
      %v308 = vunpack.c.l.b16 %v172
      %v309 = vunpack.c.l.b16 %v173
      %v310 = vunpack.c.l.b16 %v174
      %v311 = vunpack.c.l.b16 %v175
      %v312 = vunpack.c.l.b16 %v176
      %v313 = vunpack.c.l.b16 %v177
      %v314 = vunpack.c.l.b16 %v178
      %v315 = vunpack.c.l.b16 %v179
      %v316 = vunpack.c.l.b16 %v180
      %v317 = vunpack.c.l.b16 %v181
      %v318 = vunpack.c.l.b16 %v182
      %v319 = vunpack.c.l.b16 %v183
      %v320 = vunpack.c.l.b16 %v184
      %v321 = vunpack.c.l.b16 %v185
      %v322 = vunpack.c.l.b16 %v186
      %v323 = vunpack.c.l.b16 %v187
      %v324 = vpack.c.b16 %v309, %v308
      %v325 = vpack.c.b16 %v311, %v310
      %v326 = vpack.c.b16 %v313, %v312
      %v327 = vpack.c.b16 %v315, %v314
      %v328 = vpack.c.b16 %v317, %v316
      %v329 = vpack.c.b16 %v319, %v318
      %v330 = vpack.c.b16 %v321, %v320
      %v331 = vpack.c.b16 %v323, %v322
      %v340 = vunpack.c.l.b16 %v188
      %v341 = vunpack.c.l.b16 %v189
      %v342 = vunpack.c.l.b16 %v190
      %v343 = vunpack.c.l.b16 %v191
      %v344 = vunpack.c.l.b16 %v192
      %v345 = vunpack.c.l.b16 %v193
      %v346 = vunpack.c.l.b16 %v194
      %v347 = vunpack.c.l.b16 %v195
      %v348 = vpack.c.b16 %v341, %v340
      %v349 = vpack.c.b16 %v343, %v342
      %v350 = vpack.c.b16 %v345, %v344
      %v351 = vpack.c.b16 %v347, %v346
      %vm356 = vcmask 523264
      %v358 = vsel %vm356, %v324, 0
      %v361 = vsel %vm356, %v325, 0
      %v364 = vsel %vm356, %v326, 0
      %v367 = vsel %vm356, %v327, 0
      %v370 = vsel %vm356, %v328, 0
      %v373 = vsel %vm356, %v329, 0
      %v376 = vsel %vm356, %v330, 0
      %v379 = vsel %vm356, %v331, 0
      %381 = vmatprep.subr.bf16.mxu0 0
      %382 = vmatpush1.bf16.msra.mxu0 0
      %383 = vmatprep.subr.bf16.mxu0 0
      %384 = vmatpush1.bf16.msra.mxu0 0
      %385 = vmatprep.subr.bf16.mxu0 0
      %386 = vmatpush1.bf16.msra.mxu0 0
      %387 = vmatprep.subr.bf16.mxu0 0
      %388 = vmatpush1.bf16.msra.mxu0 0
      %389 = vmatprep.subr.bf16.mxu0 0
      %390 = vmatpush1.bf16.msra.mxu0 %v351
      %391 = vmatprep.subr.bf16.mxu0 0
      %392 = vmatpush1.bf16.msra.mxu0 %v350
      %393 = vmatprep.subr.bf16.mxu0 0
      %394 = vmatpush1.bf16.msra.mxu0 %v349
      %395 = vmatprep.subr.bf16.mxu0 0
      %396 = vmatpush1.bf16.msra.mxu0 %v348
      %397 = vmatprep.subr.bf16.mxu0 0
      %398 = vmatpush2.bf16.msra.mxu0 0
      %399 = vmatprep.subr.bf16.mxu0 0
      %400 = vmatpush2.bf16.msra.mxu0 0
      %401 = vmatprep.subr.bf16.mxu0 0
      %402 = vmatpush2.bf16.msra.mxu0 0
      %403 = vmatprep.subr.bf16.mxu0 0
      %404 = vmatpush2.bf16.msra.mxu0 0
      %405 = vmatprep.subr.bf16.mxu0 0
      %406 = vmatpush2.bf16.msra.mxu0 0
      %407 = vmatprep.subr.bf16.mxu0 0
      %408 = vmatpush2.bf16.msra.mxu0 0
      %409 = vmatprep.subr.bf16.mxu0 0
      %410 = vmatpush2.bf16.msra.mxu0 0
      %411 = vmatprep.subr.bf16.mxu0 0
      %412 = vmatpush2.bf16.msra.mxu0 0
      %413 = vmatprep.mubr.bf16.mxu0 0
      %414 = vmatmul.mubr.bf16.gmra.mxu0 %v358
      %v415 = vpop.f32.mrf.mxu0
      %v416 = vadd.f32 %v215, %v415
      %v417 = vpop.f32.mrf.mxu0
      %v418 = vpop.f32.mrf.mxu0
      %v419 = vadd.f32 %v220, %v418
      %v420 = vpop.f32.mrf.mxu0
      %421 = vmatprep.mubr.bf16.mxu0 0
      %422 = vmatmul.mubr.bf16.gmra.mxu0 %v361
      %v423 = vpop.f32.mrf.mxu0
      %v424 = vadd.f32 %v225, %v423
      %v425 = vpop.f32.mrf.mxu0
      %v426 = vpop.f32.mrf.mxu0
      %v427 = vadd.f32 %v230, %v426
      %v428 = vpop.f32.mrf.mxu0
      %429 = vmatprep.mubr.bf16.mxu0 0
      %430 = vmatmul.mubr.bf16.gmra.mxu0 %v364
      %v431 = vpop.f32.mrf.mxu0
      %v432 = vadd.f32 %v235, %v431
      %v433 = vpop.f32.mrf.mxu0
      %v434 = vpop.f32.mrf.mxu0
      %v435 = vadd.f32 %v240, %v434
      %v436 = vpop.f32.mrf.mxu0
      %437 = vmatprep.mubr.bf16.mxu0 0
      %438 = vmatmul.mubr.bf16.gmra.mxu0 %v367
      %v439 = vpop.f32.mrf.mxu0
      %v440 = vadd.f32 %v245, %v439
      %v441 = vpop.f32.mrf.mxu0
      %v442 = vpop.f32.mrf.mxu0
      %v443 = vadd.f32 %v250, %v442
      %v444 = vpop.f32.mrf.mxu0
      %445 = vmatprep.mubr.bf16.mxu0 0
      %446 = vmatmul.mubr.bf16.gmra.mxu0 %v370
      %v447 = vpop.f32.mrf.mxu0
      %v448 = vadd.f32 %v255, %v447
      %v449 = vpop.f32.mrf.mxu0
      %v450 = vpop.f32.mrf.mxu0
      %v451 = vadd.f32 %v260, %v450
      %v452 = vpop.f32.mrf.mxu0
      %453 = vmatprep.mubr.bf16.mxu0 0
      %454 = vmatmul.mubr.bf16.gmra.mxu0 %v373
      %v455 = vpop.f32.mrf.mxu0
      %v456 = vadd.f32 %v265, %v455
      %v457 = vpop.f32.mrf.mxu0
      %v458 = vpop.f32.mrf.mxu0
      %v459 = vadd.f32 %v270, %v458
      %v460 = vpop.f32.mrf.mxu0
      %461 = vmatprep.mubr.bf16.mxu0 0
      %462 = vmatmul.mubr.bf16.gmra.mxu0 %v376
      %v463 = vpop.f32.mrf.mxu0
      %v464 = vadd.f32 %v275, %v463
      %v465 = vpop.f32.mrf.mxu0
      %v466 = vpop.f32.mrf.mxu0
      %v467 = vadd.f32 %v280, %v466
      %v468 = vpop.f32.mrf.mxu0
      %469 = vmatprep.mubr.bf16.mxu0 0
      %470 = vmatmul.mubr.bf16.gmra.mxu0 %v379
      %v471 = vpop.f32.mrf.mxu0
      %v472 = vadd.f32 %v285, %v471
      %v473 = vpop.f32.mrf.mxu0
      %v474 = vpop.f32.mrf.mxu0
      %v475 = vadd.f32 %v290, %v474
      %v476 = vpop.f32.mrf.mxu0
      %477 = vdwg.mxu0
      %v478 = vpack.c.bf16 %v419, %v416
      %v479 = vpack.c.bf16 %v427, %v424
      %v480 = vpack.c.bf16 %v435, %v432
      %v481 = vpack.c.bf16 %v443, %v440
      %v482 = vpack.c.bf16 %v451, %v448
      %v483 = vpack.c.bf16 %v459, %v456
      %v484 = vpack.c.bf16 %v467, %v464
      %v485 = vpack.c.bf16 %v475, %v472
      %v494 = vunpack.c.l.b16 %v478
      %v495 = vunpack.c.h.b16 %v478
      %v496 = vunpack.c.l.b16 %v479
      %v497 = vunpack.c.h.b16 %v479
      %v498 = vunpack.c.l.b16 %v480
      %v499 = vunpack.c.h.b16 %v480
      %v500 = vunpack.c.l.b16 %v481
      %v501 = vunpack.c.h.b16 %v481
      %v502 = vunpack.c.l.b16 %v482
      %v503 = vunpack.c.h.b16 %v482
      %v504 = vunpack.c.l.b16 %v483
      %v505 = vunpack.c.h.b16 %v483
      %v506 = vunpack.c.l.b16 %v484
      %v507 = vunpack.c.h.b16 %v484
      %v508 = vunpack.c.l.b16 %v485
      %v509 = vunpack.c.h.b16 %v485
      %v510 = vpack.c.b16 %v494, %v494
      %v511 = vpack.c.b16 %v495, %v495
      %v512 = vpack.c.b16 %v496, %v496
      %v513 = vpack.c.b16 %v497, %v497
      %v514 = vpack.c.b16 %v498, %v498
      %v515 = vpack.c.b16 %v499, %v499
      %v516 = vpack.c.b16 %v500, %v500
      %v517 = vpack.c.b16 %v501, %v501
      %v518 = vpack.c.b16 %v502, %v502
      %v519 = vpack.c.b16 %v503, %v503
      %v520 = vpack.c.b16 %v504, %v504
      %v521 = vpack.c.b16 %v505, %v505
      %v522 = vpack.c.b16 %v506, %v506
      %v523 = vpack.c.b16 %v507, %v507
      %v524 = vpack.c.b16 %v508, %v508
      %v525 = vpack.c.b16 %v509, %v509
      %vm542 = vcmask 125952
      %543 = vst.msk [vmem:[%s170] sm:$0xf] %vm542, %v510
      %544 = vst.msk [vmem:[%s170 + $0x4] sm:$0xf] %vm542, %v511
      %545 = vst.msk [vmem:[%s170 + $0x8] sm:$0xf] %vm542, %v512
      %546 = vst.msk [vmem:[%s170 + $0xc] sm:$0xf] %vm542, %v513
      %547 = vst.msk [vmem:[%s170 + $0x10] sm:$0xf] %vm542, %v514
      %548 = vst.msk [vmem:[%s170 + $0x14] sm:$0xf] %vm542, %v515
      %549 = vst.msk [vmem:[%s170 + $0x18] sm:$0xf] %vm542, %v516
      %550 = vst.msk [vmem:[%s170 + $0x1c] sm:$0xf] %vm542, %v517
      %551 = vst.msk [vmem:[%s170 + $0x20] sm:$0xf] %vm542, %v518
      %552 = vst.msk [vmem:[%s170 + $0x24] sm:$0xf] %vm542, %v519
      %553 = vst.msk [vmem:[%s170 + $0x28] sm:$0xf] %vm542, %v520
      %554 = vst.msk [vmem:[%s170 + $0x2c] sm:$0xf] %vm542, %v521
      %555 = vst.msk [vmem:[%s170 + $0x30] sm:$0xf] %vm542, %v522
      %556 = vst.msk [vmem:[%s170 + $0x34] sm:$0xf] %vm542, %v523
      %557 = vst.msk [vmem:[%s170 + $0x38] sm:$0xf] %vm542, %v524
      %558 = vst.msk [vmem:[%s170 + $0x3c] sm:$0xf] %vm542, %v525
      %p559 = scmp.lt.s32.totalorder %s14, 1
      %s560 = scalar_select %p559, %s14, 1
      %s561 = smul.addr %s560, 16
      %s562 = smul.addr %s561, 4
      %s563 = scalar_lea.vmem %s3, %s562
      // Predicated region
      $region33: #{unet2d_forward.18} parent=31 // pred_check
        %p564 = pneg %p100
      $region34: #{unet2d_forward.18} parent=31 // pred_check_branch
        %566 = sbr.rel (%p564) target = $region36
      $region35: #{unet2d_forward.18} parent=31 // pred_region
        _
      $region36: #{unet2d_forward.18} parent=31 // pred_fallthru
        _
    $region32: #{unet2d_forward.18} parent=5 // pred_fallthru
      _
    %p567 = scmp.le.s32.totalorder 2, %s9
    // Predicated region
    $region37: #{unet2d_forward.18} parent=5 // pred_check
      %p568 = pneg %p567
    $region38: #{unet2d_forward.18} parent=5 // pred_check_branch
      %570 = sbr.rel (%p568) target = $region40
    $region39: #{unet2d_forward.18} parent=5 // pred_region
      %s571 = ssub.s32 %s9, 2
      // Predicated region
      $region41: #{unet2d_forward.18} parent=39 // pred_check
        %p572 = pneg %p106
      $region42: #{unet2d_forward.18} parent=39 // pred_check_branch
        %574 = sbr.rel (%p572) target = $region44
      $region43: #{unet2d_forward.18} parent=39 // pred_region
        %p575 = scmp.lt.s32.totalorder %s15, 1
        %s576 = scalar_select %p575, %s15, 1
        %s577 = smul.addr %s576, 16
        %s578 = smul.addr %s577, 4
        %s579 = scalar_lea.vmem %s3, %s578
      $region44: #{unet2d_forward.18} parent=39 // pred_fallthru
        _
    $region40: #{unet2d_forward.18} parent=5 // pred_fallthru
      _
  $region6: #{unet2d_forward.18} parent=0 // loop_footer
    %s13 = sadd.s32 1, %s9
  $region7: #{unet2d_forward.18} parent=0 // loop_footer_branch
    %8 = sbr.rel target = $region3
  $region8: #{unet2d_forward.18} parent=0 // loop_exit
    _

// kernel: unet2d_forward.17
$region0: #{unet2d_forward.17}
  #allocation0 [shape = 'u32[]', space=smem, size = 0x4, offset = 0x4, fixed_abs, tag = 'smem constant byte address 0x4 - core index']
  #allocation1 [shape = 'u32[144,128]{1,0:T(1,128)}', space=vmem, size = 0x12000, scoped, tag = 'internal scratch']
  %s0 = inlined_call_operand.vmem [shape: bf16[2,576,16], index: 0, kind: input, shape index: {}]
  %s1 = inlined_call_operand.vmem [shape: bf16[64,576], index: 1, kind: input, shape index: {}]
  %s2 = inlined_call_operand.vmem [shape: f32[64,1], index: 2, kind: input, shape index: {}]
  %s3 = inlined_call_operand.vmem [shape: f32[64,1], index: 3, kind: input, shape index: {}]
  %s4 = inlined_call_operand.vmem [shape: f32[64,1], index: 4, kind: input, shape index: {}]
  %s5 = inlined_call_operand.vmem [shape: f32[64,64], index: 5, kind: input, shape index: {}]
  %s6 = inlined_call_operand.vmem [shape: bf16[2,64,16], index: 6, kind: output, shape index: {}]
  %s7 = sld [smem:[#allocation0]]
  $region57: #{unet2d_forward.17} parent=0
    _
  %s9 = ssub.s32 1, %s7
  %s10 = scalar_select 0, %s9, %s7
  loop: start=0, step=1, limit=4
  $region2: #{unet2d_forward.17} parent=0 // loop_pre_header
    _
  $region3: #{unet2d_forward.17} parent=0 // loop_header
    %s12 = sphi 0, %s16
    %p13 = scmp.ge.s32.totalorder %s12, 4
    %s22 = sphi 0, %s24
    %s25 = sphi 0, %s22
    %s26 = sphi 0, %s25
    %s42 = sphi 0, %s26
    %s46 = sphi 0, %s46
    %s48 = sphi 0, %s46
    %s49 = sphi 0, %s48
    %s63 = sphi 0, %s49
    %s67 = sphi 0, %s67
    %s69 = sphi 0, %s67
    %s70 = sphi 0, %s69
    %s84 = sphi 0, %s70
    %s88 = sphi 0, %s88
    %s90 = sphi 0, %s88
    %s91 = sphi 0, %s90
    %s105 = sphi 0, %s91
    %s109 = sphi 0, %s109
    %s111 = sphi 0, %s109
    %s112 = sphi 0, %s111
    %s126 = sphi 0, %s112
    %s130 = sphi 0, %s130
    %s132 = sphi 0, %s130
    %s133 = sphi 0, %s132
    %s147 = sphi 0, %s133
    %s153 = sphi 0, %s155
    %s156 = sphi 0, %s153
    %s157 = sphi 0, %s156
    %s173 = sphi 0, %s157
  $region4: #{unet2d_forward.17} parent=0 // loop_header_branch
    %15 = sbr.rel (%p13) target = $region8
  $region5: #{unet2d_forward.17} parent=0 // loop_body
    %s17 = ssub.s32 %s12, 1
    %s18 = ssub.s32 %s12, 2
    %s19 = sadd.s32 %s12, 1
    %s20 = ssub.s32 %s12, %s19
    %p21 = scmp.eq.s32.totalorder %s20, 0
    %s23 = sadd.s32 %s22, 1
    %s24 = scalar_select %p21, %s22, %s23
    %p27 = pneg %p21
    %p28 = scmp.eq.s32.totalorder %s12, 1
    %p29 = por %p27, %p28
    %p30 = scmp.ne.s32.totalorder %s22, %s25
    %p31 = scmp.eq.s32.totalorder %s12, 0
    %p32 = por %p30, %p31
    %p33 = scmp.ne.s32.totalorder %s22, %s25
    %p34 = scmp.eq.s32.totalorder %s17, 1
    %p35 = por %p33, %p34
    %p36 = scmp.ne.s32.totalorder %s25, %s26
    %p37 = scmp.eq.s32.totalorder %s17, 0
    %p38 = por %p36, %p37
    %p39 = scmp.ne.s32.totalorder %s25, %s26
    %p40 = scmp.eq.s32.totalorder %s18, 1
    %p41 = por %p39, %p40
    %p43 = scmp.ne.s32.totalorder %s26, %s42
    %p44 = scmp.eq.s32.totalorder %s18, 0
    %p45 = por %p43, %p44
    %s47 = sadd.s32 %s46, 1
    %p50 = scmp.eq.s32.totalorder %s12, 1
    %p51 = scmp.ne.s32.totalorder %s46, %s48
    %p52 = scmp.eq.s32.totalorder %s12, 0
    %p53 = por %p51, %p52
    %p54 = scmp.ne.s32.totalorder %s46, %s48
    %p55 = scmp.eq.s32.totalorder %s17, 1
    %p56 = por %p54, %p55
    %p57 = scmp.ne.s32.totalorder %s48, %s49
    %p58 = scmp.eq.s32.totalorder %s17, 0
    %p59 = por %p57, %p58
    %p60 = scmp.ne.s32.totalorder %s48, %s49
    %p61 = scmp.eq.s32.totalorder %s18, 1
    %p62 = por %p60, %p61
    %p64 = scmp.ne.s32.totalorder %s49, %s63
    %p65 = scmp.eq.s32.totalorder %s18, 0
    %p66 = por %p64, %p65
    %s68 = sadd.s32 %s67, 1
    %p71 = scmp.eq.s32.totalorder %s12, 1
    %p72 = scmp.ne.s32.totalorder %s67, %s69
    %p73 = scmp.eq.s32.totalorder %s12, 0
    %p74 = por %p72, %p73
    %p75 = scmp.ne.s32.totalorder %s67, %s69
    %p76 = scmp.eq.s32.totalorder %s17, 1
    %p77 = por %p75, %p76
    %p78 = scmp.ne.s32.totalorder %s69, %s70
    %p79 = scmp.eq.s32.totalorder %s17, 0
    %p80 = por %p78, %p79
    %p81 = scmp.ne.s32.totalorder %s69, %s70
    %p82 = scmp.eq.s32.totalorder %s18, 1
    %p83 = por %p81, %p82
    %p85 = scmp.ne.s32.totalorder %s70, %s84
    %p86 = scmp.eq.s32.totalorder %s18, 0
    %p87 = por %p85, %p86
    %s89 = sadd.s32 %s88, 1
    %p92 = scmp.eq.s32.totalorder %s12, 1
    %p93 = scmp.ne.s32.totalorder %s88, %s90
    %p94 = scmp.eq.s32.totalorder %s12, 0
    %p95 = por %p93, %p94
    %p96 = scmp.ne.s32.totalorder %s88, %s90
    %p97 = scmp.eq.s32.totalorder %s17, 1
    %p98 = por %p96, %p97
    %p99 = scmp.ne.s32.totalorder %s90, %s91
    %p100 = scmp.eq.s32.totalorder %s17, 0
    %p101 = por %p99, %p100
    %p102 = scmp.ne.s32.totalorder %s90, %s91
    %p103 = scmp.eq.s32.totalorder %s18, 1
    %p104 = por %p102, %p103
    %p106 = scmp.ne.s32.totalorder %s91, %s105
    %p107 = scmp.eq.s32.totalorder %s18, 0
    %p108 = por %p106, %p107
    %s110 = sadd.s32 %s109, 1
    %p113 = scmp.eq.s32.totalorder %s12, 1
    %p114 = scmp.ne.s32.totalorder %s109, %s111
    %p115 = scmp.eq.s32.totalorder %s12, 0
    %p116 = por %p114, %p115
    %p117 = scmp.ne.s32.totalorder %s109, %s111
    %p118 = scmp.eq.s32.totalorder %s17, 1
    %p119 = por %p117, %p118
    %p120 = scmp.ne.s32.totalorder %s111, %s112
    %p121 = scmp.eq.s32.totalorder %s17, 0
    %p122 = por %p120, %p121
    %p123 = scmp.ne.s32.totalorder %s111, %s112
    %p124 = scmp.eq.s32.totalorder %s18, 1
    %p125 = por %p123, %p124
    %p127 = scmp.ne.s32.totalorder %s112, %s126
    %p128 = scmp.eq.s32.totalorder %s18, 0
    %p129 = por %p127, %p128
    %s131 = sadd.s32 %s130, 1
    %p134 = scmp.eq.s32.totalorder %s12, 1
    %p135 = scmp.ne.s32.totalorder %s130, %s132
    %p136 = scmp.eq.s32.totalorder %s12, 0
    %p137 = por %p135, %p136
    %p138 = scmp.ne.s32.totalorder %s130, %s132
    %p139 = scmp.eq.s32.totalorder %s17, 1
    %p140 = por %p138, %p139
    %p141 = scmp.ne.s32.totalorder %s132, %s133
    %p142 = scmp.eq.s32.totalorder %s17, 0
    %p143 = por %p141, %p142
    %p144 = scmp.ne.s32.totalorder %s132, %s133
    %p145 = scmp.eq.s32.totalorder %s18, 1
    %p146 = por %p144, %p145
    %p148 = scmp.ne.s32.totalorder %s133, %s147
    %p149 = scmp.eq.s32.totalorder %s18, 0
    %p150 = por %p148, %p149
    %s151 = ssub.s32 %s12, %s19
    %p152 = scmp.eq.s32.totalorder %s151, 0
    %s154 = sadd.s32 %s153, 1
    %s155 = scalar_select %p152, %s153, %s154
    %p158 = pneg %p152
    %p159 = scmp.eq.s32.totalorder %s12, 1
    %p160 = por %p158, %p159
    %p161 = scmp.ne.s32.totalorder %s153, %s156
    %p162 = scmp.eq.s32.totalorder %s12, 0
    %p163 = por %p161, %p162
    %p164 = scmp.ne.s32.totalorder %s153, %s156
    %p165 = scmp.eq.s32.totalorder %s17, 1
    %p166 = por %p164, %p165
    %p167 = scmp.ne.s32.totalorder %s156, %s157
    %p168 = scmp.eq.s32.totalorder %s17, 0
    %p169 = por %p167, %p168
    %p170 = scmp.ne.s32.totalorder %s156, %s157
    %p171 = scmp.eq.s32.totalorder %s18, 1
    %p172 = por %p170, %p171
    %p174 = scmp.ne.s32.totalorder %s157, %s173
    %p175 = scmp.eq.s32.totalorder %s18, 0
    %p176 = por %p174, %p175
    %p177 = scmp.le.s32.totalorder 1, %s12
    %p178 = scmp.lt.s32.totalorder %s12, 3
    %p179 = pnand %p177, %p178
    %p180 = pneg %p179
    // Predicated region
    $region9: #{unet2d_forward.17} parent=5 // pred_check
      _
    $region10: #{unet2d_forward.17} parent=5 // pred_check_branch
      %182 = sbr.rel (%p179) target = $region12
    $region11: #{unet2d_forward.17} parent=5 // pred_region
      %s183 = ssub.s32 %s12, 1
      // Predicated region
      $region13: #{unet2d_forward.17} parent=11 // pred_check
        %p184 = pneg %p59
      $region14: #{unet2d_forward.17} parent=11 // pred_check_branch
        %186 = sbr.rel (%p184) target = $region16
      $region15: #{unet2d_forward.17} parent=11 // pred_region
        _
      $region16: #{unet2d_forward.17} parent=11 // pred_fallthru
        _
      // Predicated region
      $region17: #{unet2d_forward.17} parent=11 // pred_check
        %p187 = pneg %p80
      $region18: #{unet2d_forward.17} parent=11 // pred_check_branch
        %189 = sbr.rel (%p187) target = $region20
      $region19: #{unet2d_forward.17} parent=11 // pred_region
        _
      $region20: #{unet2d_forward.17} parent=11 // pred_fallthru
        _
      // Predicated region
      $region21: #{unet2d_forward.17} parent=11 // pred_check
        %p190 = pneg %p101
      $region22: #{unet2d_forward.17} parent=11 // pred_check_branch
        %192 = sbr.rel (%p190) target = $region24
      $region23: #{unet2d_forward.17} parent=11 // pred_region
        _
      $region24: #{unet2d_forward.17} parent=11 // pred_fallthru
        _
      // Predicated region
      $region25: #{unet2d_forward.17} parent=11 // pred_check
        %p193 = pneg %p122
      $region26: #{unet2d_forward.17} parent=11 // pred_check_branch
        %195 = sbr.rel (%p193) target = $region28
      $region27: #{unet2d_forward.17} parent=11 // pred_region
        _
      $region28: #{unet2d_forward.17} parent=11 // pred_fallthru
        _
      // Predicated region
      $region29: #{unet2d_forward.17} parent=11 // pred_check
        %p196 = pneg %p143
      $region30: #{unet2d_forward.17} parent=11 // pred_check_branch
        %198 = sbr.rel (%p196) target = $region32
      $region31: #{unet2d_forward.17} parent=11 // pred_region
        _
      $region32: #{unet2d_forward.17} parent=11 // pred_fallthru
        _
    $region12: #{unet2d_forward.17} parent=5 // pred_fallthru
      _
    %p199 = scmp.lt.s32.totalorder %s12, 2
    // Predicated region
    $region33: #{unet2d_forward.17} parent=5 // pred_check
      %p200 = pneg %p199
    $region34: #{unet2d_forward.17} parent=5 // pred_check_branch
      %202 = sbr.rel (%p200) target = $region36
    $region35: #{unet2d_forward.17} parent=5 // pred_region
      // Predicated region
      $region37: #{unet2d_forward.17} parent=35 // pred_check
        %p203 = pneg %p32
      $region38: #{unet2d_forward.17} parent=35 // pred_check_branch
        %205 = sbr.rel (%p203) target = $region40
      $region39: #{unet2d_forward.17} parent=35 // pred_region
        %p206 = scmp.lt.s32.totalorder %s12, 1
        %s207 = scalar_select %p206, %s12, 1
        %s208 = smul.addr %s207, 72
        %s209 = smul.addr %s208, 4
        %s210 = scalar_lea.vmem %s0, %s209
      $region40: #{unet2d_forward.17} parent=35 // pred_fallthru
        _
    $region36: #{unet2d_forward.17} parent=5 // pred_fallthru
      _
    %p211 = scmp.le.s32.totalorder 1, %s12
    %p212 = scmp.lt.s32.totalorder %s12, 3
    %p213 = pnand %p211, %p212
    %p214 = pneg %p213
    // Predicated region
    $region41: #{unet2d_forward.17} parent=5 // pred_check
      _
    $region42: #{unet2d_forward.17} parent=5 // pred_check_branch
      %216 = sbr.rel (%p213) target = $region44
    $region43: #{unet2d_forward.17} parent=5 // pred_region
      %s217 = ssub.s32 %s12, 1
      %p218 = scmp.lt.s32.totalorder %s17, 1
      %s219 = scalar_select %p218, %s17, 1
      %s220 = smul.addr %s219, 72
      %s221 = smul.addr %s220, 4
      %s222 = scalar_lea.vmem %s0, %s221
      %p223 = pneg %p38
      %p224 = pneg %p35
      %p225 = pneg %p59
      %p226 = pneg %p56
      %p227 = pneg %p80
      %p228 = pneg %p77
      %p229 = pneg %p101
      %p230 = pneg %p98
      %p231 = pneg %p122
      %p232 = pneg %p119
      %p233 = pneg %p143
      %p234 = pneg %p140
      %p235 = pneg %p169
      %p236 = pneg %p166
      %p237 = scmp.lt.s32.totalorder %s17, 1
      %s238 = scalar_select %p237, %s17, 1
      %s239 = smul.addr %s238, 8
      %s240 = smul.addr %s239, 4
      %s241 = scalar_lea.vmem %s6, %s240
      %p242 = scmp.lt.s32.totalorder %s17, 1
      %s243 = scalar_select %p242, %s17, 1
      %s244 = smul.addr %s243, 72
      %s245 = smul.addr %s244, 4
      %s246 = scalar_lea.vmem %s0, %s245
      %p247 = scmp.lt.s32.totalorder %s17, 1
      %s248 = scalar_select %p247, %s17, 1
      %s249 = smul.addr %s248, 8
      %s250 = smul.addr %s249, 4
      %s251 = scalar_lea.vmem %s6, %s250
      %v253 = vld [vmem:[%s1] sm:$0xff]
      %v254 = vld [vmem:[%s1 + $0x8] sm:$0xff]
      %v255 = vld [vmem:[%s1 + $0x10] sm:$0xf]
      %v256 = vld [vmem:[%s1 + $0x14] sm:$0xff]
      %v257 = vld [vmem:[%s1 + $0x1c] sm:$0xff]
      %v258 = vld [vmem:[%s1 + $0x24] sm:$0xf]
      %v259 = vld [vmem:[%s1 + $0x28] sm:$0xff]
      %v260 = vld [vmem:[%s1 + $0x30] sm:$0xff]
      %v261 = vld [vmem:[%s1 + $0x38] sm:$0xf]
      %v262 = vld [vmem:[%s1 + $0x3c] sm:$0xff]
      %v263 = vld [vmem:[%s1 + $0x44] sm:$0xff]
      %v264 = vld [vmem:[%s1 + $0x4c] sm:$0xf]
      %v265 = vld [vmem:[%s1 + $0x50] sm:$0xff]
      %v266 = vld [vmem:[%s1 + $0x58] sm:$0xff]
      %v267 = vld [vmem:[%s1 + $0x60] sm:$0xf]
      %v268 = vld [vmem:[%s1 + $0x64] sm:$0xff]
      %v269 = vld [vmem:[%s1 + $0x6c] sm:$0xff]
      %v270 = vld [vmem:[%s1 + $0x74] sm:$0xf]
      %v271 = vld [vmem:[%s1 + $0x78] sm:$0xff]
      %v272 = vld [vmem:[%s1 + $0x80] sm:$0xff]
      %v273 = vld [vmem:[%s1 + $0x88] sm:$0xf]
      %v274 = vld [vmem:[%s1 + $0x8c] sm:$0xff]
      %v275 = vld [vmem:[%s1 + $0x94] sm:$0xff]
      %v276 = vld [vmem:[%s1 + $0x9c] sm:$0xf]
      %v277 = vld [vmem:[%s246] sm:$0xf]
      %v278 = vld [vmem:[%s246 + $0x4] sm:$0xf]
      %v279 = vld [vmem:[%s246 + $0x8] sm:$0xf]
      %v280 = vld [vmem:[%s246 + $0xc] sm:$0xf]
      %v281 = vld [vmem:[%s246 + $0x10] sm:$0xf]
      %v282 = vld [vmem:[%s246 + $0x14] sm:$0xf]
      %v283 = vld [vmem:[%s246 + $0x18] sm:$0xf]
      %v284 = vld [vmem:[%s246 + $0x1c] sm:$0xf]
      %v285 = vld [vmem:[%s246 + $0x20] sm:$0xf]
      %v286 = vld [vmem:[%s246 + $0x24] sm:$0xf]
      %v287 = vld [vmem:[%s246 + $0x28] sm:$0xf]
      %v288 = vld [vmem:[%s246 + $0x2c] sm:$0xf]
      %v289 = vld [vmem:[%s246 + $0x30] sm:$0xf]
      %v290 = vld [vmem:[%s246 + $0x34] sm:$0xf]
      %v291 = vld [vmem:[%s246 + $0x38] sm:$0xf]
      %v292 = vld [vmem:[%s246 + $0x3c] sm:$0xf]
      %v293 = vld [vmem:[%s246 + $0x40] sm:$0xf]
      %v294 = vld [vmem:[%s246 + $0x44] sm:$0xf]
      %v295 = vld [vmem:[%s246 + $0x48] sm:$0xf]
      %v296 = vld [vmem:[%s246 + $0x4c] sm:$0xf]
      %v297 = vld [vmem:[%s246 + $0x50] sm:$0xf]
      %v298 = vld [vmem:[%s246 + $0x54] sm:$0xf]
      %v299 = vld [vmem:[%s246 + $0x58] sm:$0xf]
      %v300 = vld [vmem:[%s246 + $0x5c] sm:$0xf]
      %v301 = vld [vmem:[%s246 + $0x60] sm:$0xf]
      %v302 = vld [vmem:[%s246 + $0x64] sm:$0xf]
      %v303 = vld [vmem:[%s246 + $0x68] sm:$0xf]
      %v304 = vld [vmem:[%s246 + $0x6c] sm:$0xf]
      %v305 = vld [vmem:[%s246 + $0x70] sm:$0xf]
      %v306 = vld [vmem:[%s246 + $0x74] sm:$0xf]
      %v307 = vld [vmem:[%s246 + $0x78] sm:$0xf]
      %v308 = vld [vmem:[%s246 + $0x7c] sm:$0xf]
      %v309 = vld [vmem:[%s246 + $0x80] sm:$0xf]
      %v310 = vld [vmem:[%s246 + $0x84] sm:$0xf]
      %v311 = vld [vmem:[%s246 + $0x88] sm:$0xf]
      %v312 = vld [vmem:[%s246 + $0x8c] sm:$0xf]
      %v313 = vld [vmem:[%s246 + $0x90] sm:$0xf]
      %v314 = vld [vmem:[%s246 + $0x94] sm:$0xf]
      %v315 = vld [vmem:[%s246 + $0x98] sm:$0xf]
      %v316 = vld [vmem:[%s246 + $0x9c] sm:$0xf]
      %v317 = vld [vmem:[%s246 + $0xa0] sm:$0xf]
      %v318 = vld [vmem:[%s246 + $0xa4] sm:$0xf]
      %v319 = vld [vmem:[%s246 + $0xa8] sm:$0xf]
      %v320 = vld [vmem:[%s246 + $0xac] sm:$0xf]
      %v321 = vld [vmem:[%s246 + $0xb0] sm:$0xf]
      %v322 = vld [vmem:[%s246 + $0xb4] sm:$0xf]
      %v323 = vld [vmem:[%s246 + $0xb8] sm:$0xf]
      %v324 = vld [vmem:[%s246 + $0xbc] sm:$0xf]
      %v325 = vld [vmem:[%s246 + $0xc0] sm:$0xf]
      %v326 = vld [vmem:[%s246 + $0xc4] sm:$0xf]
      %v327 = vld [vmem:[%s246 + $0xc8] sm:$0xf]
      %v328 = vld [vmem:[%s246 + $0xcc] sm:$0xf]
      %v329 = vld [vmem:[%s246 + $0xd0] sm:$0xf]
      %v330 = vld [vmem:[%s246 + $0xd4] sm:$0xf]
      %v331 = vld [vmem:[%s246 + $0xd8] sm:$0xf]
      %v332 = vld [vmem:[%s246 + $0xdc] sm:$0xf]
      %v333 = vld [vmem:[%s246 + $0xe0] sm:$0xf]
      %v334 = vld [vmem:[%s246 + $0xe4] sm:$0xf]
      %v335 = vld [vmem:[%s246 + $0xe8] sm:$0xf]
      %v336 = vld [vmem:[%s246 + $0xec] sm:$0xf]
      %v337 = vld [vmem:[%s246 + $0xf0] sm:$0xf]
      %v338 = vld [vmem:[%s246 + $0xf4] sm:$0xf]
      %v339 = vld [vmem:[%s246 + $0xf8] sm:$0xf]
      %v340 = vld [vmem:[%s246 + $0xfc] sm:$0xf]
      %v341 = vld [vmem:[%s246 + $0x100] sm:$0xf]
      %v342 = vld [vmem:[%s246 + $0x104] sm:$0xf]
      %v343 = vld [vmem:[%s246 + $0x108] sm:$0xf]
      %v344 = vld [vmem:[%s246 + $0x10c] sm:$0xf]
      %v345 = vld [vmem:[%s246 + $0x110] sm:$0xf]
      %v346 = vld [vmem:[%s246 + $0x114] sm:$0xf]
      %v347 = vld [vmem:[%s246 + $0x118] sm:$0xf]
      %v348 = vld [vmem:[%s246 + $0x11c] sm:$0xf]
      %v349 = vld [vmem:[%s2] sm:$0xff]
      %v350 = vld [vmem:[%s2 + $0x8] sm:$0xff]
      %v351 = vld [vmem:[%s2 + $0x10] sm:$0xff]
      %v352 = vld [vmem:[%s2 + $0x18] sm:$0xff]
      %v353 = vld [vmem:[%s2 + $0x20] sm:$0xff]
      %v354 = vld [vmem:[%s2 + $0x28] sm:$0xff]
      %v355 = vld [vmem:[%s2 + $0x30] sm:$0xff]
      %v356 = vld [vmem:[%s2 + $0x38] sm:$0xff]
      %358 = vset.pattern.permute.xlu0 0
      %359 = vperm.xlu0 %358, %v349
      %v360 = vpop.permute.xlu0 %359
      %363 = vset.pattern.permute.xlu0 0
      %364 = vperm.xlu0 %363, %v350
      %v365 = vpop.permute.xlu0 %364
      %368 = vset.pattern.permute.xlu0 0
      %369 = vperm.xlu0 %368, %v351
      %v370 = vpop.permute.xlu0 %369
      %373 = vset.pattern.permute.xlu0 0
      %374 = vperm.xlu0 %373, %v352
      %v375 = vpop.permute.xlu0 %374
      %378 = vset.pattern.permute.xlu0 0
      %379 = vperm.xlu0 %378, %v353
      %v380 = vpop.permute.xlu0 %379
      %383 = vset.pattern.permute.xlu0 0
      %384 = vperm.xlu0 %383, %v354
      %v385 = vpop.permute.xlu0 %384
      %388 = vset.pattern.permute.xlu0 0
      %389 = vperm.xlu0 %388, %v355
      %v390 = vpop.permute.xlu0 %389
      %393 = vset.pattern.permute.xlu0 0
      %394 = vperm.xlu0 %393, %v356
      %v395 = vpop.permute.xlu0 %394
      %v421 = vunpack.c.l.b16 %v253
      %v422 = vunpack.c.h.b16 %v253
      %v423 = vunpack.c.l.b16 %v254
      %v424 = vunpack.c.h.b16 %v254
      %v425 = vunpack.c.l.b16 %v255
      %v426 = vunpack.c.l.b16 %v256
      %v427 = vunpack.c.h.b16 %v256
      %v428 = vunpack.c.l.b16 %v257
      %v429 = vunpack.c.h.b16 %v257
      %v430 = vunpack.c.l.b16 %v258
      %v431 = vunpack.c.l.b16 %v259
      %v432 = vunpack.c.h.b16 %v259
      %v433 = vunpack.c.l.b16 %v260
      %v434 = vunpack.c.h.b16 %v260
      %v435 = vunpack.c.l.b16 %v261
      %v436 = vunpack.c.l.b16 %v262
      %v437 = vunpack.c.h.b16 %v262
      %v438 = vunpack.c.l.b16 %v263
      %v439 = vunpack.c.h.b16 %v263
      %v440 = vunpack.c.l.b16 %v264
      %v441 = vunpack.c.l.b16 %v265
      %v442 = vunpack.c.h.b16 %v265
      %v443 = vunpack.c.l.b16 %v266
      %v444 = vunpack.c.h.b16 %v266
      %v445 = vunpack.c.l.b16 %v267
      %v446 = vunpack.c.l.b16 %v268
      %v447 = vunpack.c.h.b16 %v268
      %v448 = vunpack.c.l.b16 %v269
      %v449 = vunpack.c.h.b16 %v269
      %v450 = vunpack.c.l.b16 %v270
      %v451 = vunpack.c.l.b16 %v271
      %v452 = vunpack.c.h.b16 %v271
      %v453 = vunpack.c.l.b16 %v272
      %v454 = vunpack.c.h.b16 %v272
      %v455 = vunpack.c.l.b16 %v273
      %v456 = vunpack.c.l.b16 %v274
      %v457 = vunpack.c.h.b16 %v274
      %v458 = vunpack.c.l.b16 %v275
      %v459 = vunpack.c.h.b16 %v275
      %v460 = vunpack.c.l.b16 %v276
      %v461 = vpack.c.b16 %v426, %v421
      %v462 = vpack.c.b16 %v427, %v422
      %v463 = vpack.c.b16 %v428, %v423
      %v464 = vpack.c.b16 %v429, %v424
      %v465 = vpack.c.b16 %v430, %v425
      %v466 = vpack.c.b16 %v436, %v431
      %v467 = vpack.c.b16 %v437, %v432
      %v468 = vpack.c.b16 %v438, %v433
      %v469 = vpack.c.b16 %v439, %v434
      %v470 = vpack.c.b16 %v440, %v435
      %v471 = vpack.c.b16 %v446, %v441
      %v472 = vpack.c.b16 %v447, %v442
      %v473 = vpack.c.b16 %v448, %v443
      %v474 = vpack.c.b16 %v449, %v444
      %v475 = vpack.c.b16 %v450, %v445
      %v476 = vpack.c.b16 %v456, %v451
      %v477 = vpack.c.b16 %v457, %v452
      %v478 = vpack.c.b16 %v458, %v453
      %v479 = vpack.c.b16 %v459, %v454
      %v480 = vpack.c.b16 %v460, %v455
      %v569 = vunpack.c.l.b16 %v277
      %v570 = vunpack.c.l.b16 %v278
      %v571 = vunpack.c.l.b16 %v279
      %v572 = vunpack.c.l.b16 %v280
      %v573 = vunpack.c.l.b16 %v281
      %v574 = vunpack.c.l.b16 %v282
      %v575 = vunpack.c.l.b16 %v283
      %v576 = vunpack.c.l.b16 %v284
      %v577 = vunpack.c.l.b16 %v285
      %v578 = vunpack.c.l.b16 %v286
      %v579 = vunpack.c.l.b16 %v287
      %v580 = vunpack.c.l.b16 %v288
      %v581 = vunpack.c.l.b16 %v289
      %v582 = vunpack.c.l.b16 %v290
      %v583 = vunpack.c.l.b16 %v291
      %v584 = vunpack.c.l.b16 %v292
      %v585 = vunpack.c.l.b16 %v293
      %v586 = vunpack.c.l.b16 %v294
      %v587 = vunpack.c.l.b16 %v295
      %v588 = vunpack.c.l.b16 %v296
      %v589 = vunpack.c.l.b16 %v297
      %v590 = vunpack.c.l.b16 %v298
      %v591 = vunpack.c.l.b16 %v299
      %v592 = vunpack.c.l.b16 %v300
      %v593 = vunpack.c.l.b16 %v301
      %v594 = vunpack.c.l.b16 %v302
      %v595 = vunpack.c.l.b16 %v303
      %v596 = vunpack.c.l.b16 %v304
      %v597 = vunpack.c.l.b16 %v305
      %v598 = vunpack.c.l.b16 %v306
      %v599 = vunpack.c.l.b16 %v307
      %v600 = vunpack.c.l.b16 %v308
      %v601 = vunpack.c.l.b16 %v309
      %v602 = vunpack.c.l.b16 %v310
      %v603 = vunpack.c.l.b16 %v311
      %v604 = vunpack.c.l.b16 %v312
      %v605 = vunpack.c.l.b16 %v313
      %v606 = vunpack.c.l.b16 %v314
      %v607 = vunpack.c.l.b16 %v315
      %v608 = vunpack.c.l.b16 %v316
      %v609 = vunpack.c.l.b16 %v317
      %v610 = vunpack.c.l.b16 %v318
      %v611 = vunpack.c.l.b16 %v319
      %v612 = vunpack.c.l.b16 %v320
      %v613 = vunpack.c.l.b16 %v321
      %v614 = vunpack.c.l.b16 %v322
      %v615 = vunpack.c.l.b16 %v323
      %v616 = vunpack.c.l.b16 %v324
      %v617 = vunpack.c.l.b16 %v325
      %v618 = vunpack.c.l.b16 %v326
      %v619 = vunpack.c.l.b16 %v327
      %v620 = vunpack.c.l.b16 %v328
      %v621 = vunpack.c.l.b16 %v329
      %v622 = vunpack.c.l.b16 %v330
      %v623 = vunpack.c.l.b16 %v331
      %v624 = vunpack.c.l.b16 %v332
      %v625 = vunpack.c.l.b16 %v333
      %v626 = vunpack.c.l.b16 %v334
      %v627 = vunpack.c.l.b16 %v335
      %v628 = vunpack.c.l.b16 %v336
      %v629 = vunpack.c.l.b16 %v337
      %v630 = vunpack.c.l.b16 %v338
      %v631 = vunpack.c.l.b16 %v339
      %v632 = vunpack.c.l.b16 %v340
      %v633 = vunpack.c.l.b16 %v341
      %v634 = vunpack.c.l.b16 %v342
      %v635 = vunpack.c.l.b16 %v343
      %v636 = vunpack.c.l.b16 %v344
      %v637 = vunpack.c.l.b16 %v345
      %v638 = vunpack.c.l.b16 %v346
      %v639 = vunpack.c.l.b16 %v347
      %v640 = vunpack.c.l.b16 %v348
      %v641 = vpack.c.b16 %v570, %v569
      %v642 = vpack.c.b16 %v572, %v571
      %v643 = vpack.c.b16 %v574, %v573
      %v644 = vpack.c.b16 %v576, %v575
      %v645 = vpack.c.b16 %v578, %v577
      %v646 = vpack.c.b16 %v580, %v579
      %v647 = vpack.c.b16 %v582, %v581
      %v648 = vpack.c.b16 %v584, %v583
      %v649 = vpack.c.b16 %v586, %v585
      %v650 = vpack.c.b16 %v588, %v587
      %v651 = vpack.c.b16 %v590, %v589
      %v652 = vpack.c.b16 %v592, %v591
      %v653 = vpack.c.b16 %v594, %v593
      %v654 = vpack.c.b16 %v596, %v595
      %v655 = vpack.c.b16 %v598, %v597
      %v656 = vpack.c.b16 %v600, %v599
      %v657 = vpack.c.b16 %v602, %v601
      %v658 = vpack.c.b16 %v604, %v603
      %v659 = vpack.c.b16 %v606, %v605
      %v660 = vpack.c.b16 %v608, %v607
      %v661 = vpack.c.b16 %v610, %v609
      %v662 = vpack.c.b16 %v612, %v611
      %v663 = vpack.c.b16 %v614, %v613
      %v664 = vpack.c.b16 %v616, %v615
      %v665 = vpack.c.b16 %v618, %v617
      %v666 = vpack.c.b16 %v620, %v619
      %v667 = vpack.c.b16 %v622, %v621
      %v668 = vpack.c.b16 %v624, %v623
      %v669 = vpack.c.b16 %v626, %v625
      %v670 = vpack.c.b16 %v628, %v627
      %v671 = vpack.c.b16 %v630, %v629
      %v672 = vpack.c.b16 %v632, %v631
      %v673 = vpack.c.b16 %v634, %v633
      %v674 = vpack.c.b16 %v636, %v635
      %v675 = vpack.c.b16 %v638, %v637
      %v676 = vpack.c.b16 %v640, %v639
      %vm713 = vcmask 523264
      %v715 = vsel %vm713, %v465, 0
      %v718 = vsel %vm713, %v470, 0
      %v721 = vsel %vm713, %v475, 0
      %v724 = vsel %vm713, %v480, 0
      %726 = vmatprep.subr.bf16.mxu0 0
      %727 = vmatpush1.bf16.msra.mxu0 %v648
      %728 = vmatprep.subr.bf16.mxu0 0
      %729 = vmatpush1.bf16.msra.mxu0 %v647
      %730 = vmatprep.subr.bf16.mxu0 0
      %731 = vmatpush1.bf16.msra.mxu0 %v646
      %732 = vmatprep.subr.bf16.mxu0 0
      %733 = vmatpush1.bf16.msra.mxu0 %v645
      %734 = vmatprep.subr.bf16.mxu0 0
      %735 = vmatpush1.bf16.msra.mxu0 %v644
      %736 = vmatprep.subr.bf16.mxu0 0
      %737 = vmatpush1.bf16.msra.mxu0 %v643
      %738 = vmatprep.subr.bf16.mxu0 0
      %739 = vmatpush1.bf16.msra.mxu0 %v642
      %740 = vmatprep.subr.bf16.mxu0 0
      %741 = vmatpush1.bf16.msra.mxu0 %v641
      %742 = vmatprep.subr.bf16.mxu0 0
      %743 = vmatpush2.bf16.msra.mxu0 %v656
      %744 = vmatprep.subr.bf16.mxu0 0
      %745 = vmatpush2.bf16.msra.mxu0 %v655
      %746 = vmatprep.subr.bf16.mxu0 0
      %747 = vmatpush2.bf16.msra.mxu0 %v654
      %748 = vmatprep.subr.bf16.mxu0 0
      %749 = vmatpush2.bf16.msra.mxu0 %v653
      %750 = vmatprep.subr.bf16.mxu0 0
      %751 = vmatpush2.bf16.msra.mxu0 %v652
      %752 = vmatprep.subr.bf16.mxu0 0
      %753 = vmatpush2.bf16.msra.mxu0 %v651
      %754 = vmatprep.subr.bf16.mxu0 0
      %755 = vmatpush2.bf16.msra.mxu0 %v650
      %756 = vmatprep.subr.bf16.mxu0 0
      %757 = vmatpush2.bf16.msra.mxu0 %v649
      %758 = vmatprep.mubr.bf16.mxu0 %v462
      %759 = vmatmul.mubr.bf16.gmra.mxu0 %v461
      %v760 = vpop.f32.mrf.mxu0
      %v761 = vadd.f32 %v360, %v760
      %v762 = vpop.f32.mrf.mxu0
      %v763 = vpop.f32.mrf.mxu0
      %v764 = vadd.f32 %v365, %v763
      %v765 = vpop.f32.mrf.mxu0
      %766 = vmatprep.mubr.bf16.mxu0 %v467
      %767 = vmatmul.mubr.bf16.gmra.mxu0 %v466
      %v768 = vpop.f32.mrf.mxu0
      %v769 = vadd.f32 %v370, %v768
      %v770 = vpop.f32.mrf.mxu0
      %v771 = vpop.f32.mrf.mxu0
      %v772 = vadd.f32 %v375, %v771
      %v773 = vpop.f32.mrf.mxu0
      %774 = vmatprep.mubr.bf16.mxu0 %v472
      %775 = vmatmul.mubr.bf16.gmra.mxu0 %v471
      %v776 = vpop.f32.mrf.mxu0
      %v777 = vadd.f32 %v380, %v776
      %v778 = vpop.f32.mrf.mxu0
      %v779 = vpop.f32.mrf.mxu0
      %v780 = vadd.f32 %v385, %v779
      %v781 = vpop.f32.mrf.mxu0
      %782 = vmatprep.mubr.bf16.mxu0 %v477
      %783 = vmatmul.mubr.bf16.gmra.mxu0 %v476
      %v784 = vpop.f32.mrf.mxu0
      %v785 = vadd.f32 %v390, %v784
      %v786 = vpop.f32.mrf.mxu0
      %v787 = vpop.f32.mrf.mxu0
      %v788 = vadd.f32 %v395, %v787
      %v789 = vpop.f32.mrf.mxu0
      %790 = vdwg.mxu0
      %791 = vmatprep.subr.bf16.mxu0 0
      %792 = vmatpush1.bf16.msra.mxu0 %v664
      %793 = vmatprep.subr.bf16.mxu0 0
      %794 = vmatpush1.bf16.msra.mxu0 %v663
      %795 = vmatprep.subr.bf16.mxu0 0
      %796 = vmatpush1.bf16.msra.mxu0 %v662
      %797 = vmatprep.subr.bf16.mxu0 0
      %798 = vmatpush1.bf16.msra.mxu0 %v661
      %799 = vmatprep.subr.bf16.mxu0 0
      %800 = vmatpush1.bf16.msra.mxu0 %v660
      %801 = vmatprep.subr.bf16.mxu0 0
      %802 = vmatpush1.bf16.msra.mxu0 %v659
      %803 = vmatprep.subr.bf16.mxu0 0
      %804 = vmatpush1.bf16.msra.mxu0 %v658
      %805 = vmatprep.subr.bf16.mxu0 0
      %806 = vmatpush1.bf16.msra.mxu0 %v657
      %807 = vmatprep.subr.bf16.mxu0 0
      %808 = vmatpush2.bf16.msra.mxu0 %v672
      %809 = vmatprep.subr.bf16.mxu0 0
      %810 = vmatpush2.bf16.msra.mxu0 %v671
      %811 = vmatprep.subr.bf16.mxu0 0
      %812 = vmatpush2.bf16.msra.mxu0 %v670
      %813 = vmatprep.subr.bf16.mxu0 0
      %814 = vmatpush2.bf16.msra.mxu0 %v669
      %815 = vmatprep.subr.bf16.mxu0 0
      %816 = vmatpush2.bf16.msra.mxu0 %v668
      %817 = vmatprep.subr.bf16.mxu0 0
      %818 = vmatpush2.bf16.msra.mxu0 %v667
      %819 = vmatprep.subr.bf16.mxu0 0
      %820 = vmatpush2.bf16.msra.mxu0 %v666
      %821 = vmatprep.subr.bf16.mxu0 0
      %822 = vmatpush2.bf16.msra.mxu0 %v665
      %823 = vmatprep.mubr.bf16.mxu0 %v464
      %824 = vmatmul.mubr.bf16.gmra.mxu0 %v463
      %v825 = vpop.f32.mrf.mxu0
      %v826 = vadd.f32 %v761, %v825
      %v827 = vpop.f32.mrf.mxu0
      %v828 = vpop.f32.mrf.mxu0
      %v829 = vadd.f32 %v764, %v828
      %v830 = vpop.f32.mrf.mxu0
      %831 = vmatprep.mubr.bf16.mxu0 %v469
      %832 = vmatmul.mubr.bf16.gmra.mxu0 %v468
      %v833 = vpop.f32.mrf.mxu0
      %v834 = vadd.f32 %v769, %v833
      %v835 = vpop.f32.mrf.mxu0
      %v836 = vpop.f32.mrf.mxu0
      %v837 = vadd.f32 %v772, %v836
      %v838 = vpop.f32.mrf.mxu0
      %839 = vmatprep.mubr.bf16.mxu0 %v474
      %840 = vmatmul.mubr.bf16.gmra.mxu0 %v473
      %v841 = vpop.f32.mrf.mxu0
      %v842 = vadd.f32 %v777, %v841
      %v843 = vpop.f32.mrf.mxu0
      %v844 = vpop.f32.mrf.mxu0
      %v845 = vadd.f32 %v780, %v844
      %v846 = vpop.f32.mrf.mxu0
      %847 = vmatprep.mubr.bf16.mxu0 %v479
      %848 = vmatmul.mubr.bf16.gmra.mxu0 %v478
      %v849 = vpop.f32.mrf.mxu0
      %v850 = vadd.f32 %v785, %v849
      %v851 = vpop.f32.mrf.mxu0
      %v852 = vpop.f32.mrf.mxu0
      %v853 = vadd.f32 %v788, %v852
      %v854 = vpop.f32.mrf.mxu0
      %855 = vdwg.mxu0
      %856 = vmatprep.subr.bf16.mxu0 0
      %857 = vmatpush1.bf16.msra.mxu0 0
      %858 = vmatprep.subr.bf16.mxu0 0
      %859 = vmatpush1.bf16.msra.mxu0 0
      %860 = vmatprep.subr.bf16.mxu0 0
      %861 = vmatpush1.bf16.msra.mxu0 0
      %862 = vmatprep.subr.bf16.mxu0 0
      %863 = vmatpush1.bf16.msra.mxu0 0
      %864 = vmatprep.subr.bf16.mxu0 0
      %865 = vmatpush1.bf16.msra.mxu0 %v676
      %866 = vmatprep.subr.bf16.mxu0 0
      %867 = vmatpush1.bf16.msra.mxu0 %v675
      %868 = vmatprep.subr.bf16.mxu0 0
      %869 = vmatpush1.bf16.msra.mxu0 %v674
      %870 = vmatprep.subr.bf16.mxu0 0
      %871 = vmatpush1.bf16.msra.mxu0 %v673
      %872 = vmatprep.subr.bf16.mxu0 0
      %873 = vmatpush2.bf16.msra.mxu0 0
      %874 = vmatprep.subr.bf16.mxu0 0
      %875 = vmatpush2.bf16.msra.mxu0 0
      %876 = vmatprep.subr.bf16.mxu0 0
      %877 = vmatpush2.bf16.msra.mxu0 0
      %878 = vmatprep.subr.bf16.mxu0 0
      %879 = vmatpush2.bf16.msra.mxu0 0
      %880 = vmatprep.subr.bf16.mxu0 0
      %881 = vmatpush2.bf16.msra.mxu0 0
      %882 = vmatprep.subr.bf16.mxu0 0
      %883 = vmatpush2.bf16.msra.mxu0 0
      %884 = vmatprep.subr.bf16.mxu0 0
      %885 = vmatpush2.bf16.msra.mxu0 0
      %886 = vmatprep.subr.bf16.mxu0 0
      %887 = vmatpush2.bf16.msra.mxu0 0
      %888 = vmatprep.mubr.bf16.mxu0 0
      %889 = vmatmul.mubr.bf16.gmra.mxu0 %v715
      %v890 = vpop.f32.mrf.mxu0
      %v891 = vadd.f32 %v826, %v890
      %v892 = vpop.f32.mrf.mxu0
      %v893 = vpop.f32.mrf.mxu0
      %v894 = vadd.f32 %v829, %v893
      %v895 = vpop.f32.mrf.mxu0
      %896 = vmatprep.mubr.bf16.mxu0 0
      %897 = vmatmul.mubr.bf16.gmra.mxu0 %v718
      %v898 = vpop.f32.mrf.mxu0
      %v899 = vadd.f32 %v834, %v898
      %v900 = vpop.f32.mrf.mxu0
      %v901 = vpop.f32.mrf.mxu0
      %v902 = vadd.f32 %v837, %v901
      %v903 = vpop.f32.mrf.mxu0
      %904 = vmatprep.mubr.bf16.mxu0 0
      %905 = vmatmul.mubr.bf16.gmra.mxu0 %v721
      %v906 = vpop.f32.mrf.mxu0
      %v907 = vadd.f32 %v842, %v906
      %v908 = vpop.f32.mrf.mxu0
      %v909 = vpop.f32.mrf.mxu0
      %v910 = vadd.f32 %v845, %v909
      %v911 = vpop.f32.mrf.mxu0
      %912 = vmatprep.mubr.bf16.mxu0 0
      %913 = vmatmul.mubr.bf16.gmra.mxu0 %v724
      %v914 = vpop.f32.mrf.mxu0
      %v915 = vadd.f32 %v850, %v914
      %v916 = vpop.f32.mrf.mxu0
      %v917 = vpop.f32.mrf.mxu0
      %v918 = vadd.f32 %v853, %v917
      %v919 = vpop.f32.mrf.mxu0
      %920 = vdwg.mxu0
      %v921 = vld [vmem:[%s5] sm:$0xff]
      %v922 = vld [vmem:[%s5 + $0x8] sm:$0xff]
      %v923 = vld [vmem:[%s5 + $0x10] sm:$0xff]
      %v924 = vld [vmem:[%s5 + $0x18] sm:$0xff]
      %v925 = vld [vmem:[%s5 + $0x20] sm:$0xff]
      %v926 = vld [vmem:[%s5 + $0x28] sm:$0xff]
      %v927 = vld [vmem:[%s5 + $0x30] sm:$0xff]
      %v928 = vld [vmem:[%s5 + $0x38] sm:$0xff]
      %v929 = vld [vmem:[%s3] sm:$0xff]
      %v930 = vld [vmem:[%s3 + $0x8] sm:$0xff]
      %v931 = vld [vmem:[%s3 + $0x10] sm:$0xff]
      %v932 = vld [vmem:[%s3 + $0x18] sm:$0xff]
      %v933 = vld [vmem:[%s3 + $0x20] sm:$0xff]
      %v934 = vld [vmem:[%s3 + $0x28] sm:$0xff]
      %v935 = vld [vmem:[%s3 + $0x30] sm:$0xff]
      %v936 = vld [vmem:[%s3 + $0x38] sm:$0xff]
      %v937 = vld [vmem:[%s4] sm:$0xff]
      %v938 = vld [vmem:[%s4 + $0x8] sm:$0xff]
      %v939 = vld [vmem:[%s4 + $0x10] sm:$0xff]
      %v940 = vld [vmem:[%s4 + $0x18] sm:$0xff]
      %v941 = vld [vmem:[%s4 + $0x20] sm:$0xff]
      %v942 = vld [vmem:[%s4 + $0x28] sm:$0xff]
      %v943 = vld [vmem:[%s4 + $0x30] sm:$0xff]
      %v944 = vld [vmem:[%s4 + $0x38] sm:$0xff]
      %vm945 = vcmask 130048
      %v946 = vsel %vm945, %v891, 0.0
      %947 = vadd.xlane.f32.xlu0 %v946
      %v948 = vpop.xlane.xlu0 %947
      %v949 = vsel %vm945, %v894, 0.0
      %950 = vadd.xlane.f32.xlu0 %v949
      %v951 = vpop.xlane.xlu0 %950
      %v952 = vsel %vm945, %v899, 0.0
      %953 = vadd.xlane.f32.xlu0 %v952
      %v954 = vpop.xlane.xlu0 %953
      %v955 = vsel %vm945, %v902, 0.0
      %956 = vadd.xlane.f32.xlu0 %v955
      %v957 = vpop.xlane.xlu0 %956
      %v958 = vsel %vm945, %v907, 0.0
      %959 = vadd.xlane.f32.xlu0 %v958
      %v960 = vpop.xlane.xlu0 %959
      %v961 = vsel %vm945, %v910, 0.0
      %962 = vadd.xlane.f32.xlu0 %v961
      %v963 = vpop.xlane.xlu0 %962
      %v964 = vsel %vm945, %v915, 0.0
      %965 = vadd.xlane.f32.xlu0 %v964
      %v966 = vpop.xlane.xlu0 %965
      %v967 = vsel %vm945, %v918, 0.0
      %968 = vadd.xlane.f32.xlu0 %v967
      %v969 = vpop.xlane.xlu0 %968
      %v970 = vmul.f32 %v891, %v891
      %v971 = vmul.f32 %v894, %v894
      %v972 = vmul.f32 %v899, %v899
      %v973 = vmul.f32 %v902, %v902
      %v974 = vmul.f32 %v907, %v907
      %v975 = vmul.f32 %v910, %v910
      %v976 = vmul.f32 %v915, %v915
      %v977 = vmul.f32 %v918, %v918
      %v978 = vsel %vm945, %v970, 0.0
      %979 = vadd.xlane.f32.xlu0 %v978
      %v980 = vpop.xlane.xlu0 %979
      %v981 = vsel %vm945, %v971, 0.0
      %982 = vadd.xlane.f32.xlu0 %v981
      %v983 = vpop.xlane.xlu0 %982
      %v984 = vsel %vm945, %v972, 0.0
      %985 = vadd.xlane.f32.xlu0 %v984
      %v986 = vpop.xlane.xlu0 %985
      %v987 = vsel %vm945, %v973, 0.0
      %988 = vadd.xlane.f32.xlu0 %v987
      %v989 = vpop.xlane.xlu0 %988
      %v990 = vsel %vm945, %v974, 0.0
      %991 = vadd.xlane.f32.xlu0 %v990
      %v992 = vpop.xlane.xlu0 %991
      %v993 = vsel %vm945, %v975, 0.0
      %994 = vadd.xlane.f32.xlu0 %v993
      %v995 = vpop.xlane.xlu0 %994
      %v996 = vsel %vm945, %v976, 0.0
      %997 = vadd.xlane.f32.xlu0 %v996
      %v998 = vpop.xlane.xlu0 %997
      %v999 = vsel %vm945, %v977, 0.0
      %1000 = vadd.xlane.f32.xlu0 %v999
      %v1001 = vpop.xlane.xlu0 %1000
      %v1003 = vsel %vm713, %v921, 0
      %v1006 = vsel %vm713, %v922, 0
      %v1009 = vsel %vm713, %v923, 0
      %v1012 = vsel %vm713, %v924, 0
      %v1015 = vsel %vm713, %v925, 0
      %v1018 = vsel %vm713, %v926, 0
      %v1021 = vsel %vm713, %v927, 0
      %v1024 = vsel %vm713, %v928, 0
      %1026 = vmatprep.subr.mxu0 0.0
      %1027 = vmatpush1.msra.mxu0 0.0
      %1028 = vmatprep.subr.mxu0 0.0
      %1029 = vmatpush1.msra.mxu0 0.0
      %1030 = vmatprep.subr.mxu0 0.0
      %1031 = vmatpush1.msra.mxu0 0.0
      %1032 = vmatprep.subr.mxu0 0.0
      %1033 = vmatpush1.msra.mxu0 0.0
      %1034 = vmatprep.subr.mxu0 0.0
      %1035 = vmatpush1.msra.mxu0 0.0
      %1036 = vmatprep.subr.mxu0 0.0
      %1037 = vmatpush1.msra.mxu0 0.0
      %1038 = vmatprep.subr.mxu0 0.0
      %1039 = vmatpush1.msra.mxu0 0.0
      %1040 = vmatprep.subr.mxu0 0.0
      %1041 = vmatpush1.msra.mxu0 0.0
      %1042 = vmatprep.subr.mxu0 0.0
      %1043 = vmatpush1.msra.mxu0 %v969
      %1044 = vmatprep.subr.mxu0 0.0
      %1045 = vmatpush1.msra.mxu0 %v966
      %1046 = vmatprep.subr.mxu0 0.0
      %1047 = vmatpush1.msra.mxu0 %v963
      %1048 = vmatprep.subr.mxu0 0.0
      %1049 = vmatpush1.msra.mxu0 %v960
      %1050 = vmatprep.subr.mxu0 0.0
      %1051 = vmatpush1.msra.mxu0 %v957
      %1052 = vmatprep.subr.mxu0 0.0
      %1053 = vmatpush1.msra.mxu0 %v954
      %1054 = vmatprep.subr.mxu0 0.0
      %1055 = vmatpush1.msra.mxu0 %v951
      %1056 = vmatprep.subr.mxu0 0.0
      %1057 = vmatpush1.msra.mxu0 %v948
      %1058 = vmatprep.subr.mxu0 0.0
      %1059 = vmatpush2.msra.mxu0 0.0
      %1060 = vmatprep.subr.mxu0 0.0
      %1061 = vmatpush2.msra.mxu0 0.0
      %1062 = vmatprep.subr.mxu0 0.0
      %1063 = vmatpush2.msra.mxu0 0.0
      %1064 = vmatprep.subr.mxu0 0.0
      %1065 = vmatpush2.msra.mxu0 0.0
      %1066 = vmatprep.subr.mxu0 0.0
      %1067 = vmatpush2.msra.mxu0 0.0
      %1068 = vmatprep.subr.mxu0 0.0
      %1069 = vmatpush2.msra.mxu0 0.0
      %1070 = vmatprep.subr.mxu0 0.0
      %1071 = vmatpush2.msra.mxu0 0.0
      %1072 = vmatprep.subr.mxu0 0.0
      %1073 = vmatpush2.msra.mxu0 0.0
      %1074 = vmatprep.subr.mxu0 0.0
      %1075 = vmatpush2.msra.mxu0 0.0
      %1076 = vmatprep.subr.mxu0 0.0
      %1077 = vmatpush2.msra.mxu0 0.0
      %1078 = vmatprep.subr.mxu0 0.0
      %1079 = vmatpush2.msra.mxu0 0.0
      %1080 = vmatprep.subr.mxu0 0.0
      %1081 = vmatpush2.msra.mxu0 0.0
      %1082 = vmatprep.subr.mxu0 0.0
      %1083 = vmatpush2.msra.mxu0 0.0
      %1084 = vmatprep.subr.mxu0 0.0
      %1085 = vmatpush2.msra.mxu0 0.0
      %1086 = vmatprep.subr.mxu0 0.0
      %1087 = vmatpush2.msra.mxu0 0.0
      %1088 = vmatprep.subr.mxu0 0.0
      %1089 = vmatpush2.msra.mxu0 0.0
      %1090 = vmatprep.mubr.f32.mxu0 0.0
      %1091 = vmatmul.mubr.f32.gmra.mxu0 %v1003
      %v1092 = vpop.f32.mrf.mxu0
      %v1093 = vadd.f32 0.0, %v1092
      %v1094 = vpop.f32.mrf.mxu0
      %1095 = vmatprep.mubr.f32.mxu0 0.0
      %1096 = vmatmul.mubr.f32.gmra.mxu0 %v1006
      %v1097 = vpop.f32.mrf.mxu0
      %v1098 = vadd.f32 0.0, %v1097
      %v1099 = vpop.f32.mrf.mxu0
      %1100 = vmatprep.mubr.f32.mxu0 0.0
      %1101 = vmatmul.mubr.f32.gmra.mxu0 %v1009
      %v1102 = vpop.f32.mrf.mxu0
      %v1103 = vadd.f32 0.0, %v1102
      %v1104 = vpop.f32.mrf.mxu0
      %1105 = vmatprep.mubr.f32.mxu0 0.0
      %1106 = vmatmul.mubr.f32.gmra.mxu0 %v1012
      %v1107 = vpop.f32.mrf.mxu0
      %v1108 = vadd.f32 0.0, %v1107
      %v1109 = vpop.f32.mrf.mxu0
      %1110 = vmatprep.mubr.f32.mxu0 0.0
      %1111 = vmatmul.mubr.f32.gmra.mxu0 %v1015
      %v1112 = vpop.f32.mrf.mxu0
      %v1113 = vadd.f32 0.0, %v1112
      %v1114 = vpop.f32.mrf.mxu0
      %1115 = vmatprep.mubr.f32.mxu0 0.0
      %1116 = vmatmul.mubr.f32.gmra.mxu0 %v1018
      %v1117 = vpop.f32.mrf.mxu0
      %v1118 = vadd.f32 0.0, %v1117
      %v1119 = vpop.f32.mrf.mxu0
      %1120 = vmatprep.mubr.f32.mxu0 0.0
      %1121 = vmatmul.mubr.f32.gmra.mxu0 %v1021
      %v1122 = vpop.f32.mrf.mxu0
      %v1123 = vadd.f32 0.0, %v1122
      %v1124 = vpop.f32.mrf.mxu0
      %1125 = vmatprep.mubr.f32.mxu0 0.0
      %1126 = vmatmul.mubr.f32.gmra.mxu0 %v1024
      %v1127 = vpop.f32.mrf.mxu0
      %v1128 = vadd.f32 0.0, %v1127
      %v1129 = vpop.f32.mrf.mxu0
      %1130 = vdwg.mxu0
      %1131 = vmatprep.subr.mxu0 0.0
      %1132 = vmatpush1.msra.mxu0 0.0
      %1133 = vmatprep.subr.mxu0 0.0
      %1134 = vmatpush1.msra.mxu0 0.0
      %1135 = vmatprep.subr.mxu0 0.0
      %1136 = vmatpush1.msra.mxu0 0.0
      %1137 = vmatprep.subr.mxu0 0.0
      %1138 = vmatpush1.msra.mxu0 0.0
      %1139 = vmatprep.subr.mxu0 0.0
      %1140 = vmatpush1.msra.mxu0 0.0
      %1141 = vmatprep.subr.mxu0 0.0
      %1142 = vmatpush1.msra.mxu0 0.0
      %1143 = vmatprep.subr.mxu0 0.0
      %1144 = vmatpush1.msra.mxu0 0.0
      %1145 = vmatprep.subr.mxu0 0.0
      %1146 = vmatpush1.msra.mxu0 0.0
      %1147 = vmatprep.subr.mxu0 0.0
      %1148 = vmatpush1.msra.mxu0 %v1001
      %1149 = vmatprep.subr.mxu0 0.0
      %1150 = vmatpush1.msra.mxu0 %v998
      %1151 = vmatprep.subr.mxu0 0.0
      %1152 = vmatpush1.msra.mxu0 %v995
      %1153 = vmatprep.subr.mxu0 0.0
      %1154 = vmatpush1.msra.mxu0 %v992
      %1155 = vmatprep.subr.mxu0 0.0
      %1156 = vmatpush1.msra.mxu0 %v989
      %1157 = vmatprep.subr.mxu0 0.0
      %1158 = vmatpush1.msra.mxu0 %v986
      %1159 = vmatprep.subr.mxu0 0.0
      %1160 = vmatpush1.msra.mxu0 %v983
      %1161 = vmatprep.subr.mxu0 0.0
      %1162 = vmatpush1.msra.mxu0 %v980
      %1163 = vmatprep.subr.mxu0 0.0
      %1164 = vmatpush2.msra.mxu0 0.0
      %1165 = vmatprep.subr.mxu0 0.0
      %1166 = vmatpush2.msra.mxu0 0.0
      %1167 = vmatprep.subr.mxu0 0.0
      %1168 = vmatpush2.msra.mxu0 0.0
      %1169 = vmatprep.subr.mxu0 0.0
      %1170 = vmatpush2.msra.mxu0 0.0
      %1171 = vmatprep.subr.mxu0 0.0
      %1172 = vmatpush2.msra.mxu0 0.0
      %1173 = vmatprep.subr.mxu0 0.0
      %1174 = vmatpush2.msra.mxu0 0.0
      %1175 = vmatprep.subr.mxu0 0.0
      %1176 = vmatpush2.msra.mxu0 0.0
      %1177 = vmatprep.subr.mxu0 0.0
      %1178 = vmatpush2.msra.mxu0 0.0
      %1179 = vmatprep.subr.mxu0 0.0
      %1180 = vmatpush2.msra.mxu0 0.0
      %1181 = vmatprep.subr.mxu0 0.0
      %1182 = vmatpush2.msra.mxu0 0.0
      %1183 = vmatprep.subr.mxu0 0.0
      %1184 = vmatpush2.msra.mxu0 0.0
      %1185 = vmatprep.subr.mxu0 0.0
      %1186 = vmatpush2.msra.mxu0 0.0
      %1187 = vmatprep.subr.mxu0 0.0
      %1188 = vmatpush2.msra.mxu0 0.0
      %1189 = vmatprep.subr.mxu0 0.0
      %1190 = vmatpush2.msra.mxu0 0.0
      %1191 = vmatprep.subr.mxu0 0.0
      %1192 = vmatpush2.msra.mxu0 0.0
      %1193 = vmatprep.subr.mxu0 0.0
      %1194 = vmatpush2.msra.mxu0 0.0
      %1195 = vmatprep.mubr.f32.mxu0 0.0
      %1196 = vmatmul.mubr.f32.gmra.mxu0 %v1003
      %v1197 = vpop.f32.mrf.mxu0
      %v1198 = vadd.f32 0.0, %v1197
      %v1199 = vpop.f32.mrf.mxu0
      %1200 = vmatprep.mubr.f32.mxu0 0.0
      %1201 = vmatmul.mubr.f32.gmra.mxu0 %v1006
      %v1202 = vpop.f32.mrf.mxu0
      %v1203 = vadd.f32 0.0, %v1202
      %v1204 = vpop.f32.mrf.mxu0
      %1205 = vmatprep.mubr.f32.mxu0 0.0
      %1206 = vmatmul.mubr.f32.gmra.mxu0 %v1009
      %v1207 = vpop.f32.mrf.mxu0
      %v1208 = vadd.f32 0.0, %v1207
      %v1209 = vpop.f32.mrf.mxu0
      %1210 = vmatprep.mubr.f32.mxu0 0.0
      %1211 = vmatmul.mubr.f32.gmra.mxu0 %v1012
      %v1212 = vpop.f32.mrf.mxu0
      %v1213 = vadd.f32 0.0, %v1212
      %v1214 = vpop.f32.mrf.mxu0
      %1215 = vmatprep.mubr.f32.mxu0 0.0
      %1216 = vmatmul.mubr.f32.gmra.mxu0 %v1015
      %v1217 = vpop.f32.mrf.mxu0
      %v1218 = vadd.f32 0.0, %v1217
      %v1219 = vpop.f32.mrf.mxu0
      %1220 = vmatprep.mubr.f32.mxu0 0.0
      %1221 = vmatmul.mubr.f32.gmra.mxu0 %v1018
      %v1222 = vpop.f32.mrf.mxu0
      %v1223 = vadd.f32 0.0, %v1222
      %v1224 = vpop.f32.mrf.mxu0
      %1225 = vmatprep.mubr.f32.mxu0 0.0
      %1226 = vmatmul.mubr.f32.gmra.mxu0 %v1021
      %v1227 = vpop.f32.mrf.mxu0
      %v1228 = vadd.f32 0.0, %v1227
      %v1229 = vpop.f32.mrf.mxu0
      %1230 = vmatprep.mubr.f32.mxu0 0.0
      %1231 = vmatmul.mubr.f32.gmra.mxu0 %v1024
      %v1232 = vpop.f32.mrf.mxu0
      %v1233 = vadd.f32 0.0, %v1232
      %v1234 = vpop.f32.mrf.mxu0
      %1235 = vdwg.mxu0
      %v1236 = vmul.f32 %v1093, %v1093
      %v1237 = vmul.f32 %v1098, %v1098
      %v1238 = vmul.f32 %v1103, %v1103
      %v1239 = vmul.f32 %v1108, %v1108
      %v1240 = vmul.f32 %v1113, %v1113
      %v1241 = vmul.f32 %v1118, %v1118
      %v1242 = vmul.f32 %v1123, %v1123
      %v1243 = vmul.f32 %v1128, %v1128
      %v1244 = vsub.f32 %v1198, %v1236
      %v1245 = vsub.f32 %v1203, %v1237
      %v1246 = vsub.f32 %v1208, %v1238
      %v1247 = vsub.f32 %v1213, %v1239
      %v1248 = vsub.f32 %v1218, %v1240
      %v1249 = vsub.f32 %v1223, %v1241
      %v1250 = vsub.f32 %v1228, %v1242
      %v1251 = vsub.f32 %v1233, %v1243
      %v1252 = vmax.f32 %v1244, 0.0
      %v1253 = vmax.f32 %v1245, 0.0
      %v1254 = vmax.f32 %v1246, 0.0
      %v1255 = vmax.f32 %v1247, 0.0
      %v1256 = vmax.f32 %v1248, 0.0
      %v1257 = vmax.f32 %v1249, 0.0
      %v1258 = vmax.f32 %v1250, 0.0
      %v1259 = vmax.f32 %v1251, 0.0
      %v1260 = vadd.f32 %v1252, 1e-05
      %v1261 = vadd.f32 %v1253, 1e-05
      %v1262 = vadd.f32 %v1254, 1e-05
      %v1263 = vadd.f32 %v1255, 1e-05
      %v1264 = vadd.f32 %v1256, 1e-05
      %v1265 = vadd.f32 %v1257, 1e-05
      %v1266 = vadd.f32 %v1258, 1e-05
      %v1267 = vadd.f32 %v1259, 1e-05
      %v1268 = vrsqrt.pop %v1260
      %v1269 = vrsqrt.pop %v1261
      %v1270 = vrsqrt.pop %v1262
      %v1271 = vrsqrt.pop %v1263
      %v1272 = vrsqrt.pop %v1264
      %v1273 = vrsqrt.pop %v1265
      %v1274 = vrsqrt.pop %v1266
      %v1275 = vrsqrt.pop %v1267
      %1277 = vset.pattern.permute.xlu0 0
      %1278 = vperm.xlu0 %1277, %v1093
      %v1279 = vpop.permute.xlu0 %1278
      %1282 = vset.pattern.permute.xlu0 0
      %1283 = vperm.xlu0 %1282, %v1098
      %v1284 = vpop.permute.xlu0 %1283
      %1287 = vset.pattern.permute.xlu0 0
      %1288 = vperm.xlu0 %1287, %v1103
      %v1289 = vpop.permute.xlu0 %1288
      %1292 = vset.pattern.permute.xlu0 0
      %1293 = vperm.xlu0 %1292, %v1108
      %v1294 = vpop.permute.xlu0 %1293
      %1297 = vset.pattern.permute.xlu0 0
      %1298 = vperm.xlu0 %1297, %v1113
      %v1299 = vpop.permute.xlu0 %1298
      %1302 = vset.pattern.permute.xlu0 0
      %1303 = vperm.xlu0 %1302, %v1118
      %v1304 = vpop.permute.xlu0 %1303
      %1307 = vset.pattern.permute.xlu0 0
      %1308 = vperm.xlu0 %1307, %v1123
      %v1309 = vpop.permute.xlu0 %1308
      %1312 = vset.pattern.permute.xlu0 0
      %1313 = vperm.xlu0 %1312, %v1128
      %v1314 = vpop.permute.xlu0 %1313
      %v1316 = vsub.f32 %v891, %v1279
      %v1317 = vsub.f32 %v894, %v1284
      %v1318 = vsub.f32 %v899, %v1289
      %v1319 = vsub.f32 %v902, %v1294
      %v1320 = vsub.f32 %v907, %v1299
      %v1321 = vsub.f32 %v910, %v1304
      %v1322 = vsub.f32 %v915, %v1309
      %v1323 = vsub.f32 %v918, %v1314
      %v1324 = vmul.f32 %v1268, %v929
      %v1325 = vmul.f32 %v1269, %v930
      %v1326 = vmul.f32 %v1270, %v931
      %v1327 = vmul.f32 %v1271, %v932
      %v1328 = vmul.f32 %v1272, %v933
      %v1329 = vmul.f32 %v1273, %v934
      %v1330 = vmul.f32 %v1274, %v935
      %v1331 = vmul.f32 %v1275, %v936
      %1333 = vset.pattern.permute.xlu0 0
      %1334 = vperm.xlu0 %1333, %v1324
      %v1335 = vpop.permute.xlu0 %1334
      %1338 = vset.pattern.permute.xlu0 0
      %1339 = vperm.xlu0 %1338, %v1325
      %v1340 = vpop.permute.xlu0 %1339
      %1343 = vset.pattern.permute.xlu0 0
      %1344 = vperm.xlu0 %1343, %v1326
      %v1345 = vpop.permute.xlu0 %1344
      %1348 = vset.pattern.permute.xlu0 0
      %1349 = vperm.xlu0 %1348, %v1327
      %v1350 = vpop.permute.xlu0 %1349
      %1353 = vset.pattern.permute.xlu0 0
      %1354 = vperm.xlu0 %1353, %v1328
      %v1355 = vpop.permute.xlu0 %1354
      %1358 = vset.pattern.permute.xlu0 0
      %1359 = vperm.xlu0 %1358, %v1329
      %v1360 = vpop.permute.xlu0 %1359
      %1363 = vset.pattern.permute.xlu0 0
      %1364 = vperm.xlu0 %1363, %v1330
      %v1365 = vpop.permute.xlu0 %1364
      %1368 = vset.pattern.permute.xlu0 0
      %1369 = vperm.xlu0 %1368, %v1331
      %v1370 = vpop.permute.xlu0 %1369
      %v1372 = vmul.f32 %v1316, %v1335
      %v1373 = vmul.f32 %v1317, %v1340
      %v1374 = vmul.f32 %v1318, %v1345
      %v1375 = vmul.f32 %v1319, %v1350
      %v1376 = vmul.f32 %v1320, %v1355
      %v1377 = vmul.f32 %v1321, %v1360
      %v1378 = vmul.f32 %v1322, %v1365
      %v1379 = vmul.f32 %v1323, %v1370
      %1381 = vset.pattern.permute.xlu0 0
      %1382 = vperm.xlu0 %1381, %v937
      %v1383 = vpop.permute.xlu0 %1382
      %1386 = vset.pattern.permute.xlu0 0
      %1387 = vperm.xlu0 %1386, %v938
      %v1388 = vpop.permute.xlu0 %1387
      %1391 = vset.pattern.permute.xlu0 0
      %1392 = vperm.xlu0 %1391, %v939
      %v1393 = vpop.permute.xlu0 %1392
      %1396 = vset.pattern.permute.xlu0 0
      %1397 = vperm.xlu0 %1396, %v940
      %v1398 = vpop.permute.xlu0 %1397
      %1401 = vset.pattern.permute.xlu0 0
      %1402 = vperm.xlu0 %1401, %v941
      %v1403 = vpop.permute.xlu0 %1402
      %1406 = vset.pattern.permute.xlu0 0
      %1407 = vperm.xlu0 %1406, %v942
      %v1408 = vpop.permute.xlu0 %1407
      %1411 = vset.pattern.permute.xlu0 0
      %1412 = vperm.xlu0 %1411, %v943
      %v1413 = vpop.permute.xlu0 %1412
      %1416 = vset.pattern.permute.xlu0 0
      %1417 = vperm.xlu0 %1416, %v944
      %v1418 = vpop.permute.xlu0 %1417
      %v1420 = vadd.f32 %v1372, %v1383
      %v1421 = vadd.f32 %v1373, %v1388
      %v1422 = vadd.f32 %v1374, %v1393
      %v1423 = vadd.f32 %v1375, %v1398
      %v1424 = vadd.f32 %v1376, %v1403
      %v1425 = vadd.f32 %v1377, %v1408
      %v1426 = vadd.f32 %v1378, %v1413
      %v1427 = vadd.f32 %v1379, %v1418
      %v1428 = vmax.f32 %v1420, 0.0
      %v1429 = vmax.f32 %v1421, 0.0
      %v1430 = vmax.f32 %v1422, 0.0
      %v1431 = vmax.f32 %v1423, 0.0
      %v1432 = vmax.f32 %v1424, 0.0
      %v1433 = vmax.f32 %v1425, 0.0
      %v1434 = vmax.f32 %v1426, 0.0
      %v1435 = vmax.f32 %v1427, 0.0
      %v1436 = vpack.c.bf16 %v1429, %v1428
      %v1437 = vpack.c.bf16 %v1431, %v1430
      %v1438 = vpack.c.bf16 %v1433, %v1432
      %v1439 = vpack.c.bf16 %v1435, %v1434
      %v1444 = vunpack.c.l.b16 %v1436
      %v1445 = vunpack.c.h.b16 %v1436
      %v1446 = vunpack.c.l.b16 %v1437
      %v1447 = vunpack.c.h.b16 %v1437
      %v1448 = vunpack.c.l.b16 %v1438
      %v1449 = vunpack.c.h.b16 %v1438
      %v1450 = vunpack.c.l.b16 %v1439
      %v1451 = vunpack.c.h.b16 %v1439
      %v1452 = vpack.c.b16 %v1444, %v1444
      %v1453 = vpack.c.b16 %v1445, %v1445
      %v1454 = vpack.c.b16 %v1446, %v1446
      %v1455 = vpack.c.b16 %v1447, %v1447
      %v1456 = vpack.c.b16 %v1448, %v1448
      %v1457 = vpack.c.b16 %v1449, %v1449
      %v1458 = vpack.c.b16 %v1450, %v1450
      %v1459 = vpack.c.b16 %v1451, %v1451
      %vm1468 = vcmask 125952
      %1469 = vst.msk [vmem:[%s251] sm:$0xf] %vm1468, %v1452
      %1470 = vst.msk [vmem:[%s251 + $0x4] sm:$0xf] %vm1468, %v1453
      %1471 = vst.msk [vmem:[%s251 + $0x8] sm:$0xf] %vm1468, %v1454
      %1472 = vst.msk [vmem:[%s251 + $0xc] sm:$0xf] %vm1468, %v1455
      %1473 = vst.msk [vmem:[%s251 + $0x10] sm:$0xf] %vm1468, %v1456
      %1474 = vst.msk [vmem:[%s251 + $0x14] sm:$0xf] %vm1468, %v1457
      %1475 = vst.msk [vmem:[%s251 + $0x18] sm:$0xf] %vm1468, %v1458
      %1476 = vst.msk [vmem:[%s251 + $0x1c] sm:$0xf] %vm1468, %v1459
      %p1477 = scmp.lt.s32.totalorder %s17, 1
      %s1478 = scalar_select %p1477, %s17, 1
      %s1479 = smul.addr %s1478, 8
      %s1480 = smul.addr %s1479, 4
      %s1481 = scalar_lea.vmem %s6, %s1480
      // Predicated region
      $region45: #{unet2d_forward.17} parent=43 // pred_check
        %p1482 = pneg %p166
      $region46: #{unet2d_forward.17} parent=43 // pred_check_branch
        %1484 = sbr.rel (%p1482) target = $region48
      $region47: #{unet2d_forward.17} parent=43 // pred_region
        _
      $region48: #{unet2d_forward.17} parent=43 // pred_fallthru
        _
    $region44: #{unet2d_forward.17} parent=5 // pred_fallthru
      _
    %p1485 = scmp.le.s32.totalorder 2, %s12
    // Predicated region
    $region49: #{unet2d_forward.17} parent=5 // pred_check
      %p1486 = pneg %p1485
    $region50: #{unet2d_forward.17} parent=5 // pred_check_branch
      %1488 = sbr.rel (%p1486) target = $region52
    $region51: #{unet2d_forward.17} parent=5 // pred_region
      %s1489 = ssub.s32 %s12, 2
      // Predicated region
      $region53: #{unet2d_forward.17} parent=51 // pred_check
        %p1490 = pneg %p172
      $region54: #{unet2d_forward.17} parent=51 // pred_check_branch
        %1492 = sbr.rel (%p1490) target = $region56
      $region55: #{unet2d_forward.17} parent=51 // pred_region
        %p1493 = scmp.lt.s32.totalorder %s18, 1
        %s1494 = scalar_select %p1493, %s18, 1
        %s1495 = smul.addr %s1494, 8
        %s1496 = smul.addr %s1495, 4
        %s1497 = scalar_lea.vmem %s6, %s1496
      $region56: #{unet2d_forward.17} parent=51 // pred_fallthru
        _
    $region52: #{unet2d_forward.17} parent=5 // pred_fallthru
      _
  $region6: #{unet2d_forward.17} parent=0 // loop_footer
    %s16 = sadd.s32 1, %s12
  $region7: #{unet2d_forward.17} parent=0 // loop_footer_branch
    %11 = sbr.rel target = $region3
  $region8: #{unet2d_forward.17} parent=0 // loop_exit
    _

// kernel: unet2d_forward.21
$region0: #{unet2d_forward.21}
  #allocation0 [shape = 'u32[]', space=smem, size = 0x4, offset = 0x4, fixed_abs, tag = 'smem constant byte address 0x4 - core index']
  #allocation1 [shape = 'u32[144,128]{1,0:T(1,128)}', space=vmem, size = 0x12000, scoped, tag = 'internal scratch']
  %s0 = inlined_call_operand.vmem [shape: bf16[2,32,64], index: 0, kind: input, shape index: {}]
  %s1 = inlined_call_operand.vmem [shape: bf16[64,32], index: 1, kind: input, shape index: {}]
  %s2 = inlined_call_operand.vmem [shape: f32[64,1], index: 2, kind: input, shape index: {}]
  %s3 = inlined_call_operand.vmem [shape: bf16[2,64,64], index: 3, kind: output, shape index: {}]
  %s4 = sld [smem:[#allocation0]]
  $region45: #{unet2d_forward.21} parent=0
    _
  %s6 = ssub.s32 1, %s4
  %s7 = scalar_select 0, %s6, %s4
  loop: start=0, step=1, limit=4
  $region2: #{unet2d_forward.21} parent=0 // loop_pre_header
    _
  $region3: #{unet2d_forward.21} parent=0 // loop_header
    %s9 = sphi 0, %s13
    %p10 = scmp.ge.s32.totalorder %s9, 4
    %s19 = sphi 0, %s21
    %s22 = sphi 0, %s19
    %s23 = sphi 0, %s22
    %s39 = sphi 0, %s23
    %s43 = sphi 0, %s43
    %s45 = sphi 0, %s43
    %s46 = sphi 0, %s45
    %s60 = sphi 0, %s46
    %s64 = sphi 0, %s64
    %s66 = sphi 0, %s64
    %s67 = sphi 0, %s66
    %s81 = sphi 0, %s67
    %s87 = sphi 0, %s89
    %s90 = sphi 0, %s87
    %s91 = sphi 0, %s90
    %s107 = sphi 0, %s91
  $region4: #{unet2d_forward.21} parent=0 // loop_header_branch
    %12 = sbr.rel (%p10) target = $region8
  $region5: #{unet2d_forward.21} parent=0 // loop_body
    %s14 = ssub.s32 %s9, 1
    %s15 = ssub.s32 %s9, 2
    %s16 = sadd.s32 %s9, 1
    %s17 = ssub.s32 %s9, %s16
    %p18 = scmp.eq.s32.totalorder %s17, 0
    %s20 = sadd.s32 %s19, 1
    %s21 = scalar_select %p18, %s19, %s20
    %p24 = pneg %p18
    %p25 = scmp.eq.s32.totalorder %s9, 1
    %p26 = por %p24, %p25
    %p27 = scmp.ne.s32.totalorder %s19, %s22
    %p28 = scmp.eq.s32.totalorder %s9, 0
    %p29 = por %p27, %p28
    %p30 = scmp.ne.s32.totalorder %s19, %s22
    %p31 = scmp.eq.s32.totalorder %s14, 1
    %p32 = por %p30, %p31
    %p33 = scmp.ne.s32.totalorder %s22, %s23
    %p34 = scmp.eq.s32.totalorder %s14, 0
    %p35 = por %p33, %p34
    %p36 = scmp.ne.s32.totalorder %s22, %s23
    %p37 = scmp.eq.s32.totalorder %s15, 1
    %p38 = por %p36, %p37
    %p40 = scmp.ne.s32.totalorder %s23, %s39
    %p41 = scmp.eq.s32.totalorder %s15, 0
    %p42 = por %p40, %p41
    %s44 = sadd.s32 %s43, 1
    %p47 = scmp.eq.s32.totalorder %s9, 1
    %p48 = scmp.ne.s32.totalorder %s43, %s45
    %p49 = scmp.eq.s32.totalorder %s9, 0
    %p50 = por %p48, %p49
    %p51 = scmp.ne.s32.totalorder %s43, %s45
    %p52 = scmp.eq.s32.totalorder %s14, 1
    %p53 = por %p51, %p52
    %p54 = scmp.ne.s32.totalorder %s45, %s46
    %p55 = scmp.eq.s32.totalorder %s14, 0
    %p56 = por %p54, %p55
    %p57 = scmp.ne.s32.totalorder %s45, %s46
    %p58 = scmp.eq.s32.totalorder %s15, 1
    %p59 = por %p57, %p58
    %p61 = scmp.ne.s32.totalorder %s46, %s60
    %p62 = scmp.eq.s32.totalorder %s15, 0
    %p63 = por %p61, %p62
    %s65 = sadd.s32 %s64, 1
    %p68 = scmp.eq.s32.totalorder %s9, 1
    %p69 = scmp.ne.s32.totalorder %s64, %s66
    %p70 = scmp.eq.s32.totalorder %s9, 0
    %p71 = por %p69, %p70
    %p72 = scmp.ne.s32.totalorder %s64, %s66
    %p73 = scmp.eq.s32.totalorder %s14, 1
    %p74 = por %p72, %p73
    %p75 = scmp.ne.s32.totalorder %s66, %s67
    %p76 = scmp.eq.s32.totalorder %s14, 0
    %p77 = por %p75, %p76
    %p78 = scmp.ne.s32.totalorder %s66, %s67
    %p79 = scmp.eq.s32.totalorder %s15, 1
    %p80 = por %p78, %p79
    %p82 = scmp.ne.s32.totalorder %s67, %s81
    %p83 = scmp.eq.s32.totalorder %s15, 0
    %p84 = por %p82, %p83
    %s85 = ssub.s32 %s9, %s16
    %p86 = scmp.eq.s32.totalorder %s85, 0
    %s88 = sadd.s32 %s87, 1
    %s89 = scalar_select %p86, %s87, %s88
    %p92 = pneg %p86
    %p93 = scmp.eq.s32.totalorder %s9, 1
    %p94 = por %p92, %p93
    %p95 = scmp.ne.s32.totalorder %s87, %s90
    %p96 = scmp.eq.s32.totalorder %s9, 0
    %p97 = por %p95, %p96
    %p98 = scmp.ne.s32.totalorder %s87, %s90
    %p99 = scmp.eq.s32.totalorder %s14, 1
    %p100 = por %p98, %p99
    %p101 = scmp.ne.s32.totalorder %s90, %s91
    %p102 = scmp.eq.s32.totalorder %s14, 0
    %p103 = por %p101, %p102
    %p104 = scmp.ne.s32.totalorder %s90, %s91
    %p105 = scmp.eq.s32.totalorder %s15, 1
    %p106 = por %p104, %p105
    %p108 = scmp.ne.s32.totalorder %s91, %s107
    %p109 = scmp.eq.s32.totalorder %s15, 0
    %p110 = por %p108, %p109
    %p111 = scmp.le.s32.totalorder 1, %s9
    %p112 = scmp.lt.s32.totalorder %s9, 3
    %p113 = pnand %p111, %p112
    %p114 = pneg %p113
    // Predicated region
    $region9: #{unet2d_forward.21} parent=5 // pred_check
      _
    $region10: #{unet2d_forward.21} parent=5 // pred_check_branch
      %116 = sbr.rel (%p113) target = $region12
    $region11: #{unet2d_forward.21} parent=5 // pred_region
      %s117 = ssub.s32 %s9, 1
      // Predicated region
      $region13: #{unet2d_forward.21} parent=11 // pred_check
        %p118 = pneg %p56
      $region14: #{unet2d_forward.21} parent=11 // pred_check_branch
        %120 = sbr.rel (%p118) target = $region16
      $region15: #{unet2d_forward.21} parent=11 // pred_region
        _
      $region16: #{unet2d_forward.21} parent=11 // pred_fallthru
        _
      // Predicated region
      $region17: #{unet2d_forward.21} parent=11 // pred_check
        %p121 = pneg %p77
      $region18: #{unet2d_forward.21} parent=11 // pred_check_branch
        %123 = sbr.rel (%p121) target = $region20
      $region19: #{unet2d_forward.21} parent=11 // pred_region
        _
      $region20: #{unet2d_forward.21} parent=11 // pred_fallthru
        _
    $region12: #{unet2d_forward.21} parent=5 // pred_fallthru
      _
    %p124 = scmp.lt.s32.totalorder %s9, 2
    // Predicated region
    $region21: #{unet2d_forward.21} parent=5 // pred_check
      %p125 = pneg %p124
    $region22: #{unet2d_forward.21} parent=5 // pred_check_branch
      %127 = sbr.rel (%p125) target = $region24
    $region23: #{unet2d_forward.21} parent=5 // pred_region
      // Predicated region
      $region25: #{unet2d_forward.21} parent=23 // pred_check
        %p128 = pneg %p29
      $region26: #{unet2d_forward.21} parent=23 // pred_check_branch
        %130 = sbr.rel (%p128) target = $region28
      $region27: #{unet2d_forward.21} parent=23 // pred_region
        %p131 = scmp.lt.s32.totalorder %s9, 1
        %s132 = scalar_select %p131, %s9, 1
        %s133 = smul.addr %s132, 4
        %s134 = smul.addr %s133, 4
        %s135 = scalar_lea.vmem %s0, %s134
      $region28: #{unet2d_forward.21} parent=23 // pred_fallthru
        _
    $region24: #{unet2d_forward.21} parent=5 // pred_fallthru
      _
    %p136 = scmp.le.s32.totalorder 1, %s9
    %p137 = scmp.lt.s32.totalorder %s9, 3
    %p138 = pnand %p136, %p137
    %p139 = pneg %p138
    // Predicated region
    $region29: #{unet2d_forward.21} parent=5 // pred_check
      _
    $region30: #{unet2d_forward.21} parent=5 // pred_check_branch
      %141 = sbr.rel (%p138) target = $region32
    $region31: #{unet2d_forward.21} parent=5 // pred_region
      %s142 = ssub.s32 %s9, 1
      %p143 = scmp.lt.s32.totalorder %s14, 1
      %s144 = scalar_select %p143, %s14, 1
      %s145 = smul.addr %s144, 4
      %s146 = smul.addr %s145, 4
      %s147 = scalar_lea.vmem %s0, %s146
      %p148 = pneg %p35
      %p149 = pneg %p32
      %p150 = pneg %p56
      %p151 = pneg %p53
      %p152 = pneg %p77
      %p153 = pneg %p74
      %p154 = pneg %p103
      %p155 = pneg %p100
      %p156 = scmp.lt.s32.totalorder %s14, 1
      %s157 = scalar_select %p156, %s14, 1
      %s158 = smul.addr %s157, 8
      %s159 = smul.addr %s158, 4
      %s160 = scalar_lea.vmem %s3, %s159
      %p161 = scmp.lt.s32.totalorder %s14, 1
      %s162 = scalar_select %p161, %s14, 1
      %s163 = smul.addr %s162, 4
      %s164 = smul.addr %s163, 4
      %s165 = scalar_lea.vmem %s0, %s164
      %p166 = scmp.lt.s32.totalorder %s14, 1
      %s167 = scalar_select %p166, %s14, 1
      %s168 = smul.addr %s167, 8
      %s169 = smul.addr %s168, 4
      %s170 = scalar_lea.vmem %s3, %s169
      %v172 = vld [vmem:[%s1] sm:$0xf]
      %v173 = vld [vmem:[%s1 + $0x4] sm:$0xf]
      %v174 = vld [vmem:[%s1 + $0x8] sm:$0xf]
      %v175 = vld [vmem:[%s1 + $0xc] sm:$0xf]
      %v176 = vld [vmem:[%s1 + $0x10] sm:$0xf]
      %v177 = vld [vmem:[%s1 + $0x14] sm:$0xf]
      %v178 = vld [vmem:[%s1 + $0x18] sm:$0xf]
      %v179 = vld [vmem:[%s1 + $0x1c] sm:$0xf]
      %v180 = vld [vmem:[%s165] sm:$0xf]
      %v181 = vld [vmem:[%s165 + $0x4] sm:$0xf]
      %v182 = vld [vmem:[%s165 + $0x8] sm:$0xf]
      %v183 = vld [vmem:[%s165 + $0xc] sm:$0xf]
      %v184 = vld [vmem:[%s2] sm:$0xff]
      %v185 = vld [vmem:[%s2 + $0x8] sm:$0xff]
      %v186 = vld [vmem:[%s2 + $0x10] sm:$0xff]
      %v187 = vld [vmem:[%s2 + $0x18] sm:$0xff]
      %v188 = vld [vmem:[%s2 + $0x20] sm:$0xff]
      %v189 = vld [vmem:[%s2 + $0x28] sm:$0xff]
      %v190 = vld [vmem:[%s2 + $0x30] sm:$0xff]
      %v191 = vld [vmem:[%s2 + $0x38] sm:$0xff]
      %193 = vset.pattern.permute.xlu0 0
      %194 = vperm.xlu0 %193, %v184
      %v195 = vpop.permute.xlu0 %194
      %198 = vset.pattern.permute.xlu0 0
      %199 = vperm.xlu0 %198, %v185
      %v200 = vpop.permute.xlu0 %199
      %203 = vset.pattern.permute.xlu0 0
      %204 = vperm.xlu0 %203, %v186
      %v205 = vpop.permute.xlu0 %204
      %208 = vset.pattern.permute.xlu0 0
      %209 = vperm.xlu0 %208, %v187
      %v210 = vpop.permute.xlu0 %209
      %213 = vset.pattern.permute.xlu0 0
      %214 = vperm.xlu0 %213, %v188
      %v215 = vpop.permute.xlu0 %214
      %218 = vset.pattern.permute.xlu0 0
      %219 = vperm.xlu0 %218, %v189
      %v220 = vpop.permute.xlu0 %219
      %223 = vset.pattern.permute.xlu0 0
      %224 = vperm.xlu0 %223, %v190
      %v225 = vpop.permute.xlu0 %224
      %228 = vset.pattern.permute.xlu0 0
      %229 = vperm.xlu0 %228, %v191
      %v230 = vpop.permute.xlu0 %229
      %v240 = vunpack.c.l.b16 %v172
      %v241 = vunpack.c.l.b16 %v173
      %v242 = vunpack.c.l.b16 %v174
      %v243 = vunpack.c.l.b16 %v175
      %v244 = vunpack.c.l.b16 %v176
      %v245 = vunpack.c.l.b16 %v177
      %v246 = vunpack.c.l.b16 %v178
      %v247 = vunpack.c.l.b16 %v179
      %v248 = vpack.c.b16 %v241, %v240
      %v249 = vpack.c.b16 %v243, %v242
      %v250 = vpack.c.b16 %v245, %v244
      %v251 = vpack.c.b16 %v247, %v246
      %v256 = vunpack.c.l.b16 %v180
      %v257 = vunpack.c.l.b16 %v181
      %v258 = vunpack.c.l.b16 %v182
      %v259 = vunpack.c.l.b16 %v183
      %v260 = vpack.c.b16 %v257, %v256
      %v261 = vpack.c.b16 %v259, %v258
      %vm264 = vcmask 261120
      %v266 = vsel %vm264, %v248, 0
      %v269 = vsel %vm264, %v249, 0
      %v272 = vsel %vm264, %v250, 0
      %v275 = vsel %vm264, %v251, 0
      %277 = vmatprep.subr.bf16.mxu0 0
      %278 = vmatpush1.bf16.msra.mxu0 0
      %279 = vmatprep.subr.bf16.mxu0 0
      %280 = vmatpush1.bf16.msra.mxu0 0
      %281 = vmatprep.subr.bf16.mxu0 0
      %282 = vmatpush1.bf16.msra.mxu0 0
      %283 = vmatprep.subr.bf16.mxu0 0
      %284 = vmatpush1.bf16.msra.mxu0 0
      %285 = vmatprep.subr.bf16.mxu0 0
      %286 = vmatpush1.bf16.msra.mxu0 0
      %287 = vmatprep.subr.bf16.mxu0 0
      %288 = vmatpush1.bf16.msra.mxu0 0
      %289 = vmatprep.subr.bf16.mxu0 0
      %290 = vmatpush1.bf16.msra.mxu0 %v261
      %291 = vmatprep.subr.bf16.mxu0 0
      %292 = vmatpush1.bf16.msra.mxu0 %v260
      %293 = vmatprep.subr.bf16.mxu0 0
      %294 = vmatpush2.bf16.msra.mxu0 0
      %295 = vmatprep.subr.bf16.mxu0 0
      %296 = vmatpush2.bf16.msra.mxu0 0
      %297 = vmatprep.subr.bf16.mxu0 0
      %298 = vmatpush2.bf16.msra.mxu0 0
      %299 = vmatprep.subr.bf16.mxu0 0
      %300 = vmatpush2.bf16.msra.mxu0 0
      %301 = vmatprep.subr.bf16.mxu0 0
      %302 = vmatpush2.bf16.msra.mxu0 0
      %303 = vmatprep.subr.bf16.mxu0 0
      %304 = vmatpush2.bf16.msra.mxu0 0
      %305 = vmatprep.subr.bf16.mxu0 0
      %306 = vmatpush2.bf16.msra.mxu0 0
      %307 = vmatprep.subr.bf16.mxu0 0
      %308 = vmatpush2.bf16.msra.mxu0 0
      %309 = vmatprep.mubr.bf16.mxu0 0
      %310 = vmatmul.mubr.bf16.gmra.mxu0 %v266
      %v311 = vpop.f32.mrf.mxu0
      %v312 = vadd.f32 %v195, %v311
      %v313 = vpop.f32.mrf.mxu0
      %v314 = vpop.f32.mrf.mxu0
      %v315 = vadd.f32 %v200, %v314
      %v316 = vpop.f32.mrf.mxu0
      %317 = vmatprep.mubr.bf16.mxu0 0
      %318 = vmatmul.mubr.bf16.gmra.mxu0 %v269
      %v319 = vpop.f32.mrf.mxu0
      %v320 = vadd.f32 %v205, %v319
      %v321 = vpop.f32.mrf.mxu0
      %v322 = vpop.f32.mrf.mxu0
      %v323 = vadd.f32 %v210, %v322
      %v324 = vpop.f32.mrf.mxu0
      %325 = vmatprep.mubr.bf16.mxu0 0
      %326 = vmatmul.mubr.bf16.gmra.mxu0 %v272
      %v327 = vpop.f32.mrf.mxu0
      %v328 = vadd.f32 %v215, %v327
      %v329 = vpop.f32.mrf.mxu0
      %v330 = vpop.f32.mrf.mxu0
      %v331 = vadd.f32 %v220, %v330
      %v332 = vpop.f32.mrf.mxu0
      %333 = vmatprep.mubr.bf16.mxu0 0
      %334 = vmatmul.mubr.bf16.gmra.mxu0 %v275
      %v335 = vpop.f32.mrf.mxu0
      %v336 = vadd.f32 %v225, %v335
      %v337 = vpop.f32.mrf.mxu0
      %v338 = vpop.f32.mrf.mxu0
      %v339 = vadd.f32 %v230, %v338
      %v340 = vpop.f32.mrf.mxu0
      %341 = vdwg.mxu0
      %v342 = vpack.c.bf16 %v315, %v312
      %v343 = vpack.c.bf16 %v323, %v320
      %v344 = vpack.c.bf16 %v331, %v328
      %v345 = vpack.c.bf16 %v339, %v336
      %v350 = vunpack.c.l.b16 %v342
      %v351 = vunpack.c.h.b16 %v342
      %v352 = vunpack.c.l.b16 %v343
      %v353 = vunpack.c.h.b16 %v343
      %v354 = vunpack.c.l.b16 %v344
      %v355 = vunpack.c.h.b16 %v344
      %v356 = vunpack.c.l.b16 %v345
      %v357 = vunpack.c.h.b16 %v345
      %v358 = vpack.c.b16 %v350, %v350
      %v359 = vpack.c.b16 %v351, %v351
      %v360 = vpack.c.b16 %v352, %v352
      %v361 = vpack.c.b16 %v353, %v353
      %v362 = vpack.c.b16 %v354, %v354
      %v363 = vpack.c.b16 %v355, %v355
      %v364 = vpack.c.b16 %v356, %v356
      %v365 = vpack.c.b16 %v357, %v357
      %vm374 = vcmask 519168
      %375 = vst.msk [vmem:[%s170] sm:$0xf] %vm374, %v358
      %376 = vst.msk [vmem:[%s170 + $0x4] sm:$0xf] %vm374, %v359
      %377 = vst.msk [vmem:[%s170 + $0x8] sm:$0xf] %vm374, %v360
      %378 = vst.msk [vmem:[%s170 + $0xc] sm:$0xf] %vm374, %v361
      %379 = vst.msk [vmem:[%s170 + $0x10] sm:$0xf] %vm374, %v362
      %380 = vst.msk [vmem:[%s170 + $0x14] sm:$0xf] %vm374, %v363
      %381 = vst.msk [vmem:[%s170 + $0x18] sm:$0xf] %vm374, %v364
      %382 = vst.msk [vmem:[%s170 + $0x1c] sm:$0xf] %vm374, %v365
      %p383 = scmp.lt.s32.totalorder %s14, 1
      %s384 = scalar_select %p383, %s14, 1
      %s385 = smul.addr %s384, 8
      %s386 = smul.addr %s385, 4
      %s387 = scalar_lea.vmem %s3, %s386
      // Predicated region
      $region33: #{unet2d_forward.21} parent=31 // pred_check
        %p388 = pneg %p100
      $region34: #{unet2d_forward.21} parent=31 // pred_check_branch
        %390 = sbr.rel (%p388) target = $region36
      $region35: #{unet2d_forward.21} parent=31 // pred_region
        _
      $region36: #{unet2d_forward.21} parent=31 // pred_fallthru
        _
    $region32: #{unet2d_forward.21} parent=5 // pred_fallthru
      _
    %p391 = scmp.le.s32.totalorder 2, %s9
    // Predicated region
    $region37: #{unet2d_forward.21} parent=5 // pred_check
      %p392 = pneg %p391
    $region38: #{unet2d_forward.21} parent=5 // pred_check_branch
      %394 = sbr.rel (%p392) target = $region40
    $region39: #{unet2d_forward.21} parent=5 // pred_region
      %s395 = ssub.s32 %s9, 2
      // Predicated region
      $region41: #{unet2d_forward.21} parent=39 // pred_check
        %p396 = pneg %p106
      $region42: #{unet2d_forward.21} parent=39 // pred_check_branch
        %398 = sbr.rel (%p396) target = $region44
      $region43: #{unet2d_forward.21} parent=39 // pred_region
        %p399 = scmp.lt.s32.totalorder %s15, 1
        %s400 = scalar_select %p399, %s15, 1
        %s401 = smul.addr %s400, 8
        %s402 = smul.addr %s401, 4
        %s403 = scalar_lea.vmem %s3, %s402
      $region44: #{unet2d_forward.21} parent=39 // pred_fallthru
        _
    $region40: #{unet2d_forward.21} parent=5 // pred_fallthru
      _
  $region6: #{unet2d_forward.21} parent=0 // loop_footer
    %s13 = sadd.s32 1, %s9
  $region7: #{unet2d_forward.21} parent=0 // loop_footer_branch
    %8 = sbr.rel target = $region3
  $region8: #{unet2d_forward.21} parent=0 // loop_exit
    _

// kernel: unet2d_forward.19
$region0: #{unet2d_forward.19}
  #allocation0 [shape = 'u32[]', space=smem, size = 0x4, offset = 0x4, fixed_abs, tag = 'smem constant byte address 0x4 - core index']
  #allocation1 [shape = 'u32[144,128]{1,0:T(1,128)}', space=vmem, size = 0x12000, scoped, tag = 'internal scratch']
  %s0 = inlined_call_operand.vmem [shape: bf16[2,576,64], index: 0, kind: input, shape index: {}]
  %s1 = inlined_call_operand.vmem [shape: bf16[32,576], index: 1, kind: input, shape index: {}]
  %s2 = inlined_call_operand.vmem [shape: f32[32,1], index: 2, kind: input, shape index: {}]
  %s3 = inlined_call_operand.vmem [shape: f32[32,1], index: 3, kind: input, shape index: {}]
  %s4 = inlined_call_operand.vmem [shape: f32[32,1], index: 4, kind: input, shape index: {}]
  %s5 = inlined_call_operand.vmem [shape: f32[32,32], index: 5, kind: input, shape index: {}]
  %s6 = inlined_call_operand.vmem [shape: bf16[2,32,64], index: 6, kind: output, shape index: {}]
  %s7 = sld [smem:[#allocation0]]
  $region57: #{unet2d_forward.19} parent=0
    _
  %s9 = ssub.s32 1, %s7
  %s10 = scalar_select 0, %s9, %s7
  loop: start=0, step=1, limit=4
  $region2: #{unet2d_forward.19} parent=0 // loop_pre_header
    _
  $region3: #{unet2d_forward.19} parent=0 // loop_header
    %s12 = sphi 0, %s16
    %p13 = scmp.ge.s32.totalorder %s12, 4
    %s22 = sphi 0, %s24
    %s25 = sphi 0, %s22
    %s26 = sphi 0, %s25
    %s42 = sphi 0, %s26
    %s46 = sphi 0, %s46
    %s48 = sphi 0, %s46
    %s49 = sphi 0, %s48
    %s63 = sphi 0, %s49
    %s67 = sphi 0, %s67
    %s69 = sphi 0, %s67
    %s70 = sphi 0, %s69
    %s84 = sphi 0, %s70
    %s88 = sphi 0, %s88
    %s90 = sphi 0, %s88
    %s91 = sphi 0, %s90
    %s105 = sphi 0, %s91
    %s109 = sphi 0, %s109
    %s111 = sphi 0, %s109
    %s112 = sphi 0, %s111
    %s126 = sphi 0, %s112
    %s130 = sphi 0, %s130
    %s132 = sphi 0, %s130
    %s133 = sphi 0, %s132
    %s147 = sphi 0, %s133
    %s153 = sphi 0, %s155
    %s156 = sphi 0, %s153
    %s157 = sphi 0, %s156
    %s173 = sphi 0, %s157
  $region4: #{unet2d_forward.19} parent=0 // loop_header_branch
    %15 = sbr.rel (%p13) target = $region8
  $region5: #{unet2d_forward.19} parent=0 // loop_body
    %s17 = ssub.s32 %s12, 1
    %s18 = ssub.s32 %s12, 2
    %s19 = sadd.s32 %s12, 1
    %s20 = ssub.s32 %s12, %s19
    %p21 = scmp.eq.s32.totalorder %s20, 0
    %s23 = sadd.s32 %s22, 1
    %s24 = scalar_select %p21, %s22, %s23
    %p27 = pneg %p21
    %p28 = scmp.eq.s32.totalorder %s12, 1
    %p29 = por %p27, %p28
    %p30 = scmp.ne.s32.totalorder %s22, %s25
    %p31 = scmp.eq.s32.totalorder %s12, 0
    %p32 = por %p30, %p31
    %p33 = scmp.ne.s32.totalorder %s22, %s25
    %p34 = scmp.eq.s32.totalorder %s17, 1
    %p35 = por %p33, %p34
    %p36 = scmp.ne.s32.totalorder %s25, %s26
    %p37 = scmp.eq.s32.totalorder %s17, 0
    %p38 = por %p36, %p37
    %p39 = scmp.ne.s32.totalorder %s25, %s26
    %p40 = scmp.eq.s32.totalorder %s18, 1
    %p41 = por %p39, %p40
    %p43 = scmp.ne.s32.totalorder %s26, %s42
    %p44 = scmp.eq.s32.totalorder %s18, 0
    %p45 = por %p43, %p44
    %s47 = sadd.s32 %s46, 1
    %p50 = scmp.eq.s32.totalorder %s12, 1
    %p51 = scmp.ne.s32.totalorder %s46, %s48
    %p52 = scmp.eq.s32.totalorder %s12, 0
    %p53 = por %p51, %p52
    %p54 = scmp.ne.s32.totalorder %s46, %s48
    %p55 = scmp.eq.s32.totalorder %s17, 1
    %p56 = por %p54, %p55
    %p57 = scmp.ne.s32.totalorder %s48, %s49
    %p58 = scmp.eq.s32.totalorder %s17, 0
    %p59 = por %p57, %p58
    %p60 = scmp.ne.s32.totalorder %s48, %s49
    %p61 = scmp.eq.s32.totalorder %s18, 1
    %p62 = por %p60, %p61
    %p64 = scmp.ne.s32.totalorder %s49, %s63
    %p65 = scmp.eq.s32.totalorder %s18, 0
    %p66 = por %p64, %p65
    %s68 = sadd.s32 %s67, 1
    %p71 = scmp.eq.s32.totalorder %s12, 1
    %p72 = scmp.ne.s32.totalorder %s67, %s69
    %p73 = scmp.eq.s32.totalorder %s12, 0
    %p74 = por %p72, %p73
    %p75 = scmp.ne.s32.totalorder %s67, %s69
    %p76 = scmp.eq.s32.totalorder %s17, 1
    %p77 = por %p75, %p76
    %p78 = scmp.ne.s32.totalorder %s69, %s70
    %p79 = scmp.eq.s32.totalorder %s17, 0
    %p80 = por %p78, %p79
    %p81 = scmp.ne.s32.totalorder %s69, %s70
    %p82 = scmp.eq.s32.totalorder %s18, 1
    %p83 = por %p81, %p82
    %p85 = scmp.ne.s32.totalorder %s70, %s84
    %p86 = scmp.eq.s32.totalorder %s18, 0
    %p87 = por %p85, %p86
    %s89 = sadd.s32 %s88, 1
    %p92 = scmp.eq.s32.totalorder %s12, 1
    %p93 = scmp.ne.s32.totalorder %s88, %s90
    %p94 = scmp.eq.s32.totalorder %s12, 0
    %p95 = por %p93, %p94
    %p96 = scmp.ne.s32.totalorder %s88, %s90
    %p97 = scmp.eq.s32.totalorder %s17, 1
    %p98 = por %p96, %p97
    %p99 = scmp.ne.s32.totalorder %s90, %s91
    %p100 = scmp.eq.s32.totalorder %s17, 0
    %p101 = por %p99, %p100
    %p102 = scmp.ne.s32.totalorder %s90, %s91
    %p103 = scmp.eq.s32.totalorder %s18, 1
    %p104 = por %p102, %p103
    %p106 = scmp.ne.s32.totalorder %s91, %s105
    %p107 = scmp.eq.s32.totalorder %s18, 0
    %p108 = por %p106, %p107
    %s110 = sadd.s32 %s109, 1
    %p113 = scmp.eq.s32.totalorder %s12, 1
    %p114 = scmp.ne.s32.totalorder %s109, %s111
    %p115 = scmp.eq.s32.totalorder %s12, 0
    %p116 = por %p114, %p115
    %p117 = scmp.ne.s32.totalorder %s109, %s111
    %p118 = scmp.eq.s32.totalorder %s17, 1
    %p119 = por %p117, %p118
    %p120 = scmp.ne.s32.totalorder %s111, %s112
    %p121 = scmp.eq.s32.totalorder %s17, 0
    %p122 = por %p120, %p121
    %p123 = scmp.ne.s32.totalorder %s111, %s112
    %p124 = scmp.eq.s32.totalorder %s18, 1
    %p125 = por %p123, %p124
    %p127 = scmp.ne.s32.totalorder %s112, %s126
    %p128 = scmp.eq.s32.totalorder %s18, 0
    %p129 = por %p127, %p128
    %s131 = sadd.s32 %s130, 1
    %p134 = scmp.eq.s32.totalorder %s12, 1
    %p135 = scmp.ne.s32.totalorder %s130, %s132
    %p136 = scmp.eq.s32.totalorder %s12, 0
    %p137 = por %p135, %p136
    %p138 = scmp.ne.s32.totalorder %s130, %s132
    %p139 = scmp.eq.s32.totalorder %s17, 1
    %p140 = por %p138, %p139
    %p141 = scmp.ne.s32.totalorder %s132, %s133
    %p142 = scmp.eq.s32.totalorder %s17, 0
    %p143 = por %p141, %p142
    %p144 = scmp.ne.s32.totalorder %s132, %s133
    %p145 = scmp.eq.s32.totalorder %s18, 1
    %p146 = por %p144, %p145
    %p148 = scmp.ne.s32.totalorder %s133, %s147
    %p149 = scmp.eq.s32.totalorder %s18, 0
    %p150 = por %p148, %p149
    %s151 = ssub.s32 %s12, %s19
    %p152 = scmp.eq.s32.totalorder %s151, 0
    %s154 = sadd.s32 %s153, 1
    %s155 = scalar_select %p152, %s153, %s154
    %p158 = pneg %p152
    %p159 = scmp.eq.s32.totalorder %s12, 1
    %p160 = por %p158, %p159
    %p161 = scmp.ne.s32.totalorder %s153, %s156
    %p162 = scmp.eq.s32.totalorder %s12, 0
    %p163 = por %p161, %p162
    %p164 = scmp.ne.s32.totalorder %s153, %s156
    %p165 = scmp.eq.s32.totalorder %s17, 1
    %p166 = por %p164, %p165
    %p167 = scmp.ne.s32.totalorder %s156, %s157
    %p168 = scmp.eq.s32.totalorder %s17, 0
    %p169 = por %p167, %p168
    %p170 = scmp.ne.s32.totalorder %s156, %s157
    %p171 = scmp.eq.s32.totalorder %s18, 1
    %p172 = por %p170, %p171
    %p174 = scmp.ne.s32.totalorder %s157, %s173
    %p175 = scmp.eq.s32.totalorder %s18, 0
    %p176 = por %p174, %p175
    %p177 = scmp.le.s32.totalorder 1, %s12
    %p178 = scmp.lt.s32.totalorder %s12, 3
    %p179 = pnand %p177, %p178
    %p180 = pneg %p179
    // Predicated region
    $region9: #{unet2d_forward.19} parent=5 // pred_check
      _
    $region10: #{unet2d_forward.19} parent=5 // pred_check_branch
      %182 = sbr.rel (%p179) target = $region12
    $region11: #{unet2d_forward.19} parent=5 // pred_region
      %s183 = ssub.s32 %s12, 1
      // Predicated region
      $region13: #{unet2d_forward.19} parent=11 // pred_check
        %p184 = pneg %p59
      $region14: #{unet2d_forward.19} parent=11 // pred_check_branch
        %186 = sbr.rel (%p184) target = $region16
      $region15: #{unet2d_forward.19} parent=11 // pred_region
        _
      $region16: #{unet2d_forward.19} parent=11 // pred_fallthru
        _
      // Predicated region
      $region17: #{unet2d_forward.19} parent=11 // pred_check
        %p187 = pneg %p80
      $region18: #{unet2d_forward.19} parent=11 // pred_check_branch
        %189 = sbr.rel (%p187) target = $region20
      $region19: #{unet2d_forward.19} parent=11 // pred_region
        _
      $region20: #{unet2d_forward.19} parent=11 // pred_fallthru
        _
      // Predicated region
      $region21: #{unet2d_forward.19} parent=11 // pred_check
        %p190 = pneg %p101
      $region22: #{unet2d_forward.19} parent=11 // pred_check_branch
        %192 = sbr.rel (%p190) target = $region24
      $region23: #{unet2d_forward.19} parent=11 // pred_region
        _
      $region24: #{unet2d_forward.19} parent=11 // pred_fallthru
        _
      // Predicated region
      $region25: #{unet2d_forward.19} parent=11 // pred_check
        %p193 = pneg %p122
      $region26: #{unet2d_forward.19} parent=11 // pred_check_branch
        %195 = sbr.rel (%p193) target = $region28
      $region27: #{unet2d_forward.19} parent=11 // pred_region
        _
      $region28: #{unet2d_forward.19} parent=11 // pred_fallthru
        _
      // Predicated region
      $region29: #{unet2d_forward.19} parent=11 // pred_check
        %p196 = pneg %p143
      $region30: #{unet2d_forward.19} parent=11 // pred_check_branch
        %198 = sbr.rel (%p196) target = $region32
      $region31: #{unet2d_forward.19} parent=11 // pred_region
        _
      $region32: #{unet2d_forward.19} parent=11 // pred_fallthru
        _
    $region12: #{unet2d_forward.19} parent=5 // pred_fallthru
      _
    %p199 = scmp.lt.s32.totalorder %s12, 2
    // Predicated region
    $region33: #{unet2d_forward.19} parent=5 // pred_check
      %p200 = pneg %p199
    $region34: #{unet2d_forward.19} parent=5 // pred_check_branch
      %202 = sbr.rel (%p200) target = $region36
    $region35: #{unet2d_forward.19} parent=5 // pred_region
      // Predicated region
      $region37: #{unet2d_forward.19} parent=35 // pred_check
        %p203 = pneg %p32
      $region38: #{unet2d_forward.19} parent=35 // pred_check_branch
        %205 = sbr.rel (%p203) target = $region40
      $region39: #{unet2d_forward.19} parent=35 // pred_region
        %p206 = scmp.lt.s32.totalorder %s12, 1
        %s207 = scalar_select %p206, %s12, 1
        %s208 = smul.addr %s207, 72
        %s209 = smul.addr %s208, 4
        %s210 = scalar_lea.vmem %s0, %s209
      $region40: #{unet2d_forward.19} parent=35 // pred_fallthru
        _
    $region36: #{unet2d_forward.19} parent=5 // pred_fallthru
      _
    %p211 = scmp.le.s32.totalorder 1, %s12
    %p212 = scmp.lt.s32.totalorder %s12, 3
    %p213 = pnand %p211, %p212
    %p214 = pneg %p213
    // Predicated region
    $region41: #{unet2d_forward.19} parent=5 // pred_check
      _
    $region42: #{unet2d_forward.19} parent=5 // pred_check_branch
      %216 = sbr.rel (%p213) target = $region44
    $region43: #{unet2d_forward.19} parent=5 // pred_region
      %s217 = ssub.s32 %s12, 1
      %p218 = scmp.lt.s32.totalorder %s17, 1
      %s219 = scalar_select %p218, %s17, 1
      %s220 = smul.addr %s219, 72
      %s221 = smul.addr %s220, 4
      %s222 = scalar_lea.vmem %s0, %s221
      %p223 = pneg %p38
      %p224 = pneg %p35
      %p225 = pneg %p59
      %p226 = pneg %p56
      %p227 = pneg %p80
      %p228 = pneg %p77
      %p229 = pneg %p101
      %p230 = pneg %p98
      %p231 = pneg %p122
      %p232 = pneg %p119
      %p233 = pneg %p143
      %p234 = pneg %p140
      %p235 = pneg %p169
      %p236 = pneg %p166
      %p237 = scmp.lt.s32.totalorder %s17, 1
      %s238 = scalar_select %p237, %s17, 1
      %s239 = smul.addr %s238, 4
      %s240 = smul.addr %s239, 4
      %s241 = scalar_lea.vmem %s6, %s240
      %p242 = scmp.lt.s32.totalorder %s17, 1
      %s243 = scalar_select %p242, %s17, 1
      %s244 = smul.addr %s243, 72
      %s245 = smul.addr %s244, 4
      %s246 = scalar_lea.vmem %s0, %s245
      %p247 = scmp.lt.s32.totalorder %s17, 1
      %s248 = scalar_select %p247, %s17, 1
      %s249 = smul.addr %s248, 4
      %s250 = smul.addr %s249, 4
      %s251 = scalar_lea.vmem %s6, %s250
      %v253 = vld [vmem:[%s1] sm:$0xff]
      %v254 = vld [vmem:[%s1 + $0x8] sm:$0xff]
      %v255 = vld [vmem:[%s1 + $0x10] sm:$0xf]
      %v256 = vld [vmem:[%s1 + $0x14] sm:$0xff]
      %v257 = vld [vmem:[%s1 + $0x1c] sm:$0xff]
      %v258 = vld [vmem:[%s1 + $0x24] sm:$0xf]
      %v259 = vld [vmem:[%s1 + $0x28] sm:$0xff]
      %v260 = vld [vmem:[%s1 + $0x30] sm:$0xff]
      %v261 = vld [vmem:[%s1 + $0x38] sm:$0xf]
      %v262 = vld [vmem:[%s1 + $0x3c] sm:$0xff]
      %v263 = vld [vmem:[%s1 + $0x44] sm:$0xff]
      %v264 = vld [vmem:[%s1 + $0x4c] sm:$0xf]
      %v265 = vld [vmem:[%s246] sm:$0xf]
      %v266 = vld [vmem:[%s246 + $0x4] sm:$0xf]
      %v267 = vld [vmem:[%s246 + $0x8] sm:$0xf]
      %v268 = vld [vmem:[%s246 + $0xc] sm:$0xf]
      %v269 = vld [vmem:[%s246 + $0x10] sm:$0xf]
      %v270 = vld [vmem:[%s246 + $0x14] sm:$0xf]
      %v271 = vld [vmem:[%s246 + $0x18] sm:$0xf]
      %v272 = vld [vmem:[%s246 + $0x1c] sm:$0xf]
      %v273 = vld [vmem:[%s246 + $0x20] sm:$0xf]
      %v274 = vld [vmem:[%s246 + $0x24] sm:$0xf]
      %v275 = vld [vmem:[%s246 + $0x28] sm:$0xf]
      %v276 = vld [vmem:[%s246 + $0x2c] sm:$0xf]
      %v277 = vld [vmem:[%s246 + $0x30] sm:$0xf]
      %v278 = vld [vmem:[%s246 + $0x34] sm:$0xf]
      %v279 = vld [vmem:[%s246 + $0x38] sm:$0xf]
      %v280 = vld [vmem:[%s246 + $0x3c] sm:$0xf]
      %v281 = vld [vmem:[%s246 + $0x40] sm:$0xf]
      %v282 = vld [vmem:[%s246 + $0x44] sm:$0xf]
      %v283 = vld [vmem:[%s246 + $0x48] sm:$0xf]
      %v284 = vld [vmem:[%s246 + $0x4c] sm:$0xf]
      %v285 = vld [vmem:[%s246 + $0x50] sm:$0xf]
      %v286 = vld [vmem:[%s246 + $0x54] sm:$0xf]
      %v287 = vld [vmem:[%s246 + $0x58] sm:$0xf]
      %v288 = vld [vmem:[%s246 + $0x5c] sm:$0xf]
      %v289 = vld [vmem:[%s246 + $0x60] sm:$0xf]
      %v290 = vld [vmem:[%s246 + $0x64] sm:$0xf]
      %v291 = vld [vmem:[%s246 + $0x68] sm:$0xf]
      %v292 = vld [vmem:[%s246 + $0x6c] sm:$0xf]
      %v293 = vld [vmem:[%s246 + $0x70] sm:$0xf]
      %v294 = vld [vmem:[%s246 + $0x74] sm:$0xf]
      %v295 = vld [vmem:[%s246 + $0x78] sm:$0xf]
      %v296 = vld [vmem:[%s246 + $0x7c] sm:$0xf]
      %v297 = vld [vmem:[%s246 + $0x80] sm:$0xf]
      %v298 = vld [vmem:[%s246 + $0x84] sm:$0xf]
      %v299 = vld [vmem:[%s246 + $0x88] sm:$0xf]
      %v300 = vld [vmem:[%s246 + $0x8c] sm:$0xf]
      %v301 = vld [vmem:[%s246 + $0x90] sm:$0xf]
      %v302 = vld [vmem:[%s246 + $0x94] sm:$0xf]
      %v303 = vld [vmem:[%s246 + $0x98] sm:$0xf]
      %v304 = vld [vmem:[%s246 + $0x9c] sm:$0xf]
      %v305 = vld [vmem:[%s246 + $0xa0] sm:$0xf]
      %v306 = vld [vmem:[%s246 + $0xa4] sm:$0xf]
      %v307 = vld [vmem:[%s246 + $0xa8] sm:$0xf]
      %v308 = vld [vmem:[%s246 + $0xac] sm:$0xf]
      %v309 = vld [vmem:[%s246 + $0xb0] sm:$0xf]
      %v310 = vld [vmem:[%s246 + $0xb4] sm:$0xf]
      %v311 = vld [vmem:[%s246 + $0xb8] sm:$0xf]
      %v312 = vld [vmem:[%s246 + $0xbc] sm:$0xf]
      %v313 = vld [vmem:[%s246 + $0xc0] sm:$0xf]
      %v314 = vld [vmem:[%s246 + $0xc4] sm:$0xf]
      %v315 = vld [vmem:[%s246 + $0xc8] sm:$0xf]
      %v316 = vld [vmem:[%s246 + $0xcc] sm:$0xf]
      %v317 = vld [vmem:[%s246 + $0xd0] sm:$0xf]
      %v318 = vld [vmem:[%s246 + $0xd4] sm:$0xf]
      %v319 = vld [vmem:[%s246 + $0xd8] sm:$0xf]
      %v320 = vld [vmem:[%s246 + $0xdc] sm:$0xf]
      %v321 = vld [vmem:[%s246 + $0xe0] sm:$0xf]
      %v322 = vld [vmem:[%s246 + $0xe4] sm:$0xf]
      %v323 = vld [vmem:[%s246 + $0xe8] sm:$0xf]
      %v324 = vld [vmem:[%s246 + $0xec] sm:$0xf]
      %v325 = vld [vmem:[%s246 + $0xf0] sm:$0xf]
      %v326 = vld [vmem:[%s246 + $0xf4] sm:$0xf]
      %v327 = vld [vmem:[%s246 + $0xf8] sm:$0xf]
      %v328 = vld [vmem:[%s246 + $0xfc] sm:$0xf]
      %v329 = vld [vmem:[%s246 + $0x100] sm:$0xf]
      %v330 = vld [vmem:[%s246 + $0x104] sm:$0xf]
      %v331 = vld [vmem:[%s246 + $0x108] sm:$0xf]
      %v332 = vld [vmem:[%s246 + $0x10c] sm:$0xf]
      %v333 = vld [vmem:[%s246 + $0x110] sm:$0xf]
      %v334 = vld [vmem:[%s246 + $0x114] sm:$0xf]
      %v335 = vld [vmem:[%s246 + $0x118] sm:$0xf]
      %v336 = vld [vmem:[%s246 + $0x11c] sm:$0xf]
      %v337 = vld [vmem:[%s2] sm:$0xff]
      %v338 = vld [vmem:[%s2 + $0x8] sm:$0xff]
      %v339 = vld [vmem:[%s2 + $0x10] sm:$0xff]
      %v340 = vld [vmem:[%s2 + $0x18] sm:$0xff]
      %342 = vset.pattern.permute.xlu0 0
      %343 = vperm.xlu0 %342, %v337
      %v344 = vpop.permute.xlu0 %343
      %347 = vset.pattern.permute.xlu0 0
      %348 = vperm.xlu0 %347, %v338
      %v349 = vpop.permute.xlu0 %348
      %352 = vset.pattern.permute.xlu0 0
      %353 = vperm.xlu0 %352, %v339
      %v354 = vpop.permute.xlu0 %353
      %357 = vset.pattern.permute.xlu0 0
      %358 = vperm.xlu0 %357, %v340
      %v359 = vpop.permute.xlu0 %358
      %v373 = vunpack.c.l.b16 %v253
      %v374 = vunpack.c.h.b16 %v253
      %v375 = vunpack.c.l.b16 %v254
      %v376 = vunpack.c.h.b16 %v254
      %v377 = vunpack.c.l.b16 %v255
      %v378 = vunpack.c.l.b16 %v256
      %v379 = vunpack.c.h.b16 %v256
      %v380 = vunpack.c.l.b16 %v257
      %v381 = vunpack.c.h.b16 %v257
      %v382 = vunpack.c.l.b16 %v258
      %v383 = vunpack.c.l.b16 %v259
      %v384 = vunpack.c.h.b16 %v259
      %v385 = vunpack.c.l.b16 %v260
      %v386 = vunpack.c.h.b16 %v260
      %v387 = vunpack.c.l.b16 %v261
      %v388 = vunpack.c.l.b16 %v262
      %v389 = vunpack.c.h.b16 %v262
      %v390 = vunpack.c.l.b16 %v263
      %v391 = vunpack.c.h.b16 %v263
      %v392 = vunpack.c.l.b16 %v264
      %v393 = vpack.c.b16 %v378, %v373
      %v394 = vpack.c.b16 %v379, %v374
      %v395 = vpack.c.b16 %v380, %v375
      %v396 = vpack.c.b16 %v381, %v376
      %v397 = vpack.c.b16 %v382, %v377
      %v398 = vpack.c.b16 %v388, %v383
      %v399 = vpack.c.b16 %v389, %v384
      %v400 = vpack.c.b16 %v390, %v385
      %v401 = vpack.c.b16 %v391, %v386
      %v402 = vpack.c.b16 %v392, %v387
      %v483 = vunpack.c.l.b16 %v265
      %v484 = vunpack.c.l.b16 %v266
      %v485 = vunpack.c.l.b16 %v267
      %v486 = vunpack.c.l.b16 %v268
      %v487 = vunpack.c.l.b16 %v269
      %v488 = vunpack.c.l.b16 %v270
      %v489 = vunpack.c.l.b16 %v271
      %v490 = vunpack.c.l.b16 %v272
      %v491 = vunpack.c.l.b16 %v273
      %v492 = vunpack.c.l.b16 %v274
      %v493 = vunpack.c.l.b16 %v275
      %v494 = vunpack.c.l.b16 %v276
      %v495 = vunpack.c.l.b16 %v277
      %v496 = vunpack.c.l.b16 %v278
      %v497 = vunpack.c.l.b16 %v279
      %v498 = vunpack.c.l.b16 %v280
      %v499 = vunpack.c.l.b16 %v281
      %v500 = vunpack.c.l.b16 %v282
      %v501 = vunpack.c.l.b16 %v283
      %v502 = vunpack.c.l.b16 %v284
      %v503 = vunpack.c.l.b16 %v285
      %v504 = vunpack.c.l.b16 %v286
      %v505 = vunpack.c.l.b16 %v287
      %v506 = vunpack.c.l.b16 %v288
      %v507 = vunpack.c.l.b16 %v289
      %v508 = vunpack.c.l.b16 %v290
      %v509 = vunpack.c.l.b16 %v291
      %v510 = vunpack.c.l.b16 %v292
      %v511 = vunpack.c.l.b16 %v293
      %v512 = vunpack.c.l.b16 %v294
      %v513 = vunpack.c.l.b16 %v295
      %v514 = vunpack.c.l.b16 %v296
      %v515 = vunpack.c.l.b16 %v297
      %v516 = vunpack.c.l.b16 %v298
      %v517 = vunpack.c.l.b16 %v299
      %v518 = vunpack.c.l.b16 %v300
      %v519 = vunpack.c.l.b16 %v301
      %v520 = vunpack.c.l.b16 %v302
      %v521 = vunpack.c.l.b16 %v303
      %v522 = vunpack.c.l.b16 %v304
      %v523 = vunpack.c.l.b16 %v305
      %v524 = vunpack.c.l.b16 %v306
      %v525 = vunpack.c.l.b16 %v307
      %v526 = vunpack.c.l.b16 %v308
      %v527 = vunpack.c.l.b16 %v309
      %v528 = vunpack.c.l.b16 %v310
      %v529 = vunpack.c.l.b16 %v311
      %v530 = vunpack.c.l.b16 %v312
      %v531 = vunpack.c.l.b16 %v313
      %v532 = vunpack.c.l.b16 %v314
      %v533 = vunpack.c.l.b16 %v315
      %v534 = vunpack.c.l.b16 %v316
      %v535 = vunpack.c.l.b16 %v317
      %v536 = vunpack.c.l.b16 %v318
      %v537 = vunpack.c.l.b16 %v319
      %v538 = vunpack.c.l.b16 %v320
      %v539 = vunpack.c.l.b16 %v321
      %v540 = vunpack.c.l.b16 %v322
      %v541 = vunpack.c.l.b16 %v323
      %v542 = vunpack.c.l.b16 %v324
      %v543 = vunpack.c.l.b16 %v325
      %v544 = vunpack.c.l.b16 %v326
      %v545 = vunpack.c.l.b16 %v327
      %v546 = vunpack.c.l.b16 %v328
      %v547 = vunpack.c.l.b16 %v329
      %v548 = vunpack.c.l.b16 %v330
      %v549 = vunpack.c.l.b16 %v331
      %v550 = vunpack.c.l.b16 %v332
      %v551 = vunpack.c.l.b16 %v333
      %v552 = vunpack.c.l.b16 %v334
      %v553 = vunpack.c.l.b16 %v335
      %v554 = vunpack.c.l.b16 %v336
      %v555 = vpack.c.b16 %v484, %v483
      %v556 = vpack.c.b16 %v486, %v485
      %v557 = vpack.c.b16 %v488, %v487
      %v558 = vpack.c.b16 %v490, %v489
      %v559 = vpack.c.b16 %v492, %v491
      %v560 = vpack.c.b16 %v494, %v493
      %v561 = vpack.c.b16 %v496, %v495
      %v562 = vpack.c.b16 %v498, %v497
      %v563 = vpack.c.b16 %v500, %v499
      %v564 = vpack.c.b16 %v502, %v501
      %v565 = vpack.c.b16 %v504, %v503
      %v566 = vpack.c.b16 %v506, %v505
      %v567 = vpack.c.b16 %v508, %v507
      %v568 = vpack.c.b16 %v510, %v509
      %v569 = vpack.c.b16 %v512, %v511
      %v570 = vpack.c.b16 %v514, %v513
      %v571 = vpack.c.b16 %v516, %v515
      %v572 = vpack.c.b16 %v518, %v517
      %v573 = vpack.c.b16 %v520, %v519
      %v574 = vpack.c.b16 %v522, %v521
      %v575 = vpack.c.b16 %v524, %v523
      %v576 = vpack.c.b16 %v526, %v525
      %v577 = vpack.c.b16 %v528, %v527
      %v578 = vpack.c.b16 %v530, %v529
      %v579 = vpack.c.b16 %v532, %v531
      %v580 = vpack.c.b16 %v534, %v533
      %v581 = vpack.c.b16 %v536, %v535
      %v582 = vpack.c.b16 %v538, %v537
      %v583 = vpack.c.b16 %v540, %v539
      %v584 = vpack.c.b16 %v542, %v541
      %v585 = vpack.c.b16 %v544, %v543
      %v586 = vpack.c.b16 %v546, %v545
      %v587 = vpack.c.b16 %v548, %v547
      %v588 = vpack.c.b16 %v550, %v549
      %v589 = vpack.c.b16 %v552, %v551
      %v590 = vpack.c.b16 %v554, %v553
      %vm627 = vcmask 523264
      %v629 = vsel %vm627, %v397, 0
      %v632 = vsel %vm627, %v402, 0
      %634 = vmatprep.subr.bf16.mxu0 0
      %635 = vmatpush1.bf16.msra.mxu0 %v562
      %636 = vmatprep.subr.bf16.mxu0 0
      %637 = vmatpush1.bf16.msra.mxu0 %v561
      %638 = vmatprep.subr.bf16.mxu0 0
      %639 = vmatpush1.bf16.msra.mxu0 %v560
      %640 = vmatprep.subr.bf16.mxu0 0
      %641 = vmatpush1.bf16.msra.mxu0 %v559
      %642 = vmatprep.subr.bf16.mxu0 0
      %643 = vmatpush1.bf16.msra.mxu0 %v558
      %644 = vmatprep.subr.bf16.mxu0 0
      %645 = vmatpush1.bf16.msra.mxu0 %v557
      %646 = vmatprep.subr.bf16.mxu0 0
      %647 = vmatpush1.bf16.msra.mxu0 %v556
      %648 = vmatprep.subr.bf16.mxu0 0
      %649 = vmatpush1.bf16.msra.mxu0 %v555
      %650 = vmatprep.subr.bf16.mxu0 0
      %651 = vmatpush2.bf16.msra.mxu0 %v570
      %652 = vmatprep.subr.bf16.mxu0 0
      %653 = vmatpush2.bf16.msra.mxu0 %v569
      %654 = vmatprep.subr.bf16.mxu0 0
      %655 = vmatpush2.bf16.msra.mxu0 %v568
      %656 = vmatprep.subr.bf16.mxu0 0
      %657 = vmatpush2.bf16.msra.mxu0 %v567
      %658 = vmatprep.subr.bf16.mxu0 0
      %659 = vmatpush2.bf16.msra.mxu0 %v566
      %660 = vmatprep.subr.bf16.mxu0 0
      %661 = vmatpush2.bf16.msra.mxu0 %v565
      %662 = vmatprep.subr.bf16.mxu0 0
      %663 = vmatpush2.bf16.msra.mxu0 %v564
      %664 = vmatprep.subr.bf16.mxu0 0
      %665 = vmatpush2.bf16.msra.mxu0 %v563
      %666 = vmatprep.mubr.bf16.mxu0 %v394
      %667 = vmatmul.mubr.bf16.gmra.mxu0 %v393
      %v668 = vpop.f32.mrf.mxu0
      %v669 = vadd.f32 %v344, %v668
      %v670 = vpop.f32.mrf.mxu0
      %v671 = vpop.f32.mrf.mxu0
      %v672 = vadd.f32 %v349, %v671
      %v673 = vpop.f32.mrf.mxu0
      %674 = vmatprep.mubr.bf16.mxu0 %v399
      %675 = vmatmul.mubr.bf16.gmra.mxu0 %v398
      %v676 = vpop.f32.mrf.mxu0
      %v677 = vadd.f32 %v354, %v676
      %v678 = vpop.f32.mrf.mxu0
      %v679 = vpop.f32.mrf.mxu0
      %v680 = vadd.f32 %v359, %v679
      %v681 = vpop.f32.mrf.mxu0
      %682 = vdwg.mxu0
      %683 = vmatprep.subr.bf16.mxu0 0
      %684 = vmatpush1.bf16.msra.mxu0 %v578
      %685 = vmatprep.subr.bf16.mxu0 0
      %686 = vmatpush1.bf16.msra.mxu0 %v577
      %687 = vmatprep.subr.bf16.mxu0 0
      %688 = vmatpush1.bf16.msra.mxu0 %v576
      %689 = vmatprep.subr.bf16.mxu0 0
      %690 = vmatpush1.bf16.msra.mxu0 %v575
      %691 = vmatprep.subr.bf16.mxu0 0
      %692 = vmatpush1.bf16.msra.mxu0 %v574
      %693 = vmatprep.subr.bf16.mxu0 0
      %694 = vmatpush1.bf16.msra.mxu0 %v573
      %695 = vmatprep.subr.bf16.mxu0 0
      %696 = vmatpush1.bf16.msra.mxu0 %v572
      %697 = vmatprep.subr.bf16.mxu0 0
      %698 = vmatpush1.bf16.msra.mxu0 %v571
      %699 = vmatprep.subr.bf16.mxu0 0
      %700 = vmatpush2.bf16.msra.mxu0 %v586
      %701 = vmatprep.subr.bf16.mxu0 0
      %702 = vmatpush2.bf16.msra.mxu0 %v585
      %703 = vmatprep.subr.bf16.mxu0 0
      %704 = vmatpush2.bf16.msra.mxu0 %v584
      %705 = vmatprep.subr.bf16.mxu0 0
      %706 = vmatpush2.bf16.msra.mxu0 %v583
      %707 = vmatprep.subr.bf16.mxu0 0
      %708 = vmatpush2.bf16.msra.mxu0 %v582
      %709 = vmatprep.subr.bf16.mxu0 0
      %710 = vmatpush2.bf16.msra.mxu0 %v581
      %711 = vmatprep.subr.bf16.mxu0 0
      %712 = vmatpush2.bf16.msra.mxu0 %v580
      %713 = vmatprep.subr.bf16.mxu0 0
      %714 = vmatpush2.bf16.msra.mxu0 %v579
      %715 = vmatprep.mubr.bf16.mxu0 %v396
      %716 = vmatmul.mubr.bf16.gmra.mxu0 %v395
      %v717 = vpop.f32.mrf.mxu0
      %v718 = vadd.f32 %v669, %v717
      %v719 = vpop.f32.mrf.mxu0
      %v720 = vpop.f32.mrf.mxu0
      %v721 = vadd.f32 %v672, %v720
      %v722 = vpop.f32.mrf.mxu0
      %723 = vmatprep.mubr.bf16.mxu0 %v401
      %724 = vmatmul.mubr.bf16.gmra.mxu0 %v400
      %v725 = vpop.f32.mrf.mxu0
      %v726 = vadd.f32 %v677, %v725
      %v727 = vpop.f32.mrf.mxu0
      %v728 = vpop.f32.mrf.mxu0
      %v729 = vadd.f32 %v680, %v728
      %v730 = vpop.f32.mrf.mxu0
      %731 = vdwg.mxu0
      %732 = vmatprep.subr.bf16.mxu0 0
      %733 = vmatpush1.bf16.msra.mxu0 0
      %734 = vmatprep.subr.bf16.mxu0 0
      %735 = vmatpush1.bf16.msra.mxu0 0
      %736 = vmatprep.subr.bf16.mxu0 0
      %737 = vmatpush1.bf16.msra.mxu0 0
      %738 = vmatprep.subr.bf16.mxu0 0
      %739 = vmatpush1.bf16.msra.mxu0 0
      %740 = vmatprep.subr.bf16.mxu0 0
      %741 = vmatpush1.bf16.msra.mxu0 %v590
      %742 = vmatprep.subr.bf16.mxu0 0
      %743 = vmatpush1.bf16.msra.mxu0 %v589
      %744 = vmatprep.subr.bf16.mxu0 0
      %745 = vmatpush1.bf16.msra.mxu0 %v588
      %746 = vmatprep.subr.bf16.mxu0 0
      %747 = vmatpush1.bf16.msra.mxu0 %v587
      %748 = vmatprep.subr.bf16.mxu0 0
      %749 = vmatpush2.bf16.msra.mxu0 0
      %750 = vmatprep.subr.bf16.mxu0 0
      %751 = vmatpush2.bf16.msra.mxu0 0
      %752 = vmatprep.subr.bf16.mxu0 0
      %753 = vmatpush2.bf16.msra.mxu0 0
      %754 = vmatprep.subr.bf16.mxu0 0
      %755 = vmatpush2.bf16.msra.mxu0 0
      %756 = vmatprep.subr.bf16.mxu0 0
      %757 = vmatpush2.bf16.msra.mxu0 0
      %758 = vmatprep.subr.bf16.mxu0 0
      %759 = vmatpush2.bf16.msra.mxu0 0
      %760 = vmatprep.subr.bf16.mxu0 0
      %761 = vmatpush2.bf16.msra.mxu0 0
      %762 = vmatprep.subr.bf16.mxu0 0
      %763 = vmatpush2.bf16.msra.mxu0 0
      %764 = vmatprep.mubr.bf16.mxu0 0
      %765 = vmatmul.mubr.bf16.gmra.mxu0 %v629
      %v766 = vpop.f32.mrf.mxu0
      %v767 = vadd.f32 %v718, %v766
      %v768 = vpop.f32.mrf.mxu0
      %v769 = vpop.f32.mrf.mxu0
      %v770 = vadd.f32 %v721, %v769
      %v771 = vpop.f32.mrf.mxu0
      %772 = vmatprep.mubr.bf16.mxu0 0
      %773 = vmatmul.mubr.bf16.gmra.mxu0 %v632
      %v774 = vpop.f32.mrf.mxu0
      %v775 = vadd.f32 %v726, %v774
      %v776 = vpop.f32.mrf.mxu0
      %v777 = vpop.f32.mrf.mxu0
      %v778 = vadd.f32 %v729, %v777
      %v779 = vpop.f32.mrf.mxu0
      %780 = vdwg.mxu0
      %v781 = vld [vmem:[%s5] sm:$0xff]
      %v782 = vld [vmem:[%s5 + $0x8] sm:$0xff]
      %v783 = vld [vmem:[%s5 + $0x10] sm:$0xff]
      %v784 = vld [vmem:[%s5 + $0x18] sm:$0xff]
      %v785 = vld [vmem:[%s3] sm:$0xff]
      %v786 = vld [vmem:[%s3 + $0x8] sm:$0xff]
      %v787 = vld [vmem:[%s3 + $0x10] sm:$0xff]
      %v788 = vld [vmem:[%s3 + $0x18] sm:$0xff]
      %v789 = vld [vmem:[%s4] sm:$0xff]
      %v790 = vld [vmem:[%s4 + $0x8] sm:$0xff]
      %v791 = vld [vmem:[%s4 + $0x10] sm:$0xff]
      %v792 = vld [vmem:[%s4 + $0x18] sm:$0xff]
      %v793 = vsel %vm627, %v767, 0.0
      %794 = vadd.xlane.f32.xlu0 %v793
      %v795 = vpop.xlane.xlu0 %794
      %v796 = vsel %vm627, %v770, 0.0
      %797 = vadd.xlane.f32.xlu0 %v796
      %v798 = vpop.xlane.xlu0 %797
      %v799 = vsel %vm627, %v775, 0.0
      %800 = vadd.xlane.f32.xlu0 %v799
      %v801 = vpop.xlane.xlu0 %800
      %v802 = vsel %vm627, %v778, 0.0
      %803 = vadd.xlane.f32.xlu0 %v802
      %v804 = vpop.xlane.xlu0 %803
      %v805 = vmul.f32 %v767, %v767
      %v806 = vmul.f32 %v770, %v770
      %v807 = vmul.f32 %v775, %v775
      %v808 = vmul.f32 %v778, %v778
      %v809 = vsel %vm627, %v805, 0.0
      %810 = vadd.xlane.f32.xlu0 %v809
      %v811 = vpop.xlane.xlu0 %810
      %v812 = vsel %vm627, %v806, 0.0
      %813 = vadd.xlane.f32.xlu0 %v812
      %v814 = vpop.xlane.xlu0 %813
      %v815 = vsel %vm627, %v807, 0.0
      %816 = vadd.xlane.f32.xlu0 %v815
      %v817 = vpop.xlane.xlu0 %816
      %v818 = vsel %vm627, %v808, 0.0
      %819 = vadd.xlane.f32.xlu0 %v818
      %v820 = vpop.xlane.xlu0 %819
      %vm821 = vcmask 261120
      %v823 = vsel %vm821, %v781, 0
      %v826 = vsel %vm821, %v782, 0
      %v829 = vsel %vm821, %v783, 0
      %v832 = vsel %vm821, %v784, 0
      %834 = vmatprep.subr.mxu0 0.0
      %835 = vmatpush1.msra.mxu0 0.0
      %836 = vmatprep.subr.mxu0 0.0
      %837 = vmatpush1.msra.mxu0 0.0
      %838 = vmatprep.subr.mxu0 0.0
      %839 = vmatpush1.msra.mxu0 0.0
      %840 = vmatprep.subr.mxu0 0.0
      %841 = vmatpush1.msra.mxu0 0.0
      %842 = vmatprep.subr.mxu0 0.0
      %843 = vmatpush1.msra.mxu0 0.0
      %844 = vmatprep.subr.mxu0 0.0
      %845 = vmatpush1.msra.mxu0 0.0
      %846 = vmatprep.subr.mxu0 0.0
      %847 = vmatpush1.msra.mxu0 0.0
      %848 = vmatprep.subr.mxu0 0.0
      %849 = vmatpush1.msra.mxu0 0.0
      %850 = vmatprep.subr.mxu0 0.0
      %851 = vmatpush1.msra.mxu0 0.0
      %852 = vmatprep.subr.mxu0 0.0
      %853 = vmatpush1.msra.mxu0 0.0
      %854 = vmatprep.subr.mxu0 0.0
      %855 = vmatpush1.msra.mxu0 0.0
      %856 = vmatprep.subr.mxu0 0.0
      %857 = vmatpush1.msra.mxu0 0.0
      %858 = vmatprep.subr.mxu0 0.0
      %859 = vmatpush1.msra.mxu0 %v804
      %860 = vmatprep.subr.mxu0 0.0
      %861 = vmatpush1.msra.mxu0 %v801
      %862 = vmatprep.subr.mxu0 0.0
      %863 = vmatpush1.msra.mxu0 %v798
      %864 = vmatprep.subr.mxu0 0.0
      %865 = vmatpush1.msra.mxu0 %v795
      %866 = vmatprep.subr.mxu0 0.0
      %867 = vmatpush2.msra.mxu0 0.0
      %868 = vmatprep.subr.mxu0 0.0
      %869 = vmatpush2.msra.mxu0 0.0
      %870 = vmatprep.subr.mxu0 0.0
      %871 = vmatpush2.msra.mxu0 0.0
      %872 = vmatprep.subr.mxu0 0.0
      %873 = vmatpush2.msra.mxu0 0.0
      %874 = vmatprep.subr.mxu0 0.0
      %875 = vmatpush2.msra.mxu0 0.0
      %876 = vmatprep.subr.mxu0 0.0
      %877 = vmatpush2.msra.mxu0 0.0
      %878 = vmatprep.subr.mxu0 0.0
      %879 = vmatpush2.msra.mxu0 0.0
      %880 = vmatprep.subr.mxu0 0.0
      %881 = vmatpush2.msra.mxu0 0.0
      %882 = vmatprep.subr.mxu0 0.0
      %883 = vmatpush2.msra.mxu0 0.0
      %884 = vmatprep.subr.mxu0 0.0
      %885 = vmatpush2.msra.mxu0 0.0
      %886 = vmatprep.subr.mxu0 0.0
      %887 = vmatpush2.msra.mxu0 0.0
      %888 = vmatprep.subr.mxu0 0.0
      %889 = vmatpush2.msra.mxu0 0.0
      %890 = vmatprep.subr.mxu0 0.0
      %891 = vmatpush2.msra.mxu0 0.0
      %892 = vmatprep.subr.mxu0 0.0
      %893 = vmatpush2.msra.mxu0 0.0
      %894 = vmatprep.subr.mxu0 0.0
      %895 = vmatpush2.msra.mxu0 0.0
      %896 = vmatprep.subr.mxu0 0.0
      %897 = vmatpush2.msra.mxu0 0.0
      %898 = vmatprep.mubr.f32.mxu0 0.0
      %899 = vmatmul.mubr.f32.gmra.mxu0 %v823
      %v900 = vpop.f32.mrf.mxu0
      %v901 = vadd.f32 0.0, %v900
      %v902 = vpop.f32.mrf.mxu0
      %903 = vmatprep.mubr.f32.mxu0 0.0
      %904 = vmatmul.mubr.f32.gmra.mxu0 %v826
      %v905 = vpop.f32.mrf.mxu0
      %v906 = vadd.f32 0.0, %v905
      %v907 = vpop.f32.mrf.mxu0
      %908 = vmatprep.mubr.f32.mxu0 0.0
      %909 = vmatmul.mubr.f32.gmra.mxu0 %v829
      %v910 = vpop.f32.mrf.mxu0
      %v911 = vadd.f32 0.0, %v910
      %v912 = vpop.f32.mrf.mxu0
      %913 = vmatprep.mubr.f32.mxu0 0.0
      %914 = vmatmul.mubr.f32.gmra.mxu0 %v832
      %v915 = vpop.f32.mrf.mxu0
      %v916 = vadd.f32 0.0, %v915
      %v917 = vpop.f32.mrf.mxu0
      %918 = vdwg.mxu0
      %919 = vmatprep.subr.mxu0 0.0
      %920 = vmatpush1.msra.mxu0 0.0
      %921 = vmatprep.subr.mxu0 0.0
      %922 = vmatpush1.msra.mxu0 0.0
      %923 = vmatprep.subr.mxu0 0.0
      %924 = vmatpush1.msra.mxu0 0.0
      %925 = vmatprep.subr.mxu0 0.0
      %926 = vmatpush1.msra.mxu0 0.0
      %927 = vmatprep.subr.mxu0 0.0
      %928 = vmatpush1.msra.mxu0 0.0
      %929 = vmatprep.subr.mxu0 0.0
      %930 = vmatpush1.msra.mxu0 0.0
      %931 = vmatprep.subr.mxu0 0.0
      %932 = vmatpush1.msra.mxu0 0.0
      %933 = vmatprep.subr.mxu0 0.0
      %934 = vmatpush1.msra.mxu0 0.0
      %935 = vmatprep.subr.mxu0 0.0
      %936 = vmatpush1.msra.mxu0 0.0
      %937 = vmatprep.subr.mxu0 0.0
      %938 = vmatpush1.msra.mxu0 0.0
      %939 = vmatprep.subr.mxu0 0.0
      %940 = vmatpush1.msra.mxu0 0.0
      %941 = vmatprep.subr.mxu0 0.0
      %942 = vmatpush1.msra.mxu0 0.0
      %943 = vmatprep.subr.mxu0 0.0
      %944 = vmatpush1.msra.mxu0 %v820
      %945 = vmatprep.subr.mxu0 0.0
      %946 = vmatpush1.msra.mxu0 %v817
      %947 = vmatprep.subr.mxu0 0.0
      %948 = vmatpush1.msra.mxu0 %v814
      %949 = vmatprep.subr.mxu0 0.0
      %950 = vmatpush1.msra.mxu0 %v811
      %951 = vmatprep.subr.mxu0 0.0
      %952 = vmatpush2.msra.mxu0 0.0
      %953 = vmatprep.subr.mxu0 0.0
      %954 = vmatpush2.msra.mxu0 0.0
      %955 = vmatprep.subr.mxu0 0.0
      %956 = vmatpush2.msra.mxu0 0.0
      %957 = vmatprep.subr.mxu0 0.0
      %958 = vmatpush2.msra.mxu0 0.0
      %959 = vmatprep.subr.mxu0 0.0
      %960 = vmatpush2.msra.mxu0 0.0
      %961 = vmatprep.subr.mxu0 0.0
      %962 = vmatpush2.msra.mxu0 0.0
      %963 = vmatprep.subr.mxu0 0.0
      %964 = vmatpush2.msra.mxu0 0.0
      %965 = vmatprep.subr.mxu0 0.0
      %966 = vmatpush2.msra.mxu0 0.0
      %967 = vmatprep.subr.mxu0 0.0
      %968 = vmatpush2.msra.mxu0 0.0
      %969 = vmatprep.subr.mxu0 0.0
      %970 = vmatpush2.msra.mxu0 0.0
      %971 = vmatprep.subr.mxu0 0.0
      %972 = vmatpush2.msra.mxu0 0.0
      %973 = vmatprep.subr.mxu0 0.0
      %974 = vmatpush2.msra.mxu0 0.0
      %975 = vmatprep.subr.mxu0 0.0
      %976 = vmatpush2.msra.mxu0 0.0
      %977 = vmatprep.subr.mxu0 0.0
      %978 = vmatpush2.msra.mxu0 0.0
      %979 = vmatprep.subr.mxu0 0.0
      %980 = vmatpush2.msra.mxu0 0.0
      %981 = vmatprep.subr.mxu0 0.0
      %982 = vmatpush2.msra.mxu0 0.0
      %983 = vmatprep.mubr.f32.mxu0 0.0
      %984 = vmatmul.mubr.f32.gmra.mxu0 %v823
      %v985 = vpop.f32.mrf.mxu0
      %v986 = vadd.f32 0.0, %v985
      %v987 = vpop.f32.mrf.mxu0
      %988 = vmatprep.mubr.f32.mxu0 0.0
      %989 = vmatmul.mubr.f32.gmra.mxu0 %v826
      %v990 = vpop.f32.mrf.mxu0
      %v991 = vadd.f32 0.0, %v990
      %v992 = vpop.f32.mrf.mxu0
      %993 = vmatprep.mubr.f32.mxu0 0.0
      %994 = vmatmul.mubr.f32.gmra.mxu0 %v829
      %v995 = vpop.f32.mrf.mxu0
      %v996 = vadd.f32 0.0, %v995
      %v997 = vpop.f32.mrf.mxu0
      %998 = vmatprep.mubr.f32.mxu0 0.0
      %999 = vmatmul.mubr.f32.gmra.mxu0 %v832
      %v1000 = vpop.f32.mrf.mxu0
      %v1001 = vadd.f32 0.0, %v1000
      %v1002 = vpop.f32.mrf.mxu0
      %1003 = vdwg.mxu0
      %v1004 = vmul.f32 %v901, %v901
      %v1005 = vmul.f32 %v906, %v906
      %v1006 = vmul.f32 %v911, %v911
      %v1007 = vmul.f32 %v916, %v916
      %v1008 = vsub.f32 %v986, %v1004
      %v1009 = vsub.f32 %v991, %v1005
      %v1010 = vsub.f32 %v996, %v1006
      %v1011 = vsub.f32 %v1001, %v1007
      %v1012 = vmax.f32 %v1008, 0.0
      %v1013 = vmax.f32 %v1009, 0.0
      %v1014 = vmax.f32 %v1010, 0.0
      %v1015 = vmax.f32 %v1011, 0.0
      %v1016 = vadd.f32 %v1012, 1e-05
      %v1017 = vadd.f32 %v1013, 1e-05
      %v1018 = vadd.f32 %v1014, 1e-05
      %v1019 = vadd.f32 %v1015, 1e-05
      %v1020 = vrsqrt.pop %v1016
      %v1021 = vrsqrt.pop %v1017
      %v1022 = vrsqrt.pop %v1018
      %v1023 = vrsqrt.pop %v1019
      %1025 = vset.pattern.permute.xlu0 0
      %1026 = vperm.xlu0 %1025, %v901
      %v1027 = vpop.permute.xlu0 %1026
      %1030 = vset.pattern.permute.xlu0 0
      %1031 = vperm.xlu0 %1030, %v906
      %v1032 = vpop.permute.xlu0 %1031
      %1035 = vset.pattern.permute.xlu0 0
      %1036 = vperm.xlu0 %1035, %v911
      %v1037 = vpop.permute.xlu0 %1036
      %1040 = vset.pattern.permute.xlu0 0
      %1041 = vperm.xlu0 %1040, %v916
      %v1042 = vpop.permute.xlu0 %1041
      %v1044 = vsub.f32 %v767, %v1027
      %v1045 = vsub.f32 %v770, %v1032
      %v1046 = vsub.f32 %v775, %v1037
      %v1047 = vsub.f32 %v778, %v1042
      %v1048 = vmul.f32 %v1020, %v785
      %v1049 = vmul.f32 %v1021, %v786
      %v1050 = vmul.f32 %v1022, %v787
      %v1051 = vmul.f32 %v1023, %v788
      %1053 = vset.pattern.permute.xlu0 0
      %1054 = vperm.xlu0 %1053, %v1048
      %v1055 = vpop.permute.xlu0 %1054
      %1058 = vset.pattern.permute.xlu0 0
      %1059 = vperm.xlu0 %1058, %v1049
      %v1060 = vpop.permute.xlu0 %1059
      %1063 = vset.pattern.permute.xlu0 0
      %1064 = vperm.xlu0 %1063, %v1050
      %v1065 = vpop.permute.xlu0 %1064
      %1068 = vset.pattern.permute.xlu0 0
      %1069 = vperm.xlu0 %1068, %v1051
      %v1070 = vpop.permute.xlu0 %1069
      %v1072 = vmul.f32 %v1044, %v1055
      %v1073 = vmul.f32 %v1045, %v1060
      %v1074 = vmul.f32 %v1046, %v1065
      %v1075 = vmul.f32 %v1047, %v1070
      %1077 = vset.pattern.permute.xlu0 0
      %1078 = vperm.xlu0 %1077, %v789
      %v1079 = vpop.permute.xlu0 %1078
      %1082 = vset.pattern.permute.xlu0 0
      %1083 = vperm.xlu0 %1082, %v790
      %v1084 = vpop.permute.xlu0 %1083
      %1087 = vset.pattern.permute.xlu0 0
      %1088 = vperm.xlu0 %1087, %v791
      %v1089 = vpop.permute.xlu0 %1088
      %1092 = vset.pattern.permute.xlu0 0
      %1093 = vperm.xlu0 %1092, %v792
      %v1094 = vpop.permute.xlu0 %1093
      %v1096 = vadd.f32 %v1072, %v1079
      %v1097 = vadd.f32 %v1073, %v1084
      %v1098 = vadd.f32 %v1074, %v1089
      %v1099 = vadd.f32 %v1075, %v1094
      %v1100 = vmax.f32 %v1096, 0.0
      %v1101 = vmax.f32 %v1097, 0.0
      %v1102 = vmax.f32 %v1098, 0.0
      %v1103 = vmax.f32 %v1099, 0.0
      %v1104 = vpack.c.bf16 %v1101, %v1100
      %v1105 = vpack.c.bf16 %v1103, %v1102
      %v1108 = vunpack.c.l.b16 %v1104
      %v1109 = vunpack.c.h.b16 %v1104
      %v1110 = vunpack.c.l.b16 %v1105
      %v1111 = vunpack.c.h.b16 %v1105
      %v1112 = vpack.c.b16 %v1108, %v1108
      %v1113 = vpack.c.b16 %v1109, %v1109
      %v1114 = vpack.c.b16 %v1110, %v1110
      %v1115 = vpack.c.b16 %v1111, %v1111
      %vm1120 = vcmask 519168
      %1121 = vst.msk [vmem:[%s251] sm:$0xf] %vm1120, %v1112
      %1122 = vst.msk [vmem:[%s251 + $0x4] sm:$0xf] %vm1120, %v1113
      %1123 = vst.msk [vmem:[%s251 + $0x8] sm:$0xf] %vm1120, %v1114
      %1124 = vst.msk [vmem:[%s251 + $0xc] sm:$0xf] %vm1120, %v1115
      %p1125 = scmp.lt.s32.totalorder %s17, 1
      %s1126 = scalar_select %p1125, %s17, 1
      %s1127 = smul.addr %s1126, 4
      %s1128 = smul.addr %s1127, 4
      %s1129 = scalar_lea.vmem %s6, %s1128
      // Predicated region
      $region45: #{unet2d_forward.19} parent=43 // pred_check
        %p1130 = pneg %p166
      $region46: #{unet2d_forward.19} parent=43 // pred_check_branch
        %1132 = sbr.rel (%p1130) target = $region48
      $region47: #{unet2d_forward.19} parent=43 // pred_region
        _
      $region48: #{unet2d_forward.19} parent=43 // pred_fallthru
        _
    $region44: #{unet2d_forward.19} parent=5 // pred_fallthru
      _
    %p1133 = scmp.le.s32.totalorder 2, %s12
    // Predicated region
    $region49: #{unet2d_forward.19} parent=5 // pred_check
      %p1134 = pneg %p1133
    $region50: #{unet2d_forward.19} parent=5 // pred_check_branch
      %1136 = sbr.rel (%p1134) target = $region52
    $region51: #{unet2d_forward.19} parent=5 // pred_region
      %s1137 = ssub.s32 %s12, 2
      // Predicated region
      $region53: #{unet2d_forward.19} parent=51 // pred_check
        %p1138 = pneg %p172
      $region54: #{unet2d_forward.19} parent=51 // pred_check_branch
        %1140 = sbr.rel (%p1138) target = $region56
      $region55: #{unet2d_forward.19} parent=51 // pred_region
        %p1141 = scmp.lt.s32.totalorder %s18, 1
        %s1142 = scalar_select %p1141, %s18, 1
        %s1143 = smul.addr %s1142, 4
        %s1144 = smul.addr %s1143, 4
        %s1145 = scalar_lea.vmem %s6, %s1144
      $region56: #{unet2d_forward.19} parent=51 // pred_fallthru
        _
    $region52: #{unet2d_forward.19} parent=5 // pred_fallthru
      _
  $region6: #{unet2d_forward.19} parent=0 // loop_footer
    %s16 = sadd.s32 1, %s12
  $region7: #{unet2d_forward.19} parent=0 // loop_footer_branch
    %11 = sbr.rel target = $region3
  $region8: #{unet2d_forward.19} parent=0 // loop_exit
    _

// kernel: unet2d_forward.22
$region0: #{unet2d_forward.22}
  #allocation0 [shape = 'u32[]', space=smem, size = 0x4, offset = 0x4, fixed_abs, tag = 'smem constant byte address 0x4 - core index']
  #allocation1 [shape = 'u32[144,128]{1,0:T(1,128)}', space=vmem, size = 0x12000, scoped, tag = 'internal scratch']
  %s0 = inlined_call_operand.vmem [shape: bf16[2,288,256], index: 0, kind: input, shape index: {}]
  %s1 = inlined_call_operand.vmem [shape: bf16[16,288], index: 1, kind: input, shape index: {}]
  %s2 = inlined_call_operand.vmem [shape: f32[16,1], index: 2, kind: input, shape index: {}]
  %s3 = inlined_call_operand.vmem [shape: f32[16,1], index: 3, kind: input, shape index: {}]
  %s4 = inlined_call_operand.vmem [shape: f32[16,1], index: 4, kind: input, shape index: {}]
  %s5 = inlined_call_operand.vmem [shape: f32[16,16], index: 5, kind: input, shape index: {}]
  %s6 = inlined_call_operand.vmem [shape: bf16[2,16,256], index: 6, kind: output, shape index: {}]
  %s7 = sld [smem:[#allocation0]]
  $region57: #{unet2d_forward.22} parent=0
    _
  %s9 = ssub.s32 1, %s7
  %s10 = scalar_select 0, %s9, %s7
  loop: start=0, step=1, limit=4
  $region2: #{unet2d_forward.22} parent=0 // loop_pre_header
    _
  $region3: #{unet2d_forward.22} parent=0 // loop_header
    %s12 = sphi 0, %s16
    %p13 = scmp.ge.s32.totalorder %s12, 4
    %s22 = sphi 0, %s24
    %s25 = sphi 0, %s22
    %s26 = sphi 0, %s25
    %s42 = sphi 0, %s26
    %s46 = sphi 0, %s46
    %s48 = sphi 0, %s46
    %s49 = sphi 0, %s48
    %s63 = sphi 0, %s49
    %s67 = sphi 0, %s67
    %s69 = sphi 0, %s67
    %s70 = sphi 0, %s69
    %s84 = sphi 0, %s70
    %s88 = sphi 0, %s88
    %s90 = sphi 0, %s88
    %s91 = sphi 0, %s90
    %s105 = sphi 0, %s91
    %s109 = sphi 0, %s109
    %s111 = sphi 0, %s109
    %s112 = sphi 0, %s111
    %s126 = sphi 0, %s112
    %s130 = sphi 0, %s130
    %s132 = sphi 0, %s130
    %s133 = sphi 0, %s132
    %s147 = sphi 0, %s133
    %s153 = sphi 0, %s155
    %s156 = sphi 0, %s153
    %s157 = sphi 0, %s156
    %s173 = sphi 0, %s157
  $region4: #{unet2d_forward.22} parent=0 // loop_header_branch
    %15 = sbr.rel (%p13) target = $region8
  $region5: #{unet2d_forward.22} parent=0 // loop_body
    %s17 = ssub.s32 %s12, 1
    %s18 = ssub.s32 %s12, 2
    %s19 = sadd.s32 %s12, 1
    %s20 = ssub.s32 %s12, %s19
    %p21 = scmp.eq.s32.totalorder %s20, 0
    %s23 = sadd.s32 %s22, 1
    %s24 = scalar_select %p21, %s22, %s23
    %p27 = pneg %p21
    %p28 = scmp.eq.s32.totalorder %s12, 1
    %p29 = por %p27, %p28
    %p30 = scmp.ne.s32.totalorder %s22, %s25
    %p31 = scmp.eq.s32.totalorder %s12, 0
    %p32 = por %p30, %p31
    %p33 = scmp.ne.s32.totalorder %s22, %s25
    %p34 = scmp.eq.s32.totalorder %s17, 1
    %p35 = por %p33, %p34
    %p36 = scmp.ne.s32.totalorder %s25, %s26
    %p37 = scmp.eq.s32.totalorder %s17, 0
    %p38 = por %p36, %p37
    %p39 = scmp.ne.s32.totalorder %s25, %s26
    %p40 = scmp.eq.s32.totalorder %s18, 1
    %p41 = por %p39, %p40
    %p43 = scmp.ne.s32.totalorder %s26, %s42
    %p44 = scmp.eq.s32.totalorder %s18, 0
    %p45 = por %p43, %p44
    %s47 = sadd.s32 %s46, 1
    %p50 = scmp.eq.s32.totalorder %s12, 1
    %p51 = scmp.ne.s32.totalorder %s46, %s48
    %p52 = scmp.eq.s32.totalorder %s12, 0
    %p53 = por %p51, %p52
    %p54 = scmp.ne.s32.totalorder %s46, %s48
    %p55 = scmp.eq.s32.totalorder %s17, 1
    %p56 = por %p54, %p55
    %p57 = scmp.ne.s32.totalorder %s48, %s49
    %p58 = scmp.eq.s32.totalorder %s17, 0
    %p59 = por %p57, %p58
    %p60 = scmp.ne.s32.totalorder %s48, %s49
    %p61 = scmp.eq.s32.totalorder %s18, 1
    %p62 = por %p60, %p61
    %p64 = scmp.ne.s32.totalorder %s49, %s63
    %p65 = scmp.eq.s32.totalorder %s18, 0
    %p66 = por %p64, %p65
    %s68 = sadd.s32 %s67, 1
    %p71 = scmp.eq.s32.totalorder %s12, 1
    %p72 = scmp.ne.s32.totalorder %s67, %s69
    %p73 = scmp.eq.s32.totalorder %s12, 0
    %p74 = por %p72, %p73
    %p75 = scmp.ne.s32.totalorder %s67, %s69
    %p76 = scmp.eq.s32.totalorder %s17, 1
    %p77 = por %p75, %p76
    %p78 = scmp.ne.s32.totalorder %s69, %s70
    %p79 = scmp.eq.s32.totalorder %s17, 0
    %p80 = por %p78, %p79
    %p81 = scmp.ne.s32.totalorder %s69, %s70
    %p82 = scmp.eq.s32.totalorder %s18, 1
    %p83 = por %p81, %p82
    %p85 = scmp.ne.s32.totalorder %s70, %s84
    %p86 = scmp.eq.s32.totalorder %s18, 0
    %p87 = por %p85, %p86
    %s89 = sadd.s32 %s88, 1
    %p92 = scmp.eq.s32.totalorder %s12, 1
    %p93 = scmp.ne.s32.totalorder %s88, %s90
    %p94 = scmp.eq.s32.totalorder %s12, 0
    %p95 = por %p93, %p94
    %p96 = scmp.ne.s32.totalorder %s88, %s90
    %p97 = scmp.eq.s32.totalorder %s17, 1
    %p98 = por %p96, %p97
    %p99 = scmp.ne.s32.totalorder %s90, %s91
    %p100 = scmp.eq.s32.totalorder %s17, 0
    %p101 = por %p99, %p100
    %p102 = scmp.ne.s32.totalorder %s90, %s91
    %p103 = scmp.eq.s32.totalorder %s18, 1
    %p104 = por %p102, %p103
    %p106 = scmp.ne.s32.totalorder %s91, %s105
    %p107 = scmp.eq.s32.totalorder %s18, 0
    %p108 = por %p106, %p107
    %s110 = sadd.s32 %s109, 1
    %p113 = scmp.eq.s32.totalorder %s12, 1
    %p114 = scmp.ne.s32.totalorder %s109, %s111
    %p115 = scmp.eq.s32.totalorder %s12, 0
    %p116 = por %p114, %p115
    %p117 = scmp.ne.s32.totalorder %s109, %s111
    %p118 = scmp.eq.s32.totalorder %s17, 1
    %p119 = por %p117, %p118
    %p120 = scmp.ne.s32.totalorder %s111, %s112
    %p121 = scmp.eq.s32.totalorder %s17, 0
    %p122 = por %p120, %p121
    %p123 = scmp.ne.s32.totalorder %s111, %s112
    %p124 = scmp.eq.s32.totalorder %s18, 1
    %p125 = por %p123, %p124
    %p127 = scmp.ne.s32.totalorder %s112, %s126
    %p128 = scmp.eq.s32.totalorder %s18, 0
    %p129 = por %p127, %p128
    %s131 = sadd.s32 %s130, 1
    %p134 = scmp.eq.s32.totalorder %s12, 1
    %p135 = scmp.ne.s32.totalorder %s130, %s132
    %p136 = scmp.eq.s32.totalorder %s12, 0
    %p137 = por %p135, %p136
    %p138 = scmp.ne.s32.totalorder %s130, %s132
    %p139 = scmp.eq.s32.totalorder %s17, 1
    %p140 = por %p138, %p139
    %p141 = scmp.ne.s32.totalorder %s132, %s133
    %p142 = scmp.eq.s32.totalorder %s17, 0
    %p143 = por %p141, %p142
    %p144 = scmp.ne.s32.totalorder %s132, %s133
    %p145 = scmp.eq.s32.totalorder %s18, 1
    %p146 = por %p144, %p145
    %p148 = scmp.ne.s32.totalorder %s133, %s147
    %p149 = scmp.eq.s32.totalorder %s18, 0
    %p150 = por %p148, %p149
    %s151 = ssub.s32 %s12, %s19
    %p152 = scmp.eq.s32.totalorder %s151, 0
    %s154 = sadd.s32 %s153, 1
    %s155 = scalar_select %p152, %s153, %s154
    %p158 = pneg %p152
    %p159 = scmp.eq.s32.totalorder %s12, 1
    %p160 = por %p158, %p159
    %p161 = scmp.ne.s32.totalorder %s153, %s156
    %p162 = scmp.eq.s32.totalorder %s12, 0
    %p163 = por %p161, %p162
    %p164 = scmp.ne.s32.totalorder %s153, %s156
    %p165 = scmp.eq.s32.totalorder %s17, 1
    %p166 = por %p164, %p165
    %p167 = scmp.ne.s32.totalorder %s156, %s157
    %p168 = scmp.eq.s32.totalorder %s17, 0
    %p169 = por %p167, %p168
    %p170 = scmp.ne.s32.totalorder %s156, %s157
    %p171 = scmp.eq.s32.totalorder %s18, 1
    %p172 = por %p170, %p171
    %p174 = scmp.ne.s32.totalorder %s157, %s173
    %p175 = scmp.eq.s32.totalorder %s18, 0
    %p176 = por %p174, %p175
    %p177 = scmp.le.s32.totalorder 1, %s12
    %p178 = scmp.lt.s32.totalorder %s12, 3
    %p179 = pnand %p177, %p178
    %p180 = pneg %p179
    // Predicated region
    $region9: #{unet2d_forward.22} parent=5 // pred_check
      _
    $region10: #{unet2d_forward.22} parent=5 // pred_check_branch
      %182 = sbr.rel (%p179) target = $region12
    $region11: #{unet2d_forward.22} parent=5 // pred_region
      %s183 = ssub.s32 %s12, 1
      // Predicated region
      $region13: #{unet2d_forward.22} parent=11 // pred_check
        %p184 = pneg %p59
      $region14: #{unet2d_forward.22} parent=11 // pred_check_branch
        %186 = sbr.rel (%p184) target = $region16
      $region15: #{unet2d_forward.22} parent=11 // pred_region
        _
      $region16: #{unet2d_forward.22} parent=11 // pred_fallthru
        _
      // Predicated region
      $region17: #{unet2d_forward.22} parent=11 // pred_check
        %p187 = pneg %p80
      $region18: #{unet2d_forward.22} parent=11 // pred_check_branch
        %189 = sbr.rel (%p187) target = $region20
      $region19: #{unet2d_forward.22} parent=11 // pred_region
        _
      $region20: #{unet2d_forward.22} parent=11 // pred_fallthru
        _
      // Predicated region
      $region21: #{unet2d_forward.22} parent=11 // pred_check
        %p190 = pneg %p101
      $region22: #{unet2d_forward.22} parent=11 // pred_check_branch
        %192 = sbr.rel (%p190) target = $region24
      $region23: #{unet2d_forward.22} parent=11 // pred_region
        _
      $region24: #{unet2d_forward.22} parent=11 // pred_fallthru
        _
      // Predicated region
      $region25: #{unet2d_forward.22} parent=11 // pred_check
        %p193 = pneg %p122
      $region26: #{unet2d_forward.22} parent=11 // pred_check_branch
        %195 = sbr.rel (%p193) target = $region28
      $region27: #{unet2d_forward.22} parent=11 // pred_region
        _
      $region28: #{unet2d_forward.22} parent=11 // pred_fallthru
        _
      // Predicated region
      $region29: #{unet2d_forward.22} parent=11 // pred_check
        %p196 = pneg %p143
      $region30: #{unet2d_forward.22} parent=11 // pred_check_branch
        %198 = sbr.rel (%p196) target = $region32
      $region31: #{unet2d_forward.22} parent=11 // pred_region
        _
      $region32: #{unet2d_forward.22} parent=11 // pred_fallthru
        _
    $region12: #{unet2d_forward.22} parent=5 // pred_fallthru
      _
    %p199 = scmp.lt.s32.totalorder %s12, 2
    // Predicated region
    $region33: #{unet2d_forward.22} parent=5 // pred_check
      %p200 = pneg %p199
    $region34: #{unet2d_forward.22} parent=5 // pred_check_branch
      %202 = sbr.rel (%p200) target = $region36
    $region35: #{unet2d_forward.22} parent=5 // pred_region
      // Predicated region
      $region37: #{unet2d_forward.22} parent=35 // pred_check
        %p203 = pneg %p32
      $region38: #{unet2d_forward.22} parent=35 // pred_check_branch
        %205 = sbr.rel (%p203) target = $region40
      $region39: #{unet2d_forward.22} parent=35 // pred_region
        %p206 = scmp.lt.s32.totalorder %s12, 1
        %s207 = scalar_select %p206, %s12, 1
        %s208 = smul.addr %s207, 72
        %s209 = smul.addr %s208, 4
        %s210 = scalar_lea.vmem %s0, %s209
      $region40: #{unet2d_forward.22} parent=35 // pred_fallthru
        _
    $region36: #{unet2d_forward.22} parent=5 // pred_fallthru
      _
    %p211 = scmp.le.s32.totalorder 1, %s12
    %p212 = scmp.lt.s32.totalorder %s12, 3
    %p213 = pnand %p211, %p212
    %p214 = pneg %p213
    // Predicated region
    $region41: #{unet2d_forward.22} parent=5 // pred_check
      _
    $region42: #{unet2d_forward.22} parent=5 // pred_check_branch
      %216 = sbr.rel (%p213) target = $region44
    $region43: #{unet2d_forward.22} parent=5 // pred_region
      %s217 = ssub.s32 %s12, 1
      %p218 = scmp.lt.s32.totalorder %s17, 1
      %s219 = scalar_select %p218, %s17, 1
      %s220 = smul.addr %s219, 72
      %s221 = smul.addr %s220, 4
      %s222 = scalar_lea.vmem %s0, %s221
      %p223 = pneg %p38
      %p224 = pneg %p35
      %p225 = pneg %p59
      %p226 = pneg %p56
      %p227 = pneg %p80
      %p228 = pneg %p77
      %p229 = pneg %p101
      %p230 = pneg %p98
      %p231 = pneg %p122
      %p232 = pneg %p119
      %p233 = pneg %p143
      %p234 = pneg %p140
      %p235 = pneg %p169
      %p236 = pneg %p166
      %p237 = scmp.lt.s32.totalorder %s17, 1
      %s238 = scalar_select %p237, %s17, 1
      %s239 = smul.addr %s238, 4
      %s240 = smul.addr %s239, 4
      %s241 = scalar_lea.vmem %s6, %s240
      %p242 = scmp.lt.s32.totalorder %s17, 1
      %s243 = scalar_select %p242, %s17, 1
      %s244 = smul.addr %s243, 72
      %s245 = smul.addr %s244, 4
      %s246 = scalar_lea.vmem %s0, %s245
      %p247 = scmp.lt.s32.totalorder %s17, 1
      %s248 = scalar_select %p247, %s17, 1
      %s249 = smul.addr %s248, 4
      %s250 = smul.addr %s249, 4
      %s251 = scalar_lea.vmem %s6, %s250
      %v253 = vld [vmem:[%s1] sm:$0xff]
      %v254 = vld [vmem:[%s1 + $0x8] sm:$0xf]
      %v255 = vld [vmem:[%s1 + $0xc] sm:$0xff]
      %v256 = vld [vmem:[%s1 + $0x14] sm:$0xf]
      %v257 = vld [vmem:[%s246] sm:$0xff]
      %v258 = vld [vmem:[%s246 + $0x8] sm:$0xff]
      %v259 = vld [vmem:[%s246 + $0x10] sm:$0xff]
      %v260 = vld [vmem:[%s246 + $0x18] sm:$0xff]
      %v261 = vld [vmem:[%s246 + $0x20] sm:$0xff]
      %v262 = vld [vmem:[%s246 + $0x28] sm:$0xff]
      %v263 = vld [vmem:[%s246 + $0x30] sm:$0xff]
      %v264 = vld [vmem:[%s246 + $0x38] sm:$0xff]
      %v265 = vld [vmem:[%s246 + $0x40] sm:$0xff]
      %v266 = vld [vmem:[%s246 + $0x48] sm:$0xff]
      %v267 = vld [vmem:[%s246 + $0x50] sm:$0xff]
      %v268 = vld [vmem:[%s246 + $0x58] sm:$0xff]
      %v269 = vld [vmem:[%s246 + $0x60] sm:$0xff]
      %v270 = vld [vmem:[%s246 + $0x68] sm:$0xff]
      %v271 = vld [vmem:[%s246 + $0x70] sm:$0xff]
      %v272 = vld [vmem:[%s246 + $0x78] sm:$0xff]
      %v273 = vld [vmem:[%s246 + $0x80] sm:$0xff]
      %v274 = vld [vmem:[%s246 + $0x88] sm:$0xff]
      %v275 = vld [vmem:[%s246 + $0x90] sm:$0xff]
      %v276 = vld [vmem:[%s246 + $0x98] sm:$0xff]
      %v277 = vld [vmem:[%s246 + $0xa0] sm:$0xff]
      %v278 = vld [vmem:[%s246 + $0xa8] sm:$0xff]
      %v279 = vld [vmem:[%s246 + $0xb0] sm:$0xff]
      %v280 = vld [vmem:[%s246 + $0xb8] sm:$0xff]
      %v281 = vld [vmem:[%s246 + $0xc0] sm:$0xff]
      %v282 = vld [vmem:[%s246 + $0xc8] sm:$0xff]
      %v283 = vld [vmem:[%s246 + $0xd0] sm:$0xff]
      %v284 = vld [vmem:[%s246 + $0xd8] sm:$0xff]
      %v285 = vld [vmem:[%s246 + $0xe0] sm:$0xff]
      %v286 = vld [vmem:[%s246 + $0xe8] sm:$0xff]
      %v287 = vld [vmem:[%s246 + $0xf0] sm:$0xff]
      %v288 = vld [vmem:[%s246 + $0xf8] sm:$0xff]
      %v289 = vld [vmem:[%s246 + $0x100] sm:$0xff]
      %v290 = vld [vmem:[%s246 + $0x108] sm:$0xff]
      %v291 = vld [vmem:[%s246 + $0x110] sm:$0xff]
      %v292 = vld [vmem:[%s246 + $0x118] sm:$0xff]
      %v293 = vld [vmem:[%s2] sm:$0xff]
      %v294 = vld [vmem:[%s2 + $0x8] sm:$0xff]
      %296 = vset.pattern.permute.xlu0 0
      %297 = vperm.xlu0 %296, %v293
      %v298 = vpop.permute.xlu0 %297
      %301 = vset.pattern.permute.xlu0 0
      %302 = vperm.xlu0 %301, %v294
      %v303 = vpop.permute.xlu0 %302
      %v309 = vunpack.c.l.b16 %v253
      %v310 = vunpack.c.h.b16 %v253
      %v311 = vunpack.c.l.b16 %v254
      %v312 = vunpack.c.l.b16 %v255
      %v313 = vunpack.c.h.b16 %v255
      %v314 = vunpack.c.l.b16 %v256
      %v315 = vpack.c.b16 %v312, %v309
      %v316 = vpack.c.b16 %v313, %v310
      %v317 = vpack.c.b16 %v314, %v311
      %v356 = vunpack.c.l.b16 %v257
      %v357 = vunpack.c.h.b16 %v257
      %v358 = vunpack.c.l.b16 %v258
      %v359 = vunpack.c.h.b16 %v258
      %v360 = vunpack.c.l.b16 %v259
      %v361 = vunpack.c.h.b16 %v259
      %v362 = vunpack.c.l.b16 %v260
      %v363 = vunpack.c.h.b16 %v260
      %v364 = vunpack.c.l.b16 %v261
      %v365 = vunpack.c.h.b16 %v261
      %v366 = vunpack.c.l.b16 %v262
      %v367 = vunpack.c.h.b16 %v262
      %v368 = vunpack.c.l.b16 %v263
      %v369 = vunpack.c.h.b16 %v263
      %v370 = vunpack.c.l.b16 %v264
      %v371 = vunpack.c.h.b16 %v264
      %v372 = vunpack.c.l.b16 %v265
      %v373 = vunpack.c.h.b16 %v265
      %v374 = vunpack.c.l.b16 %v266
      %v375 = vunpack.c.h.b16 %v266
      %v376 = vunpack.c.l.b16 %v267
      %v377 = vunpack.c.h.b16 %v267
      %v378 = vunpack.c.l.b16 %v268
      %v379 = vunpack.c.h.b16 %v268
      %v380 = vunpack.c.l.b16 %v269
      %v381 = vunpack.c.h.b16 %v269
      %v382 = vunpack.c.l.b16 %v270
      %v383 = vunpack.c.h.b16 %v270
      %v384 = vunpack.c.l.b16 %v271
      %v385 = vunpack.c.h.b16 %v271
      %v386 = vunpack.c.l.b16 %v272
      %v387 = vunpack.c.h.b16 %v272
      %v388 = vunpack.c.l.b16 %v273
      %v389 = vunpack.c.h.b16 %v273
      %v390 = vunpack.c.l.b16 %v274
      %v391 = vunpack.c.h.b16 %v274
      %v392 = vunpack.c.l.b16 %v275
      %v393 = vunpack.c.h.b16 %v275
      %v394 = vunpack.c.l.b16 %v276
      %v395 = vunpack.c.h.b16 %v276
      %v396 = vunpack.c.l.b16 %v277
      %v397 = vunpack.c.h.b16 %v277
      %v398 = vunpack.c.l.b16 %v278
      %v399 = vunpack.c.h.b16 %v278
      %v400 = vunpack.c.l.b16 %v279
      %v401 = vunpack.c.h.b16 %v279
      %v402 = vunpack.c.l.b16 %v280
      %v403 = vunpack.c.h.b16 %v280
      %v404 = vunpack.c.l.b16 %v281
      %v405 = vunpack.c.h.b16 %v281
      %v406 = vunpack.c.l.b16 %v282
      %v407 = vunpack.c.h.b16 %v282
      %v408 = vunpack.c.l.b16 %v283
      %v409 = vunpack.c.h.b16 %v283
      %v410 = vunpack.c.l.b16 %v284
      %v411 = vunpack.c.h.b16 %v284
      %v412 = vunpack.c.l.b16 %v285
      %v413 = vunpack.c.h.b16 %v285
      %v414 = vunpack.c.l.b16 %v286
      %v415 = vunpack.c.h.b16 %v286
      %v416 = vunpack.c.l.b16 %v287
      %v417 = vunpack.c.h.b16 %v287
      %v418 = vunpack.c.l.b16 %v288
      %v419 = vunpack.c.h.b16 %v288
      %v420 = vunpack.c.l.b16 %v289
      %v421 = vunpack.c.h.b16 %v289
      %v422 = vunpack.c.l.b16 %v290
      %v423 = vunpack.c.h.b16 %v290
      %v424 = vunpack.c.l.b16 %v291
      %v425 = vunpack.c.h.b16 %v291
      %v426 = vunpack.c.l.b16 %v292
      %v427 = vunpack.c.h.b16 %v292
      %v428 = vpack.c.b16 %v358, %v356
      %v429 = vpack.c.b16 %v359, %v357
      %v430 = vpack.c.b16 %v362, %v360
      %v431 = vpack.c.b16 %v363, %v361
      %v432 = vpack.c.b16 %v366, %v364
      %v433 = vpack.c.b16 %v367, %v365
      %v434 = vpack.c.b16 %v370, %v368
      %v435 = vpack.c.b16 %v371, %v369
      %v436 = vpack.c.b16 %v374, %v372
      %v437 = vpack.c.b16 %v375, %v373
      %v438 = vpack.c.b16 %v378, %v376
      %v439 = vpack.c.b16 %v379, %v377
      %v440 = vpack.c.b16 %v382, %v380
      %v441 = vpack.c.b16 %v383, %v381
      %v442 = vpack.c.b16 %v386, %v384
      %v443 = vpack.c.b16 %v387, %v385
      %v444 = vpack.c.b16 %v390, %v388
      %v445 = vpack.c.b16 %v391, %v389
      %v446 = vpack.c.b16 %v394, %v392
      %v447 = vpack.c.b16 %v395, %v393
      %v448 = vpack.c.b16 %v398, %v396
      %v449 = vpack.c.b16 %v399, %v397
      %v450 = vpack.c.b16 %v402, %v400
      %v451 = vpack.c.b16 %v403, %v401
      %v452 = vpack.c.b16 %v406, %v404
      %v453 = vpack.c.b16 %v407, %v405
      %v454 = vpack.c.b16 %v410, %v408
      %v455 = vpack.c.b16 %v411, %v409
      %v456 = vpack.c.b16 %v414, %v412
      %v457 = vpack.c.b16 %v415, %v413
      %v458 = vpack.c.b16 %v418, %v416
      %v459 = vpack.c.b16 %v419, %v417
      %v460 = vpack.c.b16 %v422, %v420
      %v461 = vpack.c.b16 %v423, %v421
      %v462 = vpack.c.b16 %v426, %v424
      %v463 = vpack.c.b16 %v427, %v425
      %vm500 = vcmask 261120
      %v502 = vsel %vm500, %v317, 0
      %504 = vmatprep.subr.bf16.mxu0 %v443
      %505 = vmatpush1.bf16.msra.mxu0 %v442
      %506 = vmatprep.subr.bf16.mxu0 %v441
      %507 = vmatpush1.bf16.msra.mxu0 %v440
      %508 = vmatprep.subr.bf16.mxu0 %v439
      %509 = vmatpush1.bf16.msra.mxu0 %v438
      %510 = vmatprep.subr.bf16.mxu0 %v437
      %511 = vmatpush1.bf16.msra.mxu0 %v436
      %512 = vmatprep.subr.bf16.mxu0 %v435
      %513 = vmatpush1.bf16.msra.mxu0 %v434
      %514 = vmatprep.subr.bf16.mxu0 %v433
      %515 = vmatpush1.bf16.msra.mxu0 %v432
      %516 = vmatprep.subr.bf16.mxu0 %v431
      %517 = vmatpush1.bf16.msra.mxu0 %v430
      %518 = vmatprep.subr.bf16.mxu0 %v429
      %519 = vmatpush1.bf16.msra.mxu0 %v428
      %520 = vmatprep.subr.bf16.mxu0 %v459
      %521 = vmatpush2.bf16.msra.mxu0 %v458
      %522 = vmatprep.subr.bf16.mxu0 %v457
      %523 = vmatpush2.bf16.msra.mxu0 %v456
      %524 = vmatprep.subr.bf16.mxu0 %v455
      %525 = vmatpush2.bf16.msra.mxu0 %v454
      %526 = vmatprep.subr.bf16.mxu0 %v453
      %527 = vmatpush2.bf16.msra.mxu0 %v452
      %528 = vmatprep.subr.bf16.mxu0 %v451
      %529 = vmatpush2.bf16.msra.mxu0 %v450
      %530 = vmatprep.subr.bf16.mxu0 %v449
      %531 = vmatpush2.bf16.msra.mxu0 %v448
      %532 = vmatprep.subr.bf16.mxu0 %v447
      %533 = vmatpush2.bf16.msra.mxu0 %v446
      %534 = vmatprep.subr.bf16.mxu0 %v445
      %535 = vmatpush2.bf16.msra.mxu0 %v444
      %536 = vmatprep.mubr.bf16.mxu0 %v316
      %537 = vmatmul.mubr.bf16.gmra.mxu0 %v315
      %v538 = vpop.f32.mrf.mxu0
      %v539 = vadd.f32 %v298, %v538
      %v540 = vpop.f32.mrf.mxu0
      %v541 = vadd.f32 %v298, %v540
      %v542 = vpop.f32.mrf.mxu0
      %v543 = vadd.f32 %v303, %v542
      %v544 = vpop.f32.mrf.mxu0
      %v545 = vadd.f32 %v303, %v544
      %546 = vdwg.mxu0
      %547 = vmatprep.subr.bf16.mxu0 0
      %548 = vmatpush1.bf16.msra.mxu0 0
      %549 = vmatprep.subr.bf16.mxu0 0
      %550 = vmatpush1.bf16.msra.mxu0 0
      %551 = vmatprep.subr.bf16.mxu0 0
      %552 = vmatpush1.bf16.msra.mxu0 0
      %553 = vmatprep.subr.bf16.mxu0 0
      %554 = vmatpush1.bf16.msra.mxu0 0
      %555 = vmatprep.subr.bf16.mxu0 0
      %556 = vmatpush1.bf16.msra.mxu0 0
      %557 = vmatprep.subr.bf16.mxu0 0
      %558 = vmatpush1.bf16.msra.mxu0 0
      %559 = vmatprep.subr.bf16.mxu0 %v463
      %560 = vmatpush1.bf16.msra.mxu0 %v462
      %561 = vmatprep.subr.bf16.mxu0 %v461
      %562 = vmatpush1.bf16.msra.mxu0 %v460
      %563 = vmatprep.subr.bf16.mxu0 0
      %564 = vmatpush2.bf16.msra.mxu0 0
      %565 = vmatprep.subr.bf16.mxu0 0
      %566 = vmatpush2.bf16.msra.mxu0 0
      %567 = vmatprep.subr.bf16.mxu0 0
      %568 = vmatpush2.bf16.msra.mxu0 0
      %569 = vmatprep.subr.bf16.mxu0 0
      %570 = vmatpush2.bf16.msra.mxu0 0
      %571 = vmatprep.subr.bf16.mxu0 0
      %572 = vmatpush2.bf16.msra.mxu0 0
      %573 = vmatprep.subr.bf16.mxu0 0
      %574 = vmatpush2.bf16.msra.mxu0 0
      %575 = vmatprep.subr.bf16.mxu0 0
      %576 = vmatpush2.bf16.msra.mxu0 0
      %577 = vmatprep.subr.bf16.mxu0 0
      %578 = vmatpush2.bf16.msra.mxu0 0
      %579 = vmatprep.mubr.bf16.mxu0 0
      %580 = vmatmul.mubr.bf16.gmra.mxu0 %v502
      %v581 = vpop.f32.mrf.mxu0
      %v582 = vadd.f32 %v539, %v581
      %v583 = vpop.f32.mrf.mxu0
      %v584 = vadd.f32 %v541, %v583
      %v585 = vpop.f32.mrf.mxu0
      %v586 = vadd.f32 %v543, %v585
      %v587 = vpop.f32.mrf.mxu0
      %v588 = vadd.f32 %v545, %v587
      %589 = vdwg.mxu0
      %v590 = vld [vmem:[%s5] sm:$0xff]
      %v591 = vld [vmem:[%s5 + $0x8] sm:$0xff]
      %v592 = vld [vmem:[%s3] sm:$0xff]
      %v593 = vld [vmem:[%s3 + $0x8] sm:$0xff]
      %v594 = vld [vmem:[%s4] sm:$0xff]
      %v595 = vld [vmem:[%s4 + $0x8] sm:$0xff]
      %v596 = vadd.f32 %v582, %v584
      %597 = vadd.xlane.f32.xlu0 %v596
      %v598 = vpop.xlane.xlu0 %597
      %v599 = vadd.f32 %v586, %v588
      %600 = vadd.xlane.f32.xlu0 %v599
      %v601 = vpop.xlane.xlu0 %600
      %v602 = vmul.f32 %v582, %v582
      %v603 = vmul.f32 %v584, %v584
      %v604 = vmul.f32 %v586, %v586
      %v605 = vmul.f32 %v588, %v588
      %v606 = vadd.f32 %v602, %v603
      %607 = vadd.xlane.f32.xlu0 %v606
      %v608 = vpop.xlane.xlu0 %607
      %v609 = vadd.f32 %v604, %v605
      %610 = vadd.xlane.f32.xlu0 %v609
      %v611 = vpop.xlane.xlu0 %610
      %vm612 = vcmask 130048
      %v614 = vsel %vm612, %v590, 0
      %v617 = vsel %vm612, %v591, 0
      %619 = vmatprep.subr.mxu0 0.0
      %620 = vmatpush1.msra.mxu0 0.0
      %621 = vmatprep.subr.mxu0 0.0
      %622 = vmatpush1.msra.mxu0 0.0
      %623 = vmatprep.subr.mxu0 0.0
      %624 = vmatpush1.msra.mxu0 0.0
      %625 = vmatprep.subr.mxu0 0.0
      %626 = vmatpush1.msra.mxu0 0.0
      %627 = vmatprep.subr.mxu0 0.0
      %628 = vmatpush1.msra.mxu0 0.0
      %629 = vmatprep.subr.mxu0 0.0
      %630 = vmatpush1.msra.mxu0 0.0
      %631 = vmatprep.subr.mxu0 0.0
      %632 = vmatpush1.msra.mxu0 0.0
      %633 = vmatprep.subr.mxu0 0.0
      %634 = vmatpush1.msra.mxu0 0.0
      %635 = vmatprep.subr.mxu0 0.0
      %636 = vmatpush1.msra.mxu0 0.0
      %637 = vmatprep.subr.mxu0 0.0
      %638 = vmatpush1.msra.mxu0 0.0
      %639 = vmatprep.subr.mxu0 0.0
      %640 = vmatpush1.msra.mxu0 0.0
      %641 = vmatprep.subr.mxu0 0.0
      %642 = vmatpush1.msra.mxu0 0.0
      %643 = vmatprep.subr.mxu0 0.0
      %644 = vmatpush1.msra.mxu0 0.0
      %645 = vmatprep.subr.mxu0 0.0
      %646 = vmatpush1.msra.mxu0 0.0
      %647 = vmatprep.subr.mxu0 0.0
      %648 = vmatpush1.msra.mxu0 %v601
      %649 = vmatprep.subr.mxu0 0.0
      %650 = vmatpush1.msra.mxu0 %v598
      %651 = vmatprep.subr.mxu0 0.0
      %652 = vmatpush2.msra.mxu0 0.0
      %653 = vmatprep.subr.mxu0 0.0
      %654 = vmatpush2.msra.mxu0 0.0
      %655 = vmatprep.subr.mxu0 0.0
      %656 = vmatpush2.msra.mxu0 0.0
      %657 = vmatprep.subr.mxu0 0.0
      %658 = vmatpush2.msra.mxu0 0.0
      %659 = vmatprep.subr.mxu0 0.0
      %660 = vmatpush2.msra.mxu0 0.0
      %661 = vmatprep.subr.mxu0 0.0
      %662 = vmatpush2.msra.mxu0 0.0
      %663 = vmatprep.subr.mxu0 0.0
      %664 = vmatpush2.msra.mxu0 0.0
      %665 = vmatprep.subr.mxu0 0.0
      %666 = vmatpush2.msra.mxu0 0.0
      %667 = vmatprep.subr.mxu0 0.0
      %668 = vmatpush2.msra.mxu0 0.0
      %669 = vmatprep.subr.mxu0 0.0
      %670 = vmatpush2.msra.mxu0 0.0
      %671 = vmatprep.subr.mxu0 0.0
      %672 = vmatpush2.msra.mxu0 0.0
      %673 = vmatprep.subr.mxu0 0.0
      %674 = vmatpush2.msra.mxu0 0.0
      %675 = vmatprep.subr.mxu0 0.0
      %676 = vmatpush2.msra.mxu0 0.0
      %677 = vmatprep.subr.mxu0 0.0
      %678 = vmatpush2.msra.mxu0 0.0
      %679 = vmatprep.subr.mxu0 0.0
      %680 = vmatpush2.msra.mxu0 0.0
      %681 = vmatprep.subr.mxu0 0.0
      %682 = vmatpush2.msra.mxu0 0.0
      %683 = vmatprep.mubr.f32.mxu0 0.0
      %684 = vmatmul.mubr.f32.gmra.mxu0 %v614
      %v685 = vpop.f32.mrf.mxu0
      %v686 = vadd.f32 0.0, %v685
      %v687 = vpop.f32.mrf.mxu0
      %688 = vmatprep.mubr.f32.mxu0 0.0
      %689 = vmatmul.mubr.f32.gmra.mxu0 %v617
      %v690 = vpop.f32.mrf.mxu0
      %v691 = vadd.f32 0.0, %v690
      %v692 = vpop.f32.mrf.mxu0
      %693 = vdwg.mxu0
      %694 = vmatprep.subr.mxu0 0.0
      %695 = vmatpush1.msra.mxu0 0.0
      %696 = vmatprep.subr.mxu0 0.0
      %697 = vmatpush1.msra.mxu0 0.0
      %698 = vmatprep.subr.mxu0 0.0
      %699 = vmatpush1.msra.mxu0 0.0
      %700 = vmatprep.subr.mxu0 0.0
      %701 = vmatpush1.msra.mxu0 0.0
      %702 = vmatprep.subr.mxu0 0.0
      %703 = vmatpush1.msra.mxu0 0.0
      %704 = vmatprep.subr.mxu0 0.0
      %705 = vmatpush1.msra.mxu0 0.0
      %706 = vmatprep.subr.mxu0 0.0
      %707 = vmatpush1.msra.mxu0 0.0
      %708 = vmatprep.subr.mxu0 0.0
      %709 = vmatpush1.msra.mxu0 0.0
      %710 = vmatprep.subr.mxu0 0.0
      %711 = vmatpush1.msra.mxu0 0.0
      %712 = vmatprep.subr.mxu0 0.0
      %713 = vmatpush1.msra.mxu0 0.0
      %714 = vmatprep.subr.mxu0 0.0
      %715 = vmatpush1.msra.mxu0 0.0
      %716 = vmatprep.subr.mxu0 0.0
      %717 = vmatpush1.msra.mxu0 0.0
      %718 = vmatprep.subr.mxu0 0.0
      %719 = vmatpush1.msra.mxu0 0.0
      %720 = vmatprep.subr.mxu0 0.0
      %721 = vmatpush1.msra.mxu0 0.0
      %722 = vmatprep.subr.mxu0 0.0
      %723 = vmatpush1.msra.mxu0 %v611
      %724 = vmatprep.subr.mxu0 0.0
      %725 = vmatpush1.msra.mxu0 %v608
      %726 = vmatprep.subr.mxu0 0.0
      %727 = vmatpush2.msra.mxu0 0.0
      %728 = vmatprep.subr.mxu0 0.0
      %729 = vmatpush2.msra.mxu0 0.0
      %730 = vmatprep.subr.mxu0 0.0
      %731 = vmatpush2.msra.mxu0 0.0
      %732 = vmatprep.subr.mxu0 0.0
      %733 = vmatpush2.msra.mxu0 0.0
      %734 = vmatprep.subr.mxu0 0.0
      %735 = vmatpush2.msra.mxu0 0.0
      %736 = vmatprep.subr.mxu0 0.0
      %737 = vmatpush2.msra.mxu0 0.0
      %738 = vmatprep.subr.mxu0 0.0
      %739 = vmatpush2.msra.mxu0 0.0
      %740 = vmatprep.subr.mxu0 0.0
      %741 = vmatpush2.msra.mxu0 0.0
      %742 = vmatprep.subr.mxu0 0.0
      %743 = vmatpush2.msra.mxu0 0.0
      %744 = vmatprep.subr.mxu0 0.0
      %745 = vmatpush2.msra.mxu0 0.0
      %746 = vmatprep.subr.mxu0 0.0
      %747 = vmatpush2.msra.mxu0 0.0
      %748 = vmatprep.subr.mxu0 0.0
      %749 = vmatpush2.msra.mxu0 0.0
      %750 = vmatprep.subr.mxu0 0.0
      %751 = vmatpush2.msra.mxu0 0.0
      %752 = vmatprep.subr.mxu0 0.0
      %753 = vmatpush2.msra.mxu0 0.0
      %754 = vmatprep.subr.mxu0 0.0
      %755 = vmatpush2.msra.mxu0 0.0
      %756 = vmatprep.subr.mxu0 0.0
      %757 = vmatpush2.msra.mxu0 0.0
      %758 = vmatprep.mubr.f32.mxu0 0.0
      %759 = vmatmul.mubr.f32.gmra.mxu0 %v614
      %v760 = vpop.f32.mrf.mxu0
      %v761 = vadd.f32 0.0, %v760
      %v762 = vpop.f32.mrf.mxu0
      %763 = vmatprep.mubr.f32.mxu0 0.0
      %764 = vmatmul.mubr.f32.gmra.mxu0 %v617
      %v765 = vpop.f32.mrf.mxu0
      %v766 = vadd.f32 0.0, %v765
      %v767 = vpop.f32.mrf.mxu0
      %768 = vdwg.mxu0
      %v769 = vmul.f32 %v686, %v686
      %v770 = vmul.f32 %v691, %v691
      %v771 = vsub.f32 %v761, %v769
      %v772 = vsub.f32 %v766, %v770
      %v773 = vmax.f32 %v771, 0.0
      %v774 = vmax.f32 %v772, 0.0
      %v775 = vadd.f32 %v773, 1e-05
      %v776 = vadd.f32 %v774, 1e-05
      %v777 = vrsqrt.pop %v775
      %v778 = vrsqrt.pop %v776
      %780 = vset.pattern.permute.xlu0 0
      %781 = vperm.xlu0 %780, %v686
      %v782 = vpop.permute.xlu0 %781
      %785 = vset.pattern.permute.xlu0 0
      %786 = vperm.xlu0 %785, %v691
      %v787 = vpop.permute.xlu0 %786
      %v789 = vsub.f32 %v582, %v782
      %v790 = vsub.f32 %v584, %v782
      %v791 = vsub.f32 %v586, %v787
      %v792 = vsub.f32 %v588, %v787
      %v793 = vmul.f32 %v777, %v592
      %v794 = vmul.f32 %v778, %v593
      %796 = vset.pattern.permute.xlu0 0
      %797 = vperm.xlu0 %796, %v793
      %v798 = vpop.permute.xlu0 %797
      %801 = vset.pattern.permute.xlu0 0
      %802 = vperm.xlu0 %801, %v794
      %v803 = vpop.permute.xlu0 %802
      %v805 = vmul.f32 %v789, %v798
      %v806 = vmul.f32 %v790, %v798
      %v807 = vmul.f32 %v791, %v803
      %v808 = vmul.f32 %v792, %v803
      %810 = vset.pattern.permute.xlu0 0
      %811 = vperm.xlu0 %810, %v594
      %v812 = vpop.permute.xlu0 %811
      %815 = vset.pattern.permute.xlu0 0
      %816 = vperm.xlu0 %815, %v595
      %v817 = vpop.permute.xlu0 %816
      %v819 = vadd.f32 %v805, %v812
      %v820 = vadd.f32 %v806, %v812
      %v821 = vadd.f32 %v807, %v817
      %v822 = vadd.f32 %v808, %v817
      %v823 = vmax.f32 %v819, 0.0
      %v824 = vmax.f32 %v820, 0.0
      %v825 = vmax.f32 %v821, 0.0
      %v826 = vmax.f32 %v822, 0.0
      %v827 = vpack.c.bf16 %v825, %v823
      %v828 = vpack.c.bf16 %v826, %v824
      %v831 = vunpack.c.l.b16 %v827
      %v832 = vunpack.c.l.b16 %v828
      %v833 = vunpack.c.h.b16 %v827
      %v834 = vunpack.c.h.b16 %v828
      %v835 = vpack.c.b16 %v832, %v831
      %v836 = vpack.c.b16 %v834, %v833
      %839 = vst [vmem:[%s251] sm:$0xff] %v835
      %840 = vst [vmem:[%s251 + $0x8] sm:$0xff] %v836
      %p841 = scmp.lt.s32.totalorder %s17, 1
      %s842 = scalar_select %p841, %s17, 1
      %s843 = smul.addr %s842, 4
      %s844 = smul.addr %s843, 4
      %s845 = scalar_lea.vmem %s6, %s844
      // Predicated region
      $region45: #{unet2d_forward.22} parent=43 // pred_check
        %p846 = pneg %p166
      $region46: #{unet2d_forward.22} parent=43 // pred_check_branch
        %848 = sbr.rel (%p846) target = $region48
      $region47: #{unet2d_forward.22} parent=43 // pred_region
        _
      $region48: #{unet2d_forward.22} parent=43 // pred_fallthru
        _
    $region44: #{unet2d_forward.22} parent=5 // pred_fallthru
      _
    %p849 = scmp.le.s32.totalorder 2, %s12
    // Predicated region
    $region49: #{unet2d_forward.22} parent=5 // pred_check
      %p850 = pneg %p849
    $region50: #{unet2d_forward.22} parent=5 // pred_check_branch
      %852 = sbr.rel (%p850) target = $region52
    $region51: #{unet2d_forward.22} parent=5 // pred_region
      %s853 = ssub.s32 %s12, 2
      // Predicated region
      $region53: #{unet2d_forward.22} parent=51 // pred_check
        %p854 = pneg %p172
      $region54: #{unet2d_forward.22} parent=51 // pred_check_branch
        %856 = sbr.rel (%p854) target = $region56
      $region55: #{unet2d_forward.22} parent=51 // pred_region
        %p857 = scmp.lt.s32.totalorder %s18, 1
        %s858 = scalar_select %p857, %s18, 1
        %s859 = smul.addr %s858, 4
        %s860 = smul.addr %s859, 4
        %s861 = scalar_lea.vmem %s6, %s860
      $region56: #{unet2d_forward.22} parent=51 // pred_fallthru
        _
    $region52: #{unet2d_forward.22} parent=5 // pred_fallthru
      _
  $region6: #{unet2d_forward.22} parent=0 // loop_footer
    %s16 = sadd.s32 1, %s12
  $region7: #{unet2d_forward.22} parent=0 // loop_footer_branch
    %11 = sbr.rel target = $region3
  $region8: #{unet2d_forward.22} parent=0 // loop_exit
    _

// kernel: unet2d_forward.23
$region0: #{unet2d_forward.23}
  #allocation0 [shape = 'u32[]', space=smem, size = 0x4, offset = 0x4, fixed_abs, tag = 'smem constant byte address 0x4 - core index']
  #allocation1 [shape = 'u32[144,128]{1,0:T(1,128)}', space=vmem, size = 0x12000, scoped, tag = 'internal scratch']
  %s0 = inlined_call_operand.vmem [shape: bf16[2,144,256], index: 0, kind: input, shape index: {}]
  %s1 = inlined_call_operand.vmem [shape: bf16[16,144], index: 1, kind: input, shape index: {}]
  %s2 = inlined_call_operand.vmem [shape: f32[16,1], index: 2, kind: input, shape index: {}]
  %s3 = inlined_call_operand.vmem [shape: f32[16,1], index: 3, kind: input, shape index: {}]
  %s4 = inlined_call_operand.vmem [shape: f32[16,1], index: 4, kind: input, shape index: {}]
  %s5 = inlined_call_operand.vmem [shape: f32[16,16], index: 5, kind: input, shape index: {}]
  %s6 = inlined_call_operand.vmem [shape: bf16[3,16], index: 6, kind: input, shape index: {}]
  %s7 = inlined_call_operand.vmem [shape: f32[3,1], index: 7, kind: input, shape index: {}]
  %s8 = inlined_call_operand.vmem [shape: f32[2,3,256], index: 8, kind: output, shape index: {}]
  %s9 = sld [smem:[#allocation0]]
  $region65: #{unet2d_forward.23} parent=0
    _
  %s11 = ssub.s32 1, %s9
  %s12 = scalar_select 0, %s11, %s9
  loop: start=0, step=1, limit=4
  $region2: #{unet2d_forward.23} parent=0 // loop_pre_header
    _
  $region3: #{unet2d_forward.23} parent=0 // loop_header
    %s14 = sphi 0, %s18
    %p15 = scmp.ge.s32.totalorder %s14, 4
    %s24 = sphi 0, %s26
    %s27 = sphi 0, %s24
    %s28 = sphi 0, %s27
    %s44 = sphi 0, %s28
    %s48 = sphi 0, %s48
    %s50 = sphi 0, %s48
    %s51 = sphi 0, %s50
    %s65 = sphi 0, %s51
    %s69 = sphi 0, %s69
    %s71 = sphi 0, %s69
    %s72 = sphi 0, %s71
    %s86 = sphi 0, %s72
    %s90 = sphi 0, %s90
    %s92 = sphi 0, %s90
    %s93 = sphi 0, %s92
    %s107 = sphi 0, %s93
    %s111 = sphi 0, %s111
    %s113 = sphi 0, %s111
    %s114 = sphi 0, %s113
    %s128 = sphi 0, %s114
    %s132 = sphi 0, %s132
    %s134 = sphi 0, %s132
    %s135 = sphi 0, %s134
    %s149 = sphi 0, %s135
    %s153 = sphi 0, %s153
    %s155 = sphi 0, %s153
    %s156 = sphi 0, %s155
    %s170 = sphi 0, %s156
    %s174 = sphi 0, %s174
    %s176 = sphi 0, %s174
    %s177 = sphi 0, %s176
    %s191 = sphi 0, %s177
    %s197 = sphi 0, %s199
    %s200 = sphi 0, %s197
    %s201 = sphi 0, %s200
    %s217 = sphi 0, %s201
  $region4: #{unet2d_forward.23} parent=0 // loop_header_branch
    %17 = sbr.rel (%p15) target = $region8
  $region5: #{unet2d_forward.23} parent=0 // loop_body
    %s19 = ssub.s32 %s14, 1
    %s20 = ssub.s32 %s14, 2
    %s21 = sadd.s32 %s14, 1
    %s22 = ssub.s32 %s14, %s21
    %p23 = scmp.eq.s32.totalorder %s22, 0
    %s25 = sadd.s32 %s24, 1
    %s26 = scalar_select %p23, %s24, %s25
    %p29 = pneg %p23
    %p30 = scmp.eq.s32.totalorder %s14, 1
    %p31 = por %p29, %p30
    %p32 = scmp.ne.s32.totalorder %s24, %s27
    %p33 = scmp.eq.s32.totalorder %s14, 0
    %p34 = por %p32, %p33
    %p35 = scmp.ne.s32.totalorder %s24, %s27
    %p36 = scmp.eq.s32.totalorder %s19, 1
    %p37 = por %p35, %p36
    %p38 = scmp.ne.s32.totalorder %s27, %s28
    %p39 = scmp.eq.s32.totalorder %s19, 0
    %p40 = por %p38, %p39
    %p41 = scmp.ne.s32.totalorder %s27, %s28
    %p42 = scmp.eq.s32.totalorder %s20, 1
    %p43 = por %p41, %p42
    %p45 = scmp.ne.s32.totalorder %s28, %s44
    %p46 = scmp.eq.s32.totalorder %s20, 0
    %p47 = por %p45, %p46
    %s49 = sadd.s32 %s48, 1
    %p52 = scmp.eq.s32.totalorder %s14, 1
    %p53 = scmp.ne.s32.totalorder %s48, %s50
    %p54 = scmp.eq.s32.totalorder %s14, 0
    %p55 = por %p53, %p54
    %p56 = scmp.ne.s32.totalorder %s48, %s50
    %p57 = scmp.eq.s32.totalorder %s19, 1
    %p58 = por %p56, %p57
    %p59 = scmp.ne.s32.totalorder %s50, %s51
    %p60 = scmp.eq.s32.totalorder %s19, 0
    %p61 = por %p59, %p60
    %p62 = scmp.ne.s32.totalorder %s50, %s51
    %p63 = scmp.eq.s32.totalorder %s20, 1
    %p64 = por %p62, %p63
    %p66 = scmp.ne.s32.totalorder %s51, %s65
    %p67 = scmp.eq.s32.totalorder %s20, 0
    %p68 = por %p66, %p67
    %s70 = sadd.s32 %s69, 1
    %p73 = scmp.eq.s32.totalorder %s14, 1
    %p74 = scmp.ne.s32.totalorder %s69, %s71
    %p75 = scmp.eq.s32.totalorder %s14, 0
    %p76 = por %p74, %p75
    %p77 = scmp.ne.s32.totalorder %s69, %s71
    %p78 = scmp.eq.s32.totalorder %s19, 1
    %p79 = por %p77, %p78
    %p80 = scmp.ne.s32.totalorder %s71, %s72
    %p81 = scmp.eq.s32.totalorder %s19, 0
    %p82 = por %p80, %p81
    %p83 = scmp.ne.s32.totalorder %s71, %s72
    %p84 = scmp.eq.s32.totalorder %s20, 1
    %p85 = por %p83, %p84
    %p87 = scmp.ne.s32.totalorder %s72, %s86
    %p88 = scmp.eq.s32.totalorder %s20, 0
    %p89 = por %p87, %p88
    %s91 = sadd.s32 %s90, 1
    %p94 = scmp.eq.s32.totalorder %s14, 1
    %p95 = scmp.ne.s32.totalorder %s90, %s92
    %p96 = scmp.eq.s32.totalorder %s14, 0
    %p97 = por %p95, %p96
    %p98 = scmp.ne.s32.totalorder %s90, %s92
    %p99 = scmp.eq.s32.totalorder %s19, 1
    %p100 = por %p98, %p99
    %p101 = scmp.ne.s32.totalorder %s92, %s93
    %p102 = scmp.eq.s32.totalorder %s19, 0
    %p103 = por %p101, %p102
    %p104 = scmp.ne.s32.totalorder %s92, %s93
    %p105 = scmp.eq.s32.totalorder %s20, 1
    %p106 = por %p104, %p105
    %p108 = scmp.ne.s32.totalorder %s93, %s107
    %p109 = scmp.eq.s32.totalorder %s20, 0
    %p110 = por %p108, %p109
    %s112 = sadd.s32 %s111, 1
    %p115 = scmp.eq.s32.totalorder %s14, 1
    %p116 = scmp.ne.s32.totalorder %s111, %s113
    %p117 = scmp.eq.s32.totalorder %s14, 0
    %p118 = por %p116, %p117
    %p119 = scmp.ne.s32.totalorder %s111, %s113
    %p120 = scmp.eq.s32.totalorder %s19, 1
    %p121 = por %p119, %p120
    %p122 = scmp.ne.s32.totalorder %s113, %s114
    %p123 = scmp.eq.s32.totalorder %s19, 0
    %p124 = por %p122, %p123
    %p125 = scmp.ne.s32.totalorder %s113, %s114
    %p126 = scmp.eq.s32.totalorder %s20, 1
    %p127 = por %p125, %p126
    %p129 = scmp.ne.s32.totalorder %s114, %s128
    %p130 = scmp.eq.s32.totalorder %s20, 0
    %p131 = por %p129, %p130
    %s133 = sadd.s32 %s132, 1
    %p136 = scmp.eq.s32.totalorder %s14, 1
    %p137 = scmp.ne.s32.totalorder %s132, %s134
    %p138 = scmp.eq.s32.totalorder %s14, 0
    %p139 = por %p137, %p138
    %p140 = scmp.ne.s32.totalorder %s132, %s134
    %p141 = scmp.eq.s32.totalorder %s19, 1
    %p142 = por %p140, %p141
    %p143 = scmp.ne.s32.totalorder %s134, %s135
    %p144 = scmp.eq.s32.totalorder %s19, 0
    %p145 = por %p143, %p144
    %p146 = scmp.ne.s32.totalorder %s134, %s135
    %p147 = scmp.eq.s32.totalorder %s20, 1
    %p148 = por %p146, %p147
    %p150 = scmp.ne.s32.totalorder %s135, %s149
    %p151 = scmp.eq.s32.totalorder %s20, 0
    %p152 = por %p150, %p151
    %s154 = sadd.s32 %s153, 1
    %p157 = scmp.eq.s32.totalorder %s14, 1
    %p158 = scmp.ne.s32.totalorder %s153, %s155
    %p159 = scmp.eq.s32.totalorder %s14, 0
    %p160 = por %p158, %p159
    %p161 = scmp.ne.s32.totalorder %s153, %s155
    %p162 = scmp.eq.s32.totalorder %s19, 1
    %p163 = por %p161, %p162
    %p164 = scmp.ne.s32.totalorder %s155, %s156
    %p165 = scmp.eq.s32.totalorder %s19, 0
    %p166 = por %p164, %p165
    %p167 = scmp.ne.s32.totalorder %s155, %s156
    %p168 = scmp.eq.s32.totalorder %s20, 1
    %p169 = por %p167, %p168
    %p171 = scmp.ne.s32.totalorder %s156, %s170
    %p172 = scmp.eq.s32.totalorder %s20, 0
    %p173 = por %p171, %p172
    %s175 = sadd.s32 %s174, 1
    %p178 = scmp.eq.s32.totalorder %s14, 1
    %p179 = scmp.ne.s32.totalorder %s174, %s176
    %p180 = scmp.eq.s32.totalorder %s14, 0
    %p181 = por %p179, %p180
    %p182 = scmp.ne.s32.totalorder %s174, %s176
    %p183 = scmp.eq.s32.totalorder %s19, 1
    %p184 = por %p182, %p183
    %p185 = scmp.ne.s32.totalorder %s176, %s177
    %p186 = scmp.eq.s32.totalorder %s19, 0
    %p187 = por %p185, %p186
    %p188 = scmp.ne.s32.totalorder %s176, %s177
    %p189 = scmp.eq.s32.totalorder %s20, 1
    %p190 = por %p188, %p189
    %p192 = scmp.ne.s32.totalorder %s177, %s191
    %p193 = scmp.eq.s32.totalorder %s20, 0
    %p194 = por %p192, %p193
    %s195 = ssub.s32 %s14, %s21
    %p196 = scmp.eq.s32.totalorder %s195, 0
    %s198 = sadd.s32 %s197, 1
    %s199 = scalar_select %p196, %s197, %s198
    %p202 = pneg %p196
    %p203 = scmp.eq.s32.totalorder %s14, 1
    %p204 = por %p202, %p203
    %p205 = scmp.ne.s32.totalorder %s197, %s200
    %p206 = scmp.eq.s32.totalorder %s14, 0
    %p207 = por %p205, %p206
    %p208 = scmp.ne.s32.totalorder %s197, %s200
    %p209 = scmp.eq.s32.totalorder %s19, 1
    %p210 = por %p208, %p209
    %p211 = scmp.ne.s32.totalorder %s200, %s201
    %p212 = scmp.eq.s32.totalorder %s19, 0
    %p213 = por %p211, %p212
    %p214 = scmp.ne.s32.totalorder %s200, %s201
    %p215 = scmp.eq.s32.totalorder %s20, 1
    %p216 = por %p214, %p215
    %p218 = scmp.ne.s32.totalorder %s201, %s217
    %p219 = scmp.eq.s32.totalorder %s20, 0
    %p220 = por %p218, %p219
    %p221 = scmp.le.s32.totalorder 1, %s14
    %p222 = scmp.lt.s32.totalorder %s14, 3
    %p223 = pnand %p221, %p222
    %p224 = pneg %p223
    // Predicated region
    $region9: #{unet2d_forward.23} parent=5 // pred_check
      _
    $region10: #{unet2d_forward.23} parent=5 // pred_check_branch
      %226 = sbr.rel (%p223) target = $region12
    $region11: #{unet2d_forward.23} parent=5 // pred_region
      %s227 = ssub.s32 %s14, 1
      // Predicated region
      $region13: #{unet2d_forward.23} parent=11 // pred_check
        %p228 = pneg %p61
      $region14: #{unet2d_forward.23} parent=11 // pred_check_branch
        %230 = sbr.rel (%p228) target = $region16
      $region15: #{unet2d_forward.23} parent=11 // pred_region
        _
      $region16: #{unet2d_forward.23} parent=11 // pred_fallthru
        _
      // Predicated region
      $region17: #{unet2d_forward.23} parent=11 // pred_check
        %p231 = pneg %p82
      $region18: #{unet2d_forward.23} parent=11 // pred_check_branch
        %233 = sbr.rel (%p231) target = $region20
      $region19: #{unet2d_forward.23} parent=11 // pred_region
        _
      $region20: #{unet2d_forward.23} parent=11 // pred_fallthru
        _
      // Predicated region
      $region21: #{unet2d_forward.23} parent=11 // pred_check
        %p234 = pneg %p103
      $region22: #{unet2d_forward.23} parent=11 // pred_check_branch
        %236 = sbr.rel (%p234) target = $region24
      $region23: #{unet2d_forward.23} parent=11 // pred_region
        _
      $region24: #{unet2d_forward.23} parent=11 // pred_fallthru
        _
      // Predicated region
      $region25: #{unet2d_forward.23} parent=11 // pred_check
        %p237 = pneg %p124
      $region26: #{unet2d_forward.23} parent=11 // pred_check_branch
        %239 = sbr.rel (%p237) target = $region28
      $region27: #{unet2d_forward.23} parent=11 // pred_region
        _
      $region28: #{unet2d_forward.23} parent=11 // pred_fallthru
        _
      // Predicated region
      $region29: #{unet2d_forward.23} parent=11 // pred_check
        %p240 = pneg %p145
      $region30: #{unet2d_forward.23} parent=11 // pred_check_branch
        %242 = sbr.rel (%p240) target = $region32
      $region31: #{unet2d_forward.23} parent=11 // pred_region
        _
      $region32: #{unet2d_forward.23} parent=11 // pred_fallthru
        _
      // Predicated region
      $region33: #{unet2d_forward.23} parent=11 // pred_check
        %p243 = pneg %p166
      $region34: #{unet2d_forward.23} parent=11 // pred_check_branch
        %245 = sbr.rel (%p243) target = $region36
      $region35: #{unet2d_forward.23} parent=11 // pred_region
        _
      $region36: #{unet2d_forward.23} parent=11 // pred_fallthru
        _
      // Predicated region
      $region37: #{unet2d_forward.23} parent=11 // pred_check
        %p246 = pneg %p187
      $region38: #{unet2d_forward.23} parent=11 // pred_check_branch
        %248 = sbr.rel (%p246) target = $region40
      $region39: #{unet2d_forward.23} parent=11 // pred_region
        _
      $region40: #{unet2d_forward.23} parent=11 // pred_fallthru
        _
    $region12: #{unet2d_forward.23} parent=5 // pred_fallthru
      _
    %p249 = scmp.lt.s32.totalorder %s14, 2
    // Predicated region
    $region41: #{unet2d_forward.23} parent=5 // pred_check
      %p250 = pneg %p249
    $region42: #{unet2d_forward.23} parent=5 // pred_check_branch
      %252 = sbr.rel (%p250) target = $region44
    $region43: #{unet2d_forward.23} parent=5 // pred_region
      // Predicated region
      $region45: #{unet2d_forward.23} parent=43 // pred_check
        %p253 = pneg %p34
      $region46: #{unet2d_forward.23} parent=43 // pred_check_branch
        %255 = sbr.rel (%p253) target = $region48
      $region47: #{unet2d_forward.23} parent=43 // pred_region
        %p256 = scmp.lt.s32.totalorder %s14, 1
        %s257 = scalar_select %p256, %s14, 1
        %s258 = smul.addr %s257, 36
        %s259 = smul.addr %s258, 4
        %s260 = scalar_lea.vmem %s0, %s259
      $region48: #{unet2d_forward.23} parent=43 // pred_fallthru
        _
    $region44: #{unet2d_forward.23} parent=5 // pred_fallthru
      _
    %p261 = scmp.le.s32.totalorder 1, %s14
    %p262 = scmp.lt.s32.totalorder %s14, 3
    %p263 = pnand %p261, %p262
    %p264 = pneg %p263
    // Predicated region
    $region49: #{unet2d_forward.23} parent=5 // pred_check
      _
    $region50: #{unet2d_forward.23} parent=5 // pred_check_branch
      %266 = sbr.rel (%p263) target = $region52
    $region51: #{unet2d_forward.23} parent=5 // pred_region
      %s267 = ssub.s32 %s14, 1
      %p268 = scmp.lt.s32.totalorder %s19, 1
      %s269 = scalar_select %p268, %s19, 1
      %s270 = smul.addr %s269, 36
      %s271 = smul.addr %s270, 4
      %s272 = scalar_lea.vmem %s0, %s271
      %p273 = pneg %p40
      %p274 = pneg %p37
      %p275 = pneg %p61
      %p276 = pneg %p58
      %p277 = pneg %p82
      %p278 = pneg %p79
      %p279 = pneg %p103
      %p280 = pneg %p100
      %p281 = pneg %p124
      %p282 = pneg %p121
      %p283 = pneg %p145
      %p284 = pneg %p142
      %p285 = pneg %p166
      %p286 = pneg %p163
      %p287 = pneg %p187
      %p288 = pneg %p184
      %p289 = pneg %p213
      %p290 = pneg %p210
      %p291 = scmp.lt.s32.totalorder %s19, 1
      %s292 = scalar_select %p291, %s19, 1
      %s293 = smul.addr %s292, 2
      %s294 = smul.addr %s293, 4
      %s295 = scalar_lea.vmem %s8, %s294
      %p296 = scmp.lt.s32.totalorder %s19, 1
      %s297 = scalar_select %p296, %s19, 1
      %s298 = smul.addr %s297, 36
      %s299 = smul.addr %s298, 4
      %s300 = scalar_lea.vmem %s0, %s299
      %p301 = scmp.lt.s32.totalorder %s19, 1
      %s302 = scalar_select %p301, %s19, 1
      %s303 = smul.addr %s302, 2
      %s304 = smul.addr %s303, 4
      %s305 = scalar_lea.vmem %s8, %s304
      %v307 = vld [vmem:[%s1] sm:$0xff]
      %v308 = vld [vmem:[%s1 + $0x8] sm:$0xff]
      %v309 = vld [vmem:[%s300] sm:$0xff]
      %v310 = vld [vmem:[%s300 + $0x8] sm:$0xff]
      %v311 = vld [vmem:[%s300 + $0x10] sm:$0xff]
      %v312 = vld [vmem:[%s300 + $0x18] sm:$0xff]
      %v313 = vld [vmem:[%s300 + $0x20] sm:$0xff]
      %v314 = vld [vmem:[%s300 + $0x28] sm:$0xff]
      %v315 = vld [vmem:[%s300 + $0x30] sm:$0xff]
      %v316 = vld [vmem:[%s300 + $0x38] sm:$0xff]
      %v317 = vld [vmem:[%s300 + $0x40] sm:$0xff]
      %v318 = vld [vmem:[%s300 + $0x48] sm:$0xff]
      %v319 = vld [vmem:[%s300 + $0x50] sm:$0xff]
      %v320 = vld [vmem:[%s300 + $0x58] sm:$0xff]
      %v321 = vld [vmem:[%s300 + $0x60] sm:$0xff]
      %v322 = vld [vmem:[%s300 + $0x68] sm:$0xff]
      %v323 = vld [vmem:[%s300 + $0x70] sm:$0xff]
      %v324 = vld [vmem:[%s300 + $0x78] sm:$0xff]
      %v325 = vld [vmem:[%s300 + $0x80] sm:$0xff]
      %v326 = vld [vmem:[%s300 + $0x88] sm:$0xff]
      %v327 = vld [vmem:[%s2] sm:$0xff]
      %v328 = vld [vmem:[%s2 + $0x8] sm:$0xff]
      %330 = vset.pattern.permute.xlu0 0
      %331 = vperm.xlu0 %330, %v327
      %v332 = vpop.permute.xlu0 %331
      %335 = vset.pattern.permute.xlu0 0
      %336 = vperm.xlu0 %335, %v328
      %v337 = vpop.permute.xlu0 %336
      %v341 = vunpack.c.l.b16 %v307
      %v342 = vunpack.c.h.b16 %v307
      %v343 = vunpack.c.l.b16 %v308
      %v344 = vunpack.c.h.b16 %v308
      %v345 = vpack.c.b16 %v343, %v341
      %v346 = vpack.c.b16 %v344, %v342
      %v366 = vunpack.c.l.b16 %v309
      %v367 = vunpack.c.h.b16 %v309
      %v368 = vunpack.c.l.b16 %v310
      %v369 = vunpack.c.h.b16 %v310
      %v370 = vunpack.c.l.b16 %v311
      %v371 = vunpack.c.h.b16 %v311
      %v372 = vunpack.c.l.b16 %v312
      %v373 = vunpack.c.h.b16 %v312
      %v374 = vunpack.c.l.b16 %v313
      %v375 = vunpack.c.h.b16 %v313
      %v376 = vunpack.c.l.b16 %v314
      %v377 = vunpack.c.h.b16 %v314
      %v378 = vunpack.c.l.b16 %v315
      %v379 = vunpack.c.h.b16 %v315
      %v380 = vunpack.c.l.b16 %v316
      %v381 = vunpack.c.h.b16 %v316
      %v382 = vunpack.c.l.b16 %v317
      %v383 = vunpack.c.h.b16 %v317
      %v384 = vunpack.c.l.b16 %v318
      %v385 = vunpack.c.h.b16 %v318
      %v386 = vunpack.c.l.b16 %v319
      %v387 = vunpack.c.h.b16 %v319
      %v388 = vunpack.c.l.b16 %v320
      %v389 = vunpack.c.h.b16 %v320
      %v390 = vunpack.c.l.b16 %v321
      %v391 = vunpack.c.h.b16 %v321
      %v392 = vunpack.c.l.b16 %v322
      %v393 = vunpack.c.h.b16 %v322
      %v394 = vunpack.c.l.b16 %v323
      %v395 = vunpack.c.h.b16 %v323
      %v396 = vunpack.c.l.b16 %v324
      %v397 = vunpack.c.h.b16 %v324
      %v398 = vunpack.c.l.b16 %v325
      %v399 = vunpack.c.h.b16 %v325
      %v400 = vunpack.c.l.b16 %v326
      %v401 = vunpack.c.h.b16 %v326
      %v402 = vpack.c.b16 %v368, %v366
      %v403 = vpack.c.b16 %v369, %v367
      %v404 = vpack.c.b16 %v372, %v370
      %v405 = vpack.c.b16 %v373, %v371
      %v406 = vpack.c.b16 %v376, %v374
      %v407 = vpack.c.b16 %v377, %v375
      %v408 = vpack.c.b16 %v380, %v378
      %v409 = vpack.c.b16 %v381, %v379
      %v410 = vpack.c.b16 %v384, %v382
      %v411 = vpack.c.b16 %v385, %v383
      %v412 = vpack.c.b16 %v388, %v386
      %v413 = vpack.c.b16 %v389, %v387
      %v414 = vpack.c.b16 %v392, %v390
      %v415 = vpack.c.b16 %v393, %v391
      %v416 = vpack.c.b16 %v396, %v394
      %v417 = vpack.c.b16 %v397, %v395
      %v418 = vpack.c.b16 %v400, %v398
      %v419 = vpack.c.b16 %v401, %v399
      %vm438 = vcmask 130048
      %v440 = vsel %vm438, %v346, 0
      %442 = vmatprep.subr.bf16.mxu0 %v417
      %443 = vmatpush1.bf16.msra.mxu0 %v416
      %444 = vmatprep.subr.bf16.mxu0 %v415
      %445 = vmatpush1.bf16.msra.mxu0 %v414
      %446 = vmatprep.subr.bf16.mxu0 %v413
      %447 = vmatpush1.bf16.msra.mxu0 %v412
      %448 = vmatprep.subr.bf16.mxu0 %v411
      %449 = vmatpush1.bf16.msra.mxu0 %v410
      %450 = vmatprep.subr.bf16.mxu0 %v409
      %451 = vmatpush1.bf16.msra.mxu0 %v408
      %452 = vmatprep.subr.bf16.mxu0 %v407
      %453 = vmatpush1.bf16.msra.mxu0 %v406
      %454 = vmatprep.subr.bf16.mxu0 %v405
      %455 = vmatpush1.bf16.msra.mxu0 %v404
      %456 = vmatprep.subr.bf16.mxu0 %v403
      %457 = vmatpush1.bf16.msra.mxu0 %v402
      %458 = vmatprep.subr.bf16.mxu0 0
      %459 = vmatpush2.bf16.msra.mxu0 0
      %460 = vmatprep.subr.bf16.mxu0 0
      %461 = vmatpush2.bf16.msra.mxu0 0
      %462 = vmatprep.subr.bf16.mxu0 0
      %463 = vmatpush2.bf16.msra.mxu0 0
      %464 = vmatprep.subr.bf16.mxu0 0
      %465 = vmatpush2.bf16.msra.mxu0 0
      %466 = vmatprep.subr.bf16.mxu0 0
      %467 = vmatpush2.bf16.msra.mxu0 0
      %468 = vmatprep.subr.bf16.mxu0 0
      %469 = vmatpush2.bf16.msra.mxu0 0
      %470 = vmatprep.subr.bf16.mxu0 0
      %471 = vmatpush2.bf16.msra.mxu0 0
      %472 = vmatprep.subr.bf16.mxu0 %v419
      %473 = vmatpush2.bf16.msra.mxu0 %v418
      %474 = vmatprep.mubr.bf16.mxu0 %v440
      %475 = vmatmul.mubr.bf16.gmra.mxu0 %v345
      %v476 = vpop.f32.mrf.mxu0
      %v477 = vadd.f32 %v332, %v476
      %v478 = vpop.f32.mrf.mxu0
      %v479 = vadd.f32 %v332, %v478
      %v480 = vpop.f32.mrf.mxu0
      %v481 = vadd.f32 %v337, %v480
      %v482 = vpop.f32.mrf.mxu0
      %v483 = vadd.f32 %v337, %v482
      %484 = vdwg.mxu0
      %v485 = vld [vmem:[%s5] sm:$0xff]
      %v486 = vld [vmem:[%s5 + $0x8] sm:$0xff]
      %v487 = vld [vmem:[%s3] sm:$0xff]
      %v488 = vld [vmem:[%s3 + $0x8] sm:$0xff]
      %v489 = vld [vmem:[%s4] sm:$0xff]
      %v490 = vld [vmem:[%s4 + $0x8] sm:$0xff]
      %v491 = vadd.f32 %v477, %v479
      %492 = vadd.xlane.f32.xlu0 %v491
      %v493 = vpop.xlane.xlu0 %492
      %v494 = vadd.f32 %v481, %v483
      %495 = vadd.xlane.f32.xlu0 %v494
      %v496 = vpop.xlane.xlu0 %495
      %v497 = vmul.f32 %v477, %v477
      %v498 = vmul.f32 %v479, %v479
      %v499 = vmul.f32 %v481, %v481
      %v500 = vmul.f32 %v483, %v483
      %v501 = vadd.f32 %v497, %v498
      %502 = vadd.xlane.f32.xlu0 %v501
      %v503 = vpop.xlane.xlu0 %502
      %v504 = vadd.f32 %v499, %v500
      %505 = vadd.xlane.f32.xlu0 %v504
      %v506 = vpop.xlane.xlu0 %505
      %v508 = vsel %vm438, %v485, 0
      %v511 = vsel %vm438, %v486, 0
      %513 = vmatprep.subr.mxu0 0.0
      %514 = vmatpush1.msra.mxu0 0.0
      %515 = vmatprep.subr.mxu0 0.0
      %516 = vmatpush1.msra.mxu0 0.0
      %517 = vmatprep.subr.mxu0 0.0
      %518 = vmatpush1.msra.mxu0 0.0
      %519 = vmatprep.subr.mxu0 0.0
      %520 = vmatpush1.msra.mxu0 0.0
      %521 = vmatprep.subr.mxu0 0.0
      %522 = vmatpush1.msra.mxu0 0.0
      %523 = vmatprep.subr.mxu0 0.0
      %524 = vmatpush1.msra.mxu0 0.0
      %525 = vmatprep.subr.mxu0 0.0
      %526 = vmatpush1.msra.mxu0 0.0
      %527 = vmatprep.subr.mxu0 0.0
      %528 = vmatpush1.msra.mxu0 0.0
      %529 = vmatprep.subr.mxu0 0.0
      %530 = vmatpush1.msra.mxu0 0.0
      %531 = vmatprep.subr.mxu0 0.0
      %532 = vmatpush1.msra.mxu0 0.0
      %533 = vmatprep.subr.mxu0 0.0
      %534 = vmatpush1.msra.mxu0 0.0
      %535 = vmatprep.subr.mxu0 0.0
      %536 = vmatpush1.msra.mxu0 0.0
      %537 = vmatprep.subr.mxu0 0.0
      %538 = vmatpush1.msra.mxu0 0.0
      %539 = vmatprep.subr.mxu0 0.0
      %540 = vmatpush1.msra.mxu0 0.0
      %541 = vmatprep.subr.mxu0 0.0
      %542 = vmatpush1.msra.mxu0 %v496
      %543 = vmatprep.subr.mxu0 0.0
      %544 = vmatpush1.msra.mxu0 %v493
      %545 = vmatprep.subr.mxu0 0.0
      %546 = vmatpush2.msra.mxu0 0.0
      %547 = vmatprep.subr.mxu0 0.0
      %548 = vmatpush2.msra.mxu0 0.0
      %549 = vmatprep.subr.mxu0 0.0
      %550 = vmatpush2.msra.mxu0 0.0
      %551 = vmatprep.subr.mxu0 0.0
      %552 = vmatpush2.msra.mxu0 0.0
      %553 = vmatprep.subr.mxu0 0.0
      %554 = vmatpush2.msra.mxu0 0.0
      %555 = vmatprep.subr.mxu0 0.0
      %556 = vmatpush2.msra.mxu0 0.0
      %557 = vmatprep.subr.mxu0 0.0
      %558 = vmatpush2.msra.mxu0 0.0
      %559 = vmatprep.subr.mxu0 0.0
      %560 = vmatpush2.msra.mxu0 0.0
      %561 = vmatprep.subr.mxu0 0.0
      %562 = vmatpush2.msra.mxu0 0.0
      %563 = vmatprep.subr.mxu0 0.0
      %564 = vmatpush2.msra.mxu0 0.0
      %565 = vmatprep.subr.mxu0 0.0
      %566 = vmatpush2.msra.mxu0 0.0
      %567 = vmatprep.subr.mxu0 0.0
      %568 = vmatpush2.msra.mxu0 0.0
      %569 = vmatprep.subr.mxu0 0.0
      %570 = vmatpush2.msra.mxu0 0.0
      %571 = vmatprep.subr.mxu0 0.0
      %572 = vmatpush2.msra.mxu0 0.0
      %573 = vmatprep.subr.mxu0 0.0
      %574 = vmatpush2.msra.mxu0 0.0
      %575 = vmatprep.subr.mxu0 0.0
      %576 = vmatpush2.msra.mxu0 0.0
      %577 = vmatprep.mubr.f32.mxu0 0.0
      %578 = vmatmul.mubr.f32.gmra.mxu0 %v508
      %v579 = vpop.f32.mrf.mxu0
      %v580 = vadd.f32 0.0, %v579
      %v581 = vpop.f32.mrf.mxu0
      %582 = vmatprep.mubr.f32.mxu0 0.0
      %583 = vmatmul.mubr.f32.gmra.mxu0 %v511
      %v584 = vpop.f32.mrf.mxu0
      %v585 = vadd.f32 0.0, %v584
      %v586 = vpop.f32.mrf.mxu0
      %587 = vdwg.mxu0
      %588 = vmatprep.subr.mxu0 0.0
      %589 = vmatpush1.msra.mxu0 0.0
      %590 = vmatprep.subr.mxu0 0.0
      %591 = vmatpush1.msra.mxu0 0.0
      %592 = vmatprep.subr.mxu0 0.0
      %593 = vmatpush1.msra.mxu0 0.0
      %594 = vmatprep.subr.mxu0 0.0
      %595 = vmatpush1.msra.mxu0 0.0
      %596 = vmatprep.subr.mxu0 0.0
      %597 = vmatpush1.msra.mxu0 0.0
      %598 = vmatprep.subr.mxu0 0.0
      %599 = vmatpush1.msra.mxu0 0.0
      %600 = vmatprep.subr.mxu0 0.0
      %601 = vmatpush1.msra.mxu0 0.0
      %602 = vmatprep.subr.mxu0 0.0
      %603 = vmatpush1.msra.mxu0 0.0
      %604 = vmatprep.subr.mxu0 0.0
      %605 = vmatpush1.msra.mxu0 0.0
      %606 = vmatprep.subr.mxu0 0.0
      %607 = vmatpush1.msra.mxu0 0.0
      %608 = vmatprep.subr.mxu0 0.0
      %609 = vmatpush1.msra.mxu0 0.0
      %610 = vmatprep.subr.mxu0 0.0
      %611 = vmatpush1.msra.mxu0 0.0
      %612 = vmatprep.subr.mxu0 0.0
      %613 = vmatpush1.msra.mxu0 0.0
      %614 = vmatprep.subr.mxu0 0.0
      %615 = vmatpush1.msra.mxu0 0.0
      %616 = vmatprep.subr.mxu0 0.0
      %617 = vmatpush1.msra.mxu0 %v506
      %618 = vmatprep.subr.mxu0 0.0
      %619 = vmatpush1.msra.mxu0 %v503
      %620 = vmatprep.subr.mxu0 0.0
      %621 = vmatpush2.msra.mxu0 0.0
      %622 = vmatprep.subr.mxu0 0.0
      %623 = vmatpush2.msra.mxu0 0.0
      %624 = vmatprep.subr.mxu0 0.0
      %625 = vmatpush2.msra.mxu0 0.0
      %626 = vmatprep.subr.mxu0 0.0
      %627 = vmatpush2.msra.mxu0 0.0
      %628 = vmatprep.subr.mxu0 0.0
      %629 = vmatpush2.msra.mxu0 0.0
      %630 = vmatprep.subr.mxu0 0.0
      %631 = vmatpush2.msra.mxu0 0.0
      %632 = vmatprep.subr.mxu0 0.0
      %633 = vmatpush2.msra.mxu0 0.0
      %634 = vmatprep.subr.mxu0 0.0
      %635 = vmatpush2.msra.mxu0 0.0
      %636 = vmatprep.subr.mxu0 0.0
      %637 = vmatpush2.msra.mxu0 0.0
      %638 = vmatprep.subr.mxu0 0.0
      %639 = vmatpush2.msra.mxu0 0.0
      %640 = vmatprep.subr.mxu0 0.0
      %641 = vmatpush2.msra.mxu0 0.0
      %642 = vmatprep.subr.mxu0 0.0
      %643 = vmatpush2.msra.mxu0 0.0
      %644 = vmatprep.subr.mxu0 0.0
      %645 = vmatpush2.msra.mxu0 0.0
      %646 = vmatprep.subr.mxu0 0.0
      %647 = vmatpush2.msra.mxu0 0.0
      %648 = vmatprep.subr.mxu0 0.0
      %649 = vmatpush2.msra.mxu0 0.0
      %650 = vmatprep.subr.mxu0 0.0
      %651 = vmatpush2.msra.mxu0 0.0
      %652 = vmatprep.mubr.f32.mxu0 0.0
      %653 = vmatmul.mubr.f32.gmra.mxu0 %v508
      %v654 = vpop.f32.mrf.mxu0
      %v655 = vadd.f32 0.0, %v654
      %v656 = vpop.f32.mrf.mxu0
      %657 = vmatprep.mubr.f32.mxu0 0.0
      %658 = vmatmul.mubr.f32.gmra.mxu0 %v511
      %v659 = vpop.f32.mrf.mxu0
      %v660 = vadd.f32 0.0, %v659
      %v661 = vpop.f32.mrf.mxu0
      %662 = vdwg.mxu0
      %v663 = vmul.f32 %v580, %v580
      %v664 = vmul.f32 %v585, %v585
      %v665 = vsub.f32 %v655, %v663
      %v666 = vsub.f32 %v660, %v664
      %v667 = vmax.f32 %v665, 0.0
      %v668 = vmax.f32 %v666, 0.0
      %v669 = vadd.f32 %v667, 1e-05
      %v670 = vadd.f32 %v668, 1e-05
      %v671 = vrsqrt.pop %v669
      %v672 = vrsqrt.pop %v670
      %674 = vset.pattern.permute.xlu0 0
      %675 = vperm.xlu0 %674, %v580
      %v676 = vpop.permute.xlu0 %675
      %679 = vset.pattern.permute.xlu0 0
      %680 = vperm.xlu0 %679, %v585
      %v681 = vpop.permute.xlu0 %680
      %v683 = vsub.f32 %v477, %v676
      %v684 = vsub.f32 %v479, %v676
      %v685 = vsub.f32 %v481, %v681
      %v686 = vsub.f32 %v483, %v681
      %v687 = vmul.f32 %v671, %v487
      %v688 = vmul.f32 %v672, %v488
      %690 = vset.pattern.permute.xlu0 0
      %691 = vperm.xlu0 %690, %v687
      %v692 = vpop.permute.xlu0 %691
      %695 = vset.pattern.permute.xlu0 0
      %696 = vperm.xlu0 %695, %v688
      %v697 = vpop.permute.xlu0 %696
      %v699 = vmul.f32 %v683, %v692
      %v700 = vmul.f32 %v684, %v692
      %v701 = vmul.f32 %v685, %v697
      %v702 = vmul.f32 %v686, %v697
      %704 = vset.pattern.permute.xlu0 0
      %705 = vperm.xlu0 %704, %v489
      %v706 = vpop.permute.xlu0 %705
      %709 = vset.pattern.permute.xlu0 0
      %710 = vperm.xlu0 %709, %v490
      %v711 = vpop.permute.xlu0 %710
      %v713 = vadd.f32 %v699, %v706
      %v714 = vadd.f32 %v700, %v706
      %v715 = vadd.f32 %v701, %v711
      %v716 = vadd.f32 %v702, %v711
      %v717 = vmax.f32 %v713, 0.0
      %v718 = vmax.f32 %v714, 0.0
      %v719 = vmax.f32 %v715, 0.0
      %v720 = vmax.f32 %v716, 0.0
      %v721 = vld [vmem:[%s6] sm:$0x3]
      %v722 = vpack.c.bf16 %v719, %v717
      %v723 = vpack.c.bf16 %v720, %v718
      %v724 = vld [vmem:[%s7] sm:$0x7]
      %726 = vset.pattern.permute.xlu0 0
      %727 = vperm.xlu0 %726, %v724
      %v728 = vpop.permute.xlu0 %727
      %v731 = vsel %vm438, %v721, 0
      %733 = vmatprep.subr.bf16.mxu0 0
      %734 = vmatpush1.bf16.msra.mxu0 0
      %735 = vmatprep.subr.bf16.mxu0 0
      %736 = vmatpush1.bf16.msra.mxu0 0
      %737 = vmatprep.subr.bf16.mxu0 0
      %738 = vmatpush1.bf16.msra.mxu0 0
      %739 = vmatprep.subr.bf16.mxu0 0
      %740 = vmatpush1.bf16.msra.mxu0 0
      %741 = vmatprep.subr.bf16.mxu0 0
      %742 = vmatpush1.bf16.msra.mxu0 0
      %743 = vmatprep.subr.bf16.mxu0 0
      %744 = vmatpush1.bf16.msra.mxu0 0
      %745 = vmatprep.subr.bf16.mxu0 0
      %746 = vmatpush1.bf16.msra.mxu0 0
      %747 = vmatprep.subr.bf16.mxu0 %v723
      %748 = vmatpush1.bf16.msra.mxu0 %v722
      %749 = vmatprep.subr.bf16.mxu0 0
      %750 = vmatpush2.bf16.msra.mxu0 0
      %751 = vmatprep.subr.bf16.mxu0 0
      %752 = vmatpush2.bf16.msra.mxu0 0
      %753 = vmatprep.subr.bf16.mxu0 0
      %754 = vmatpush2.bf16.msra.mxu0 0
      %755 = vmatprep.subr.bf16.mxu0 0
      %756 = vmatpush2.bf16.msra.mxu0 0
      %757 = vmatprep.subr.bf16.mxu0 0
      %758 = vmatpush2.bf16.msra.mxu0 0
      %759 = vmatprep.subr.bf16.mxu0 0
      %760 = vmatpush2.bf16.msra.mxu0 0
      %761 = vmatprep.subr.bf16.mxu0 0
      %762 = vmatpush2.bf16.msra.mxu0 0
      %763 = vmatprep.subr.bf16.mxu0 0
      %764 = vmatpush2.bf16.msra.mxu0 0
      %765 = vmatprep.mubr.bf16.mxu0 0
      %766 = vmatmul.mubr.bf16.gmra.mxu0 %v731
      %v767 = vpop.f32.mrf.mxu0
      %v768 = vadd.f32 %v728, %v767
      %v769 = vpop.f32.mrf.mxu0
      %v770 = vadd.f32 %v728, %v769
      %v771 = vpop.f32.mrf.mxu0
      %v772 = vpop.f32.mrf.mxu0
      %773 = vdwg.mxu0
      %v776 = vcombine.low %v768, %v770
      %778 = vst [vmem:[%s305] sm:$0x77] %v776
      %p779 = scmp.lt.s32.totalorder %s19, 1
      %s780 = scalar_select %p779, %s19, 1
      %s781 = smul.addr %s780, 2
      %s782 = smul.addr %s781, 4
      %s783 = scalar_lea.vmem %s8, %s782
      // Predicated region
      $region53: #{unet2d_forward.23} parent=51 // pred_check
        %p784 = pneg %p210
      $region54: #{unet2d_forward.23} parent=51 // pred_check_branch
        %786 = sbr.rel (%p784) target = $region56
      $region55: #{unet2d_forward.23} parent=51 // pred_region
        _
      $region56: #{unet2d_forward.23} parent=51 // pred_fallthru
        _
    $region52: #{unet2d_forward.23} parent=5 // pred_fallthru
      _
    %p787 = scmp.le.s32.totalorder 2, %s14
    // Predicated region
    $region57: #{unet2d_forward.23} parent=5 // pred_check
      %p788 = pneg %p787
    $region58: #{unet2d_forward.23} parent=5 // pred_check_branch
      %790 = sbr.rel (%p788) target = $region60
    $region59: #{unet2d_forward.23} parent=5 // pred_region
      %s791 = ssub.s32 %s14, 2
      // Predicated region
      $region61: #{unet2d_forward.23} parent=59 // pred_check
        %p792 = pneg %p216
      $region62: #{unet2d_forward.23} parent=59 // pred_check_branch
        %794 = sbr.rel (%p792) target = $region64
      $region63: #{unet2d_forward.23} parent=59 // pred_region
        %p795 = scmp.lt.s32.totalorder %s20, 1
        %s796 = scalar_select %p795, %s20, 1
        %s797 = smul.addr %s796, 2
        %s798 = smul.addr %s797, 4
        %s799 = scalar_lea.vmem %s8, %s798
      $region64: #{unet2d_forward.23} parent=59 // pred_fallthru
        _
    $region60: #{unet2d_forward.23} parent=5 // pred_fallthru
      _
  $region6: #{unet2d_forward.23} parent=0 // loop_footer
    %s18 = sadd.s32 1, %s14
  $region7: #{unet2d_forward.23} parent=0 // loop_footer_branch
    %13 = sbr.rel target = $region3
  $region8: #{unet2d_forward.23} parent=0 // loop_exit
    _

</llo_original>
